<compile_context>
chip_gen: v5e
topology: v5e:2x2
jax: 0.10.0
libtpu: 0.0.40
codegen_flags: <defaults>
</compile_context>

<pallas_src>
import functools

import jax
import jax.numpy as jnp
from jax.experimental import pallas as pl
from jax.experimental.pallas import tpu as pltpu

EPS = 1e-5
NEG_SLOPE = 0.2

IMAGE_SIZE = 64
FMS = IMAGE_SIZE // 2  # feature_map_size = 32

TM = 512    # max M-tile (patch-matrix rows)
LANE = 128  # TPU lane width


def _round_up(x, m):
    return ((x + m - 1) // m) * m


# ----------------------------- Pallas kernels ------------------------------

def _conv_fused_kernel(sc_ref, sh_ref, p_ref, w_ref, y_ref, st_ref,
                       *, tm, m_true, pre_act):
    """[optional per-K-column BN affine + LeakyReLU on the patch tile] -> bf16 GEMM
    (f32 accumulate) -> per-tile per-channel (sum, sum-of-squares) for this layer's BN."""
    p = p_ref[...]
    if pre_act:
        z = p.astype(jnp.float32) * sc_ref[...] + sh_ref[...]
        p = jnp.where(z >= 0, z, NEG_SLOPE * z).astype(jnp.bfloat16)
    acc = jnp.dot(p, w_ref[...], preferred_element_type=jnp.float32)
    y_ref[...] = acc.astype(y_ref.dtype)
    # Exclude zero-padded M rows from the BatchNorm statistics (static no-op when M
    # divides the tile size).
    if m_true % tm != 0:
        row = (jax.lax.broadcasted_iota(jnp.int32, acc.shape, 0)
               + pl.program_id(0) * tm)
        acc = jnp.where(row < m_true, acc, 0.0)
    s1 = jnp.sum(acc, axis=0, keepdims=True)          # (1, C)
    s2 = jnp.sum(acc * acc, axis=0, keepdims=True)    # (1, C)
    st_ref[...] = jnp.concatenate([s1, s2], axis=0).reshape(1, 2, acc.shape[1])


def _final_kernel(sc_ref, sh_ref, p_ref, w_ref, o_ref):
    """Previous layer's BN affine + LeakyReLU on the patch tile -> bf16 GEMM
    (f32 accumulate) -> Sigmoid (lane-padded output channel)."""
    z = p_ref[...].astype(jnp.float32) * sc_ref[...] + sh_ref[...]
    p = jnp.where(z >= 0, z, NEG_SLOPE * z).astype(jnp.bfloat16)
    acc = jnp.dot(p, w_ref[...], preferred_element_type=jnp.float32)
    o_ref[...] = 1.0 / (1.0 + jnp.exp(-acc))


# ------------------------------ glue helpers -------------------------------

def _im2col_nhwc(x, kh, kw, stride, pad, pad_value=None):
    """x: (N, H, W, C) -> patches (N*Ho*Wo, kh*kw*C); feature order (di, dj, c).

    If `pad_value` (shape (C,)) is given, spatial padding uses that per-channel value
    instead of zero (so that scale*pad+shift == 0 for the fused BN/LReLU in the kernel).
    """
    n, h, w, c = x.shape
    if pad:
        x = jnp.pad(x, ((0, 0), (pad, pad), (pad, pad), (0, 0)))
        if pad_value is not None:
            pv = pad_value.astype(x.dtype).reshape(1, 1, 1, c)
            border = jnp.pad(jnp.ones((1, h, w, 1), dtype=x.dtype),
                             ((0, 0), (pad, pad), (pad, pad), (0, 0)))
            x = x + (1.0 - border) * pv     # interior untouched (adds exact 0)
    h_out = (h + 2 * pad - kh) // stride + 1
    w_out = (w + 2 * pad - kw) // stride + 1
    cols = []
    for di in range(kh):
        for dj in range(kw):
            cols.append(x[:, di:di + stride * h_out:stride,
                          dj:dj + stride * w_out:stride, :])
    patches = jnp.concatenate(cols, axis=-1)            # (N, Ho, Wo, kh*kw*C)
    return patches.reshape(n * h_out * w_out, kh * kw * c), h_out, w_out


def _weight_matrix(w_oihw):
    """PyTorch (C_out, C_in, kh, kw) -> (kh*kw*C_in, C_out) matching _im2col_nhwc order."""
    c_out, c_in, kh, kw = w_oihw.shape
    return w_oihw.transpose(2, 3, 1, 0).reshape(kh * kw * c_in, c_out)


def _compiler_params():
    return pltpu.CompilerParams(dimension_semantics=("parallel",))


def _pre_vectors(pre, kh, kw, k, k_pad):
    """Tile previous layer's per-channel (scale, shift) across the kh*kw taps of K."""
    if pre is None:
        return (jnp.ones((1, k_pad), jnp.float32),
                jnp.zeros((1, k_pad), jnp.float32))
    scale_p, shift_p = pre
    sc = jnp.tile(scale_p.astype(jnp.float32), kh * kw)
    sh = jnp.tile(shift_p.astype(jnp.float32), kh * kw)
    if k_pad != k:
        sc = jnp.pad(sc, (0, k_pad - k), constant_values=1.0)
        sh = jnp.pad(sh, (0, k_pad - k))
    return sc.reshape(1, k_pad), sh.reshape(1, k_pad)


def _pad_value(pre):
    if pre is None:
        return None
    scale_p, shift_p = pre
    return jnp.where(scale_p != 0, -shift_p / scale_p, 0.0)


def _to_img(y_pad, geom):
    m_true, n, h, w, c = geom
    return y_pad[:m_true].reshape(n, h, w, c)


# ------------------------------ conv layers --------------------------------

def _conv_layer(x_img, w_oihw, gamma, beta, *, stride, pad, pre):
    """[pre-BN affine + LReLU of previous layer, fused] + Conv2d(bias=False), returning
    the un-normalized conv output plus this layer's BN (scale, shift)."""
    n = x_img.shape[0]
    c_out, _, kh, kw = w_oihw.shape
    patches, h_out, w_out = _im2col_nhwc(x_img, kh, kw, stride, pad,
                                         pad_value=_pad_value(pre))
    m_true, k = patches.shape
    k_pad = _round_up(k, LANE)                  # conv1: K=16 -> 128 (MXU/lane fill)
    tm = min(TM, _round_up(m_true, 8))
    m_pad = _round_up(m_true, tm)
    if (m_pad, k_pad) != (m_true, k):
        patches = jnp.pad(patches, ((0, m_pad - m_true), (0, k_pad - k)))
    wmat = _weight_matrix(w_oihw).astype(jnp.bfloat16)
    if k_pad != k:
        wmat = jnp.pad(wmat, ((0, k_pad - k), (0, 0)))
    sc_vec, sh_vec = _pre_vectors(pre, kh, kw, k, k_pad)
    g = m_pad // tm

    flops = 2 * m_pad * k_pad * c_out
    bytes_acc = ((m_pad * k_pad + k_pad * c_out + m_pad * c_out) * 2
                 + (2 * k_pad + g * 2 * c_out) * 4)
    y, stats = pl.pallas_call(
        functools.partial(_conv_fused_kernel, tm=tm, m_true=m_true,
                          pre_act=(pre is not None)),
        grid=(g,),
        in_specs=[
            pl.BlockSpec((1, k_pad), lambda i: (0, 0)),      # scale (resident)
            pl.BlockSpec((1, k_pad), lambda i: (0, 0)),      # shift (resident)
            pl.BlockSpec((tm, k_pad), lambda i: (i, 0)),     # patch tile (pipelined)
            pl.BlockSpec((k_pad, c_out), lambda i: (0, 0)),  # full weight, resident
        ],
        out_specs=(
            pl.BlockSpec((tm, c_out), lambda i: (i, 0)),
            pl.BlockSpec((1, 2, c_out), lambda i: (i, 0, 0)),
        ),
        out_shape=(
            jax.ShapeDtypeStruct((m_pad, c_out), jnp.bfloat16),
            jax.ShapeDtypeStruct((g, 2, c_out), jnp.float32),
        ),
        compiler_params=_compiler_params(),
        cost_estimate=pl.CostEstimate(flops=flops, transcendentals=0,
                                      bytes_accessed=bytes_acc),
    )(sc_vec, sh_vec, patches, wmat)

    # This layer's BatchNorm (training-mode batch statistics, biased variance).
    tot = jnp.sum(stats, axis=0)                           # (2, C) f32
    mean = tot[0] / m_true
    var = jnp.maximum(tot[1] / m_true - mean * mean, 0.0)
    scale = gamma * jax.lax.rsqrt(var + EPS)
    shift = beta - mean * scale
    return y, scale, shift, (m_true, n, h_out, w_out, c_out)


def _final_conv_sigmoid(x_img, w_oihw, *, pre, stride, pad):
    """Previous layer's BN+LReLU (fused) + final Conv2d(bias=False) + Sigmoid."""
    n = x_img.shape[0]
    c_out, _, kh, kw = w_oihw.shape
    patches, h_out, w_out = _im2col_nhwc(x_img, kh, kw, stride, pad,
                                         pad_value=_pad_value(pre) if pad else None)
    m_true, k = patches.shape
    k_pad = _round_up(k, LANE)
    c_pad = _round_up(c_out, LANE)              # lane-dense stores (1 -> 128)
    tm = min(TM, _round_up(m_true, 8))
    m_pad = _round_up(m_true, tm)
    patches = jnp.pad(patches, ((0, m_pad - m_true), (0, k_pad - k)))
    wmat = jnp.pad(_weight_matrix(w_oihw).astype(jnp.bfloat16),
                   ((0, k_pad - k), (0, c_pad - c_out)))
    sc_vec, sh_vec = _pre_vectors(pre, kh, kw, k, k_pad)
    g = m_pad // tm

    out = pl.pallas_call(
        _final_kernel,
        grid=(g,),
        in_specs=[
            pl.BlockSpec((1, k_pad), lambda i: (0, 0)),
            pl.BlockSpec((1, k_pad), lambda i: (0, 0)),
            pl.BlockSpec((tm, k_pad), lambda i: (i, 0)),
            pl.BlockSpec((k_pad, c_pad), lambda i: (0, 0)),
        ],
        out_specs=pl.BlockSpec((tm, c_pad), lambda i: (i, 0)),
        out_shape=jax.ShapeDtypeStruct((m_pad, c_pad), jnp.float32),
        compiler_params=_compiler_params(),
        cost_estimate=pl.CostEstimate(flops=2 * m_pad * k_pad * c_pad,
                                      transcendentals=m_pad * c_pad,
                                      bytes_accessed=(m_pad * k_pad + k_pad * c_pad) * 2
                                                     + m_pad * c_pad * 4
                                                     + 2 * k_pad * 4),
    )(sc_vec, sh_vec, patches, wmat)
    return out[:m_true, :c_out].reshape(n, h_out, w_out, c_out)


# ------------------------------ Discriminator ------------------------------

def init_params(key):
    """DCGAN-style init: conv ~ N(0, 0.02); gamma ~ N(1, 0.02); beta = 0; bias=False."""
    dims = [
        (FMS, 1),             # conv1: (32, 1, 4, 4)
        (FMS * 2, FMS),       # conv2: (64, 32, 4, 4)
        (FMS * 4, FMS * 2),   # conv3: (128, 64, 4, 4)
        (FMS * 8, FMS * 4),   # conv4: (256, 128, 4, 4)
        (1, FMS * 8),         # conv5: (1, 256, 4, 4)
    ]
    params = {}
    keys = jax.random.split(key, 2 * len(dims))
    for i, (c_out, c_in) in enumerate(dims):
        params[f"w{i + 1}"] = 0.02 * jax.random.normal(
            keys[2 * i], (c_out, c_in, 4, 4), dtype=jnp.float32)
        if i < 4:  # BN only on the first four convs
            params[f"g{i + 1}"] = 1.0 + 0.02 * jax.random.normal(
                keys[2 * i + 1], (c_out,), dtype=jnp.float32)
            params[f"b{i + 1}"] = jnp.zeros((c_out,), dtype=jnp.float32)
    return params


def discriminator_forward(params, x_nchw):
    # x: (N, 1, 64, 64) NCHW float32 -> NHWC bf16 once; stays NHWC between layers.
    x = jnp.transpose(x_nchw, (0, 2, 3, 1)).astype(jnp.bfloat16)
    # conv1 (no fused pre-activation: its input is the raw image).
    y, sc, sh, geom = _conv_layer(x, params["w1"], params["g1"], params["b1"],
                                  stride=2, pad=1, pre=None)          # (N,32,32,32)
    for i in (2, 3, 4):                                               # (N,16,16,64) ... (N,4,4,256)
        y, sc, sh, geom = _conv_layer(_to_img(y, geom),
                                      params[f"w{i}"], params[f"g{i}"], params[f"b{i}"],
                                      stride=2, pad=1, pre=(sc, sh))
    out = _final_conv_sigmoid(_to_img(y, geom), params["w5"],
                              pre=(sc, sh), stride=1, pad=0)          # (N,1,1,1)
    return jnp.transpose(out, (0, 3, 1, 2)).astype(jnp.float32)       # NCHW


# -------------------------- plain-JAX f32 reference ------------------------

def _reference_forward(params, x):
    def conv(x, w, stride, pad):
        return jax.lax.conv_general_dilated(
            x, w, window_strides=(stride, stride),
            padding=[(pad, pad), (pad, pad)],
            dimension_numbers=("NCHW", "OIHW", "NCHW"))

    def bn_lrelu(y, g, b):
        mean = jnp.mean(y, axis=(0, 2, 3), keepdims=True)
        var = jnp.mean((y - mean) ** 2, axis=(0, 2, 3), keepdims=True)
        z = ((y - mean) * jax.lax.rsqrt(var + EPS)
             * g.reshape(1, -1, 1, 1) + b.reshape(1, -1, 1, 1))
        return jnp.where(z >= 0, z, NEG_SLOPE * z)

    y = bn_lrelu(conv(x, params["w1"], 2, 1), params["g1"], params["b1"])
    y = bn_lrelu(conv(y, params["w2"], 2, 1), params["g2"], params["b2"])
    y = bn_lrelu(conv(y, params["w3"], 2, 1), params["g3"], params["b3"])
    y = bn_lrelu(conv(y, params["w4"], 2, 1), params["g4"], params["b4"])
    return jax.nn.sigmoid(conv(y, params["w5"], 1, 0))


if __name__ == "__main__":
    key = jax.random.PRNGKey(0)
    pkey, xkey = jax.random.split(key)
    params = init_params(pkey)
    # Spatial size must be 64 so the final 4x4/stride-1/pad-0 conv yields 1x1.
    x = jax.random.normal(xkey, (2, 1, IMAGE_SIZE, IMAGE_SIZE), dtype=jnp.float32)

    out = jax.block_until_ready(jax.jit(discriminator_forward)(params, x))

    assert out.shape == (2, 1, 1, 1), out.shape
    assert bool(jnp.all(jnp.isfinite(out)))
    assert bool(jnp.all((out >= 0.0) & (out <= 1.0)))

    ref = jax.block_until_ready(jax.jit(_reference_forward)(params, x))
    err = float(jnp.max(jnp.abs(out - ref)))
    assert err < 0.1, f"max abs diff vs f32 reference: {err}"

    print("KERNEL_OK")
</pallas_src>

<mosaic_0001>
module attributes {stable_mosaic.version = 11 : i64} {
  func.func @_conv_fused_kernel(%arg0: i32, %arg1: memref<1x128xf32, #tpu.memory_space<vmem>>, %arg2: memref<1x128xf32, #tpu.memory_space<vmem>>, %arg3: memref<512x128xbf16, #tpu.memory_space<vmem>>, %arg4: memref<128x32xbf16, #tpu.memory_space<vmem>>, %arg5: memref<512x32xbf16, #tpu.memory_space<vmem>>, %arg6: memref<1x2x32xf32, #tpu.memory_space<vmem>>) attributes {dimension_semantics = [#tpu.dimension_semantics<parallel>], iteration_bounds = array<i64: 4>, scalar_prefetch = 0 : i64, scratch_operands = 0 : i64, tpu.core_type = #tpu.core_type<tc>, window_params = [{pipeline_mode = #tpu.pipeline_mode<synchronous>, transform_indices = @transform_0, window_bounds = array<i64: 1, 128>}, {pipeline_mode = #tpu.pipeline_mode<synchronous>, transform_indices = @transform_1, window_bounds = array<i64: 1, 128>}, {transform_indices = @transform_2, window_bounds = array<i64: 512, 128>}, {pipeline_mode = #tpu.pipeline_mode<synchronous>, transform_indices = @transform_3, window_bounds = array<i64: 128, 32>}, {transform_indices = @transform_4, window_bounds = array<i64: 512, 32>}, {transform_indices = @transform_5, window_bounds = array<i64: 1, 2, 32>}]} {
    %c0 = arith.constant 0 : index
    %c0_0 = arith.constant 0 : index
    %0 = vector.load %arg3[%c0, %c0_0] : memref<512x128xbf16, #tpu.memory_space<vmem>>, vector<512x128xbf16>
    %c0_1 = arith.constant 0 : index
    %c0_2 = arith.constant 0 : index
    %1 = vector.load %arg4[%c0_1, %c0_2] : memref<128x32xbf16, #tpu.memory_space<vmem>>, vector<128x32xbf16>
    %cst = arith.constant dense<0.000000e+00> : vector<512x32xf32>
    %2 = tpu.matmul %0, %1, %cst {dimension_numbers = #tpu.dot_dimension_numbers<[1], [0], [0], [1], [0, 0, 1, 1], [], []>} : vector<512x128xbf16>, vector<128x32xbf16>, vector<512x32xf32> -> vector<512x32xf32>
    %3 = arith.truncf %2 : vector<512x32xf32> to vector<512x32xbf16>
    %c0_3 = arith.constant 0 : index
    %c0_4 = arith.constant 0 : index
    %4 = vector.load %arg5[%c0_3, %c0_4] : memref<512x32xbf16, #tpu.memory_space<vmem>>, vector<512x32xbf16>
    tpu.vector_store %arg5[%c0_3, %c0_4], %3 {strides = array<i32>} : memref<512x32xbf16, #tpu.memory_space<vmem>>, vector<512x32xbf16>,
    %cst_5 = arith.constant dense<0.000000e+00> : vector<32xf32>
    %5 = vector.multi_reduction <add>, %2, %cst_5 [0] : vector<512x32xf32> to vector<32xf32>
    %6 = vector.shape_cast %5 : vector<32xf32> to vector<1x32xf32>
    %7 = arith.mulf %2, %2 : vector<512x32xf32>
    %cst_6 = arith.constant dense<0.000000e+00> : vector<32xf32>
    %8 = vector.multi_reduction <add>, %7, %cst_6 [0] : vector<512x32xf32> to vector<32xf32>
    %9 = vector.shape_cast %8 : vector<32xf32> to vector<1x32xf32>
    %10 = tpu.concatenate %6, %9 in 0 : vector<1x32xf32>, vector<1x32xf32> -> vector<2x32xf32>
    %11 = vector.shape_cast %10 : vector<2x32xf32> to vector<1x2x32xf32>
    %c0_7 = arith.constant 0 : index
    %c0_8 = arith.constant 0 : index
    %c0_9 = arith.constant 0 : index
    %12 = vector.load %arg6[%c0_7, %c0_8, %c0_9] : memref<1x2x32xf32, #tpu.memory_space<vmem>>, vector<1x2x32xf32>
    tpu.vector_store %arg6[%c0_7, %c0_8, %c0_9], %11 {strides = array<i32>} : memref<1x2x32xf32, #tpu.memory_space<vmem>>, vector<1x2x32xf32>,
    return
  }
  func.func @transform_0(%arg0: i32) -> (i32, i32) {
    %c0_i32 = arith.constant 0 : i32
    %c0_i32_0 = arith.constant 0 : i32
    %c0_i32_1 = arith.constant 0 : i32
    return %c0_i32, %c0_i32_0 : i32, i32
  }
  func.func @transform_1(%arg0: i32) -> (i32, i32) {
    %c0_i32 = arith.constant 0 : i32
    %c0_i32_0 = arith.constant 0 : i32
    %c0_i32_1 = arith.constant 0 : i32
    return %c0_i32, %c0_i32_0 : i32, i32
  }
  func.func @transform_2(%arg0: i32) -> (i32, i32) {
    %c0_i32 = arith.constant 0 : i32
    %c0_i32_0 = arith.constant 0 : i32
    return %arg0, %c0_i32 : i32, i32
  }
  func.func @transform_3(%arg0: i32) -> (i32, i32) {
    %c0_i32 = arith.constant 0 : i32
    %c0_i32_0 = arith.constant 0 : i32
    %c0_i32_1 = arith.constant 0 : i32
    return %c0_i32, %c0_i32_0 : i32, i32
  }
  func.func @transform_4(%arg0: i32) -> (i32, i32) {
    %c0_i32 = arith.constant 0 : i32
    %c0_i32_0 = arith.constant 0 : i32
    return %arg0, %c0_i32 : i32, i32
  }
  func.func @transform_5(%arg0: i32) -> (i32, i32, i32) {
    %c0_i32 = arith.constant 0 : i32
    %c0_i32_0 = arith.constant 0 : i32
    %c0_i32_1 = arith.constant 0 : i32
    return %arg0, %c0_i32, %c0_i32_0 : i32, i32, i32
  }
}

module attributes {stable_mosaic.version = 11 : i64} {
  func.func @_conv_fused_kernel(%arg0: i32, %arg1: memref<1x512xf32, #tpu.memory_space<vmem>>, %arg2: memref<1x512xf32, #tpu.memory_space<vmem>>, %arg3: memref<512x512xbf16, #tpu.memory_space<vmem>>, %arg4: memref<512x64xbf16, #tpu.memory_space<vmem>>, %arg5: memref<512x64xbf16, #tpu.memory_space<vmem>>, %arg6: memref<1x2x64xf32, #tpu.memory_space<vmem>>) attributes {dimension_semantics = [#tpu.dimension_semantics<parallel>], iteration_bounds = array<i64: 1>, scalar_prefetch = 0 : i64, scratch_operands = 0 : i64, tpu.core_type = #tpu.core_type<tc>, window_params = [{pipeline_mode = #tpu.pipeline_mode<synchronous>, transform_indices = @transform_0, window_bounds = array<i64: 1, 512>}, {pipeline_mode = #tpu.pipeline_mode<synchronous>, transform_indices = @transform_1, window_bounds = array<i64: 1, 512>}, {transform_indices = @transform_2, window_bounds = array<i64: 512, 512>}, {pipeline_mode = #tpu.pipeline_mode<synchronous>, transform_indices = @transform_3, window_bounds = array<i64: 512, 64>}, {transform_indices = @transform_4, window_bounds = array<i64: 512, 64>}, {transform_indices = @transform_5, window_bounds = array<i64: 1, 2, 64>}]} {
    %c0 = arith.constant 0 : index
    %c0_0 = arith.constant 0 : index
    %0 = vector.load %arg3[%c0, %c0_0] : memref<512x512xbf16, #tpu.memory_space<vmem>>, vector<512x512xbf16>
    %1 = arith.extf %0 : vector<512x512xbf16> to vector<512x512xf32>
    %c0_1 = arith.constant 0 : index
    %c0_2 = arith.constant 0 : index
    %2 = vector.load %arg1[%c0_1, %c0_2] : memref<1x512xf32, #tpu.memory_space<vmem>>, vector<1x512xf32>
    %3 = vector.broadcast %2 : vector<1x512xf32> to vector<512x512xf32>
    %4 = arith.mulf %1, %3 : vector<512x512xf32>
    %c0_3 = arith.constant 0 : index
    %c0_4 = arith.constant 0 : index
    %5 = vector.load %arg2[%c0_3, %c0_4] : memref<1x512xf32, #tpu.memory_space<vmem>>, vector<1x512xf32>
    %6 = vector.broadcast %5 : vector<1x512xf32> to vector<512x512xf32>
    %7 = arith.addf %4, %6 : vector<512x512xf32>
    %cst = arith.constant 0.000000e+00 : f32
    %8 = vector.broadcast %cst : f32 to vector<512x512xf32>
    %9 = arith.cmpf oge, %7, %8 : vector<512x512xf32>
    %cst_5 = arith.constant 2.000000e-01 : f32
    %10 = vector.broadcast %cst_5 : f32 to vector<512x512xf32>
    %11 = arith.mulf %10, %7 : vector<512x512xf32>
    %12 = arith.select %9, %7, %11 : vector<512x512xi1>, vector<512x512xf32>
    %13 = arith.truncf %12 : vector<512x512xf32> to vector<512x512xbf16>
    %c0_6 = arith.constant 0 : index
    %c0_7 = arith.constant 0 : index
    %14 = vector.load %arg4[%c0_6, %c0_7] : memref<512x64xbf16, #tpu.memory_space<vmem>>, vector<512x64xbf16>
    %cst_8 = arith.constant dense<0.000000e+00> : vector<512x64xf32>
    %15 = tpu.matmul %13, %14, %cst_8 {dimension_numbers = #tpu.dot_dimension_numbers<[1], [0], [0], [1], [0, 0, 1, 1], [], []>} : vector<512x512xbf16>, vector<512x64xbf16>, vector<512x64xf32> -> vector<512x64xf32>
    %16 = arith.truncf %15 : vector<512x64xf32> to vector<512x64xbf16>
    %c0_9 = arith.constant 0 : index
    %c0_10 = arith.constant 0 : index
    %17 = vector.load %arg5[%c0_9, %c0_10] : memref<512x64xbf16, #tpu.memory_space<vmem>>, vector<512x64xbf16>
    tpu.vector_store %arg5[%c0_9, %c0_10], %16 {strides = array<i32>} : memref<512x64xbf16, #tpu.memory_space<vmem>>, vector<512x64xbf16>,
    %cst_11 = arith.constant dense<0.000000e+00> : vector<64xf32>
    %18 = vector.multi_reduction <add>, %15, %cst_11 [0] : vector<512x64xf32> to vector<64xf32>
    %19 = vector.shape_cast %18 : vector<64xf32> to vector<1x64xf32>
    %20 = arith.mulf %15, %15 : vector<512x64xf32>
    %cst_12 = arith.constant dense<0.000000e+00> : vector<64xf32>
    %21 = vector.multi_reduction <add>, %20, %cst_12 [0] : vector<512x64xf32> to vector<64xf32>
    %22 = vector.shape_cast %21 : vector<64xf32> to vector<1x64xf32>
    %23 = tpu.concatenate %19, %22 in 0 : vector<1x64xf32>, vector<1x64xf32> -> vector<2x64xf32>
    %24 = vector.shape_cast %23 : vector<2x64xf32> to vector<1x2x64xf32>
    %c0_13 = arith.constant 0 : index
    %c0_14 = arith.constant 0 : index
    %c0_15 = arith.constant 0 : index
    %25 = vector.load %arg6[%c0_13, %c0_14, %c0_15] : memref<1x2x64xf32, #tpu.memory_space<vmem>>, vector<1x2x64xf32>
    tpu.vector_store %arg6[%c0_13, %c0_14, %c0_15], %24 {strides = array<i32>} : memref<1x2x64xf32, #tpu.memory_space<vmem>>, vector<1x2x64xf32>,
    return
  }
  func.func @transform_0(%arg0: i32) -> (i32, i32) {
    %c0_i32 = arith.constant 0 : i32
    %c0_i32_0 = arith.constant 0 : i32
    %c0_i32_1 = arith.constant 0 : i32
    return %c0_i32, %c0_i32_0 : i32, i32
  }
  func.func @transform_1(%arg0: i32) -> (i32, i32) {
    %c0_i32 = arith.constant 0 : i32
    %c0_i32_0 = arith.constant 0 : i32
    %c0_i32_1 = arith.constant 0 : i32
    return %c0_i32, %c0_i32_0 : i32, i32
  }
  func.func @transform_2(%arg0: i32) -> (i32, i32) {
    %c0_i32 = arith.constant 0 : i32
    %c0_i32_0 = arith.constant 0 : i32
    return %arg0, %c0_i32 : i32, i32
  }
  func.func @transform_3(%arg0: i32) -> (i32, i32) {
    %c0_i32 = arith.constant 0 : i32
    %c0_i32_0 = arith.constant 0 : i32
    %c0_i32_1 = arith.constant 0 : i32
    return %c0_i32, %c0_i32_0 : i32, i32
  }
  func.func @transform_4(%arg0: i32) -> (i32, i32) {
    %c0_i32 = arith.constant 0 : i32
    %c0_i32_0 = arith.constant 0 : i32
    return %arg0, %c0_i32 : i32, i32
  }
  func.func @transform_5(%arg0: i32) -> (i32, i32, i32) {
    %c0_i32 = arith.constant 0 : i32
    %c0_i32_0 = arith.constant 0 : i32
    %c0_i32_1 = arith.constant 0 : i32
    return %arg0, %c0_i32, %c0_i32_0 : i32, i32, i32
  }
}

module attributes {stable_mosaic.version = 11 : i64} {
  func.func @_conv_fused_kernel(%arg0: i32, %arg1: memref<1x1024xf32, #tpu.memory_space<vmem>>, %arg2: memref<1x1024xf32, #tpu.memory_space<vmem>>, %arg3: memref<128x1024xbf16, #tpu.memory_space<vmem>>, %arg4: memref<1024x128xbf16, #tpu.memory_space<vmem>>, %arg5: memref<128x128xbf16, #tpu.memory_space<vmem>>, %arg6: memref<1x2x128xf32, #tpu.memory_space<vmem>>) attributes {dimension_semantics = [#tpu.dimension_semantics<parallel>], iteration_bounds = array<i64: 1>, scalar_prefetch = 0 : i64, scratch_operands = 0 : i64, tpu.core_type = #tpu.core_type<tc>, window_params = [{pipeline_mode = #tpu.pipeline_mode<synchronous>, transform_indices = @transform_0, window_bounds = array<i64: 1, 1024>}, {pipeline_mode = #tpu.pipeline_mode<synchronous>, transform_indices = @transform_1, window_bounds = array<i64: 1, 1024>}, {transform_indices = @transform_2, window_bounds = array<i64: 128, 1024>}, {pipeline_mode = #tpu.pipeline_mode<synchronous>, transform_indices = @transform_3, window_bounds = array<i64: 1024, 128>}, {transform_indices = @transform_4, window_bounds = array<i64: 128, 128>}, {transform_indices = @transform_5, window_bounds = array<i64: 1, 2, 128>}]} {
    %c0 = arith.constant 0 : index
    %c0_0 = arith.constant 0 : index
    %0 = vector.load %arg3[%c0, %c0_0] : memref<128x1024xbf16, #tpu.memory_space<vmem>>, vector<128x1024xbf16>
    %1 = arith.extf %0 : vector<128x1024xbf16> to vector<128x1024xf32>
    %c0_1 = arith.constant 0 : index
    %c0_2 = arith.constant 0 : index
    %2 = vector.load %arg1[%c0_1, %c0_2] : memref<1x1024xf32, #tpu.memory_space<vmem>>, vector<1x1024xf32>
    %3 = vector.broadcast %2 : vector<1x1024xf32> to vector<128x1024xf32>
    %4 = arith.mulf %1, %3 : vector<128x1024xf32>
    %c0_3 = arith.constant 0 : index
    %c0_4 = arith.constant 0 : index
    %5 = vector.load %arg2[%c0_3, %c0_4] : memref<1x1024xf32, #tpu.memory_space<vmem>>, vector<1x1024xf32>
    %6 = vector.broadcast %5 : vector<1x1024xf32> to vector<128x1024xf32>
    %7 = arith.addf %4, %6 : vector<128x1024xf32>
    %cst = arith.constant 0.000000e+00 : f32
    %8 = vector.broadcast %cst : f32 to vector<128x1024xf32>
    %9 = arith.cmpf oge, %7, %8 : vector<128x1024xf32>
    %cst_5 = arith.constant 2.000000e-01 : f32
    %10 = vector.broadcast %cst_5 : f32 to vector<128x1024xf32>
    %11 = arith.mulf %10, %7 : vector<128x1024xf32>
    %12 = arith.select %9, %7, %11 : vector<128x1024xi1>, vector<128x1024xf32>
    %13 = arith.truncf %12 : vector<128x1024xf32> to vector<128x1024xbf16>
    %c0_6 = arith.constant 0 : index
    %c0_7 = arith.constant 0 : index
    %14 = vector.load %arg4[%c0_6, %c0_7] : memref<1024x128xbf16, #tpu.memory_space<vmem>>, vector<1024x128xbf16>
    %cst_8 = arith.constant dense<0.000000e+00> : vector<128x128xf32>
    %15 = tpu.matmul %13, %14, %cst_8 {dimension_numbers = #tpu.dot_dimension_numbers<[1], [0], [0], [1], [0, 0, 1, 1], [], []>} : vector<128x1024xbf16>, vector<1024x128xbf16>, vector<128x128xf32> -> vector<128x128xf32>
    %16 = arith.truncf %15 : vector<128x128xf32> to vector<128x128xbf16>
    %c0_9 = arith.constant 0 : index
    %c0_10 = arith.constant 0 : index
    %17 = vector.load %arg5[%c0_9, %c0_10] : memref<128x128xbf16, #tpu.memory_space<vmem>>, vector<128x128xbf16>
    tpu.vector_store %arg5[%c0_9, %c0_10], %16 {strides = array<i32>} : memref<128x128xbf16, #tpu.memory_space<vmem>>, vector<128x128xbf16>,
    %cst_11 = arith.constant dense<0.000000e+00> : vector<128xf32>
    %18 = vector.multi_reduction <add>, %15, %cst_11 [0] : vector<128x128xf32> to vector<128xf32>
    %19 = vector.shape_cast %18 : vector<128xf32> to vector<1x128xf32>
    %20 = arith.mulf %15, %15 : vector<128x128xf32>
    %cst_12 = arith.constant dense<0.000000e+00> : vector<128xf32>
    %21 = vector.multi_reduction <add>, %20, %cst_12 [0] : vector<128x128xf32> to vector<128xf32>
    %22 = vector.shape_cast %21 : vector<128xf32> to vector<1x128xf32>
    %23 = tpu.concatenate %19, %22 in 0 : vector<1x128xf32>, vector<1x128xf32> -> vector<2x128xf32>
    %24 = vector.shape_cast %23 : vector<2x128xf32> to vector<1x2x128xf32>
    %c0_13 = arith.constant 0 : index
    %c0_14 = arith.constant 0 : index
    %c0_15 = arith.constant 0 : index
    %25 = vector.load %arg6[%c0_13, %c0_14, %c0_15] : memref<1x2x128xf32, #tpu.memory_space<vmem>>, vector<1x2x128xf32>
    tpu.vector_store %arg6[%c0_13, %c0_14, %c0_15], %24 {strides = array<i32>} : memref<1x2x128xf32, #tpu.memory_space<vmem>>, vector<1x2x128xf32>,
    return
  }
  func.func @transform_0(%arg0: i32) -> (i32, i32) {
    %c0_i32 = arith.constant 0 : i32
    %c0_i32_0 = arith.constant 0 : i32
    %c0_i32_1 = arith.constant 0 : i32
    return %c0_i32, %c0_i32_0 : i32, i32
  }
  func.func @transform_1(%arg0: i32) -> (i32, i32) {
    %c0_i32 = arith.constant 0 : i32
    %c0_i32_0 = arith.constant 0 : i32
    %c0_i32_1 = arith.constant 0 : i32
    return %c0_i32, %c0_i32_0 : i32, i32
  }
  func.func @transform_2(%arg0: i32) -> (i32, i32) {
    %c0_i32 = arith.constant 0 : i32
    %c0_i32_0 = arith.constant 0 : i32
    return %arg0, %c0_i32 : i32, i32
  }
  func.func @transform_3(%arg0: i32) -> (i32, i32) {
    %c0_i32 = arith.constant 0 : i32
    %c0_i32_0 = arith.constant 0 : i32
    %c0_i32_1 = arith.constant 0 : i32
    return %c0_i32, %c0_i32_0 : i32, i32
  }
  func.func @transform_4(%arg0: i32) -> (i32, i32) {
    %c0_i32 = arith.constant 0 : i32
    %c0_i32_0 = arith.constant 0 : i32
    return %arg0, %c0_i32 : i32, i32
  }
  func.func @transform_5(%arg0: i32) -> (i32, i32, i32) {
    %c0_i32 = arith.constant 0 : i32
    %c0_i32_0 = arith.constant 0 : i32
    %c0_i32_1 = arith.constant 0 : i32
    return %arg0, %c0_i32, %c0_i32_0 : i32, i32, i32
  }
}

module attributes {stable_mosaic.version = 11 : i64} {
  func.func @_conv_fused_kernel(%arg0: i32, %arg1: memref<1x2048xf32, #tpu.memory_space<vmem>>, %arg2: memref<1x2048xf32, #tpu.memory_space<vmem>>, %arg3: memref<32x2048xbf16, #tpu.memory_space<vmem>>, %arg4: memref<2048x256xbf16, #tpu.memory_space<vmem>>, %arg5: memref<32x256xbf16, #tpu.memory_space<vmem>>, %arg6: memref<1x2x256xf32, #tpu.memory_space<vmem>>) attributes {dimension_semantics = [#tpu.dimension_semantics<parallel>], iteration_bounds = array<i64: 1>, scalar_prefetch = 0 : i64, scratch_operands = 0 : i64, tpu.core_type = #tpu.core_type<tc>, window_params = [{pipeline_mode = #tpu.pipeline_mode<synchronous>, transform_indices = @transform_0, window_bounds = array<i64: 1, 2048>}, {pipeline_mode = #tpu.pipeline_mode<synchronous>, transform_indices = @transform_1, window_bounds = array<i64: 1, 2048>}, {transform_indices = @transform_2, window_bounds = array<i64: 32, 2048>}, {pipeline_mode = #tpu.pipeline_mode<synchronous>, transform_indices = @transform_3, window_bounds = array<i64: 2048, 256>}, {transform_indices = @transform_4, window_bounds = array<i64: 32, 256>}, {transform_indices = @transform_5, window_bounds = array<i64: 1, 2, 256>}]} {
    %c0 = arith.constant 0 : index
    %c0_0 = arith.constant 0 : index
    %0 = vector.load %arg3[%c0, %c0_0] : memref<32x2048xbf16, #tpu.memory_space<vmem>>, vector<32x2048xbf16>
    %1 = arith.extf %0 : vector<32x2048xbf16> to vector<32x2048xf32>
    %c0_1 = arith.constant 0 : index
    %c0_2 = arith.constant 0 : index
    %2 = vector.load %arg1[%c0_1, %c0_2] : memref<1x2048xf32, #tpu.memory_space<vmem>>, vector<1x2048xf32>
    %3 = vector.broadcast %2 : vector<1x2048xf32> to vector<32x2048xf32>
    %4 = arith.mulf %1, %3 : vector<32x2048xf32>
    %c0_3 = arith.constant 0 : index
    %c0_4 = arith.constant 0 : index
    %5 = vector.load %arg2[%c0_3, %c0_4] : memref<1x2048xf32, #tpu.memory_space<vmem>>, vector<1x2048xf32>
    %6 = vector.broadcast %5 : vector<1x2048xf32> to vector<32x2048xf32>
    %7 = arith.addf %4, %6 : vector<32x2048xf32>
    %cst = arith.constant 0.000000e+00 : f32
    %8 = vector.broadcast %cst : f32 to vector<32x2048xf32>
    %9 = arith.cmpf oge, %7, %8 : vector<32x2048xf32>
    %cst_5 = arith.constant 2.000000e-01 : f32
    %10 = vector.broadcast %cst_5 : f32 to vector<32x2048xf32>
    %11 = arith.mulf %10, %7 : vector<32x2048xf32>
    %12 = arith.select %9, %7, %11 : vector<32x2048xi1>, vector<32x2048xf32>
    %13 = arith.truncf %12 : vector<32x2048xf32> to vector<32x2048xbf16>
    %c0_6 = arith.constant 0 : index
    %c0_7 = arith.constant 0 : index
    %14 = vector.load %arg4[%c0_6, %c0_7] : memref<2048x256xbf16, #tpu.memory_space<vmem>>, vector<2048x256xbf16>
    %cst_8 = arith.constant dense<0.000000e+00> : vector<32x256xf32>
    %15 = tpu.matmul %13, %14, %cst_8 {dimension_numbers = #tpu.dot_dimension_numbers<[1], [0], [0], [1], [0, 0, 1, 1], [], []>} : vector<32x2048xbf16>, vector<2048x256xbf16>, vector<32x256xf32> -> vector<32x256xf32>
    %16 = arith.truncf %15 : vector<32x256xf32> to vector<32x256xbf16>
    %c0_9 = arith.constant 0 : index
    %c0_10 = arith.constant 0 : index
    %17 = vector.load %arg5[%c0_9, %c0_10] : memref<32x256xbf16, #tpu.memory_space<vmem>>, vector<32x256xbf16>
    tpu.vector_store %arg5[%c0_9, %c0_10], %16 {strides = array<i32>} : memref<32x256xbf16, #tpu.memory_space<vmem>>, vector<32x256xbf16>,
    %cst_11 = arith.constant dense<0.000000e+00> : vector<256xf32>
    %18 = vector.multi_reduction <add>, %15, %cst_11 [0] : vector<32x256xf32> to vector<256xf32>
    %19 = vector.shape_cast %18 : vector<256xf32> to vector<1x256xf32>
    %20 = arith.mulf %15, %15 : vector<32x256xf32>
    %cst_12 = arith.constant dense<0.000000e+00> : vector<256xf32>
    %21 = vector.multi_reduction <add>, %20, %cst_12 [0] : vector<32x256xf32> to vector<256xf32>
    %22 = vector.shape_cast %21 : vector<256xf32> to vector<1x256xf32>
    %23 = tpu.concatenate %19, %22 in 0 : vector<1x256xf32>, vector<1x256xf32> -> vector<2x256xf32>
    %24 = vector.shape_cast %23 : vector<2x256xf32> to vector<1x2x256xf32>
    %c0_13 = arith.constant 0 : index
    %c0_14 = arith.constant 0 : index
    %c0_15 = arith.constant 0 : index
    %25 = vector.load %arg6[%c0_13, %c0_14, %c0_15] : memref<1x2x256xf32, #tpu.memory_space<vmem>>, vector<1x2x256xf32>
    tpu.vector_store %arg6[%c0_13, %c0_14, %c0_15], %24 {strides = array<i32>} : memref<1x2x256xf32, #tpu.memory_space<vmem>>, vector<1x2x256xf32>,
    return
  }
  func.func @transform_0(%arg0: i32) -> (i32, i32) {
    %c0_i32 = arith.constant 0 : i32
    %c0_i32_0 = arith.constant 0 : i32
    %c0_i32_1 = arith.constant 0 : i32
    return %c0_i32, %c0_i32_0 : i32, i32
  }
  func.func @transform_1(%arg0: i32) -> (i32, i32) {
    %c0_i32 = arith.constant 0 : i32
    %c0_i32_0 = arith.constant 0 : i32
    %c0_i32_1 = arith.constant 0 : i32
    return %c0_i32, %c0_i32_0 : i32, i32
  }
  func.func @transform_2(%arg0: i32) -> (i32, i32) {
    %c0_i32 = arith.constant 0 : i32
    %c0_i32_0 = arith.constant 0 : i32
    return %arg0, %c0_i32 : i32, i32
  }
  func.func @transform_3(%arg0: i32) -> (i32, i32) {
    %c0_i32 = arith.constant 0 : i32
    %c0_i32_0 = arith.constant 0 : i32
    %c0_i32_1 = arith.constant 0 : i32
    return %c0_i32, %c0_i32_0 : i32, i32
  }
  func.func @transform_4(%arg0: i32) -> (i32, i32) {
    %c0_i32 = arith.constant 0 : i32
    %c0_i32_0 = arith.constant 0 : i32
    return %arg0, %c0_i32 : i32, i32
  }
  func.func @transform_5(%arg0: i32) -> (i32, i32, i32) {
    %c0_i32 = arith.constant 0 : i32
    %c0_i32_0 = arith.constant 0 : i32
    %c0_i32_1 = arith.constant 0 : i32
    return %arg0, %c0_i32, %c0_i32_0 : i32, i32, i32
  }
}

module attributes {stable_mosaic.version = 11 : i64} {
  func.func @_final_kernel(%arg0: i32, %arg1: memref<1x4096xf32, #tpu.memory_space<vmem>>, %arg2: memref<1x4096xf32, #tpu.memory_space<vmem>>, %arg3: memref<8x4096xbf16, #tpu.memory_space<vmem>>, %arg4: memref<4096x128xbf16, #tpu.memory_space<vmem>>, %arg5: memref<8x128xf32, #tpu.memory_space<vmem>>) attributes {dimension_semantics = [#tpu.dimension_semantics<parallel>], iteration_bounds = array<i64: 1>, scalar_prefetch = 0 : i64, scratch_operands = 0 : i64, tpu.core_type = #tpu.core_type<tc>, window_params = [{pipeline_mode = #tpu.pipeline_mode<synchronous>, transform_indices = @transform_0, window_bounds = array<i64: 1, 4096>}, {pipeline_mode = #tpu.pipeline_mode<synchronous>, transform_indices = @transform_1, window_bounds = array<i64: 1, 4096>}, {transform_indices = @transform_2, window_bounds = array<i64: 8, 4096>}, {pipeline_mode = #tpu.pipeline_mode<synchronous>, transform_indices = @transform_3, window_bounds = array<i64: 4096, 128>}, {transform_indices = @transform_4, window_bounds = array<i64: 8, 128>}]} {
    %c0 = arith.constant 0 : index
    %c0_0 = arith.constant 0 : index
    %0 = vector.load %arg3[%c0, %c0_0] : memref<8x4096xbf16, #tpu.memory_space<vmem>>, vector<8x4096xbf16>
    %1 = arith.extf %0 : vector<8x4096xbf16> to vector<8x4096xf32>
    %c0_1 = arith.constant 0 : index
    %c0_2 = arith.constant 0 : index
    %2 = vector.load %arg1[%c0_1, %c0_2] : memref<1x4096xf32, #tpu.memory_space<vmem>>, vector<1x4096xf32>
    %3 = vector.broadcast %2 : vector<1x4096xf32> to vector<8x4096xf32>
    %4 = arith.mulf %1, %3 : vector<8x4096xf32>
    %c0_3 = arith.constant 0 : index
    %c0_4 = arith.constant 0 : index
    %5 = vector.load %arg2[%c0_3, %c0_4] : memref<1x4096xf32, #tpu.memory_space<vmem>>, vector<1x4096xf32>
    %6 = vector.broadcast %5 : vector<1x4096xf32> to vector<8x4096xf32>
    %7 = arith.addf %4, %6 : vector<8x4096xf32>
    %cst = arith.constant 0.000000e+00 : f32
    %8 = vector.broadcast %cst : f32 to vector<8x4096xf32>
    %9 = arith.cmpf oge, %7, %8 : vector<8x4096xf32>
    %cst_5 = arith.constant 2.000000e-01 : f32
    %10 = vector.broadcast %cst_5 : f32 to vector<8x4096xf32>
    %11 = arith.mulf %10, %7 : vector<8x4096xf32>
    %12 = arith.select %9, %7, %11 : vector<8x4096xi1>, vector<8x4096xf32>
    %13 = arith.truncf %12 : vector<8x4096xf32> to vector<8x4096xbf16>
    %c0_6 = arith.constant 0 : index
    %c0_7 = arith.constant 0 : index
    %14 = vector.load %arg4[%c0_6, %c0_7] : memref<4096x128xbf16, #tpu.memory_space<vmem>>, vector<4096x128xbf16>
    %cst_8 = arith.constant dense<0.000000e+00> : vector<8x128xf32>
    %15 = tpu.matmul %13, %14, %cst_8 {dimension_numbers = #tpu.dot_dimension_numbers<[1], [0], [0], [1], [0, 0, 1, 1], [], []>} : vector<8x4096xbf16>, vector<4096x128xbf16>, vector<8x128xf32> -> vector<8x128xf32>
    %cst_9 = arith.constant 0.000000e+00 : f32
    %16 = vector.broadcast %cst_9 : f32 to vector<8x128xf32>
    %17 = arith.subf %16, %15 : vector<8x128xf32>
    %18 = math.exp %17 : vector<8x128xf32>
    %cst_10 = arith.constant 1.000000e+00 : f32
    %19 = vector.broadcast %cst_10 : f32 to vector<8x128xf32>
    %20 = arith.addf %19, %18 : vector<8x128xf32>
    %cst_11 = arith.constant 1.000000e+00 : f32
    %21 = vector.broadcast %cst_11 : f32 to vector<8x128xf32>
    %22 = arith.divf %21, %20 : vector<8x128xf32>
    %c0_12 = arith.constant 0 : index
    %c0_13 = arith.constant 0 : index
    %23 = vector.load %arg5[%c0_12, %c0_13] : memref<8x128xf32, #tpu.memory_space<vmem>>, vector<8x128xf32>
    tpu.vector_store %arg5[%c0_12, %c0_13], %22 {strides = array<i32>} : memref<8x128xf32, #tpu.memory_space<vmem>>, vector<8x128xf32>,
    return
  }
  func.func @transform_0(%arg0: i32) -> (i32, i32) {
    %c0_i32 = arith.constant 0 : i32
    %c0_i32_0 = arith.constant 0 : i32
    %c0_i32_1 = arith.constant 0 : i32
    return %c0_i32, %c0_i32_0 : i32, i32
  }
  func.func @transform_1(%arg0: i32) -> (i32, i32) {
    %c0_i32 = arith.constant 0 : i32
    %c0_i32_0 = arith.constant 0 : i32
    %c0_i32_1 = arith.constant 0 : i32
    return %c0_i32, %c0_i32_0 : i32, i32
  }
  func.func @transform_2(%arg0: i32) -> (i32, i32) {
    %c0_i32 = arith.constant 0 : i32
    %c0_i32_0 = arith.constant 0 : i32
    return %arg0, %c0_i32 : i32, i32
  }
  func.func @transform_3(%arg0: i32) -> (i32, i32) {
    %c0_i32 = arith.constant 0 : i32
    %c0_i32_0 = arith.constant 0 : i32
    %c0_i32_1 = arith.constant 0 : i32
    return %c0_i32, %c0_i32_0 : i32, i32
  }
  func.func @transform_4(%arg0: i32) -> (i32, i32) {
    %c0_i32 = arith.constant 0 : i32
    %c0_i32_0 = arith.constant 0 : i32
    return %arg0, %c0_i32 : i32, i32
  }
}

</mosaic_0001>

<llo_original>
// kernel: discriminator_forward.5
$region0: #{discriminator_forward.5}
  #allocation0 [shape = 'u32[]', space=smem, size = 0x4, offset = 0x4, fixed_abs, tag = 'smem constant byte address 0x4 - core index']
  #allocation1 [shape = 'u32[72,128]{1,0:T(1,128)}', space=vmem, size = 0x9000, scoped, tag = 'internal scratch']
  %s0 = inlined_call_operand.vmem [shape: f32[1,128], index: 0, kind: input, shape index: {}]
  %s1 = inlined_call_operand.vmem [shape: f32[1,128], index: 1, kind: input, shape index: {}]
  %s2 = inlined_call_operand.vmem [shape: bf16[2048,128], index: 2, kind: input, shape index: {}]
  %s3 = inlined_call_operand.vmem [shape: bf16[128,32], index: 3, kind: input, shape index: {}]
  %s4 = inlined_call_operand.vmem [shape: bf16[2048,32], index: 4, kind: output, shape index: {0}]
  %s5 = inlined_call_operand.vmem [shape: f32[4,2,32], index: 5, kind: output, shape index: {1}]
  %6 = xla_tuple %s4, %s5
  %s7 = sld [smem:[#allocation0]]
  $region57: #{discriminator_forward.5} parent=0
    _
  %s9 = ssub.s32 1, %s7
  %s10 = scalar_select 0, %s9, %s7
  loop: start=0, step=1, limit=6
  $region2: #{discriminator_forward.5} parent=0 // loop_pre_header
    _
  $region3: #{discriminator_forward.5} parent=0 // loop_header
    %s12 = sphi 0, %s16
    %p13 = scmp.ge.s32.totalorder %s12, 6
    %s20 = sphi 0, %s20
    %s22 = sphi 0, %s20
    %s23 = sphi 0, %s22
    %s37 = sphi 0, %s23
    %s41 = sphi 0, %s41
    %s43 = sphi 0, %s41
    %s44 = sphi 0, %s43
    %s58 = sphi 0, %s44
    %s64 = sphi 0, %s66
    %s67 = sphi 0, %s64
    %s68 = sphi 0, %s67
    %s84 = sphi 0, %s68
    %s88 = sphi 0, %s88
    %s90 = sphi 0, %s88
    %s91 = sphi 0, %s90
    %s105 = sphi 0, %s91
    %s111 = sphi 0, %s113
    %s114 = sphi 0, %s111
    %s115 = sphi 0, %s114
    %s131 = sphi 0, %s115
    %s137 = sphi 0, %s139
    %s140 = sphi 0, %s137
    %s141 = sphi 0, %s140
    %s157 = sphi 0, %s141
  $region4: #{discriminator_forward.5} parent=0 // loop_header_branch
    %15 = sbr.rel (%p13) target = $region8
  $region5: #{discriminator_forward.5} parent=0 // loop_body
    %s17 = ssub.s32 %s12, 1
    %s18 = ssub.s32 %s12, 2
    %s19 = sadd.s32 %s12, 1
    %s21 = sadd.s32 %s20, 1
    %p24 = scmp.eq.s32.totalorder %s12, 3
    %p25 = scmp.ne.s32.totalorder %s20, %s22
    %p26 = scmp.eq.s32.totalorder %s12, 0
    %p27 = por %p25, %p26
    %p28 = scmp.ne.s32.totalorder %s20, %s22
    %p29 = scmp.eq.s32.totalorder %s17, 3
    %p30 = por %p28, %p29
    %p31 = scmp.ne.s32.totalorder %s22, %s23
    %p32 = scmp.eq.s32.totalorder %s17, 0
    %p33 = por %p31, %p32
    %p34 = scmp.ne.s32.totalorder %s22, %s23
    %p35 = scmp.eq.s32.totalorder %s18, 3
    %p36 = por %p34, %p35
    %p38 = scmp.ne.s32.totalorder %s23, %s37
    %p39 = scmp.eq.s32.totalorder %s18, 0
    %p40 = por %p38, %p39
    %s42 = sadd.s32 %s41, 1
    %p45 = scmp.eq.s32.totalorder %s12, 3
    %p46 = scmp.ne.s32.totalorder %s41, %s43
    %p47 = scmp.eq.s32.totalorder %s12, 0
    %p48 = por %p46, %p47
    %p49 = scmp.ne.s32.totalorder %s41, %s43
    %p50 = scmp.eq.s32.totalorder %s17, 3
    %p51 = por %p49, %p50
    %p52 = scmp.ne.s32.totalorder %s43, %s44
    %p53 = scmp.eq.s32.totalorder %s17, 0
    %p54 = por %p52, %p53
    %p55 = scmp.ne.s32.totalorder %s43, %s44
    %p56 = scmp.eq.s32.totalorder %s18, 3
    %p57 = por %p55, %p56
    %p59 = scmp.ne.s32.totalorder %s44, %s58
    %p60 = scmp.eq.s32.totalorder %s18, 0
    %p61 = por %p59, %p60
    %s62 = ssub.s32 %s12, %s19
    %p63 = scmp.eq.s32.totalorder %s62, 0
    %s65 = sadd.s32 %s64, 1
    %s66 = scalar_select %p63, %s64, %s65
    %p69 = pneg %p63
    %p70 = scmp.eq.s32.totalorder %s12, 3
    %p71 = por %p69, %p70
    %p72 = scmp.ne.s32.totalorder %s64, %s67
    %p73 = scmp.eq.s32.totalorder %s12, 0
    %p74 = por %p72, %p73
    %p75 = scmp.ne.s32.totalorder %s64, %s67
    %p76 = scmp.eq.s32.totalorder %s17, 3
    %p77 = por %p75, %p76
    %p78 = scmp.ne.s32.totalorder %s67, %s68
    %p79 = scmp.eq.s32.totalorder %s17, 0
    %p80 = por %p78, %p79
    %p81 = scmp.ne.s32.totalorder %s67, %s68
    %p82 = scmp.eq.s32.totalorder %s18, 3
    %p83 = por %p81, %p82
    %p85 = scmp.ne.s32.totalorder %s68, %s84
    %p86 = scmp.eq.s32.totalorder %s18, 0
    %p87 = por %p85, %p86
    %s89 = sadd.s32 %s88, 1
    %p92 = scmp.eq.s32.totalorder %s12, 3
    %p93 = scmp.ne.s32.totalorder %s88, %s90
    %p94 = scmp.eq.s32.totalorder %s12, 0
    %p95 = por %p93, %p94
    %p96 = scmp.ne.s32.totalorder %s88, %s90
    %p97 = scmp.eq.s32.totalorder %s17, 3
    %p98 = por %p96, %p97
    %p99 = scmp.ne.s32.totalorder %s90, %s91
    %p100 = scmp.eq.s32.totalorder %s17, 0
    %p101 = por %p99, %p100
    %p102 = scmp.ne.s32.totalorder %s90, %s91
    %p103 = scmp.eq.s32.totalorder %s18, 3
    %p104 = por %p102, %p103
    %p106 = scmp.ne.s32.totalorder %s91, %s105
    %p107 = scmp.eq.s32.totalorder %s18, 0
    %p108 = por %p106, %p107
    %s109 = ssub.s32 %s12, %s19
    %p110 = scmp.eq.s32.totalorder %s109, 0
    %s112 = sadd.s32 %s111, 1
    %s113 = scalar_select %p110, %s111, %s112
    %p116 = pneg %p110
    %p117 = scmp.eq.s32.totalorder %s12, 3
    %p118 = por %p116, %p117
    %p119 = scmp.ne.s32.totalorder %s111, %s114
    %p120 = scmp.eq.s32.totalorder %s12, 0
    %p121 = por %p119, %p120
    %p122 = scmp.ne.s32.totalorder %s111, %s114
    %p123 = scmp.eq.s32.totalorder %s17, 3
    %p124 = por %p122, %p123
    %p125 = scmp.ne.s32.totalorder %s114, %s115
    %p126 = scmp.eq.s32.totalorder %s17, 0
    %p127 = por %p125, %p126
    %p128 = scmp.ne.s32.totalorder %s114, %s115
    %p129 = scmp.eq.s32.totalorder %s18, 3
    %p130 = por %p128, %p129
    %p132 = scmp.ne.s32.totalorder %s115, %s131
    %p133 = scmp.eq.s32.totalorder %s18, 0
    %p134 = por %p132, %p133
    %s135 = ssub.s32 %s12, %s19
    %p136 = scmp.eq.s32.totalorder %s135, 0
    %s138 = sadd.s32 %s137, 1
    %s139 = scalar_select %p136, %s137, %s138
    %p142 = pneg %p136
    %p143 = scmp.eq.s32.totalorder %s12, 3
    %p144 = por %p142, %p143
    %p145 = scmp.ne.s32.totalorder %s137, %s140
    %p146 = scmp.eq.s32.totalorder %s12, 0
    %p147 = por %p145, %p146
    %p148 = scmp.ne.s32.totalorder %s137, %s140
    %p149 = scmp.eq.s32.totalorder %s17, 3
    %p150 = por %p148, %p149
    %p151 = scmp.ne.s32.totalorder %s140, %s141
    %p152 = scmp.eq.s32.totalorder %s17, 0
    %p153 = por %p151, %p152
    %p154 = scmp.ne.s32.totalorder %s140, %s141
    %p155 = scmp.eq.s32.totalorder %s18, 3
    %p156 = por %p154, %p155
    %p158 = scmp.ne.s32.totalorder %s141, %s157
    %p159 = scmp.eq.s32.totalorder %s18, 0
    %p160 = por %p158, %p159
    %p161 = scmp.le.s32.totalorder 1, %s12
    %p162 = scmp.lt.s32.totalorder %s12, 5
    %p163 = pnand %p161, %p162
    %p164 = pneg %p163
    // Predicated region
    $region9: #{discriminator_forward.5} parent=5 // pred_check
      _
    $region10: #{discriminator_forward.5} parent=5 // pred_check_branch
      %166 = sbr.rel (%p163) target = $region12
    $region11: #{discriminator_forward.5} parent=5 // pred_region
      %s167 = ssub.s32 %s12, 1
      // Predicated region
      $region13: #{discriminator_forward.5} parent=11 // pred_check
        %p168 = pneg %p33
      $region14: #{discriminator_forward.5} parent=11 // pred_check_branch
        %170 = sbr.rel (%p168) target = $region16
      $region15: #{discriminator_forward.5} parent=11 // pred_region
        _
      $region16: #{discriminator_forward.5} parent=11 // pred_fallthru
        _
      // Predicated region
      $region17: #{discriminator_forward.5} parent=11 // pred_check
        %p171 = pneg %p54
      $region18: #{discriminator_forward.5} parent=11 // pred_check_branch
        %173 = sbr.rel (%p171) target = $region20
      $region19: #{discriminator_forward.5} parent=11 // pred_region
        _
      $region20: #{discriminator_forward.5} parent=11 // pred_fallthru
        _
      // Predicated region
      $region21: #{discriminator_forward.5} parent=11 // pred_check
        %p174 = pneg %p101
      $region22: #{discriminator_forward.5} parent=11 // pred_check_branch
        %176 = sbr.rel (%p174) target = $region24
      $region23: #{discriminator_forward.5} parent=11 // pred_region
        _
      $region24: #{discriminator_forward.5} parent=11 // pred_fallthru
        _
    $region12: #{discriminator_forward.5} parent=5 // pred_fallthru
      _
    %p177 = scmp.lt.s32.totalorder %s12, 4
    // Predicated region
    $region25: #{discriminator_forward.5} parent=5 // pred_check
      %p178 = pneg %p177
    $region26: #{discriminator_forward.5} parent=5 // pred_check_branch
      %180 = sbr.rel (%p178) target = $region28
    $region27: #{discriminator_forward.5} parent=5 // pred_region
      // Predicated region
      $region29: #{discriminator_forward.5} parent=27 // pred_check
        %p181 = pneg %p74
      $region30: #{discriminator_forward.5} parent=27 // pred_check_branch
        %183 = sbr.rel (%p181) target = $region32
      $region31: #{discriminator_forward.5} parent=27 // pred_region
        %s184 = smul.u32 64, %s12
        %p185 = scmp.lt.s32.totalorder %s184, 255
        %s186 = scalar_select %p185, %s184, 255
        %s187 = smul.addr %s186, 4
        %s188 = scalar_lea.vmem %s2, %s187
        %s189 = smul.u32 64, %s12
      $region32: #{discriminator_forward.5} parent=27 // pred_fallthru
        _
    $region28: #{discriminator_forward.5} parent=5 // pred_fallthru
      _
    %p190 = scmp.le.s32.totalorder 1, %s12
    %p191 = scmp.lt.s32.totalorder %s12, 5
    %p192 = pnand %p190, %p191
    %p193 = pneg %p192
    // Predicated region
    $region33: #{discriminator_forward.5} parent=5 // pred_check
      _
    $region34: #{discriminator_forward.5} parent=5 // pred_check_branch
      %195 = sbr.rel (%p192) target = $region36
    $region35: #{discriminator_forward.5} parent=5 // pred_region
      %s196 = ssub.s32 %s12, 1
      %p197 = pneg %p33
      %p198 = pneg %p30
      %p199 = pneg %p54
      %p200 = pneg %p51
      %s201 = smul.u32 64, %s17
      %p202 = scmp.lt.s32.totalorder %s201, 255
      %s203 = scalar_select %p202, %s201, 255
      %s204 = smul.addr %s203, 4
      %s205 = scalar_lea.vmem %s2, %s204
      %p206 = pneg %p80
      %p207 = pneg %p77
      %p208 = pneg %p101
      %p209 = pneg %p98
      %p210 = pneg %p127
      %p211 = pneg %p124
      %s212 = smul.u32 64, %s17
      %p213 = scmp.lt.s32.totalorder %s212, 255
      %s214 = scalar_select %p213, %s212, 255
      %s215 = smul.addr %s214, 4
      %s216 = scalar_lea.vmem %s4, %s215
      %p217 = pneg %p153
      %p218 = pneg %p150
      %p219 = scmp.lt.s32.totalorder %s17, 3
      %s220 = scalar_select %p219, %s17, 3
      %s221 = smul.addr %s220, 2
      %s222 = scalar_lea.vmem %s5, %s221
      %s223 = smul.u32 64, %s17
      %p224 = scmp.lt.s32.totalorder %s223, 255
      %s225 = scalar_select %p224, %s223, 255
      %s226 = smul.addr %s225, 4
      %s227 = scalar_lea.vmem %s2, %s226
      %s228 = smul.u32 64, %s17
      %s229 = smul.u32 64, %s17
      %p230 = scmp.lt.s32.totalorder %s229, 255
      %s231 = scalar_select %p230, %s229, 255
      %s232 = smul.addr %s231, 4
      %s233 = scalar_lea.vmem %s4, %s232
      %s234 = smul.u32 64, %s17
      %p235 = scmp.lt.s32.totalorder %s17, 3
      %s236 = scalar_select %p235, %s17, 3
      %s237 = smul.addr %s236, 2
      %s238 = scalar_lea.vmem %s5, %s237
      %v239 = vld [vmem:[%s227] sm:$0xf]
      %v240 = vld [vmem:[%s227 + $0x4] sm:$0xf]
      %v241 = vld [vmem:[%s227 + $0x8] sm:$0xf]
      %v242 = vld [vmem:[%s227 + $0xc] sm:$0xf]
      %v243 = vld [vmem:[%s227 + $0x10] sm:$0xf]
      %v244 = vld [vmem:[%s227 + $0x14] sm:$0xf]
      %v245 = vld [vmem:[%s227 + $0x18] sm:$0xf]
      %v246 = vld [vmem:[%s227 + $0x1c] sm:$0xf]
      %v247 = vld [vmem:[%s227 + $0x20] sm:$0xf]
      %v248 = vld [vmem:[%s227 + $0x24] sm:$0xf]
      %v249 = vld [vmem:[%s227 + $0x28] sm:$0xf]
      %v250 = vld [vmem:[%s227 + $0x2c] sm:$0xf]
      %v251 = vld [vmem:[%s227 + $0x30] sm:$0xf]
      %v252 = vld [vmem:[%s227 + $0x34] sm:$0xf]
      %v253 = vld [vmem:[%s227 + $0x38] sm:$0xf]
      %v254 = vld [vmem:[%s227 + $0x3c] sm:$0xf]
      %v255 = vld [vmem:[%s227 + $0x40] sm:$0xf]
      %v256 = vld [vmem:[%s227 + $0x44] sm:$0xf]
      %v257 = vld [vmem:[%s227 + $0x48] sm:$0xf]
      %v258 = vld [vmem:[%s227 + $0x4c] sm:$0xf]
      %v259 = vld [vmem:[%s227 + $0x50] sm:$0xf]
      %v260 = vld [vmem:[%s227 + $0x54] sm:$0xf]
      %v261 = vld [vmem:[%s227 + $0x58] sm:$0xf]
      %v262 = vld [vmem:[%s227 + $0x5c] sm:$0xf]
      %v263 = vld [vmem:[%s227 + $0x60] sm:$0xf]
      %v264 = vld [vmem:[%s227 + $0x64] sm:$0xf]
      %v265 = vld [vmem:[%s227 + $0x68] sm:$0xf]
      %v266 = vld [vmem:[%s227 + $0x6c] sm:$0xf]
      %v267 = vld [vmem:[%s227 + $0x70] sm:$0xf]
      %v268 = vld [vmem:[%s227 + $0x74] sm:$0xf]
      %v269 = vld [vmem:[%s227 + $0x78] sm:$0xf]
      %v270 = vld [vmem:[%s227 + $0x7c] sm:$0xf]
      %v271 = vld [vmem:[%s227 + $0x80] sm:$0xf]
      %v272 = vld [vmem:[%s227 + $0x84] sm:$0xf]
      %v273 = vld [vmem:[%s227 + $0x88] sm:$0xf]
      %v274 = vld [vmem:[%s227 + $0x8c] sm:$0xf]
      %v275 = vld [vmem:[%s227 + $0x90] sm:$0xf]
      %v276 = vld [vmem:[%s227 + $0x94] sm:$0xf]
      %v277 = vld [vmem:[%s227 + $0x98] sm:$0xf]
      %v278 = vld [vmem:[%s227 + $0x9c] sm:$0xf]
      %v279 = vld [vmem:[%s227 + $0xa0] sm:$0xf]
      %v280 = vld [vmem:[%s227 + $0xa4] sm:$0xf]
      %v281 = vld [vmem:[%s227 + $0xa8] sm:$0xf]
      %v282 = vld [vmem:[%s227 + $0xac] sm:$0xf]
      %v283 = vld [vmem:[%s227 + $0xb0] sm:$0xf]
      %v284 = vld [vmem:[%s227 + $0xb4] sm:$0xf]
      %v285 = vld [vmem:[%s227 + $0xb8] sm:$0xf]
      %v286 = vld [vmem:[%s227 + $0xbc] sm:$0xf]
      %v287 = vld [vmem:[%s227 + $0xc0] sm:$0xf]
      %v288 = vld [vmem:[%s227 + $0xc4] sm:$0xf]
      %v289 = vld [vmem:[%s227 + $0xc8] sm:$0xf]
      %v290 = vld [vmem:[%s227 + $0xcc] sm:$0xf]
      %v291 = vld [vmem:[%s227 + $0xd0] sm:$0xf]
      %v292 = vld [vmem:[%s227 + $0xd4] sm:$0xf]
      %v293 = vld [vmem:[%s227 + $0xd8] sm:$0xf]
      %v294 = vld [vmem:[%s227 + $0xdc] sm:$0xf]
      %v295 = vld [vmem:[%s227 + $0xe0] sm:$0xf]
      %v296 = vld [vmem:[%s227 + $0xe4] sm:$0xf]
      %v297 = vld [vmem:[%s227 + $0xe8] sm:$0xf]
      %v298 = vld [vmem:[%s227 + $0xec] sm:$0xf]
      %v299 = vld [vmem:[%s227 + $0xf0] sm:$0xf]
      %v300 = vld [vmem:[%s227 + $0xf4] sm:$0xf]
      %v301 = vld [vmem:[%s227 + $0xf8] sm:$0xf]
      %v302 = vld [vmem:[%s227 + $0xfc] sm:$0xf]
      %v303 = vld [vmem:[%s3] sm:$0xf]
      %v304 = vld [vmem:[%s3 + $0x4] sm:$0xf]
      %v305 = vld [vmem:[%s3 + $0x8] sm:$0xf]
      %v306 = vld [vmem:[%s3 + $0xc] sm:$0xf]
      %v307 = vld [vmem:[%s3 + $0x10] sm:$0xf]
      %v308 = vld [vmem:[%s3 + $0x14] sm:$0xf]
      %v309 = vld [vmem:[%s3 + $0x18] sm:$0xf]
      %v310 = vld [vmem:[%s3 + $0x1c] sm:$0xf]
      %v311 = vld [vmem:[%s3 + $0x20] sm:$0xf]
      %v312 = vld [vmem:[%s3 + $0x24] sm:$0xf]
      %v313 = vld [vmem:[%s3 + $0x28] sm:$0xf]
      %v314 = vld [vmem:[%s3 + $0x2c] sm:$0xf]
      %v315 = vld [vmem:[%s3 + $0x30] sm:$0xf]
      %v316 = vld [vmem:[%s3 + $0x34] sm:$0xf]
      %v317 = vld [vmem:[%s3 + $0x38] sm:$0xf]
      %v318 = vld [vmem:[%s3 + $0x3c] sm:$0xf]
      %v383 = vunpack.c.l.b16 %v239
      %v384 = vunpack.c.l.b16 %v240
      %v385 = vunpack.c.l.b16 %v241
      %v386 = vunpack.c.l.b16 %v242
      %v387 = vunpack.c.l.b16 %v243
      %v388 = vunpack.c.l.b16 %v244
      %v389 = vunpack.c.l.b16 %v245
      %v390 = vunpack.c.l.b16 %v246
      %v391 = vunpack.c.l.b16 %v247
      %v392 = vunpack.c.l.b16 %v248
      %v393 = vunpack.c.l.b16 %v249
      %v394 = vunpack.c.l.b16 %v250
      %v395 = vunpack.c.l.b16 %v251
      %v396 = vunpack.c.l.b16 %v252
      %v397 = vunpack.c.l.b16 %v253
      %v398 = vunpack.c.l.b16 %v254
      %v399 = vunpack.c.l.b16 %v255
      %v400 = vunpack.c.l.b16 %v256
      %v401 = vunpack.c.l.b16 %v257
      %v402 = vunpack.c.l.b16 %v258
      %v403 = vunpack.c.l.b16 %v259
      %v404 = vunpack.c.l.b16 %v260
      %v405 = vunpack.c.l.b16 %v261
      %v406 = vunpack.c.l.b16 %v262
      %v407 = vunpack.c.l.b16 %v263
      %v408 = vunpack.c.l.b16 %v264
      %v409 = vunpack.c.l.b16 %v265
      %v410 = vunpack.c.l.b16 %v266
      %v411 = vunpack.c.l.b16 %v267
      %v412 = vunpack.c.l.b16 %v268
      %v413 = vunpack.c.l.b16 %v269
      %v414 = vunpack.c.l.b16 %v270
      %v415 = vunpack.c.l.b16 %v271
      %v416 = vunpack.c.l.b16 %v272
      %v417 = vunpack.c.l.b16 %v273
      %v418 = vunpack.c.l.b16 %v274
      %v419 = vunpack.c.l.b16 %v275
      %v420 = vunpack.c.l.b16 %v276
      %v421 = vunpack.c.l.b16 %v277
      %v422 = vunpack.c.l.b16 %v278
      %v423 = vunpack.c.l.b16 %v279
      %v424 = vunpack.c.l.b16 %v280
      %v425 = vunpack.c.l.b16 %v281
      %v426 = vunpack.c.l.b16 %v282
      %v427 = vunpack.c.l.b16 %v283
      %v428 = vunpack.c.l.b16 %v284
      %v429 = vunpack.c.l.b16 %v285
      %v430 = vunpack.c.l.b16 %v286
      %v431 = vunpack.c.l.b16 %v287
      %v432 = vunpack.c.l.b16 %v288
      %v433 = vunpack.c.l.b16 %v289
      %v434 = vunpack.c.l.b16 %v290
      %v435 = vunpack.c.l.b16 %v291
      %v436 = vunpack.c.l.b16 %v292
      %v437 = vunpack.c.l.b16 %v293
      %v438 = vunpack.c.l.b16 %v294
      %v439 = vunpack.c.l.b16 %v295
      %v440 = vunpack.c.l.b16 %v296
      %v441 = vunpack.c.l.b16 %v297
      %v442 = vunpack.c.l.b16 %v298
      %v443 = vunpack.c.l.b16 %v299
      %v444 = vunpack.c.l.b16 %v300
      %v445 = vunpack.c.l.b16 %v301
      %v446 = vunpack.c.l.b16 %v302
      %v447 = vpack.c.b16 %v384, %v383
      %v448 = vpack.c.b16 %v386, %v385
      %v449 = vpack.c.b16 %v388, %v387
      %v450 = vpack.c.b16 %v390, %v389
      %v451 = vpack.c.b16 %v392, %v391
      %v452 = vpack.c.b16 %v394, %v393
      %v453 = vpack.c.b16 %v396, %v395
      %v454 = vpack.c.b16 %v398, %v397
      %v455 = vpack.c.b16 %v400, %v399
      %v456 = vpack.c.b16 %v402, %v401
      %v457 = vpack.c.b16 %v404, %v403
      %v458 = vpack.c.b16 %v406, %v405
      %v459 = vpack.c.b16 %v408, %v407
      %v460 = vpack.c.b16 %v410, %v409
      %v461 = vpack.c.b16 %v412, %v411
      %v462 = vpack.c.b16 %v414, %v413
      %v463 = vpack.c.b16 %v416, %v415
      %v464 = vpack.c.b16 %v418, %v417
      %v465 = vpack.c.b16 %v420, %v419
      %v466 = vpack.c.b16 %v422, %v421
      %v467 = vpack.c.b16 %v424, %v423
      %v468 = vpack.c.b16 %v426, %v425
      %v469 = vpack.c.b16 %v428, %v427
      %v470 = vpack.c.b16 %v430, %v429
      %v471 = vpack.c.b16 %v432, %v431
      %v472 = vpack.c.b16 %v434, %v433
      %v473 = vpack.c.b16 %v436, %v435
      %v474 = vpack.c.b16 %v438, %v437
      %v475 = vpack.c.b16 %v440, %v439
      %v476 = vpack.c.b16 %v442, %v441
      %v477 = vpack.c.b16 %v444, %v443
      %v478 = vpack.c.b16 %v446, %v445
      %v527 = vunpack.c.l.b16 %v303
      %v528 = vunpack.c.l.b16 %v304
      %v529 = vunpack.c.l.b16 %v305
      %v530 = vunpack.c.l.b16 %v306
      %v531 = vunpack.c.l.b16 %v307
      %v532 = vunpack.c.l.b16 %v308
      %v533 = vunpack.c.l.b16 %v309
      %v534 = vunpack.c.l.b16 %v310
      %v535 = vunpack.c.l.b16 %v311
      %v536 = vunpack.c.l.b16 %v312
      %v537 = vunpack.c.l.b16 %v313
      %v538 = vunpack.c.l.b16 %v314
      %v539 = vunpack.c.l.b16 %v315
      %v540 = vunpack.c.l.b16 %v316
      %v541 = vunpack.c.l.b16 %v317
      %v542 = vunpack.c.l.b16 %v318
      %v543 = vpack.c.b16 %v528, %v527
      %v544 = vpack.c.b16 %v530, %v529
      %v545 = vpack.c.b16 %v532, %v531
      %v546 = vpack.c.b16 %v534, %v533
      %v547 = vpack.c.b16 %v536, %v535
      %v548 = vpack.c.b16 %v538, %v537
      %v549 = vpack.c.b16 %v540, %v539
      %v550 = vpack.c.b16 %v542, %v541
      %559 = vmatpush.bf16.msra.mxu0 %v550
      %560 = vmatpush.bf16.msra.mxu0 %v549
      %561 = vmatpush.bf16.msra.mxu0 %v548
      %562 = vmatpush.bf16.msra.mxu0 %v547
      %563 = vmatpush.bf16.msra.mxu0 %v546
      %564 = vmatpush.bf16.msra.mxu0 %v545
      %565 = vmatpush.bf16.msra.mxu0 %v544
      %566 = vmatpush.bf16.msra.mxu0 %v543
      %567 = vmatmul.bf16.gmra.mxu0 %v447
      %v568 = vpop.f32.mrf.mxu0
      %v569 = vadd.f32 0.0, %v568
      %v570 = vpop.f32.mrf.mxu0
      %v571 = vadd.f32 0.0, %v570
      %572 = vmatmul.bf16.gmra.mxu0 %v448
      %v573 = vpop.f32.mrf.mxu0
      %v574 = vadd.f32 0.0, %v573
      %v575 = vpop.f32.mrf.mxu0
      %v576 = vadd.f32 0.0, %v575
      %577 = vmatmul.bf16.gmra.mxu0 %v449
      %v578 = vpop.f32.mrf.mxu0
      %v579 = vadd.f32 0.0, %v578
      %v580 = vpop.f32.mrf.mxu0
      %v581 = vadd.f32 0.0, %v580
      %582 = vmatmul.bf16.gmra.mxu0 %v450
      %v583 = vpop.f32.mrf.mxu0
      %v584 = vadd.f32 0.0, %v583
      %v585 = vpop.f32.mrf.mxu0
      %v586 = vadd.f32 0.0, %v585
      %587 = vmatmul.bf16.gmra.mxu0 %v451
      %v588 = vpop.f32.mrf.mxu0
      %v589 = vadd.f32 0.0, %v588
      %v590 = vpop.f32.mrf.mxu0
      %v591 = vadd.f32 0.0, %v590
      %592 = vmatmul.bf16.gmra.mxu0 %v452
      %v593 = vpop.f32.mrf.mxu0
      %v594 = vadd.f32 0.0, %v593
      %v595 = vpop.f32.mrf.mxu0
      %v596 = vadd.f32 0.0, %v595
      %597 = vmatmul.bf16.gmra.mxu0 %v453
      %v598 = vpop.f32.mrf.mxu0
      %v599 = vadd.f32 0.0, %v598
      %v600 = vpop.f32.mrf.mxu0
      %v601 = vadd.f32 0.0, %v600
      %602 = vmatmul.bf16.gmra.mxu0 %v454
      %v603 = vpop.f32.mrf.mxu0
      %v604 = vadd.f32 0.0, %v603
      %v605 = vpop.f32.mrf.mxu0
      %v606 = vadd.f32 0.0, %v605
      %607 = vmatmul.bf16.gmra.mxu0 %v455
      %v608 = vpop.f32.mrf.mxu0
      %v609 = vadd.f32 0.0, %v608
      %v610 = vpop.f32.mrf.mxu0
      %v611 = vadd.f32 0.0, %v610
      %612 = vmatmul.bf16.gmra.mxu0 %v456
      %v613 = vpop.f32.mrf.mxu0
      %v614 = vadd.f32 0.0, %v613
      %v615 = vpop.f32.mrf.mxu0
      %v616 = vadd.f32 0.0, %v615
      %617 = vmatmul.bf16.gmra.mxu0 %v457
      %v618 = vpop.f32.mrf.mxu0
      %v619 = vadd.f32 0.0, %v618
      %v620 = vpop.f32.mrf.mxu0
      %v621 = vadd.f32 0.0, %v620
      %622 = vmatmul.bf16.gmra.mxu0 %v458
      %v623 = vpop.f32.mrf.mxu0
      %v624 = vadd.f32 0.0, %v623
      %v625 = vpop.f32.mrf.mxu0
      %v626 = vadd.f32 0.0, %v625
      %627 = vmatmul.bf16.gmra.mxu0 %v459
      %v628 = vpop.f32.mrf.mxu0
      %v629 = vadd.f32 0.0, %v628
      %v630 = vpop.f32.mrf.mxu0
      %v631 = vadd.f32 0.0, %v630
      %632 = vmatmul.bf16.gmra.mxu0 %v460
      %v633 = vpop.f32.mrf.mxu0
      %v634 = vadd.f32 0.0, %v633
      %v635 = vpop.f32.mrf.mxu0
      %v636 = vadd.f32 0.0, %v635
      %637 = vmatmul.bf16.gmra.mxu0 %v461
      %v638 = vpop.f32.mrf.mxu0
      %v639 = vadd.f32 0.0, %v638
      %v640 = vpop.f32.mrf.mxu0
      %v641 = vadd.f32 0.0, %v640
      %642 = vmatmul.bf16.gmra.mxu0 %v462
      %v643 = vpop.f32.mrf.mxu0
      %v644 = vadd.f32 0.0, %v643
      %v645 = vpop.f32.mrf.mxu0
      %v646 = vadd.f32 0.0, %v645
      %647 = vmatmul.bf16.gmra.mxu0 %v463
      %v648 = vpop.f32.mrf.mxu0
      %v649 = vadd.f32 0.0, %v648
      %v650 = vpop.f32.mrf.mxu0
      %v651 = vadd.f32 0.0, %v650
      %652 = vmatmul.bf16.gmra.mxu0 %v464
      %v653 = vpop.f32.mrf.mxu0
      %v654 = vadd.f32 0.0, %v653
      %v655 = vpop.f32.mrf.mxu0
      %v656 = vadd.f32 0.0, %v655
      %657 = vmatmul.bf16.gmra.mxu0 %v465
      %v658 = vpop.f32.mrf.mxu0
      %v659 = vadd.f32 0.0, %v658
      %v660 = vpop.f32.mrf.mxu0
      %v661 = vadd.f32 0.0, %v660
      %662 = vmatmul.bf16.gmra.mxu0 %v466
      %v663 = vpop.f32.mrf.mxu0
      %v664 = vadd.f32 0.0, %v663
      %v665 = vpop.f32.mrf.mxu0
      %v666 = vadd.f32 0.0, %v665
      %667 = vmatmul.bf16.gmra.mxu0 %v467
      %v668 = vpop.f32.mrf.mxu0
      %v669 = vadd.f32 0.0, %v668
      %v670 = vpop.f32.mrf.mxu0
      %v671 = vadd.f32 0.0, %v670
      %672 = vmatmul.bf16.gmra.mxu0 %v468
      %v673 = vpop.f32.mrf.mxu0
      %v674 = vadd.f32 0.0, %v673
      %v675 = vpop.f32.mrf.mxu0
      %v676 = vadd.f32 0.0, %v675
      %677 = vmatmul.bf16.gmra.mxu0 %v469
      %v678 = vpop.f32.mrf.mxu0
      %v679 = vadd.f32 0.0, %v678
      %v680 = vpop.f32.mrf.mxu0
      %v681 = vadd.f32 0.0, %v680
      %682 = vmatmul.bf16.gmra.mxu0 %v470
      %v683 = vpop.f32.mrf.mxu0
      %v684 = vadd.f32 0.0, %v683
      %v685 = vpop.f32.mrf.mxu0
      %v686 = vadd.f32 0.0, %v685
      %687 = vmatmul.bf16.gmra.mxu0 %v471
      %v688 = vpop.f32.mrf.mxu0
      %v689 = vadd.f32 0.0, %v688
      %v690 = vpop.f32.mrf.mxu0
      %v691 = vadd.f32 0.0, %v690
      %692 = vmatmul.bf16.gmra.mxu0 %v472
      %v693 = vpop.f32.mrf.mxu0
      %v694 = vadd.f32 0.0, %v693
      %v695 = vpop.f32.mrf.mxu0
      %v696 = vadd.f32 0.0, %v695
      %697 = vmatmul.bf16.gmra.mxu0 %v473
      %v698 = vpop.f32.mrf.mxu0
      %v699 = vadd.f32 0.0, %v698
      %v700 = vpop.f32.mrf.mxu0
      %v701 = vadd.f32 0.0, %v700
      %702 = vmatmul.bf16.gmra.mxu0 %v474
      %v703 = vpop.f32.mrf.mxu0
      %v704 = vadd.f32 0.0, %v703
      %v705 = vpop.f32.mrf.mxu0
      %v706 = vadd.f32 0.0, %v705
      %707 = vmatmul.bf16.gmra.mxu0 %v475
      %v708 = vpop.f32.mrf.mxu0
      %v709 = vadd.f32 0.0, %v708
      %v710 = vpop.f32.mrf.mxu0
      %v711 = vadd.f32 0.0, %v710
      %712 = vmatmul.bf16.gmra.mxu0 %v476
      %v713 = vpop.f32.mrf.mxu0
      %v714 = vadd.f32 0.0, %v713
      %v715 = vpop.f32.mrf.mxu0
      %v716 = vadd.f32 0.0, %v715
      %717 = vmatmul.bf16.gmra.mxu0 %v477
      %v718 = vpop.f32.mrf.mxu0
      %v719 = vadd.f32 0.0, %v718
      %v720 = vpop.f32.mrf.mxu0
      %v721 = vadd.f32 0.0, %v720
      %722 = vmatmul.bf16.gmra.mxu0 %v478
      %v723 = vpop.f32.mrf.mxu0
      %v724 = vadd.f32 0.0, %v723
      %v725 = vpop.f32.mrf.mxu0
      %v726 = vadd.f32 0.0, %v725
      %727 = vdwg.mxu0
      %v728 = vpack.c.bf16 %v569, %v569
      %v729 = vpack.c.bf16 %v571, %v571
      %v730 = vpack.c.bf16 %v574, %v574
      %v731 = vpack.c.bf16 %v576, %v576
      %v732 = vpack.c.bf16 %v579, %v579
      %v733 = vpack.c.bf16 %v581, %v581
      %v734 = vpack.c.bf16 %v584, %v584
      %v735 = vpack.c.bf16 %v586, %v586
      %v736 = vpack.c.bf16 %v589, %v589
      %v737 = vpack.c.bf16 %v591, %v591
      %v738 = vpack.c.bf16 %v594, %v594
      %v739 = vpack.c.bf16 %v596, %v596
      %v740 = vpack.c.bf16 %v599, %v599
      %v741 = vpack.c.bf16 %v601, %v601
      %v742 = vpack.c.bf16 %v604, %v604
      %v743 = vpack.c.bf16 %v606, %v606
      %v744 = vpack.c.bf16 %v609, %v609
      %v745 = vpack.c.bf16 %v611, %v611
      %v746 = vpack.c.bf16 %v614, %v614
      %v747 = vpack.c.bf16 %v616, %v616
      %v748 = vpack.c.bf16 %v619, %v619
      %v749 = vpack.c.bf16 %v621, %v621
      %v750 = vpack.c.bf16 %v624, %v624
      %v751 = vpack.c.bf16 %v626, %v626
      %v752 = vpack.c.bf16 %v629, %v629
      %v753 = vpack.c.bf16 %v631, %v631
      %v754 = vpack.c.bf16 %v634, %v634
      %v755 = vpack.c.bf16 %v636, %v636
      %v756 = vpack.c.bf16 %v639, %v639
      %v757 = vpack.c.bf16 %v641, %v641
      %v758 = vpack.c.bf16 %v644, %v644
      %v759 = vpack.c.bf16 %v646, %v646
      %v760 = vpack.c.bf16 %v649, %v649
      %v761 = vpack.c.bf16 %v651, %v651
      %v762 = vpack.c.bf16 %v654, %v654
      %v763 = vpack.c.bf16 %v656, %v656
      %v764 = vpack.c.bf16 %v659, %v659
      %v765 = vpack.c.bf16 %v661, %v661
      %v766 = vpack.c.bf16 %v664, %v664
      %v767 = vpack.c.bf16 %v666, %v666
      %v768 = vpack.c.bf16 %v669, %v669
      %v769 = vpack.c.bf16 %v671, %v671
      %v770 = vpack.c.bf16 %v674, %v674
      %v771 = vpack.c.bf16 %v676, %v676
      %v772 = vpack.c.bf16 %v679, %v679
      %v773 = vpack.c.bf16 %v681, %v681
      %v774 = vpack.c.bf16 %v684, %v684
      %v775 = vpack.c.bf16 %v686, %v686
      %v776 = vpack.c.bf16 %v689, %v689
      %v777 = vpack.c.bf16 %v691, %v691
      %v778 = vpack.c.bf16 %v694, %v694
      %v779 = vpack.c.bf16 %v696, %v696
      %v780 = vpack.c.bf16 %v699, %v699
      %v781 = vpack.c.bf16 %v701, %v701
      %v782 = vpack.c.bf16 %v704, %v704
      %v783 = vpack.c.bf16 %v706, %v706
      %v784 = vpack.c.bf16 %v709, %v709
      %v785 = vpack.c.bf16 %v711, %v711
      %v786 = vpack.c.bf16 %v714, %v714
      %v787 = vpack.c.bf16 %v716, %v716
      %v788 = vpack.c.bf16 %v719, %v719
      %v789 = vpack.c.bf16 %v721, %v721
      %v790 = vpack.c.bf16 %v724, %v724
      %v791 = vpack.c.bf16 %v726, %v726
      %vm792 = vcmask 257024
      %793 = vst.msk [vmem:[%s233] sm:$0xf] %vm792, %v728
      %794 = vst.msk [vmem:[%s233 + $0x4] sm:$0xf] %vm792, %v729
      %795 = vst.msk [vmem:[%s233 + $0x8] sm:$0xf] %vm792, %v730
      %796 = vst.msk [vmem:[%s233 + $0xc] sm:$0xf] %vm792, %v731
      %797 = vst.msk [vmem:[%s233 + $0x10] sm:$0xf] %vm792, %v732
      %798 = vst.msk [vmem:[%s233 + $0x14] sm:$0xf] %vm792, %v733
      %799 = vst.msk [vmem:[%s233 + $0x18] sm:$0xf] %vm792, %v734
      %800 = vst.msk [vmem:[%s233 + $0x1c] sm:$0xf] %vm792, %v735
      %801 = vst.msk [vmem:[%s233 + $0x20] sm:$0xf] %vm792, %v736
      %802 = vst.msk [vmem:[%s233 + $0x24] sm:$0xf] %vm792, %v737
      %803 = vst.msk [vmem:[%s233 + $0x28] sm:$0xf] %vm792, %v738
      %804 = vst.msk [vmem:[%s233 + $0x2c] sm:$0xf] %vm792, %v739
      %805 = vst.msk [vmem:[%s233 + $0x30] sm:$0xf] %vm792, %v740
      %806 = vst.msk [vmem:[%s233 + $0x34] sm:$0xf] %vm792, %v741
      %807 = vst.msk [vmem:[%s233 + $0x38] sm:$0xf] %vm792, %v742
      %808 = vst.msk [vmem:[%s233 + $0x3c] sm:$0xf] %vm792, %v743
      %809 = vst.msk [vmem:[%s233 + $0x40] sm:$0xf] %vm792, %v744
      %810 = vst.msk [vmem:[%s233 + $0x44] sm:$0xf] %vm792, %v745
      %811 = vst.msk [vmem:[%s233 + $0x48] sm:$0xf] %vm792, %v746
      %812 = vst.msk [vmem:[%s233 + $0x4c] sm:$0xf] %vm792, %v747
      %813 = vst.msk [vmem:[%s233 + $0x50] sm:$0xf] %vm792, %v748
      %814 = vst.msk [vmem:[%s233 + $0x54] sm:$0xf] %vm792, %v749
      %815 = vst.msk [vmem:[%s233 + $0x58] sm:$0xf] %vm792, %v750
      %816 = vst.msk [vmem:[%s233 + $0x5c] sm:$0xf] %vm792, %v751
      %817 = vst.msk [vmem:[%s233 + $0x60] sm:$0xf] %vm792, %v752
      %818 = vst.msk [vmem:[%s233 + $0x64] sm:$0xf] %vm792, %v753
      %819 = vst.msk [vmem:[%s233 + $0x68] sm:$0xf] %vm792, %v754
      %820 = vst.msk [vmem:[%s233 + $0x6c] sm:$0xf] %vm792, %v755
      %821 = vst.msk [vmem:[%s233 + $0x70] sm:$0xf] %vm792, %v756
      %822 = vst.msk [vmem:[%s233 + $0x74] sm:$0xf] %vm792, %v757
      %823 = vst.msk [vmem:[%s233 + $0x78] sm:$0xf] %vm792, %v758
      %824 = vst.msk [vmem:[%s233 + $0x7c] sm:$0xf] %vm792, %v759
      %825 = vst.msk [vmem:[%s233 + $0x80] sm:$0xf] %vm792, %v760
      %826 = vst.msk [vmem:[%s233 + $0x84] sm:$0xf] %vm792, %v761
      %827 = vst.msk [vmem:[%s233 + $0x88] sm:$0xf] %vm792, %v762
      %828 = vst.msk [vmem:[%s233 + $0x8c] sm:$0xf] %vm792, %v763
      %829 = vst.msk [vmem:[%s233 + $0x90] sm:$0xf] %vm792, %v764
      %830 = vst.msk [vmem:[%s233 + $0x94] sm:$0xf] %vm792, %v765
      %831 = vst.msk [vmem:[%s233 + $0x98] sm:$0xf] %vm792, %v766
      %832 = vst.msk [vmem:[%s233 + $0x9c] sm:$0xf] %vm792, %v767
      %833 = vst.msk [vmem:[%s233 + $0xa0] sm:$0xf] %vm792, %v768
      %834 = vst.msk [vmem:[%s233 + $0xa4] sm:$0xf] %vm792, %v769
      %835 = vst.msk [vmem:[%s233 + $0xa8] sm:$0xf] %vm792, %v770
      %836 = vst.msk [vmem:[%s233 + $0xac] sm:$0xf] %vm792, %v771
      %837 = vst.msk [vmem:[%s233 + $0xb0] sm:$0xf] %vm792, %v772
      %838 = vst.msk [vmem:[%s233 + $0xb4] sm:$0xf] %vm792, %v773
      %839 = vst.msk [vmem:[%s233 + $0xb8] sm:$0xf] %vm792, %v774
      %840 = vst.msk [vmem:[%s233 + $0xbc] sm:$0xf] %vm792, %v775
      %841 = vst.msk [vmem:[%s233 + $0xc0] sm:$0xf] %vm792, %v776
      %842 = vst.msk [vmem:[%s233 + $0xc4] sm:$0xf] %vm792, %v777
      %843 = vst.msk [vmem:[%s233 + $0xc8] sm:$0xf] %vm792, %v778
      %844 = vst.msk [vmem:[%s233 + $0xcc] sm:$0xf] %vm792, %v779
      %845 = vst.msk [vmem:[%s233 + $0xd0] sm:$0xf] %vm792, %v780
      %846 = vst.msk [vmem:[%s233 + $0xd4] sm:$0xf] %vm792, %v781
      %847 = vst.msk [vmem:[%s233 + $0xd8] sm:$0xf] %vm792, %v782
      %848 = vst.msk [vmem:[%s233 + $0xdc] sm:$0xf] %vm792, %v783
      %849 = vst.msk [vmem:[%s233 + $0xe0] sm:$0xf] %vm792, %v784
      %850 = vst.msk [vmem:[%s233 + $0xe4] sm:$0xf] %vm792, %v785
      %851 = vst.msk [vmem:[%s233 + $0xe8] sm:$0xf] %vm792, %v786
      %852 = vst.msk [vmem:[%s233 + $0xec] sm:$0xf] %vm792, %v787
      %853 = vst.msk [vmem:[%s233 + $0xf0] sm:$0xf] %vm792, %v788
      %854 = vst.msk [vmem:[%s233 + $0xf4] sm:$0xf] %vm792, %v789
      %855 = vst.msk [vmem:[%s233 + $0xf8] sm:$0xf] %vm792, %v790
      %856 = vst.msk [vmem:[%s233 + $0xfc] sm:$0xf] %vm792, %v791
      %vm857 = vcmask 261120
      %v858 = vsel %vm857, %v569, 0.0
      %v859 = vsel %vm857, %v571, 0.0
      %v860 = vadd.f32 %v858, %v859
      %v861 = vsel %vm857, %v574, 0.0
      %v862 = vadd.f32 %v860, %v861
      %v863 = vsel %vm857, %v576, 0.0
      %v864 = vadd.f32 %v862, %v863
      %v865 = vsel %vm857, %v579, 0.0
      %v866 = vadd.f32 %v864, %v865
      %v867 = vsel %vm857, %v581, 0.0
      %v868 = vadd.f32 %v866, %v867
      %v869 = vsel %vm857, %v584, 0.0
      %v870 = vadd.f32 %v868, %v869
      %v871 = vsel %vm857, %v586, 0.0
      %v872 = vadd.f32 %v870, %v871
      %v873 = vsel %vm857, %v589, 0.0
      %v874 = vadd.f32 %v872, %v873
      %v875 = vsel %vm857, %v591, 0.0
      %v876 = vadd.f32 %v874, %v875
      %v877 = vsel %vm857, %v594, 0.0
      %v878 = vadd.f32 %v876, %v877
      %v879 = vsel %vm857, %v596, 0.0
      %v880 = vadd.f32 %v878, %v879
      %v881 = vsel %vm857, %v599, 0.0
      %v882 = vadd.f32 %v880, %v881
      %v883 = vsel %vm857, %v601, 0.0
      %v884 = vadd.f32 %v882, %v883
      %v885 = vsel %vm857, %v604, 0.0
      %v886 = vadd.f32 %v884, %v885
      %v887 = vsel %vm857, %v606, 0.0
      %v888 = vadd.f32 %v886, %v887
      %v889 = vsel %vm857, %v609, 0.0
      %v890 = vadd.f32 %v888, %v889
      %v891 = vsel %vm857, %v611, 0.0
      %v892 = vadd.f32 %v890, %v891
      %v893 = vsel %vm857, %v614, 0.0
      %v894 = vadd.f32 %v892, %v893
      %v895 = vsel %vm857, %v616, 0.0
      %v896 = vadd.f32 %v894, %v895
      %v897 = vsel %vm857, %v619, 0.0
      %v898 = vadd.f32 %v896, %v897
      %v899 = vsel %vm857, %v621, 0.0
      %v900 = vadd.f32 %v898, %v899
      %v901 = vsel %vm857, %v624, 0.0
      %v902 = vadd.f32 %v900, %v901
      %v903 = vsel %vm857, %v626, 0.0
      %v904 = vadd.f32 %v902, %v903
      %v905 = vsel %vm857, %v629, 0.0
      %v906 = vadd.f32 %v904, %v905
      %v907 = vsel %vm857, %v631, 0.0
      %v908 = vadd.f32 %v906, %v907
      %v909 = vsel %vm857, %v634, 0.0
      %v910 = vadd.f32 %v908, %v909
      %v911 = vsel %vm857, %v636, 0.0
      %v912 = vadd.f32 %v910, %v911
      %v913 = vsel %vm857, %v639, 0.0
      %v914 = vadd.f32 %v912, %v913
      %v915 = vsel %vm857, %v641, 0.0
      %v916 = vadd.f32 %v914, %v915
      %v917 = vsel %vm857, %v644, 0.0
      %v918 = vadd.f32 %v916, %v917
      %v919 = vsel %vm857, %v646, 0.0
      %v920 = vadd.f32 %v918, %v919
      %v921 = vsel %vm857, %v649, 0.0
      %v922 = vadd.f32 %v920, %v921
      %v923 = vsel %vm857, %v651, 0.0
      %v924 = vadd.f32 %v922, %v923
      %v925 = vsel %vm857, %v654, 0.0
      %v926 = vadd.f32 %v924, %v925
      %v927 = vsel %vm857, %v656, 0.0
      %v928 = vadd.f32 %v926, %v927
      %v929 = vsel %vm857, %v659, 0.0
      %v930 = vadd.f32 %v928, %v929
      %v931 = vsel %vm857, %v661, 0.0
      %v932 = vadd.f32 %v930, %v931
      %v933 = vsel %vm857, %v664, 0.0
      %v934 = vadd.f32 %v932, %v933
      %v935 = vsel %vm857, %v666, 0.0
      %v936 = vadd.f32 %v934, %v935
      %v937 = vsel %vm857, %v669, 0.0
      %v938 = vadd.f32 %v936, %v937
      %v939 = vsel %vm857, %v671, 0.0
      %v940 = vadd.f32 %v938, %v939
      %v941 = vsel %vm857, %v674, 0.0
      %v942 = vadd.f32 %v940, %v941
      %v943 = vsel %vm857, %v676, 0.0
      %v944 = vadd.f32 %v942, %v943
      %v945 = vsel %vm857, %v679, 0.0
      %v946 = vadd.f32 %v944, %v945
      %v947 = vsel %vm857, %v681, 0.0
      %v948 = vadd.f32 %v946, %v947
      %v949 = vsel %vm857, %v684, 0.0
      %v950 = vadd.f32 %v948, %v949
      %v951 = vsel %vm857, %v686, 0.0
      %v952 = vadd.f32 %v950, %v951
      %v953 = vsel %vm857, %v689, 0.0
      %v954 = vadd.f32 %v952, %v953
      %v955 = vsel %vm857, %v691, 0.0
      %v956 = vadd.f32 %v954, %v955
      %v957 = vsel %vm857, %v694, 0.0
      %v958 = vadd.f32 %v956, %v957
      %v959 = vsel %vm857, %v696, 0.0
      %v960 = vadd.f32 %v958, %v959
      %v961 = vsel %vm857, %v699, 0.0
      %v962 = vadd.f32 %v960, %v961
      %v963 = vsel %vm857, %v701, 0.0
      %v964 = vadd.f32 %v962, %v963
      %v965 = vsel %vm857, %v704, 0.0
      %v966 = vadd.f32 %v964, %v965
      %v967 = vsel %vm857, %v706, 0.0
      %v968 = vadd.f32 %v966, %v967
      %v969 = vsel %vm857, %v709, 0.0
      %v970 = vadd.f32 %v968, %v969
      %v971 = vsel %vm857, %v711, 0.0
      %v972 = vadd.f32 %v970, %v971
      %v973 = vsel %vm857, %v714, 0.0
      %v974 = vadd.f32 %v972, %v973
      %v975 = vsel %vm857, %v716, 0.0
      %v976 = vadd.f32 %v974, %v975
      %v977 = vsel %vm857, %v719, 0.0
      %v978 = vadd.f32 %v976, %v977
      %v979 = vsel %vm857, %v721, 0.0
      %v980 = vadd.f32 %v978, %v979
      %v981 = vsel %vm857, %v724, 0.0
      %v982 = vadd.f32 %v980, %v981
      %v983 = vsel %vm857, %v726, 0.0
      %v984 = vadd.f32 %v982, %v983
      %v985 = vrot.slane %v984, 4
      %v986 = vadd.f32 %v984, %v985
      %v987 = vrot.slane %v986, 2
      %v988 = vadd.f32 %v986, %v987
      %v989 = vrot.slane %v988, 1
      %v990 = vadd.f32 %v988, %v989
      %v991 = vmul.f32 %v569, %v569
      %v992 = vmul.f32 %v571, %v571
      %v993 = vmul.f32 %v574, %v574
      %v994 = vmul.f32 %v576, %v576
      %v995 = vmul.f32 %v579, %v579
      %v996 = vmul.f32 %v581, %v581
      %v997 = vmul.f32 %v584, %v584
      %v998 = vmul.f32 %v586, %v586
      %v999 = vmul.f32 %v589, %v589
      %v1000 = vmul.f32 %v591, %v591
      %v1001 = vmul.f32 %v594, %v594
      %v1002 = vmul.f32 %v596, %v596
      %v1003 = vmul.f32 %v599, %v599
      %v1004 = vmul.f32 %v601, %v601
      %v1005 = vmul.f32 %v604, %v604
      %v1006 = vmul.f32 %v606, %v606
      %v1007 = vmul.f32 %v609, %v609
      %v1008 = vmul.f32 %v611, %v611
      %v1009 = vmul.f32 %v614, %v614
      %v1010 = vmul.f32 %v616, %v616
      %v1011 = vmul.f32 %v619, %v619
      %v1012 = vmul.f32 %v621, %v621
      %v1013 = vmul.f32 %v624, %v624
      %v1014 = vmul.f32 %v626, %v626
      %v1015 = vmul.f32 %v629, %v629
      %v1016 = vmul.f32 %v631, %v631
      %v1017 = vmul.f32 %v634, %v634
      %v1018 = vmul.f32 %v636, %v636
      %v1019 = vmul.f32 %v639, %v639
      %v1020 = vmul.f32 %v641, %v641
      %v1021 = vmul.f32 %v644, %v644
      %v1022 = vmul.f32 %v646, %v646
      %v1023 = vmul.f32 %v649, %v649
      %v1024 = vmul.f32 %v651, %v651
      %v1025 = vmul.f32 %v654, %v654
      %v1026 = vmul.f32 %v656, %v656
      %v1027 = vmul.f32 %v659, %v659
      %v1028 = vmul.f32 %v661, %v661
      %v1029 = vmul.f32 %v664, %v664
      %v1030 = vmul.f32 %v666, %v666
      %v1031 = vmul.f32 %v669, %v669
      %v1032 = vmul.f32 %v671, %v671
      %v1033 = vmul.f32 %v674, %v674
      %v1034 = vmul.f32 %v676, %v676
      %v1035 = vmul.f32 %v679, %v679
      %v1036 = vmul.f32 %v681, %v681
      %v1037 = vmul.f32 %v684, %v684
      %v1038 = vmul.f32 %v686, %v686
      %v1039 = vmul.f32 %v689, %v689
      %v1040 = vmul.f32 %v691, %v691
      %v1041 = vmul.f32 %v694, %v694
      %v1042 = vmul.f32 %v696, %v696
      %v1043 = vmul.f32 %v699, %v699
      %v1044 = vmul.f32 %v701, %v701
      %v1045 = vmul.f32 %v704, %v704
      %v1046 = vmul.f32 %v706, %v706
      %v1047 = vmul.f32 %v709, %v709
      %v1048 = vmul.f32 %v711, %v711
      %v1049 = vmul.f32 %v714, %v714
      %v1050 = vmul.f32 %v716, %v716
      %v1051 = vmul.f32 %v719, %v719
      %v1052 = vmul.f32 %v721, %v721
      %v1053 = vmul.f32 %v724, %v724
      %v1054 = vmul.f32 %v726, %v726
      %v1055 = vsel %vm857, %v991, 0.0
      %v1056 = vsel %vm857, %v992, 0.0
      %v1057 = vadd.f32 %v1055, %v1056
      %v1058 = vsel %vm857, %v993, 0.0
      %v1059 = vadd.f32 %v1057, %v1058
      %v1060 = vsel %vm857, %v994, 0.0
      %v1061 = vadd.f32 %v1059, %v1060
      %v1062 = vsel %vm857, %v995, 0.0
      %v1063 = vadd.f32 %v1061, %v1062
      %v1064 = vsel %vm857, %v996, 0.0
      %v1065 = vadd.f32 %v1063, %v1064
      %v1066 = vsel %vm857, %v997, 0.0
      %v1067 = vadd.f32 %v1065, %v1066
      %v1068 = vsel %vm857, %v998, 0.0
      %v1069 = vadd.f32 %v1067, %v1068
      %v1070 = vsel %vm857, %v999, 0.0
      %v1071 = vadd.f32 %v1069, %v1070
      %v1072 = vsel %vm857, %v1000, 0.0
      %v1073 = vadd.f32 %v1071, %v1072
      %v1074 = vsel %vm857, %v1001, 0.0
      %v1075 = vadd.f32 %v1073, %v1074
      %v1076 = vsel %vm857, %v1002, 0.0
      %v1077 = vadd.f32 %v1075, %v1076
      %v1078 = vsel %vm857, %v1003, 0.0
      %v1079 = vadd.f32 %v1077, %v1078
      %v1080 = vsel %vm857, %v1004, 0.0
      %v1081 = vadd.f32 %v1079, %v1080
      %v1082 = vsel %vm857, %v1005, 0.0
      %v1083 = vadd.f32 %v1081, %v1082
      %v1084 = vsel %vm857, %v1006, 0.0
      %v1085 = vadd.f32 %v1083, %v1084
      %v1086 = vsel %vm857, %v1007, 0.0
      %v1087 = vadd.f32 %v1085, %v1086
      %v1088 = vsel %vm857, %v1008, 0.0
      %v1089 = vadd.f32 %v1087, %v1088
      %v1090 = vsel %vm857, %v1009, 0.0
      %v1091 = vadd.f32 %v1089, %v1090
      %v1092 = vsel %vm857, %v1010, 0.0
      %v1093 = vadd.f32 %v1091, %v1092
      %v1094 = vsel %vm857, %v1011, 0.0
      %v1095 = vadd.f32 %v1093, %v1094
      %v1096 = vsel %vm857, %v1012, 0.0
      %v1097 = vadd.f32 %v1095, %v1096
      %v1098 = vsel %vm857, %v1013, 0.0
      %v1099 = vadd.f32 %v1097, %v1098
      %v1100 = vsel %vm857, %v1014, 0.0
      %v1101 = vadd.f32 %v1099, %v1100
      %v1102 = vsel %vm857, %v1015, 0.0
      %v1103 = vadd.f32 %v1101, %v1102
      %v1104 = vsel %vm857, %v1016, 0.0
      %v1105 = vadd.f32 %v1103, %v1104
      %v1106 = vsel %vm857, %v1017, 0.0
      %v1107 = vadd.f32 %v1105, %v1106
      %v1108 = vsel %vm857, %v1018, 0.0
      %v1109 = vadd.f32 %v1107, %v1108
      %v1110 = vsel %vm857, %v1019, 0.0
      %v1111 = vadd.f32 %v1109, %v1110
      %v1112 = vsel %vm857, %v1020, 0.0
      %v1113 = vadd.f32 %v1111, %v1112
      %v1114 = vsel %vm857, %v1021, 0.0
      %v1115 = vadd.f32 %v1113, %v1114
      %v1116 = vsel %vm857, %v1022, 0.0
      %v1117 = vadd.f32 %v1115, %v1116
      %v1118 = vsel %vm857, %v1023, 0.0
      %v1119 = vadd.f32 %v1117, %v1118
      %v1120 = vsel %vm857, %v1024, 0.0
      %v1121 = vadd.f32 %v1119, %v1120
      %v1122 = vsel %vm857, %v1025, 0.0
      %v1123 = vadd.f32 %v1121, %v1122
      %v1124 = vsel %vm857, %v1026, 0.0
      %v1125 = vadd.f32 %v1123, %v1124
      %v1126 = vsel %vm857, %v1027, 0.0
      %v1127 = vadd.f32 %v1125, %v1126
      %v1128 = vsel %vm857, %v1028, 0.0
      %v1129 = vadd.f32 %v1127, %v1128
      %v1130 = vsel %vm857, %v1029, 0.0
      %v1131 = vadd.f32 %v1129, %v1130
      %v1132 = vsel %vm857, %v1030, 0.0
      %v1133 = vadd.f32 %v1131, %v1132
      %v1134 = vsel %vm857, %v1031, 0.0
      %v1135 = vadd.f32 %v1133, %v1134
      %v1136 = vsel %vm857, %v1032, 0.0
      %v1137 = vadd.f32 %v1135, %v1136
      %v1138 = vsel %vm857, %v1033, 0.0
      %v1139 = vadd.f32 %v1137, %v1138
      %v1140 = vsel %vm857, %v1034, 0.0
      %v1141 = vadd.f32 %v1139, %v1140
      %v1142 = vsel %vm857, %v1035, 0.0
      %v1143 = vadd.f32 %v1141, %v1142
      %v1144 = vsel %vm857, %v1036, 0.0
      %v1145 = vadd.f32 %v1143, %v1144
      %v1146 = vsel %vm857, %v1037, 0.0
      %v1147 = vadd.f32 %v1145, %v1146
      %v1148 = vsel %vm857, %v1038, 0.0
      %v1149 = vadd.f32 %v1147, %v1148
      %v1150 = vsel %vm857, %v1039, 0.0
      %v1151 = vadd.f32 %v1149, %v1150
      %v1152 = vsel %vm857, %v1040, 0.0
      %v1153 = vadd.f32 %v1151, %v1152
      %v1154 = vsel %vm857, %v1041, 0.0
      %v1155 = vadd.f32 %v1153, %v1154
      %v1156 = vsel %vm857, %v1042, 0.0
      %v1157 = vadd.f32 %v1155, %v1156
      %v1158 = vsel %vm857, %v1043, 0.0
      %v1159 = vadd.f32 %v1157, %v1158
      %v1160 = vsel %vm857, %v1044, 0.0
      %v1161 = vadd.f32 %v1159, %v1160
      %v1162 = vsel %vm857, %v1045, 0.0
      %v1163 = vadd.f32 %v1161, %v1162
      %v1164 = vsel %vm857, %v1046, 0.0
      %v1165 = vadd.f32 %v1163, %v1164
      %v1166 = vsel %vm857, %v1047, 0.0
      %v1167 = vadd.f32 %v1165, %v1166
      %v1168 = vsel %vm857, %v1048, 0.0
      %v1169 = vadd.f32 %v1167, %v1168
      %v1170 = vsel %vm857, %v1049, 0.0
      %v1171 = vadd.f32 %v1169, %v1170
      %v1172 = vsel %vm857, %v1050, 0.0
      %v1173 = vadd.f32 %v1171, %v1172
      %v1174 = vsel %vm857, %v1051, 0.0
      %v1175 = vadd.f32 %v1173, %v1174
      %v1176 = vsel %vm857, %v1052, 0.0
      %v1177 = vadd.f32 %v1175, %v1176
      %v1178 = vsel %vm857, %v1053, 0.0
      %v1179 = vadd.f32 %v1177, %v1178
      %v1180 = vsel %vm857, %v1054, 0.0
      %v1181 = vadd.f32 %v1179, %v1180
      %v1182 = vrot.slane %v1181, 4
      %v1183 = vadd.f32 %v1181, %v1182
      %v1184 = vrot.slane %v1183, 2
      %v1185 = vadd.f32 %v1183, %v1184
      %v1186 = vrot.slane %v1185, 1
      %v1187 = vadd.f32 %v1185, %v1186
      %vm1188 = vcmask 1040384
      %v1189 = vsel %vm1188, %v990, %v1187
      %vm1190 = vcmask 254976
      %1191 = vst.msk [vmem:[%s238] sm:$0x3] %vm1190, %v1189
      %s1192 = smul.u32 64, %s17
      %p1193 = scmp.lt.s32.totalorder %s1192, 255
      %s1194 = scalar_select %p1193, %s1192, 255
      %s1195 = smul.addr %s1194, 4
      %s1196 = scalar_lea.vmem %s4, %s1195
      %p1197 = scmp.lt.s32.totalorder %s17, 3
      %s1198 = scalar_select %p1197, %s17, 3
      %s1199 = smul.addr %s1198, 2
      %s1200 = scalar_lea.vmem %s5, %s1199
      // Predicated region
      $region37: #{discriminator_forward.5} parent=35 // pred_check
        %p1201 = pneg %p124
      $region38: #{discriminator_forward.5} parent=35 // pred_check_branch
        %1203 = sbr.rel (%p1201) target = $region40
      $region39: #{discriminator_forward.5} parent=35 // pred_region
        %s1204 = smul.u32 64, %s17
      $region40: #{discriminator_forward.5} parent=35 // pred_fallthru
        _
      // Predicated region
      $region41: #{discriminator_forward.5} parent=35 // pred_check
        %p1205 = pneg %p150
      $region42: #{discriminator_forward.5} parent=35 // pred_check_branch
        %1207 = sbr.rel (%p1205) target = $region44
      $region43: #{discriminator_forward.5} parent=35 // pred_region
        _
      $region44: #{discriminator_forward.5} parent=35 // pred_fallthru
        _
    $region36: #{discriminator_forward.5} parent=5 // pred_fallthru
      _
    %p1208 = scmp.le.s32.totalorder 2, %s12
    // Predicated region
    $region45: #{discriminator_forward.5} parent=5 // pred_check
      %p1209 = pneg %p1208
    $region46: #{discriminator_forward.5} parent=5 // pred_check_branch
      %1211 = sbr.rel (%p1209) target = $region48
    $region47: #{discriminator_forward.5} parent=5 // pred_region
      %s1212 = ssub.s32 %s12, 2
      // Predicated region
      $region49: #{discriminator_forward.5} parent=47 // pred_check
        %p1213 = pneg %p130
      $region50: #{discriminator_forward.5} parent=47 // pred_check_branch
        %1215 = sbr.rel (%p1213) target = $region52
      $region51: #{discriminator_forward.5} parent=47 // pred_region
        %s1216 = smul.u32 64, %s18
        %p1217 = scmp.lt.s32.totalorder %s1216, 255
        %s1218 = scalar_select %p1217, %s1216, 255
        %s1219 = smul.addr %s1218, 4
        %s1220 = scalar_lea.vmem %s4, %s1219
      $region52: #{discriminator_forward.5} parent=47 // pred_fallthru
        _
      // Predicated region
      $region53: #{discriminator_forward.5} parent=47 // pred_check
        %p1221 = pneg %p156
      $region54: #{discriminator_forward.5} parent=47 // pred_check_branch
        %1223 = sbr.rel (%p1221) target = $region56
      $region55: #{discriminator_forward.5} parent=47 // pred_region
        %p1224 = scmp.lt.s32.totalorder %s18, 3
        %s1225 = scalar_select %p1224, %s18, 3
        %s1226 = smul.addr %s1225, 2
        %s1227 = scalar_lea.vmem %s5, %s1226
      $region56: #{discriminator_forward.5} parent=47 // pred_fallthru
        _
    $region48: #{discriminator_forward.5} parent=5 // pred_fallthru
      _
  $region6: #{discriminator_forward.5} parent=0 // loop_footer
    %s16 = sadd.s32 1, %s12
  $region7: #{discriminator_forward.5} parent=0 // loop_footer_branch
    %11 = sbr.rel target = $region3
  $region8: #{discriminator_forward.5} parent=0 // loop_exit
    _

// kernel: tile.43
$region0: #{tile.43}
  #allocation0 [shape = 's32[1]{0}', space=sflag, size = 0x4, scoped, tag = 'scoped memory for tile.43']
  %s0 = inlined_call_operand.vmem [shape: f32[32], index: 0, kind: input, shape index: {}]
  %s1 = inlined_call_operand.vmem [shape: f32[16,32], index: 1, kind: output, shape index: {}]
  // Predicated region
  $region2: #{tile.43} parent=0 // pred_check
    _
  $region3: #{tile.43} parent=0 // pred_check_branch
    %3 = sbr.rel (0) target = $region5
  $region4: #{tile.43} parent=0 // pred_region
    _
  $region5: #{tile.43} parent=0 // pred_fallthru
    _
  %v4 = vld [vmem:[%s0] ss:$0 sm:$0xff]
  %5 = vst [vmem:[%s1] sm:$0xff] %v4
  %s6 = scalar_lea.vmem %s1, 8
  %7 = vst [vmem:[%s6] sm:$0xff] %v4

// kernel: tile.48
$region0: #{tile.48}
  %s0 = inlined_call_operand.vmem [shape: f32[16,32], index: 0, kind: input, shape index: {}]
  %s1 = inlined_call_operand.vmem [shape: f32[1,512], index: 1, kind: output, shape index: {}]
  $region1: #{tile.48} parent=0
    #allocation0 [shape = 'u8[16384]{0}', space=vmem, size = 0x4000, scoped, tag = 'scoped mem for output reshape']
    %v2 = vld [vmem:[%s0] ss:$4 sm:$0xf]
    %vm3 = vcmask 261120
    %4 = vst.msk [vmem:[#allocation0] ss:$8 sm:$0xf] %vm3, %v2
    %s5 = scalar_lea.vmem %s0, 3
    %v6 = vld [vmem:[%s5] ss:$4 sm:$0xf]
    %7 = vrot.lane.b32.xlu0 %v6, 96
    %v8 = vpop.permute.xlu0 %7
    %vm9 = vcmask 1048320
    %10 = vst.msk [vmem:[#allocation0] ss:$8 sm:$0xf] %vm9, %v8
    %s11 = scalar_lea.vmem %s0, 2
    %v12 = vld [vmem:[%s11] ss:$4 sm:$0xf]
    %13 = vrot.lane.b32.xlu0 %v12, 64
    %v14 = vpop.permute.xlu0 %13
    %vm15 = vcmask 785920
    %16 = vst.msk [vmem:[#allocation0] ss:$8 sm:$0xf] %vm15, %v14
    %s17 = scalar_lea.vmem %s0, 1
    %v18 = vld [vmem:[%s17] ss:$4 sm:$0xf]
    %19 = vrot.lane.b32.xlu0 %v18, 32
    %v20 = vpop.permute.xlu0 %19
    %vm21 = vcmask 523520
    %22 = vst.msk [vmem:[#allocation0] ss:$8 sm:$0xf] %vm21, %v20
    %s24 = ssub.s32 2, 1
    %v25 = vld [vmem:[#allocation0] sm:%s24]
    %s27 = ssub.s32 2, 1
    %28 = vst [vmem:[%s1] sm:%s27] %v25
    %s29 = scalar_lea.vmem [#allocation0], 8
    %v30 = vld [vmem:[%s29] sm:%s24]
    %s32 = ssub.s32 2, 1
    %s33 = scalar_lea.vmem %s1, 1
    %34 = vst [vmem:[%s33] sm:%s32] %v30
    %s35 = scalar_lea.vmem [#allocation0], 16
    %v36 = vld [vmem:[%s35] sm:%s24]
    %s38 = ssub.s32 2, 1
    %s39 = scalar_lea.vmem %s1, 2
    %40 = vst [vmem:[%s39] sm:%s38] %v36
    %s41 = scalar_lea.vmem [#allocation0], 24
    %v42 = vld [vmem:[%s41] sm:%s24]
    %s44 = ssub.s32 2, 1
    %s45 = scalar_lea.vmem %s1, 3
    %46 = vst [vmem:[%s45] sm:%s44] %v42

// kernel: tile.53
$region0: #{tile.53}
  #allocation0 [shape = 's32[1]{0}', space=sflag, size = 0x4, scoped, tag = 'scoped memory for tile.53']
  %s0 = inlined_call_operand.vmem [shape: f32[64], index: 0, kind: input, shape index: {}]
  %s1 = inlined_call_operand.vmem [shape: f32[16,64], index: 1, kind: output, shape index: {}]
  // Predicated region
  $region2: #{tile.53} parent=0 // pred_check
    _
  $region3: #{tile.53} parent=0 // pred_check_branch
    %3 = sbr.rel (0) target = $region5
  $region4: #{tile.53} parent=0 // pred_region
    _
  $region5: #{tile.53} parent=0 // pred_fallthru
    _
  %v4 = vld [vmem:[%s0] ss:$0 sm:$0xff]
  %5 = vst [vmem:[%s1] sm:$0xff] %v4
  %s6 = scalar_lea.vmem %s1, 8
  %7 = vst [vmem:[%s6] sm:$0xff] %v4

// kernel: tile.58
$region0: #{tile.58}
  %s0 = inlined_call_operand.vmem [shape: f32[16,64], index: 0, kind: input, shape index: {}]
  %s1 = inlined_call_operand.vmem [shape: f32[1,1024], index: 1, kind: output, shape index: {}]
  $region1: #{tile.58} parent=0
    #allocation0 [shape = 'u8[32768]{0}', space=vmem, size = 0x8000, scoped, tag = 'scoped mem for output reshape']
    %v2 = vld [vmem:[%s0] ss:$2 sm:$0xff]
    %vm3 = vcmask 523264
    %4 = vst.msk [vmem:[#allocation0] ss:$8 sm:$0xf] %vm3, %v2
    %5 = vst.msk [vmem:[#allocation0] ss:$8 sm:$0xf0] %vm3, %v2
    %s6 = scalar_lea.vmem %s0, 1
    %v7 = vld [vmem:[%s6] ss:$2 sm:$0xff]
    %8 = vrot.lane.b32.xlu0 %v7, 64
    %v9 = vpop.permute.xlu0 %8
    %vm10 = vcmask 1048064
    %11 = vst.msk [vmem:[#allocation0] ss:$8 sm:$0xf] %vm10, %v9
    %12 = vst.msk [vmem:[#allocation0] ss:$8 sm:$0xf0] %vm10, %v9
    %s14 = ssub.s32 2, 1
    %v15 = vld [vmem:[#allocation0] sm:%s14]
    %s17 = ssub.s32 2, 1
    %18 = vst [vmem:[%s1] sm:%s17] %v15
    %s19 = scalar_lea.vmem [#allocation0], 8
    %v20 = vld [vmem:[%s19] sm:%s14]
    %s22 = ssub.s32 2, 1
    %s23 = scalar_lea.vmem %s1, 1
    %24 = vst [vmem:[%s23] sm:%s22] %v20
    %s25 = scalar_lea.vmem [#allocation0], 16
    %v26 = vld [vmem:[%s25] sm:%s14]
    %s28 = ssub.s32 2, 1
    %s29 = scalar_lea.vmem %s1, 2
    %30 = vst [vmem:[%s29] sm:%s28] %v26
    %s31 = scalar_lea.vmem [#allocation0], 24
    %v32 = vld [vmem:[%s31] sm:%s14]
    %s34 = ssub.s32 2, 1
    %s35 = scalar_lea.vmem %s1, 3
    %36 = vst [vmem:[%s35] sm:%s34] %v32
    %s37 = scalar_lea.vmem [#allocation0], 32
    %v38 = vld [vmem:[%s37] sm:%s14]
    %s40 = ssub.s32 2, 1
    %s41 = scalar_lea.vmem %s1, 4
    %42 = vst [vmem:[%s41] sm:%s40] %v38
    %s43 = scalar_lea.vmem [#allocation0], 40
    %v44 = vld [vmem:[%s43] sm:%s14]
    %s46 = ssub.s32 2, 1
    %s47 = scalar_lea.vmem %s1, 5
    %48 = vst [vmem:[%s47] sm:%s46] %v44
    %s49 = scalar_lea.vmem [#allocation0], 48
    %v50 = vld [vmem:[%s49] sm:%s14]
    %s52 = ssub.s32 2, 1
    %s53 = scalar_lea.vmem %s1, 6
    %54 = vst [vmem:[%s53] sm:%s52] %v50
    %s55 = scalar_lea.vmem [#allocation0], 56
    %v56 = vld [vmem:[%s55] sm:%s14]
    %s58 = ssub.s32 2, 1
    %s59 = scalar_lea.vmem %s1, 7
    %60 = vst [vmem:[%s59] sm:%s58] %v56

// kernel: discriminator_forward.6
$region0: #{discriminator_forward.6}
  #allocation0 [shape = 'u32[]', space=smem, size = 0x4, offset = 0x4, fixed_abs, tag = 'smem constant byte address 0x4 - core index']
  #allocation1 [shape = 'u32[72,128]{1,0:T(1,128)}', space=vmem, size = 0x9000, scoped, tag = 'internal scratch']
  %s0 = inlined_call_operand.vmem [shape: f32[1,512], index: 0, kind: input, shape index: {}]
  %s1 = inlined_call_operand.vmem [shape: f32[1,512], index: 1, kind: input, shape index: {}]
  %s2 = inlined_call_operand.vmem [shape: bf16[512,512], index: 2, kind: input, shape index: {}]
  %s3 = inlined_call_operand.vmem [shape: bf16[512,64], index: 3, kind: input, shape index: {}]
  %s4 = inlined_call_operand.vmem [shape: bf16[512,64], index: 4, kind: output, shape index: {0}]
  %s5 = inlined_call_operand.vmem [shape: f32[1,2,64], index: 5, kind: output, shape index: {1}]
  %6 = xla_tuple %s4, %s5
  %s7 = sld [smem:[#allocation0]]
  $region34: #{discriminator_forward.6} parent=0
    _
  %s9 = ssub.s32 1, %s7
  %s10 = scalar_select 0, %s9, %s7
  // Predicated region
  $region2: #{discriminator_forward.6} parent=0 // pred_check
    _
  $region3: #{discriminator_forward.6} parent=0 // pred_check_branch
    %12 = sbr.rel (0) target = $region5
  $region4: #{discriminator_forward.6} parent=0 // pred_region
    _
  $region5: #{discriminator_forward.6} parent=0 // pred_fallthru
    _
  // Predicated region
  $region6: #{discriminator_forward.6} parent=0 // pred_check
    _
  $region7: #{discriminator_forward.6} parent=0 // pred_check_branch
    %14 = sbr.rel (0) target = $region9
  $region8: #{discriminator_forward.6} parent=0 // pred_region
    _
  $region9: #{discriminator_forward.6} parent=0 // pred_fallthru
    _
  // Predicated region
  $region10: #{discriminator_forward.6} parent=0 // pred_check
    _
  $region11: #{discriminator_forward.6} parent=0 // pred_check_branch
    %16 = sbr.rel (0) target = $region13
  $region12: #{discriminator_forward.6} parent=0 // pred_region
    _
  $region13: #{discriminator_forward.6} parent=0 // pred_fallthru
    _
  // Predicated region
  $region14: #{discriminator_forward.6} parent=0 // pred_check
    _
  $region15: #{discriminator_forward.6} parent=0 // pred_check_branch
    %18 = sbr.rel (0) target = $region17
  $region16: #{discriminator_forward.6} parent=0 // pred_region
    _
  $region17: #{discriminator_forward.6} parent=0 // pred_fallthru
    _
  %v19 = vld [vmem:[%s2] sm:$0xff]
  %v20 = vld [vmem:[%s2 + $0x8] sm:$0xff]
  %v21 = vld [vmem:[%s2 + $0x10] sm:$0xff]
  %v22 = vld [vmem:[%s2 + $0x18] sm:$0xff]
  %v23 = vld [vmem:[%s2 + $0x20] sm:$0xff]
  %v24 = vld [vmem:[%s2 + $0x28] sm:$0xff]
  %v25 = vld [vmem:[%s2 + $0x30] sm:$0xff]
  %v26 = vld [vmem:[%s2 + $0x38] sm:$0xff]
  %v27 = vld [vmem:[%s2 + $0x40] sm:$0xff]
  %v28 = vld [vmem:[%s2 + $0x48] sm:$0xff]
  %v29 = vld [vmem:[%s2 + $0x50] sm:$0xff]
  %v30 = vld [vmem:[%s2 + $0x58] sm:$0xff]
  %v31 = vld [vmem:[%s2 + $0x60] sm:$0xff]
  %v32 = vld [vmem:[%s2 + $0x68] sm:$0xff]
  %v33 = vld [vmem:[%s2 + $0x70] sm:$0xff]
  %v34 = vld [vmem:[%s2 + $0x78] sm:$0xff]
  %v35 = vld [vmem:[%s2 + $0x80] sm:$0xff]
  %v36 = vld [vmem:[%s2 + $0x88] sm:$0xff]
  %v37 = vld [vmem:[%s2 + $0x90] sm:$0xff]
  %v38 = vld [vmem:[%s2 + $0x98] sm:$0xff]
  %v39 = vld [vmem:[%s2 + $0xa0] sm:$0xff]
  %v40 = vld [vmem:[%s2 + $0xa8] sm:$0xff]
  %v41 = vld [vmem:[%s2 + $0xb0] sm:$0xff]
  %v42 = vld [vmem:[%s2 + $0xb8] sm:$0xff]
  %v43 = vld [vmem:[%s2 + $0xc0] sm:$0xff]
  %v44 = vld [vmem:[%s2 + $0xc8] sm:$0xff]
  %v45 = vld [vmem:[%s2 + $0xd0] sm:$0xff]
  %v46 = vld [vmem:[%s2 + $0xd8] sm:$0xff]
  %v47 = vld [vmem:[%s2 + $0xe0] sm:$0xff]
  %v48 = vld [vmem:[%s2 + $0xe8] sm:$0xff]
  %v49 = vld [vmem:[%s2 + $0xf0] sm:$0xff]
  %v50 = vld [vmem:[%s2 + $0xf8] sm:$0xff]
  %v51 = vld [vmem:[%s2 + $0x100] sm:$0xff]
  %v52 = vld [vmem:[%s2 + $0x108] sm:$0xff]
  %v53 = vld [vmem:[%s2 + $0x110] sm:$0xff]
  %v54 = vld [vmem:[%s2 + $0x118] sm:$0xff]
  %v55 = vld [vmem:[%s2 + $0x120] sm:$0xff]
  %v56 = vld [vmem:[%s2 + $0x128] sm:$0xff]
  %v57 = vld [vmem:[%s2 + $0x130] sm:$0xff]
  %v58 = vld [vmem:[%s2 + $0x138] sm:$0xff]
  %v59 = vld [vmem:[%s2 + $0x140] sm:$0xff]
  %v60 = vld [vmem:[%s2 + $0x148] sm:$0xff]
  %v61 = vld [vmem:[%s2 + $0x150] sm:$0xff]
  %v62 = vld [vmem:[%s2 + $0x158] sm:$0xff]
  %v63 = vld [vmem:[%s2 + $0x160] sm:$0xff]
  %v64 = vld [vmem:[%s2 + $0x168] sm:$0xff]
  %v65 = vld [vmem:[%s2 + $0x170] sm:$0xff]
  %v66 = vld [vmem:[%s2 + $0x178] sm:$0xff]
  %v67 = vld [vmem:[%s2 + $0x180] sm:$0xff]
  %v68 = vld [vmem:[%s2 + $0x188] sm:$0xff]
  %v69 = vld [vmem:[%s2 + $0x190] sm:$0xff]
  %v70 = vld [vmem:[%s2 + $0x198] sm:$0xff]
  %v71 = vld [vmem:[%s2 + $0x1a0] sm:$0xff]
  %v72 = vld [vmem:[%s2 + $0x1a8] sm:$0xff]
  %v73 = vld [vmem:[%s2 + $0x1b0] sm:$0xff]
  %v74 = vld [vmem:[%s2 + $0x1b8] sm:$0xff]
  %v75 = vld [vmem:[%s2 + $0x1c0] sm:$0xff]
  %v76 = vld [vmem:[%s2 + $0x1c8] sm:$0xff]
  %v77 = vld [vmem:[%s2 + $0x1d0] sm:$0xff]
  %v78 = vld [vmem:[%s2 + $0x1d8] sm:$0xff]
  %v79 = vld [vmem:[%s2 + $0x1e0] sm:$0xff]
  %v80 = vld [vmem:[%s2 + $0x1e8] sm:$0xff]
  %v81 = vld [vmem:[%s2 + $0x1f0] sm:$0xff]
  %v82 = vld [vmem:[%s2 + $0x1f8] sm:$0xff]
  %v83 = vld [vmem:[%s2 + $0x200] sm:$0xff]
  %v84 = vld [vmem:[%s2 + $0x208] sm:$0xff]
  %v85 = vld [vmem:[%s2 + $0x210] sm:$0xff]
  %v86 = vld [vmem:[%s2 + $0x218] sm:$0xff]
  %v87 = vld [vmem:[%s2 + $0x220] sm:$0xff]
  %v88 = vld [vmem:[%s2 + $0x228] sm:$0xff]
  %v89 = vld [vmem:[%s2 + $0x230] sm:$0xff]
  %v90 = vld [vmem:[%s2 + $0x238] sm:$0xff]
  %v91 = vld [vmem:[%s2 + $0x240] sm:$0xff]
  %v92 = vld [vmem:[%s2 + $0x248] sm:$0xff]
  %v93 = vld [vmem:[%s2 + $0x250] sm:$0xff]
  %v94 = vld [vmem:[%s2 + $0x258] sm:$0xff]
  %v95 = vld [vmem:[%s2 + $0x260] sm:$0xff]
  %v96 = vld [vmem:[%s2 + $0x268] sm:$0xff]
  %v97 = vld [vmem:[%s2 + $0x270] sm:$0xff]
  %v98 = vld [vmem:[%s2 + $0x278] sm:$0xff]
  %v99 = vld [vmem:[%s2 + $0x280] sm:$0xff]
  %v100 = vld [vmem:[%s2 + $0x288] sm:$0xff]
  %v101 = vld [vmem:[%s2 + $0x290] sm:$0xff]
  %v102 = vld [vmem:[%s2 + $0x298] sm:$0xff]
  %v103 = vld [vmem:[%s2 + $0x2a0] sm:$0xff]
  %v104 = vld [vmem:[%s2 + $0x2a8] sm:$0xff]
  %v105 = vld [vmem:[%s2 + $0x2b0] sm:$0xff]
  %v106 = vld [vmem:[%s2 + $0x2b8] sm:$0xff]
  %v107 = vld [vmem:[%s2 + $0x2c0] sm:$0xff]
  %v108 = vld [vmem:[%s2 + $0x2c8] sm:$0xff]
  %v109 = vld [vmem:[%s2 + $0x2d0] sm:$0xff]
  %v110 = vld [vmem:[%s2 + $0x2d8] sm:$0xff]
  %v111 = vld [vmem:[%s2 + $0x2e0] sm:$0xff]
  %v112 = vld [vmem:[%s2 + $0x2e8] sm:$0xff]
  %v113 = vld [vmem:[%s2 + $0x2f0] sm:$0xff]
  %v114 = vld [vmem:[%s2 + $0x2f8] sm:$0xff]
  %v115 = vld [vmem:[%s2 + $0x300] sm:$0xff]
  %v116 = vld [vmem:[%s2 + $0x308] sm:$0xff]
  %v117 = vld [vmem:[%s2 + $0x310] sm:$0xff]
  %v118 = vld [vmem:[%s2 + $0x318] sm:$0xff]
  %v119 = vld [vmem:[%s2 + $0x320] sm:$0xff]
  %v120 = vld [vmem:[%s2 + $0x328] sm:$0xff]
  %v121 = vld [vmem:[%s2 + $0x330] sm:$0xff]
  %v122 = vld [vmem:[%s2 + $0x338] sm:$0xff]
  %v123 = vld [vmem:[%s2 + $0x340] sm:$0xff]
  %v124 = vld [vmem:[%s2 + $0x348] sm:$0xff]
  %v125 = vld [vmem:[%s2 + $0x350] sm:$0xff]
  %v126 = vld [vmem:[%s2 + $0x358] sm:$0xff]
  %v127 = vld [vmem:[%s2 + $0x360] sm:$0xff]
  %v128 = vld [vmem:[%s2 + $0x368] sm:$0xff]
  %v129 = vld [vmem:[%s2 + $0x370] sm:$0xff]
  %v130 = vld [vmem:[%s2 + $0x378] sm:$0xff]
  %v131 = vld [vmem:[%s2 + $0x380] sm:$0xff]
  %v132 = vld [vmem:[%s2 + $0x388] sm:$0xff]
  %v133 = vld [vmem:[%s2 + $0x390] sm:$0xff]
  %v134 = vld [vmem:[%s2 + $0x398] sm:$0xff]
  %v135 = vld [vmem:[%s2 + $0x3a0] sm:$0xff]
  %v136 = vld [vmem:[%s2 + $0x3a8] sm:$0xff]
  %v137 = vld [vmem:[%s2 + $0x3b0] sm:$0xff]
  %v138 = vld [vmem:[%s2 + $0x3b8] sm:$0xff]
  %v139 = vld [vmem:[%s2 + $0x3c0] sm:$0xff]
  %v140 = vld [vmem:[%s2 + $0x3c8] sm:$0xff]
  %v141 = vld [vmem:[%s2 + $0x3d0] sm:$0xff]
  %v142 = vld [vmem:[%s2 + $0x3d8] sm:$0xff]
  %v143 = vld [vmem:[%s2 + $0x3e0] sm:$0xff]
  %v144 = vld [vmem:[%s2 + $0x3e8] sm:$0xff]
  %v145 = vld [vmem:[%s2 + $0x3f0] sm:$0xff]
  %v146 = vld [vmem:[%s2 + $0x3f8] sm:$0xff]
  %v147 = vunpack.c.l.bf16 %v19
  %v148 = vunpack.c.h.bf16 %v19
  %v149 = vunpack.c.l.bf16 %v20
  %v150 = vunpack.c.h.bf16 %v20
  %v151 = vunpack.c.l.bf16 %v21
  %v152 = vunpack.c.h.bf16 %v21
  %v153 = vunpack.c.l.bf16 %v22
  %v154 = vunpack.c.h.bf16 %v22
  %v155 = vunpack.c.l.bf16 %v23
  %v156 = vunpack.c.h.bf16 %v23
  %v157 = vunpack.c.l.bf16 %v24
  %v158 = vunpack.c.h.bf16 %v24
  %v159 = vunpack.c.l.bf16 %v25
  %v160 = vunpack.c.h.bf16 %v25
  %v161 = vunpack.c.l.bf16 %v26
  %v162 = vunpack.c.h.bf16 %v26
  %v163 = vunpack.c.l.bf16 %v27
  %v164 = vunpack.c.h.bf16 %v27
  %v165 = vunpack.c.l.bf16 %v28
  %v166 = vunpack.c.h.bf16 %v28
  %v167 = vunpack.c.l.bf16 %v29
  %v168 = vunpack.c.h.bf16 %v29
  %v169 = vunpack.c.l.bf16 %v30
  %v170 = vunpack.c.h.bf16 %v30
  %v171 = vunpack.c.l.bf16 %v31
  %v172 = vunpack.c.h.bf16 %v31
  %v173 = vunpack.c.l.bf16 %v32
  %v174 = vunpack.c.h.bf16 %v32
  %v175 = vunpack.c.l.bf16 %v33
  %v176 = vunpack.c.h.bf16 %v33
  %v177 = vunpack.c.l.bf16 %v34
  %v178 = vunpack.c.h.bf16 %v34
  %v179 = vunpack.c.l.bf16 %v35
  %v180 = vunpack.c.h.bf16 %v35
  %v181 = vunpack.c.l.bf16 %v36
  %v182 = vunpack.c.h.bf16 %v36
  %v183 = vunpack.c.l.bf16 %v37
  %v184 = vunpack.c.h.bf16 %v37
  %v185 = vunpack.c.l.bf16 %v38
  %v186 = vunpack.c.h.bf16 %v38
  %v187 = vunpack.c.l.bf16 %v39
  %v188 = vunpack.c.h.bf16 %v39
  %v189 = vunpack.c.l.bf16 %v40
  %v190 = vunpack.c.h.bf16 %v40
  %v191 = vunpack.c.l.bf16 %v41
  %v192 = vunpack.c.h.bf16 %v41
  %v193 = vunpack.c.l.bf16 %v42
  %v194 = vunpack.c.h.bf16 %v42
  %v195 = vunpack.c.l.bf16 %v43
  %v196 = vunpack.c.h.bf16 %v43
  %v197 = vunpack.c.l.bf16 %v44
  %v198 = vunpack.c.h.bf16 %v44
  %v199 = vunpack.c.l.bf16 %v45
  %v200 = vunpack.c.h.bf16 %v45
  %v201 = vunpack.c.l.bf16 %v46
  %v202 = vunpack.c.h.bf16 %v46
  %v203 = vunpack.c.l.bf16 %v47
  %v204 = vunpack.c.h.bf16 %v47
  %v205 = vunpack.c.l.bf16 %v48
  %v206 = vunpack.c.h.bf16 %v48
  %v207 = vunpack.c.l.bf16 %v49
  %v208 = vunpack.c.h.bf16 %v49
  %v209 = vunpack.c.l.bf16 %v50
  %v210 = vunpack.c.h.bf16 %v50
  %v211 = vunpack.c.l.bf16 %v51
  %v212 = vunpack.c.h.bf16 %v51
  %v213 = vunpack.c.l.bf16 %v52
  %v214 = vunpack.c.h.bf16 %v52
  %v215 = vunpack.c.l.bf16 %v53
  %v216 = vunpack.c.h.bf16 %v53
  %v217 = vunpack.c.l.bf16 %v54
  %v218 = vunpack.c.h.bf16 %v54
  %v219 = vunpack.c.l.bf16 %v55
  %v220 = vunpack.c.h.bf16 %v55
  %v221 = vunpack.c.l.bf16 %v56
  %v222 = vunpack.c.h.bf16 %v56
  %v223 = vunpack.c.l.bf16 %v57
  %v224 = vunpack.c.h.bf16 %v57
  %v225 = vunpack.c.l.bf16 %v58
  %v226 = vunpack.c.h.bf16 %v58
  %v227 = vunpack.c.l.bf16 %v59
  %v228 = vunpack.c.h.bf16 %v59
  %v229 = vunpack.c.l.bf16 %v60
  %v230 = vunpack.c.h.bf16 %v60
  %v231 = vunpack.c.l.bf16 %v61
  %v232 = vunpack.c.h.bf16 %v61
  %v233 = vunpack.c.l.bf16 %v62
  %v234 = vunpack.c.h.bf16 %v62
  %v235 = vunpack.c.l.bf16 %v63
  %v236 = vunpack.c.h.bf16 %v63
  %v237 = vunpack.c.l.bf16 %v64
  %v238 = vunpack.c.h.bf16 %v64
  %v239 = vunpack.c.l.bf16 %v65
  %v240 = vunpack.c.h.bf16 %v65
  %v241 = vunpack.c.l.bf16 %v66
  %v242 = vunpack.c.h.bf16 %v66
  %v243 = vunpack.c.l.bf16 %v67
  %v244 = vunpack.c.h.bf16 %v67
  %v245 = vunpack.c.l.bf16 %v68
  %v246 = vunpack.c.h.bf16 %v68
  %v247 = vunpack.c.l.bf16 %v69
  %v248 = vunpack.c.h.bf16 %v69
  %v249 = vunpack.c.l.bf16 %v70
  %v250 = vunpack.c.h.bf16 %v70
  %v251 = vunpack.c.l.bf16 %v71
  %v252 = vunpack.c.h.bf16 %v71
  %v253 = vunpack.c.l.bf16 %v72
  %v254 = vunpack.c.h.bf16 %v72
  %v255 = vunpack.c.l.bf16 %v73
  %v256 = vunpack.c.h.bf16 %v73
  %v257 = vunpack.c.l.bf16 %v74
  %v258 = vunpack.c.h.bf16 %v74
  %v259 = vunpack.c.l.bf16 %v75
  %v260 = vunpack.c.h.bf16 %v75
  %v261 = vunpack.c.l.bf16 %v76
  %v262 = vunpack.c.h.bf16 %v76
  %v263 = vunpack.c.l.bf16 %v77
  %v264 = vunpack.c.h.bf16 %v77
  %v265 = vunpack.c.l.bf16 %v78
  %v266 = vunpack.c.h.bf16 %v78
  %v267 = vunpack.c.l.bf16 %v79
  %v268 = vunpack.c.h.bf16 %v79
  %v269 = vunpack.c.l.bf16 %v80
  %v270 = vunpack.c.h.bf16 %v80
  %v271 = vunpack.c.l.bf16 %v81
  %v272 = vunpack.c.h.bf16 %v81
  %v273 = vunpack.c.l.bf16 %v82
  %v274 = vunpack.c.h.bf16 %v82
  %v275 = vunpack.c.l.bf16 %v83
  %v276 = vunpack.c.h.bf16 %v83
  %v277 = vunpack.c.l.bf16 %v84
  %v278 = vunpack.c.h.bf16 %v84
  %v279 = vunpack.c.l.bf16 %v85
  %v280 = vunpack.c.h.bf16 %v85
  %v281 = vunpack.c.l.bf16 %v86
  %v282 = vunpack.c.h.bf16 %v86
  %v283 = vunpack.c.l.bf16 %v87
  %v284 = vunpack.c.h.bf16 %v87
  %v285 = vunpack.c.l.bf16 %v88
  %v286 = vunpack.c.h.bf16 %v88
  %v287 = vunpack.c.l.bf16 %v89
  %v288 = vunpack.c.h.bf16 %v89
  %v289 = vunpack.c.l.bf16 %v90
  %v290 = vunpack.c.h.bf16 %v90
  %v291 = vunpack.c.l.bf16 %v91
  %v292 = vunpack.c.h.bf16 %v91
  %v293 = vunpack.c.l.bf16 %v92
  %v294 = vunpack.c.h.bf16 %v92
  %v295 = vunpack.c.l.bf16 %v93
  %v296 = vunpack.c.h.bf16 %v93
  %v297 = vunpack.c.l.bf16 %v94
  %v298 = vunpack.c.h.bf16 %v94
  %v299 = vunpack.c.l.bf16 %v95
  %v300 = vunpack.c.h.bf16 %v95
  %v301 = vunpack.c.l.bf16 %v96
  %v302 = vunpack.c.h.bf16 %v96
  %v303 = vunpack.c.l.bf16 %v97
  %v304 = vunpack.c.h.bf16 %v97
  %v305 = vunpack.c.l.bf16 %v98
  %v306 = vunpack.c.h.bf16 %v98
  %v307 = vunpack.c.l.bf16 %v99
  %v308 = vunpack.c.h.bf16 %v99
  %v309 = vunpack.c.l.bf16 %v100
  %v310 = vunpack.c.h.bf16 %v100
  %v311 = vunpack.c.l.bf16 %v101
  %v312 = vunpack.c.h.bf16 %v101
  %v313 = vunpack.c.l.bf16 %v102
  %v314 = vunpack.c.h.bf16 %v102
  %v315 = vunpack.c.l.bf16 %v103
  %v316 = vunpack.c.h.bf16 %v103
  %v317 = vunpack.c.l.bf16 %v104
  %v318 = vunpack.c.h.bf16 %v104
  %v319 = vunpack.c.l.bf16 %v105
  %v320 = vunpack.c.h.bf16 %v105
  %v321 = vunpack.c.l.bf16 %v106
  %v322 = vunpack.c.h.bf16 %v106
  %v323 = vunpack.c.l.bf16 %v107
  %v324 = vunpack.c.h.bf16 %v107
  %v325 = vunpack.c.l.bf16 %v108
  %v326 = vunpack.c.h.bf16 %v108
  %v327 = vunpack.c.l.bf16 %v109
  %v328 = vunpack.c.h.bf16 %v109
  %v329 = vunpack.c.l.bf16 %v110
  %v330 = vunpack.c.h.bf16 %v110
  %v331 = vunpack.c.l.bf16 %v111
  %v332 = vunpack.c.h.bf16 %v111
  %v333 = vunpack.c.l.bf16 %v112
  %v334 = vunpack.c.h.bf16 %v112
  %v335 = vunpack.c.l.bf16 %v113
  %v336 = vunpack.c.h.bf16 %v113
  %v337 = vunpack.c.l.bf16 %v114
  %v338 = vunpack.c.h.bf16 %v114
  %v339 = vunpack.c.l.bf16 %v115
  %v340 = vunpack.c.h.bf16 %v115
  %v341 = vunpack.c.l.bf16 %v116
  %v342 = vunpack.c.h.bf16 %v116
  %v343 = vunpack.c.l.bf16 %v117
  %v344 = vunpack.c.h.bf16 %v117
  %v345 = vunpack.c.l.bf16 %v118
  %v346 = vunpack.c.h.bf16 %v118
  %v347 = vunpack.c.l.bf16 %v119
  %v348 = vunpack.c.h.bf16 %v119
  %v349 = vunpack.c.l.bf16 %v120
  %v350 = vunpack.c.h.bf16 %v120
  %v351 = vunpack.c.l.bf16 %v121
  %v352 = vunpack.c.h.bf16 %v121
  %v353 = vunpack.c.l.bf16 %v122
  %v354 = vunpack.c.h.bf16 %v122
  %v355 = vunpack.c.l.bf16 %v123
  %v356 = vunpack.c.h.bf16 %v123
  %v357 = vunpack.c.l.bf16 %v124
  %v358 = vunpack.c.h.bf16 %v124
  %v359 = vunpack.c.l.bf16 %v125
  %v360 = vunpack.c.h.bf16 %v125
  %v361 = vunpack.c.l.bf16 %v126
  %v362 = vunpack.c.h.bf16 %v126
  %v363 = vunpack.c.l.bf16 %v127
  %v364 = vunpack.c.h.bf16 %v127
  %v365 = vunpack.c.l.bf16 %v128
  %v366 = vunpack.c.h.bf16 %v128
  %v367 = vunpack.c.l.bf16 %v129
  %v368 = vunpack.c.h.bf16 %v129
  %v369 = vunpack.c.l.bf16 %v130
  %v370 = vunpack.c.h.bf16 %v130
  %v371 = vunpack.c.l.bf16 %v131
  %v372 = vunpack.c.h.bf16 %v131
  %v373 = vunpack.c.l.bf16 %v132
  %v374 = vunpack.c.h.bf16 %v132
  %v375 = vunpack.c.l.bf16 %v133
  %v376 = vunpack.c.h.bf16 %v133
  %v377 = vunpack.c.l.bf16 %v134
  %v378 = vunpack.c.h.bf16 %v134
  %v379 = vunpack.c.l.bf16 %v135
  %v380 = vunpack.c.h.bf16 %v135
  %v381 = vunpack.c.l.bf16 %v136
  %v382 = vunpack.c.h.bf16 %v136
  %v383 = vunpack.c.l.bf16 %v137
  %v384 = vunpack.c.h.bf16 %v137
  %v385 = vunpack.c.l.bf16 %v138
  %v386 = vunpack.c.h.bf16 %v138
  %v387 = vunpack.c.l.bf16 %v139
  %v388 = vunpack.c.h.bf16 %v139
  %v389 = vunpack.c.l.bf16 %v140
  %v390 = vunpack.c.h.bf16 %v140
  %v391 = vunpack.c.l.bf16 %v141
  %v392 = vunpack.c.h.bf16 %v141
  %v393 = vunpack.c.l.bf16 %v142
  %v394 = vunpack.c.h.bf16 %v142
  %v395 = vunpack.c.l.bf16 %v143
  %v396 = vunpack.c.h.bf16 %v143
  %v397 = vunpack.c.l.bf16 %v144
  %v398 = vunpack.c.h.bf16 %v144
  %v399 = vunpack.c.l.bf16 %v145
  %v400 = vunpack.c.h.bf16 %v145
  %v401 = vunpack.c.l.bf16 %v146
  %v402 = vunpack.c.h.bf16 %v146
  %v403 = vld [vmem:[%s0] sm:$0xf]
  %v405 = vperm.slane %v403, 0
  %v406 = vperm.slane %v403, 1
  %v407 = vperm.slane %v403, 2
  %v408 = vperm.slane %v403, 3
  %v413 = vmul.f32 %v147, %v405
  %v414 = vmul.f32 %v148, %v406
  %v415 = vmul.f32 %v149, %v407
  %v416 = vmul.f32 %v150, %v408
  %v417 = vmul.f32 %v151, %v405
  %v418 = vmul.f32 %v152, %v406
  %v419 = vmul.f32 %v153, %v407
  %v420 = vmul.f32 %v154, %v408
  %v421 = vmul.f32 %v155, %v405
  %v422 = vmul.f32 %v156, %v406
  %v423 = vmul.f32 %v157, %v407
  %v424 = vmul.f32 %v158, %v408
  %v425 = vmul.f32 %v159, %v405
  %v426 = vmul.f32 %v160, %v406
  %v427 = vmul.f32 %v161, %v407
  %v428 = vmul.f32 %v162, %v408
  %v429 = vmul.f32 %v163, %v405
  %v430 = vmul.f32 %v164, %v406
  %v431 = vmul.f32 %v165, %v407
  %v432 = vmul.f32 %v166, %v408
  %v433 = vmul.f32 %v167, %v405
  %v434 = vmul.f32 %v168, %v406
  %v435 = vmul.f32 %v169, %v407
  %v436 = vmul.f32 %v170, %v408
  %v437 = vmul.f32 %v171, %v405
  %v438 = vmul.f32 %v172, %v406
  %v439 = vmul.f32 %v173, %v407
  %v440 = vmul.f32 %v174, %v408
  %v441 = vmul.f32 %v175, %v405
  %v442 = vmul.f32 %v176, %v406
  %v443 = vmul.f32 %v177, %v407
  %v444 = vmul.f32 %v178, %v408
  %v445 = vmul.f32 %v179, %v405
  %v446 = vmul.f32 %v180, %v406
  %v447 = vmul.f32 %v181, %v407
  %v448 = vmul.f32 %v182, %v408
  %v449 = vmul.f32 %v183, %v405
  %v450 = vmul.f32 %v184, %v406
  %v451 = vmul.f32 %v185, %v407
  %v452 = vmul.f32 %v186, %v408
  %v453 = vmul.f32 %v187, %v405
  %v454 = vmul.f32 %v188, %v406
  %v455 = vmul.f32 %v189, %v407
  %v456 = vmul.f32 %v190, %v408
  %v457 = vmul.f32 %v191, %v405
  %v458 = vmul.f32 %v192, %v406
  %v459 = vmul.f32 %v193, %v407
  %v460 = vmul.f32 %v194, %v408
  %v461 = vmul.f32 %v195, %v405
  %v462 = vmul.f32 %v196, %v406
  %v463 = vmul.f32 %v197, %v407
  %v464 = vmul.f32 %v198, %v408
  %v465 = vmul.f32 %v199, %v405
  %v466 = vmul.f32 %v200, %v406
  %v467 = vmul.f32 %v201, %v407
  %v468 = vmul.f32 %v202, %v408
  %v469 = vmul.f32 %v203, %v405
  %v470 = vmul.f32 %v204, %v406
  %v471 = vmul.f32 %v205, %v407
  %v472 = vmul.f32 %v206, %v408
  %v473 = vmul.f32 %v207, %v405
  %v474 = vmul.f32 %v208, %v406
  %v475 = vmul.f32 %v209, %v407
  %v476 = vmul.f32 %v210, %v408
  %v477 = vmul.f32 %v211, %v405
  %v478 = vmul.f32 %v212, %v406
  %v479 = vmul.f32 %v213, %v407
  %v480 = vmul.f32 %v214, %v408
  %v481 = vmul.f32 %v215, %v405
  %v482 = vmul.f32 %v216, %v406
  %v483 = vmul.f32 %v217, %v407
  %v484 = vmul.f32 %v218, %v408
  %v485 = vmul.f32 %v219, %v405
  %v486 = vmul.f32 %v220, %v406
  %v487 = vmul.f32 %v221, %v407
  %v488 = vmul.f32 %v222, %v408
  %v489 = vmul.f32 %v223, %v405
  %v490 = vmul.f32 %v224, %v406
  %v491 = vmul.f32 %v225, %v407
  %v492 = vmul.f32 %v226, %v408
  %v493 = vmul.f32 %v227, %v405
  %v494 = vmul.f32 %v228, %v406
  %v495 = vmul.f32 %v229, %v407
  %v496 = vmul.f32 %v230, %v408
  %v497 = vmul.f32 %v231, %v405
  %v498 = vmul.f32 %v232, %v406
  %v499 = vmul.f32 %v233, %v407
  %v500 = vmul.f32 %v234, %v408
  %v501 = vmul.f32 %v235, %v405
  %v502 = vmul.f32 %v236, %v406
  %v503 = vmul.f32 %v237, %v407
  %v504 = vmul.f32 %v238, %v408
  %v505 = vmul.f32 %v239, %v405
  %v506 = vmul.f32 %v240, %v406
  %v507 = vmul.f32 %v241, %v407
  %v508 = vmul.f32 %v242, %v408
  %v509 = vmul.f32 %v243, %v405
  %v510 = vmul.f32 %v244, %v406
  %v511 = vmul.f32 %v245, %v407
  %v512 = vmul.f32 %v246, %v408
  %v513 = vmul.f32 %v247, %v405
  %v514 = vmul.f32 %v248, %v406
  %v515 = vmul.f32 %v249, %v407
  %v516 = vmul.f32 %v250, %v408
  %v517 = vmul.f32 %v251, %v405
  %v518 = vmul.f32 %v252, %v406
  %v519 = vmul.f32 %v253, %v407
  %v520 = vmul.f32 %v254, %v408
  %v521 = vmul.f32 %v255, %v405
  %v522 = vmul.f32 %v256, %v406
  %v523 = vmul.f32 %v257, %v407
  %v524 = vmul.f32 %v258, %v408
  %v525 = vmul.f32 %v259, %v405
  %v526 = vmul.f32 %v260, %v406
  %v527 = vmul.f32 %v261, %v407
  %v528 = vmul.f32 %v262, %v408
  %v529 = vmul.f32 %v263, %v405
  %v530 = vmul.f32 %v264, %v406
  %v531 = vmul.f32 %v265, %v407
  %v532 = vmul.f32 %v266, %v408
  %v533 = vmul.f32 %v267, %v405
  %v534 = vmul.f32 %v268, %v406
  %v535 = vmul.f32 %v269, %v407
  %v536 = vmul.f32 %v270, %v408
  %v537 = vmul.f32 %v271, %v405
  %v538 = vmul.f32 %v272, %v406
  %v539 = vmul.f32 %v273, %v407
  %v540 = vmul.f32 %v274, %v408
  %v541 = vmul.f32 %v275, %v405
  %v542 = vmul.f32 %v276, %v406
  %v543 = vmul.f32 %v277, %v407
  %v544 = vmul.f32 %v278, %v408
  %v545 = vmul.f32 %v279, %v405
  %v546 = vmul.f32 %v280, %v406
  %v547 = vmul.f32 %v281, %v407
  %v548 = vmul.f32 %v282, %v408
  %v549 = vmul.f32 %v283, %v405
  %v550 = vmul.f32 %v284, %v406
  %v551 = vmul.f32 %v285, %v407
  %v552 = vmul.f32 %v286, %v408
  %v553 = vmul.f32 %v287, %v405
  %v554 = vmul.f32 %v288, %v406
  %v555 = vmul.f32 %v289, %v407
  %v556 = vmul.f32 %v290, %v408
  %v557 = vmul.f32 %v291, %v405
  %v558 = vmul.f32 %v292, %v406
  %v559 = vmul.f32 %v293, %v407
  %v560 = vmul.f32 %v294, %v408
  %v561 = vmul.f32 %v295, %v405
  %v562 = vmul.f32 %v296, %v406
  %v563 = vmul.f32 %v297, %v407
  %v564 = vmul.f32 %v298, %v408
  %v565 = vmul.f32 %v299, %v405
  %v566 = vmul.f32 %v300, %v406
  %v567 = vmul.f32 %v301, %v407
  %v568 = vmul.f32 %v302, %v408
  %v569 = vmul.f32 %v303, %v405
  %v570 = vmul.f32 %v304, %v406
  %v571 = vmul.f32 %v305, %v407
  %v572 = vmul.f32 %v306, %v408
  %v573 = vmul.f32 %v307, %v405
  %v574 = vmul.f32 %v308, %v406
  %v575 = vmul.f32 %v309, %v407
  %v576 = vmul.f32 %v310, %v408
  %v577 = vmul.f32 %v311, %v405
  %v578 = vmul.f32 %v312, %v406
  %v579 = vmul.f32 %v313, %v407
  %v580 = vmul.f32 %v314, %v408
  %v581 = vmul.f32 %v315, %v405
  %v582 = vmul.f32 %v316, %v406
  %v583 = vmul.f32 %v317, %v407
  %v584 = vmul.f32 %v318, %v408
  %v585 = vmul.f32 %v319, %v405
  %v586 = vmul.f32 %v320, %v406
  %v587 = vmul.f32 %v321, %v407
  %v588 = vmul.f32 %v322, %v408
  %v589 = vmul.f32 %v323, %v405
  %v590 = vmul.f32 %v324, %v406
  %v591 = vmul.f32 %v325, %v407
  %v592 = vmul.f32 %v326, %v408
  %v593 = vmul.f32 %v327, %v405
  %v594 = vmul.f32 %v328, %v406
  %v595 = vmul.f32 %v329, %v407
  %v596 = vmul.f32 %v330, %v408
  %v597 = vmul.f32 %v331, %v405
  %v598 = vmul.f32 %v332, %v406
  %v599 = vmul.f32 %v333, %v407
  %v600 = vmul.f32 %v334, %v408
  %v601 = vmul.f32 %v335, %v405
  %v602 = vmul.f32 %v336, %v406
  %v603 = vmul.f32 %v337, %v407
  %v604 = vmul.f32 %v338, %v408
  %v605 = vmul.f32 %v339, %v405
  %v606 = vmul.f32 %v340, %v406
  %v607 = vmul.f32 %v341, %v407
  %v608 = vmul.f32 %v342, %v408
  %v609 = vmul.f32 %v343, %v405
  %v610 = vmul.f32 %v344, %v406
  %v611 = vmul.f32 %v345, %v407
  %v612 = vmul.f32 %v346, %v408
  %v613 = vmul.f32 %v347, %v405
  %v614 = vmul.f32 %v348, %v406
  %v615 = vmul.f32 %v349, %v407
  %v616 = vmul.f32 %v350, %v408
  %v617 = vmul.f32 %v351, %v405
  %v618 = vmul.f32 %v352, %v406
  %v619 = vmul.f32 %v353, %v407
  %v620 = vmul.f32 %v354, %v408
  %v621 = vmul.f32 %v355, %v405
  %v622 = vmul.f32 %v356, %v406
  %v623 = vmul.f32 %v357, %v407
  %v624 = vmul.f32 %v358, %v408
  %v625 = vmul.f32 %v359, %v405
  %v626 = vmul.f32 %v360, %v406
  %v627 = vmul.f32 %v361, %v407
  %v628 = vmul.f32 %v362, %v408
  %v629 = vmul.f32 %v363, %v405
  %v630 = vmul.f32 %v364, %v406
  %v631 = vmul.f32 %v365, %v407
  %v632 = vmul.f32 %v366, %v408
  %v633 = vmul.f32 %v367, %v405
  %v634 = vmul.f32 %v368, %v406
  %v635 = vmul.f32 %v369, %v407
  %v636 = vmul.f32 %v370, %v408
  %v637 = vmul.f32 %v371, %v405
  %v638 = vmul.f32 %v372, %v406
  %v639 = vmul.f32 %v373, %v407
  %v640 = vmul.f32 %v374, %v408
  %v641 = vmul.f32 %v375, %v405
  %v642 = vmul.f32 %v376, %v406
  %v643 = vmul.f32 %v377, %v407
  %v644 = vmul.f32 %v378, %v408
  %v645 = vmul.f32 %v379, %v405
  %v646 = vmul.f32 %v380, %v406
  %v647 = vmul.f32 %v381, %v407
  %v648 = vmul.f32 %v382, %v408
  %v649 = vmul.f32 %v383, %v405
  %v650 = vmul.f32 %v384, %v406
  %v651 = vmul.f32 %v385, %v407
  %v652 = vmul.f32 %v386, %v408
  %v653 = vmul.f32 %v387, %v405
  %v654 = vmul.f32 %v388, %v406
  %v655 = vmul.f32 %v389, %v407
  %v656 = vmul.f32 %v390, %v408
  %v657 = vmul.f32 %v391, %v405
  %v658 = vmul.f32 %v392, %v406
  %v659 = vmul.f32 %v393, %v407
  %v660 = vmul.f32 %v394, %v408
  %v661 = vmul.f32 %v395, %v405
  %v662 = vmul.f32 %v396, %v406
  %v663 = vmul.f32 %v397, %v407
  %v664 = vmul.f32 %v398, %v408
  %v665 = vmul.f32 %v399, %v405
  %v666 = vmul.f32 %v400, %v406
  %v667 = vmul.f32 %v401, %v407
  %v668 = vmul.f32 %v402, %v408
  %v669 = vld [vmem:[%s1] sm:$0xf]
  %v671 = vperm.slane %v669, 0
  %v672 = vperm.slane %v669, 1
  %v673 = vperm.slane %v669, 2
  %v674 = vperm.slane %v669, 3
  %v679 = vadd.f32 %v413, %v671
  %v680 = vadd.f32 %v414, %v672
  %v681 = vadd.f32 %v415, %v673
  %v682 = vadd.f32 %v416, %v674
  %v683 = vadd.f32 %v417, %v671
  %v684 = vadd.f32 %v418, %v672
  %v685 = vadd.f32 %v419, %v673
  %v686 = vadd.f32 %v420, %v674
  %v687 = vadd.f32 %v421, %v671
  %v688 = vadd.f32 %v422, %v672
  %v689 = vadd.f32 %v423, %v673
  %v690 = vadd.f32 %v424, %v674
  %v691 = vadd.f32 %v425, %v671
  %v692 = vadd.f32 %v426, %v672
  %v693 = vadd.f32 %v427, %v673
  %v694 = vadd.f32 %v428, %v674
  %v695 = vadd.f32 %v429, %v671
  %v696 = vadd.f32 %v430, %v672
  %v697 = vadd.f32 %v431, %v673
  %v698 = vadd.f32 %v432, %v674
  %v699 = vadd.f32 %v433, %v671
  %v700 = vadd.f32 %v434, %v672
  %v701 = vadd.f32 %v435, %v673
  %v702 = vadd.f32 %v436, %v674
  %v703 = vadd.f32 %v437, %v671
  %v704 = vadd.f32 %v438, %v672
  %v705 = vadd.f32 %v439, %v673
  %v706 = vadd.f32 %v440, %v674
  %v707 = vadd.f32 %v441, %v671
  %v708 = vadd.f32 %v442, %v672
  %v709 = vadd.f32 %v443, %v673
  %v710 = vadd.f32 %v444, %v674
  %v711 = vadd.f32 %v445, %v671
  %v712 = vadd.f32 %v446, %v672
  %v713 = vadd.f32 %v447, %v673
  %v714 = vadd.f32 %v448, %v674
  %v715 = vadd.f32 %v449, %v671
  %v716 = vadd.f32 %v450, %v672
  %v717 = vadd.f32 %v451, %v673
  %v718 = vadd.f32 %v452, %v674
  %v719 = vadd.f32 %v453, %v671
  %v720 = vadd.f32 %v454, %v672
  %v721 = vadd.f32 %v455, %v673
  %v722 = vadd.f32 %v456, %v674
  %v723 = vadd.f32 %v457, %v671
  %v724 = vadd.f32 %v458, %v672
  %v725 = vadd.f32 %v459, %v673
  %v726 = vadd.f32 %v460, %v674
  %v727 = vadd.f32 %v461, %v671
  %v728 = vadd.f32 %v462, %v672
  %v729 = vadd.f32 %v463, %v673
  %v730 = vadd.f32 %v464, %v674
  %v731 = vadd.f32 %v465, %v671
  %v732 = vadd.f32 %v466, %v672
  %v733 = vadd.f32 %v467, %v673
  %v734 = vadd.f32 %v468, %v674
  %v735 = vadd.f32 %v469, %v671
  %v736 = vadd.f32 %v470, %v672
  %v737 = vadd.f32 %v471, %v673
  %v738 = vadd.f32 %v472, %v674
  %v739 = vadd.f32 %v473, %v671
  %v740 = vadd.f32 %v474, %v672
  %v741 = vadd.f32 %v475, %v673
  %v742 = vadd.f32 %v476, %v674
  %v743 = vadd.f32 %v477, %v671
  %v744 = vadd.f32 %v478, %v672
  %v745 = vadd.f32 %v479, %v673
  %v746 = vadd.f32 %v480, %v674
  %v747 = vadd.f32 %v481, %v671
  %v748 = vadd.f32 %v482, %v672
  %v749 = vadd.f32 %v483, %v673
  %v750 = vadd.f32 %v484, %v674
  %v751 = vadd.f32 %v485, %v671
  %v752 = vadd.f32 %v486, %v672
  %v753 = vadd.f32 %v487, %v673
  %v754 = vadd.f32 %v488, %v674
  %v755 = vadd.f32 %v489, %v671
  %v756 = vadd.f32 %v490, %v672
  %v757 = vadd.f32 %v491, %v673
  %v758 = vadd.f32 %v492, %v674
  %v759 = vadd.f32 %v493, %v671
  %v760 = vadd.f32 %v494, %v672
  %v761 = vadd.f32 %v495, %v673
  %v762 = vadd.f32 %v496, %v674
  %v763 = vadd.f32 %v497, %v671
  %v764 = vadd.f32 %v498, %v672
  %v765 = vadd.f32 %v499, %v673
  %v766 = vadd.f32 %v500, %v674
  %v767 = vadd.f32 %v501, %v671
  %v768 = vadd.f32 %v502, %v672
  %v769 = vadd.f32 %v503, %v673
  %v770 = vadd.f32 %v504, %v674
  %v771 = vadd.f32 %v505, %v671
  %v772 = vadd.f32 %v506, %v672
  %v773 = vadd.f32 %v507, %v673
  %v774 = vadd.f32 %v508, %v674
  %v775 = vadd.f32 %v509, %v671
  %v776 = vadd.f32 %v510, %v672
  %v777 = vadd.f32 %v511, %v673
  %v778 = vadd.f32 %v512, %v674
  %v779 = vadd.f32 %v513, %v671
  %v780 = vadd.f32 %v514, %v672
  %v781 = vadd.f32 %v515, %v673
  %v782 = vadd.f32 %v516, %v674
  %v783 = vadd.f32 %v517, %v671
  %v784 = vadd.f32 %v518, %v672
  %v785 = vadd.f32 %v519, %v673
  %v786 = vadd.f32 %v520, %v674
  %v787 = vadd.f32 %v521, %v671
  %v788 = vadd.f32 %v522, %v672
  %v789 = vadd.f32 %v523, %v673
  %v790 = vadd.f32 %v524, %v674
  %v791 = vadd.f32 %v525, %v671
  %v792 = vadd.f32 %v526, %v672
  %v793 = vadd.f32 %v527, %v673
  %v794 = vadd.f32 %v528, %v674
  %v795 = vadd.f32 %v529, %v671
  %v796 = vadd.f32 %v530, %v672
  %v797 = vadd.f32 %v531, %v673
  %v798 = vadd.f32 %v532, %v674
  %v799 = vadd.f32 %v533, %v671
  %v800 = vadd.f32 %v534, %v672
  %v801 = vadd.f32 %v535, %v673
  %v802 = vadd.f32 %v536, %v674
  %v803 = vadd.f32 %v537, %v671
  %v804 = vadd.f32 %v538, %v672
  %v805 = vadd.f32 %v539, %v673
  %v806 = vadd.f32 %v540, %v674
  %v807 = vadd.f32 %v541, %v671
  %v808 = vadd.f32 %v542, %v672
  %v809 = vadd.f32 %v543, %v673
  %v810 = vadd.f32 %v544, %v674
  %v811 = vadd.f32 %v545, %v671
  %v812 = vadd.f32 %v546, %v672
  %v813 = vadd.f32 %v547, %v673
  %v814 = vadd.f32 %v548, %v674
  %v815 = vadd.f32 %v549, %v671
  %v816 = vadd.f32 %v550, %v672
  %v817 = vadd.f32 %v551, %v673
  %v818 = vadd.f32 %v552, %v674
  %v819 = vadd.f32 %v553, %v671
  %v820 = vadd.f32 %v554, %v672
  %v821 = vadd.f32 %v555, %v673
  %v822 = vadd.f32 %v556, %v674
  %v823 = vadd.f32 %v557, %v671
  %v824 = vadd.f32 %v558, %v672
  %v825 = vadd.f32 %v559, %v673
  %v826 = vadd.f32 %v560, %v674
  %v827 = vadd.f32 %v561, %v671
  %v828 = vadd.f32 %v562, %v672
  %v829 = vadd.f32 %v563, %v673
  %v830 = vadd.f32 %v564, %v674
  %v831 = vadd.f32 %v565, %v671
  %v832 = vadd.f32 %v566, %v672
  %v833 = vadd.f32 %v567, %v673
  %v834 = vadd.f32 %v568, %v674
  %v835 = vadd.f32 %v569, %v671
  %v836 = vadd.f32 %v570, %v672
  %v837 = vadd.f32 %v571, %v673
  %v838 = vadd.f32 %v572, %v674
  %v839 = vadd.f32 %v573, %v671
  %v840 = vadd.f32 %v574, %v672
  %v841 = vadd.f32 %v575, %v673
  %v842 = vadd.f32 %v576, %v674
  %v843 = vadd.f32 %v577, %v671
  %v844 = vadd.f32 %v578, %v672
  %v845 = vadd.f32 %v579, %v673
  %v846 = vadd.f32 %v580, %v674
  %v847 = vadd.f32 %v581, %v671
  %v848 = vadd.f32 %v582, %v672
  %v849 = vadd.f32 %v583, %v673
  %v850 = vadd.f32 %v584, %v674
  %v851 = vadd.f32 %v585, %v671
  %v852 = vadd.f32 %v586, %v672
  %v853 = vadd.f32 %v587, %v673
  %v854 = vadd.f32 %v588, %v674
  %v855 = vadd.f32 %v589, %v671
  %v856 = vadd.f32 %v590, %v672
  %v857 = vadd.f32 %v591, %v673
  %v858 = vadd.f32 %v592, %v674
  %v859 = vadd.f32 %v593, %v671
  %v860 = vadd.f32 %v594, %v672
  %v861 = vadd.f32 %v595, %v673
  %v862 = vadd.f32 %v596, %v674
  %v863 = vadd.f32 %v597, %v671
  %v864 = vadd.f32 %v598, %v672
  %v865 = vadd.f32 %v599, %v673
  %v866 = vadd.f32 %v600, %v674
  %v867 = vadd.f32 %v601, %v671
  %v868 = vadd.f32 %v602, %v672
  %v869 = vadd.f32 %v603, %v673
  %v870 = vadd.f32 %v604, %v674
  %v871 = vadd.f32 %v605, %v671
  %v872 = vadd.f32 %v606, %v672
  %v873 = vadd.f32 %v607, %v673
  %v874 = vadd.f32 %v608, %v674
  %v875 = vadd.f32 %v609, %v671
  %v876 = vadd.f32 %v610, %v672
  %v877 = vadd.f32 %v611, %v673
  %v878 = vadd.f32 %v612, %v674
  %v879 = vadd.f32 %v613, %v671
  %v880 = vadd.f32 %v614, %v672
  %v881 = vadd.f32 %v615, %v673
  %v882 = vadd.f32 %v616, %v674
  %v883 = vadd.f32 %v617, %v671
  %v884 = vadd.f32 %v618, %v672
  %v885 = vadd.f32 %v619, %v673
  %v886 = vadd.f32 %v620, %v674
  %v887 = vadd.f32 %v621, %v671
  %v888 = vadd.f32 %v622, %v672
  %v889 = vadd.f32 %v623, %v673
  %v890 = vadd.f32 %v624, %v674
  %v891 = vadd.f32 %v625, %v671
  %v892 = vadd.f32 %v626, %v672
  %v893 = vadd.f32 %v627, %v673
  %v894 = vadd.f32 %v628, %v674
  %v895 = vadd.f32 %v629, %v671
  %v896 = vadd.f32 %v630, %v672
  %v897 = vadd.f32 %v631, %v673
  %v898 = vadd.f32 %v632, %v674
  %v899 = vadd.f32 %v633, %v671
  %v900 = vadd.f32 %v634, %v672
  %v901 = vadd.f32 %v635, %v673
  %v902 = vadd.f32 %v636, %v674
  %v903 = vadd.f32 %v637, %v671
  %v904 = vadd.f32 %v638, %v672
  %v905 = vadd.f32 %v639, %v673
  %v906 = vadd.f32 %v640, %v674
  %v907 = vadd.f32 %v641, %v671
  %v908 = vadd.f32 %v642, %v672
  %v909 = vadd.f32 %v643, %v673
  %v910 = vadd.f32 %v644, %v674
  %v911 = vadd.f32 %v645, %v671
  %v912 = vadd.f32 %v646, %v672
  %v913 = vadd.f32 %v647, %v673
  %v914 = vadd.f32 %v648, %v674
  %v915 = vadd.f32 %v649, %v671
  %v916 = vadd.f32 %v650, %v672
  %v917 = vadd.f32 %v651, %v673
  %v918 = vadd.f32 %v652, %v674
  %v919 = vadd.f32 %v653, %v671
  %v920 = vadd.f32 %v654, %v672
  %v921 = vadd.f32 %v655, %v673
  %v922 = vadd.f32 %v656, %v674
  %v923 = vadd.f32 %v657, %v671
  %v924 = vadd.f32 %v658, %v672
  %v925 = vadd.f32 %v659, %v673
  %v926 = vadd.f32 %v660, %v674
  %v927 = vadd.f32 %v661, %v671
  %v928 = vadd.f32 %v662, %v672
  %v929 = vadd.f32 %v663, %v673
  %v930 = vadd.f32 %v664, %v674
  %v931 = vadd.f32 %v665, %v671
  %v932 = vadd.f32 %v666, %v672
  %v933 = vadd.f32 %v667, %v673
  %v934 = vadd.f32 %v668, %v674
  %vm935 = vcmp.ge.f32.partialorder %v679, 0.0
  %vm936 = vcmp.ge.f32.partialorder %v680, 0.0
  %vm937 = vcmp.ge.f32.partialorder %v681, 0.0
  %vm938 = vcmp.ge.f32.partialorder %v682, 0.0
  %vm939 = vcmp.ge.f32.partialorder %v683, 0.0
  %vm940 = vcmp.ge.f32.partialorder %v684, 0.0
  %vm941 = vcmp.ge.f32.partialorder %v685, 0.0
  %vm942 = vcmp.ge.f32.partialorder %v686, 0.0
  %vm943 = vcmp.ge.f32.partialorder %v687, 0.0
  %vm944 = vcmp.ge.f32.partialorder %v688, 0.0
  %vm945 = vcmp.ge.f32.partialorder %v689, 0.0
  %vm946 = vcmp.ge.f32.partialorder %v690, 0.0
  %vm947 = vcmp.ge.f32.partialorder %v691, 0.0
  %vm948 = vcmp.ge.f32.partialorder %v692, 0.0
  %vm949 = vcmp.ge.f32.partialorder %v693, 0.0
  %vm950 = vcmp.ge.f32.partialorder %v694, 0.0
  %vm951 = vcmp.ge.f32.partialorder %v695, 0.0
  %vm952 = vcmp.ge.f32.partialorder %v696, 0.0
  %vm953 = vcmp.ge.f32.partialorder %v697, 0.0
  %vm954 = vcmp.ge.f32.partialorder %v698, 0.0
  %vm955 = vcmp.ge.f32.partialorder %v699, 0.0
  %vm956 = vcmp.ge.f32.partialorder %v700, 0.0
  %vm957 = vcmp.ge.f32.partialorder %v701, 0.0
  %vm958 = vcmp.ge.f32.partialorder %v702, 0.0
  %vm959 = vcmp.ge.f32.partialorder %v703, 0.0
  %vm960 = vcmp.ge.f32.partialorder %v704, 0.0
  %vm961 = vcmp.ge.f32.partialorder %v705, 0.0
  %vm962 = vcmp.ge.f32.partialorder %v706, 0.0
  %vm963 = vcmp.ge.f32.partialorder %v707, 0.0
  %vm964 = vcmp.ge.f32.partialorder %v708, 0.0
  %vm965 = vcmp.ge.f32.partialorder %v709, 0.0
  %vm966 = vcmp.ge.f32.partialorder %v710, 0.0
  %vm967 = vcmp.ge.f32.partialorder %v711, 0.0
  %vm968 = vcmp.ge.f32.partialorder %v712, 0.0
  %vm969 = vcmp.ge.f32.partialorder %v713, 0.0
  %vm970 = vcmp.ge.f32.partialorder %v714, 0.0
  %vm971 = vcmp.ge.f32.partialorder %v715, 0.0
  %vm972 = vcmp.ge.f32.partialorder %v716, 0.0
  %vm973 = vcmp.ge.f32.partialorder %v717, 0.0
  %vm974 = vcmp.ge.f32.partialorder %v718, 0.0
  %vm975 = vcmp.ge.f32.partialorder %v719, 0.0
  %vm976 = vcmp.ge.f32.partialorder %v720, 0.0
  %vm977 = vcmp.ge.f32.partialorder %v721, 0.0
  %vm978 = vcmp.ge.f32.partialorder %v722, 0.0
  %vm979 = vcmp.ge.f32.partialorder %v723, 0.0
  %vm980 = vcmp.ge.f32.partialorder %v724, 0.0
  %vm981 = vcmp.ge.f32.partialorder %v725, 0.0
  %vm982 = vcmp.ge.f32.partialorder %v726, 0.0
  %vm983 = vcmp.ge.f32.partialorder %v727, 0.0
  %vm984 = vcmp.ge.f32.partialorder %v728, 0.0
  %vm985 = vcmp.ge.f32.partialorder %v729, 0.0
  %vm986 = vcmp.ge.f32.partialorder %v730, 0.0
  %vm987 = vcmp.ge.f32.partialorder %v731, 0.0
  %vm988 = vcmp.ge.f32.partialorder %v732, 0.0
  %vm989 = vcmp.ge.f32.partialorder %v733, 0.0
  %vm990 = vcmp.ge.f32.partialorder %v734, 0.0
  %vm991 = vcmp.ge.f32.partialorder %v735, 0.0
  %vm992 = vcmp.ge.f32.partialorder %v736, 0.0
  %vm993 = vcmp.ge.f32.partialorder %v737, 0.0
  %vm994 = vcmp.ge.f32.partialorder %v738, 0.0
  %vm995 = vcmp.ge.f32.partialorder %v739, 0.0
  %vm996 = vcmp.ge.f32.partialorder %v740, 0.0
  %vm997 = vcmp.ge.f32.partialorder %v741, 0.0
  %vm998 = vcmp.ge.f32.partialorder %v742, 0.0
  %vm999 = vcmp.ge.f32.partialorder %v743, 0.0
  %vm1000 = vcmp.ge.f32.partialorder %v744, 0.0
  %vm1001 = vcmp.ge.f32.partialorder %v745, 0.0
  %vm1002 = vcmp.ge.f32.partialorder %v746, 0.0
  %vm1003 = vcmp.ge.f32.partialorder %v747, 0.0
  %vm1004 = vcmp.ge.f32.partialorder %v748, 0.0
  %vm1005 = vcmp.ge.f32.partialorder %v749, 0.0
  %vm1006 = vcmp.ge.f32.partialorder %v750, 0.0
  %vm1007 = vcmp.ge.f32.partialorder %v751, 0.0
  %vm1008 = vcmp.ge.f32.partialorder %v752, 0.0
  %vm1009 = vcmp.ge.f32.partialorder %v753, 0.0
  %vm1010 = vcmp.ge.f32.partialorder %v754, 0.0
  %vm1011 = vcmp.ge.f32.partialorder %v755, 0.0
  %vm1012 = vcmp.ge.f32.partialorder %v756, 0.0
  %vm1013 = vcmp.ge.f32.partialorder %v757, 0.0
  %vm1014 = vcmp.ge.f32.partialorder %v758, 0.0
  %vm1015 = vcmp.ge.f32.partialorder %v759, 0.0
  %vm1016 = vcmp.ge.f32.partialorder %v760, 0.0
  %vm1017 = vcmp.ge.f32.partialorder %v761, 0.0
  %vm1018 = vcmp.ge.f32.partialorder %v762, 0.0
  %vm1019 = vcmp.ge.f32.partialorder %v763, 0.0
  %vm1020 = vcmp.ge.f32.partialorder %v764, 0.0
  %vm1021 = vcmp.ge.f32.partialorder %v765, 0.0
  %vm1022 = vcmp.ge.f32.partialorder %v766, 0.0
  %vm1023 = vcmp.ge.f32.partialorder %v767, 0.0
  %vm1024 = vcmp.ge.f32.partialorder %v768, 0.0
  %vm1025 = vcmp.ge.f32.partialorder %v769, 0.0
  %vm1026 = vcmp.ge.f32.partialorder %v770, 0.0
  %vm1027 = vcmp.ge.f32.partialorder %v771, 0.0
  %vm1028 = vcmp.ge.f32.partialorder %v772, 0.0
  %vm1029 = vcmp.ge.f32.partialorder %v773, 0.0
  %vm1030 = vcmp.ge.f32.partialorder %v774, 0.0
  %vm1031 = vcmp.ge.f32.partialorder %v775, 0.0
  %vm1032 = vcmp.ge.f32.partialorder %v776, 0.0
  %vm1033 = vcmp.ge.f32.partialorder %v777, 0.0
  %vm1034 = vcmp.ge.f32.partialorder %v778, 0.0
  %vm1035 = vcmp.ge.f32.partialorder %v779, 0.0
  %vm1036 = vcmp.ge.f32.partialorder %v780, 0.0
  %vm1037 = vcmp.ge.f32.partialorder %v781, 0.0
  %vm1038 = vcmp.ge.f32.partialorder %v782, 0.0
  %vm1039 = vcmp.ge.f32.partialorder %v783, 0.0
  %vm1040 = vcmp.ge.f32.partialorder %v784, 0.0
  %vm1041 = vcmp.ge.f32.partialorder %v785, 0.0
  %vm1042 = vcmp.ge.f32.partialorder %v786, 0.0
  %vm1043 = vcmp.ge.f32.partialorder %v787, 0.0
  %vm1044 = vcmp.ge.f32.partialorder %v788, 0.0
  %vm1045 = vcmp.ge.f32.partialorder %v789, 0.0
  %vm1046 = vcmp.ge.f32.partialorder %v790, 0.0
  %vm1047 = vcmp.ge.f32.partialorder %v791, 0.0
  %vm1048 = vcmp.ge.f32.partialorder %v792, 0.0
  %vm1049 = vcmp.ge.f32.partialorder %v793, 0.0
  %vm1050 = vcmp.ge.f32.partialorder %v794, 0.0
  %vm1051 = vcmp.ge.f32.partialorder %v795, 0.0
  %vm1052 = vcmp.ge.f32.partialorder %v796, 0.0
  %vm1053 = vcmp.ge.f32.partialorder %v797, 0.0
  %vm1054 = vcmp.ge.f32.partialorder %v798, 0.0
  %vm1055 = vcmp.ge.f32.partialorder %v799, 0.0
  %vm1056 = vcmp.ge.f32.partialorder %v800, 0.0
  %vm1057 = vcmp.ge.f32.partialorder %v801, 0.0
  %vm1058 = vcmp.ge.f32.partialorder %v802, 0.0
  %vm1059 = vcmp.ge.f32.partialorder %v803, 0.0
  %vm1060 = vcmp.ge.f32.partialorder %v804, 0.0
  %vm1061 = vcmp.ge.f32.partialorder %v805, 0.0
  %vm1062 = vcmp.ge.f32.partialorder %v806, 0.0
  %vm1063 = vcmp.ge.f32.partialorder %v807, 0.0
  %vm1064 = vcmp.ge.f32.partialorder %v808, 0.0
  %vm1065 = vcmp.ge.f32.partialorder %v809, 0.0
  %vm1066 = vcmp.ge.f32.partialorder %v810, 0.0
  %vm1067 = vcmp.ge.f32.partialorder %v811, 0.0
  %vm1068 = vcmp.ge.f32.partialorder %v812, 0.0
  %vm1069 = vcmp.ge.f32.partialorder %v813, 0.0
  %vm1070 = vcmp.ge.f32.partialorder %v814, 0.0
  %vm1071 = vcmp.ge.f32.partialorder %v815, 0.0
  %vm1072 = vcmp.ge.f32.partialorder %v816, 0.0
  %vm1073 = vcmp.ge.f32.partialorder %v817, 0.0
  %vm1074 = vcmp.ge.f32.partialorder %v818, 0.0
  %vm1075 = vcmp.ge.f32.partialorder %v819, 0.0
  %vm1076 = vcmp.ge.f32.partialorder %v820, 0.0
  %vm1077 = vcmp.ge.f32.partialorder %v821, 0.0
  %vm1078 = vcmp.ge.f32.partialorder %v822, 0.0
  %vm1079 = vcmp.ge.f32.partialorder %v823, 0.0
  %vm1080 = vcmp.ge.f32.partialorder %v824, 0.0
  %vm1081 = vcmp.ge.f32.partialorder %v825, 0.0
  %vm1082 = vcmp.ge.f32.partialorder %v826, 0.0
  %vm1083 = vcmp.ge.f32.partialorder %v827, 0.0
  %vm1084 = vcmp.ge.f32.partialorder %v828, 0.0
  %vm1085 = vcmp.ge.f32.partialorder %v829, 0.0
  %vm1086 = vcmp.ge.f32.partialorder %v830, 0.0
  %vm1087 = vcmp.ge.f32.partialorder %v831, 0.0
  %vm1088 = vcmp.ge.f32.partialorder %v832, 0.0
  %vm1089 = vcmp.ge.f32.partialorder %v833, 0.0
  %vm1090 = vcmp.ge.f32.partialorder %v834, 0.0
  %vm1091 = vcmp.ge.f32.partialorder %v835, 0.0
  %vm1092 = vcmp.ge.f32.partialorder %v836, 0.0
  %vm1093 = vcmp.ge.f32.partialorder %v837, 0.0
  %vm1094 = vcmp.ge.f32.partialorder %v838, 0.0
  %vm1095 = vcmp.ge.f32.partialorder %v839, 0.0
  %vm1096 = vcmp.ge.f32.partialorder %v840, 0.0
  %vm1097 = vcmp.ge.f32.partialorder %v841, 0.0
  %vm1098 = vcmp.ge.f32.partialorder %v842, 0.0
  %vm1099 = vcmp.ge.f32.partialorder %v843, 0.0
  %vm1100 = vcmp.ge.f32.partialorder %v844, 0.0
  %vm1101 = vcmp.ge.f32.partialorder %v845, 0.0
  %vm1102 = vcmp.ge.f32.partialorder %v846, 0.0
  %vm1103 = vcmp.ge.f32.partialorder %v847, 0.0
  %vm1104 = vcmp.ge.f32.partialorder %v848, 0.0
  %vm1105 = vcmp.ge.f32.partialorder %v849, 0.0
  %vm1106 = vcmp.ge.f32.partialorder %v850, 0.0
  %vm1107 = vcmp.ge.f32.partialorder %v851, 0.0
  %vm1108 = vcmp.ge.f32.partialorder %v852, 0.0
  %vm1109 = vcmp.ge.f32.partialorder %v853, 0.0
  %vm1110 = vcmp.ge.f32.partialorder %v854, 0.0
  %vm1111 = vcmp.ge.f32.partialorder %v855, 0.0
  %vm1112 = vcmp.ge.f32.partialorder %v856, 0.0
  %vm1113 = vcmp.ge.f32.partialorder %v857, 0.0
  %vm1114 = vcmp.ge.f32.partialorder %v858, 0.0
  %vm1115 = vcmp.ge.f32.partialorder %v859, 0.0
  %vm1116 = vcmp.ge.f32.partialorder %v860, 0.0
  %vm1117 = vcmp.ge.f32.partialorder %v861, 0.0
  %vm1118 = vcmp.ge.f32.partialorder %v862, 0.0
  %vm1119 = vcmp.ge.f32.partialorder %v863, 0.0
  %vm1120 = vcmp.ge.f32.partialorder %v864, 0.0
  %vm1121 = vcmp.ge.f32.partialorder %v865, 0.0
  %vm1122 = vcmp.ge.f32.partialorder %v866, 0.0
  %vm1123 = vcmp.ge.f32.partialorder %v867, 0.0
  %vm1124 = vcmp.ge.f32.partialorder %v868, 0.0
  %vm1125 = vcmp.ge.f32.partialorder %v869, 0.0
  %vm1126 = vcmp.ge.f32.partialorder %v870, 0.0
  %vm1127 = vcmp.ge.f32.partialorder %v871, 0.0
  %vm1128 = vcmp.ge.f32.partialorder %v872, 0.0
  %vm1129 = vcmp.ge.f32.partialorder %v873, 0.0
  %vm1130 = vcmp.ge.f32.partialorder %v874, 0.0
  %vm1131 = vcmp.ge.f32.partialorder %v875, 0.0
  %vm1132 = vcmp.ge.f32.partialorder %v876, 0.0
  %vm1133 = vcmp.ge.f32.partialorder %v877, 0.0
  %vm1134 = vcmp.ge.f32.partialorder %v878, 0.0
  %vm1135 = vcmp.ge.f32.partialorder %v879, 0.0
  %vm1136 = vcmp.ge.f32.partialorder %v880, 0.0
  %vm1137 = vcmp.ge.f32.partialorder %v881, 0.0
  %vm1138 = vcmp.ge.f32.partialorder %v882, 0.0
  %vm1139 = vcmp.ge.f32.partialorder %v883, 0.0
  %vm1140 = vcmp.ge.f32.partialorder %v884, 0.0
  %vm1141 = vcmp.ge.f32.partialorder %v885, 0.0
  %vm1142 = vcmp.ge.f32.partialorder %v886, 0.0
  %vm1143 = vcmp.ge.f32.partialorder %v887, 0.0
  %vm1144 = vcmp.ge.f32.partialorder %v888, 0.0
  %vm1145 = vcmp.ge.f32.partialorder %v889, 0.0
  %vm1146 = vcmp.ge.f32.partialorder %v890, 0.0
  %vm1147 = vcmp.ge.f32.partialorder %v891, 0.0
  %vm1148 = vcmp.ge.f32.partialorder %v892, 0.0
  %vm1149 = vcmp.ge.f32.partialorder %v893, 0.0
  %vm1150 = vcmp.ge.f32.partialorder %v894, 0.0
  %vm1151 = vcmp.ge.f32.partialorder %v895, 0.0
  %vm1152 = vcmp.ge.f32.partialorder %v896, 0.0
  %vm1153 = vcmp.ge.f32.partialorder %v897, 0.0
  %vm1154 = vcmp.ge.f32.partialorder %v898, 0.0
  %vm1155 = vcmp.ge.f32.partialorder %v899, 0.0
  %vm1156 = vcmp.ge.f32.partialorder %v900, 0.0
  %vm1157 = vcmp.ge.f32.partialorder %v901, 0.0
  %vm1158 = vcmp.ge.f32.partialorder %v902, 0.0
  %vm1159 = vcmp.ge.f32.partialorder %v903, 0.0
  %vm1160 = vcmp.ge.f32.partialorder %v904, 0.0
  %vm1161 = vcmp.ge.f32.partialorder %v905, 0.0
  %vm1162 = vcmp.ge.f32.partialorder %v906, 0.0
  %vm1163 = vcmp.ge.f32.partialorder %v907, 0.0
  %vm1164 = vcmp.ge.f32.partialorder %v908, 0.0
  %vm1165 = vcmp.ge.f32.partialorder %v909, 0.0
  %vm1166 = vcmp.ge.f32.partialorder %v910, 0.0
  %vm1167 = vcmp.ge.f32.partialorder %v911, 0.0
  %vm1168 = vcmp.ge.f32.partialorder %v912, 0.0
  %vm1169 = vcmp.ge.f32.partialorder %v913, 0.0
  %vm1170 = vcmp.ge.f32.partialorder %v914, 0.0
  %vm1171 = vcmp.ge.f32.partialorder %v915, 0.0
  %vm1172 = vcmp.ge.f32.partialorder %v916, 0.0
  %vm1173 = vcmp.ge.f32.partialorder %v917, 0.0
  %vm1174 = vcmp.ge.f32.partialorder %v918, 0.0
  %vm1175 = vcmp.ge.f32.partialorder %v919, 0.0
  %vm1176 = vcmp.ge.f32.partialorder %v920, 0.0
  %vm1177 = vcmp.ge.f32.partialorder %v921, 0.0
  %vm1178 = vcmp.ge.f32.partialorder %v922, 0.0
  %vm1179 = vcmp.ge.f32.partialorder %v923, 0.0
  %vm1180 = vcmp.ge.f32.partialorder %v924, 0.0
  %vm1181 = vcmp.ge.f32.partialorder %v925, 0.0
  %vm1182 = vcmp.ge.f32.partialorder %v926, 0.0
  %vm1183 = vcmp.ge.f32.partialorder %v927, 0.0
  %vm1184 = vcmp.ge.f32.partialorder %v928, 0.0
  %vm1185 = vcmp.ge.f32.partialorder %v929, 0.0
  %vm1186 = vcmp.ge.f32.partialorder %v930, 0.0
  %vm1187 = vcmp.ge.f32.partialorder %v931, 0.0
  %vm1188 = vcmp.ge.f32.partialorder %v932, 0.0
  %vm1189 = vcmp.ge.f32.partialorder %v933, 0.0
  %vm1190 = vcmp.ge.f32.partialorder %v934, 0.0
  %v1191 = vmul.f32 %v679, 0.2
  %v1192 = vmul.f32 %v680, 0.2
  %v1193 = vmul.f32 %v681, 0.2
  %v1194 = vmul.f32 %v682, 0.2
  %v1195 = vmul.f32 %v683, 0.2
  %v1196 = vmul.f32 %v684, 0.2
  %v1197 = vmul.f32 %v685, 0.2
  %v1198 = vmul.f32 %v686, 0.2
  %v1199 = vmul.f32 %v687, 0.2
  %v1200 = vmul.f32 %v688, 0.2
  %v1201 = vmul.f32 %v689, 0.2
  %v1202 = vmul.f32 %v690, 0.2
  %v1203 = vmul.f32 %v691, 0.2
  %v1204 = vmul.f32 %v692, 0.2
  %v1205 = vmul.f32 %v693, 0.2
  %v1206 = vmul.f32 %v694, 0.2
  %v1207 = vmul.f32 %v695, 0.2
  %v1208 = vmul.f32 %v696, 0.2
  %v1209 = vmul.f32 %v697, 0.2
  %v1210 = vmul.f32 %v698, 0.2
  %v1211 = vmul.f32 %v699, 0.2
  %v1212 = vmul.f32 %v700, 0.2
  %v1213 = vmul.f32 %v701, 0.2
  %v1214 = vmul.f32 %v702, 0.2
  %v1215 = vmul.f32 %v703, 0.2
  %v1216 = vmul.f32 %v704, 0.2
  %v1217 = vmul.f32 %v705, 0.2
  %v1218 = vmul.f32 %v706, 0.2
  %v1219 = vmul.f32 %v707, 0.2
  %v1220 = vmul.f32 %v708, 0.2
  %v1221 = vmul.f32 %v709, 0.2
  %v1222 = vmul.f32 %v710, 0.2
  %v1223 = vmul.f32 %v711, 0.2
  %v1224 = vmul.f32 %v712, 0.2
  %v1225 = vmul.f32 %v713, 0.2
  %v1226 = vmul.f32 %v714, 0.2
  %v1227 = vmul.f32 %v715, 0.2
  %v1228 = vmul.f32 %v716, 0.2
  %v1229 = vmul.f32 %v717, 0.2
  %v1230 = vmul.f32 %v718, 0.2
  %v1231 = vmul.f32 %v719, 0.2
  %v1232 = vmul.f32 %v720, 0.2
  %v1233 = vmul.f32 %v721, 0.2
  %v1234 = vmul.f32 %v722, 0.2
  %v1235 = vmul.f32 %v723, 0.2
  %v1236 = vmul.f32 %v724, 0.2
  %v1237 = vmul.f32 %v725, 0.2
  %v1238 = vmul.f32 %v726, 0.2
  %v1239 = vmul.f32 %v727, 0.2
  %v1240 = vmul.f32 %v728, 0.2
  %v1241 = vmul.f32 %v729, 0.2
  %v1242 = vmul.f32 %v730, 0.2
  %v1243 = vmul.f32 %v731, 0.2
  %v1244 = vmul.f32 %v732, 0.2
  %v1245 = vmul.f32 %v733, 0.2
  %v1246 = vmul.f32 %v734, 0.2
  %v1247 = vmul.f32 %v735, 0.2
  %v1248 = vmul.f32 %v736, 0.2
  %v1249 = vmul.f32 %v737, 0.2
  %v1250 = vmul.f32 %v738, 0.2
  %v1251 = vmul.f32 %v739, 0.2
  %v1252 = vmul.f32 %v740, 0.2
  %v1253 = vmul.f32 %v741, 0.2
  %v1254 = vmul.f32 %v742, 0.2
  %v1255 = vmul.f32 %v743, 0.2
  %v1256 = vmul.f32 %v744, 0.2
  %v1257 = vmul.f32 %v745, 0.2
  %v1258 = vmul.f32 %v746, 0.2
  %v1259 = vmul.f32 %v747, 0.2
  %v1260 = vmul.f32 %v748, 0.2
  %v1261 = vmul.f32 %v749, 0.2
  %v1262 = vmul.f32 %v750, 0.2
  %v1263 = vmul.f32 %v751, 0.2
  %v1264 = vmul.f32 %v752, 0.2
  %v1265 = vmul.f32 %v753, 0.2
  %v1266 = vmul.f32 %v754, 0.2
  %v1267 = vmul.f32 %v755, 0.2
  %v1268 = vmul.f32 %v756, 0.2
  %v1269 = vmul.f32 %v757, 0.2
  %v1270 = vmul.f32 %v758, 0.2
  %v1271 = vmul.f32 %v759, 0.2
  %v1272 = vmul.f32 %v760, 0.2
  %v1273 = vmul.f32 %v761, 0.2
  %v1274 = vmul.f32 %v762, 0.2
  %v1275 = vmul.f32 %v763, 0.2
  %v1276 = vmul.f32 %v764, 0.2
  %v1277 = vmul.f32 %v765, 0.2
  %v1278 = vmul.f32 %v766, 0.2
  %v1279 = vmul.f32 %v767, 0.2
  %v1280 = vmul.f32 %v768, 0.2
  %v1281 = vmul.f32 %v769, 0.2
  %v1282 = vmul.f32 %v770, 0.2
  %v1283 = vmul.f32 %v771, 0.2
  %v1284 = vmul.f32 %v772, 0.2
  %v1285 = vmul.f32 %v773, 0.2
  %v1286 = vmul.f32 %v774, 0.2
  %v1287 = vmul.f32 %v775, 0.2
  %v1288 = vmul.f32 %v776, 0.2
  %v1289 = vmul.f32 %v777, 0.2
  %v1290 = vmul.f32 %v778, 0.2
  %v1291 = vmul.f32 %v779, 0.2
  %v1292 = vmul.f32 %v780, 0.2
  %v1293 = vmul.f32 %v781, 0.2
  %v1294 = vmul.f32 %v782, 0.2
  %v1295 = vmul.f32 %v783, 0.2
  %v1296 = vmul.f32 %v784, 0.2
  %v1297 = vmul.f32 %v785, 0.2
  %v1298 = vmul.f32 %v786, 0.2
  %v1299 = vmul.f32 %v787, 0.2
  %v1300 = vmul.f32 %v788, 0.2
  %v1301 = vmul.f32 %v789, 0.2
  %v1302 = vmul.f32 %v790, 0.2
  %v1303 = vmul.f32 %v791, 0.2
  %v1304 = vmul.f32 %v792, 0.2
  %v1305 = vmul.f32 %v793, 0.2
  %v1306 = vmul.f32 %v794, 0.2
  %v1307 = vmul.f32 %v795, 0.2
  %v1308 = vmul.f32 %v796, 0.2
  %v1309 = vmul.f32 %v797, 0.2
  %v1310 = vmul.f32 %v798, 0.2
  %v1311 = vmul.f32 %v799, 0.2
  %v1312 = vmul.f32 %v800, 0.2
  %v1313 = vmul.f32 %v801, 0.2
  %v1314 = vmul.f32 %v802, 0.2
  %v1315 = vmul.f32 %v803, 0.2
  %v1316 = vmul.f32 %v804, 0.2
  %v1317 = vmul.f32 %v805, 0.2
  %v1318 = vmul.f32 %v806, 0.2
  %v1319 = vmul.f32 %v807, 0.2
  %v1320 = vmul.f32 %v808, 0.2
  %v1321 = vmul.f32 %v809, 0.2
  %v1322 = vmul.f32 %v810, 0.2
  %v1323 = vmul.f32 %v811, 0.2
  %v1324 = vmul.f32 %v812, 0.2
  %v1325 = vmul.f32 %v813, 0.2
  %v1326 = vmul.f32 %v814, 0.2
  %v1327 = vmul.f32 %v815, 0.2
  %v1328 = vmul.f32 %v816, 0.2
  %v1329 = vmul.f32 %v817, 0.2
  %v1330 = vmul.f32 %v818, 0.2
  %v1331 = vmul.f32 %v819, 0.2
  %v1332 = vmul.f32 %v820, 0.2
  %v1333 = vmul.f32 %v821, 0.2
  %v1334 = vmul.f32 %v822, 0.2
  %v1335 = vmul.f32 %v823, 0.2
  %v1336 = vmul.f32 %v824, 0.2
  %v1337 = vmul.f32 %v825, 0.2
  %v1338 = vmul.f32 %v826, 0.2
  %v1339 = vmul.f32 %v827, 0.2
  %v1340 = vmul.f32 %v828, 0.2
  %v1341 = vmul.f32 %v829, 0.2
  %v1342 = vmul.f32 %v830, 0.2
  %v1343 = vmul.f32 %v831, 0.2
  %v1344 = vmul.f32 %v832, 0.2
  %v1345 = vmul.f32 %v833, 0.2
  %v1346 = vmul.f32 %v834, 0.2
  %v1347 = vmul.f32 %v835, 0.2
  %v1348 = vmul.f32 %v836, 0.2
  %v1349 = vmul.f32 %v837, 0.2
  %v1350 = vmul.f32 %v838, 0.2
  %v1351 = vmul.f32 %v839, 0.2
  %v1352 = vmul.f32 %v840, 0.2
  %v1353 = vmul.f32 %v841, 0.2
  %v1354 = vmul.f32 %v842, 0.2
  %v1355 = vmul.f32 %v843, 0.2
  %v1356 = vmul.f32 %v844, 0.2
  %v1357 = vmul.f32 %v845, 0.2
  %v1358 = vmul.f32 %v846, 0.2
  %v1359 = vmul.f32 %v847, 0.2
  %v1360 = vmul.f32 %v848, 0.2
  %v1361 = vmul.f32 %v849, 0.2
  %v1362 = vmul.f32 %v850, 0.2
  %v1363 = vmul.f32 %v851, 0.2
  %v1364 = vmul.f32 %v852, 0.2
  %v1365 = vmul.f32 %v853, 0.2
  %v1366 = vmul.f32 %v854, 0.2
  %v1367 = vmul.f32 %v855, 0.2
  %v1368 = vmul.f32 %v856, 0.2
  %v1369 = vmul.f32 %v857, 0.2
  %v1370 = vmul.f32 %v858, 0.2
  %v1371 = vmul.f32 %v859, 0.2
  %v1372 = vmul.f32 %v860, 0.2
  %v1373 = vmul.f32 %v861, 0.2
  %v1374 = vmul.f32 %v862, 0.2
  %v1375 = vmul.f32 %v863, 0.2
  %v1376 = vmul.f32 %v864, 0.2
  %v1377 = vmul.f32 %v865, 0.2
  %v1378 = vmul.f32 %v866, 0.2
  %v1379 = vmul.f32 %v867, 0.2
  %v1380 = vmul.f32 %v868, 0.2
  %v1381 = vmul.f32 %v869, 0.2
  %v1382 = vmul.f32 %v870, 0.2
  %v1383 = vmul.f32 %v871, 0.2
  %v1384 = vmul.f32 %v872, 0.2
  %v1385 = vmul.f32 %v873, 0.2
  %v1386 = vmul.f32 %v874, 0.2
  %v1387 = vmul.f32 %v875, 0.2
  %v1388 = vmul.f32 %v876, 0.2
  %v1389 = vmul.f32 %v877, 0.2
  %v1390 = vmul.f32 %v878, 0.2
  %v1391 = vmul.f32 %v879, 0.2
  %v1392 = vmul.f32 %v880, 0.2
  %v1393 = vmul.f32 %v881, 0.2
  %v1394 = vmul.f32 %v882, 0.2
  %v1395 = vmul.f32 %v883, 0.2
  %v1396 = vmul.f32 %v884, 0.2
  %v1397 = vmul.f32 %v885, 0.2
  %v1398 = vmul.f32 %v886, 0.2
  %v1399 = vmul.f32 %v887, 0.2
  %v1400 = vmul.f32 %v888, 0.2
  %v1401 = vmul.f32 %v889, 0.2
  %v1402 = vmul.f32 %v890, 0.2
  %v1403 = vmul.f32 %v891, 0.2
  %v1404 = vmul.f32 %v892, 0.2
  %v1405 = vmul.f32 %v893, 0.2
  %v1406 = vmul.f32 %v894, 0.2
  %v1407 = vmul.f32 %v895, 0.2
  %v1408 = vmul.f32 %v896, 0.2
  %v1409 = vmul.f32 %v897, 0.2
  %v1410 = vmul.f32 %v898, 0.2
  %v1411 = vmul.f32 %v899, 0.2
  %v1412 = vmul.f32 %v900, 0.2
  %v1413 = vmul.f32 %v901, 0.2
  %v1414 = vmul.f32 %v902, 0.2
  %v1415 = vmul.f32 %v903, 0.2
  %v1416 = vmul.f32 %v904, 0.2
  %v1417 = vmul.f32 %v905, 0.2
  %v1418 = vmul.f32 %v906, 0.2
  %v1419 = vmul.f32 %v907, 0.2
  %v1420 = vmul.f32 %v908, 0.2
  %v1421 = vmul.f32 %v909, 0.2
  %v1422 = vmul.f32 %v910, 0.2
  %v1423 = vmul.f32 %v911, 0.2
  %v1424 = vmul.f32 %v912, 0.2
  %v1425 = vmul.f32 %v913, 0.2
  %v1426 = vmul.f32 %v914, 0.2
  %v1427 = vmul.f32 %v915, 0.2
  %v1428 = vmul.f32 %v916, 0.2
  %v1429 = vmul.f32 %v917, 0.2
  %v1430 = vmul.f32 %v918, 0.2
  %v1431 = vmul.f32 %v919, 0.2
  %v1432 = vmul.f32 %v920, 0.2
  %v1433 = vmul.f32 %v921, 0.2
  %v1434 = vmul.f32 %v922, 0.2
  %v1435 = vmul.f32 %v923, 0.2
  %v1436 = vmul.f32 %v924, 0.2
  %v1437 = vmul.f32 %v925, 0.2
  %v1438 = vmul.f32 %v926, 0.2
  %v1439 = vmul.f32 %v927, 0.2
  %v1440 = vmul.f32 %v928, 0.2
  %v1441 = vmul.f32 %v929, 0.2
  %v1442 = vmul.f32 %v930, 0.2
  %v1443 = vmul.f32 %v931, 0.2
  %v1444 = vmul.f32 %v932, 0.2
  %v1445 = vmul.f32 %v933, 0.2
  %v1446 = vmul.f32 %v934, 0.2
  %v1447 = vsel %vm935, %v679, %v1191
  %v1448 = vsel %vm936, %v680, %v1192
  %v1449 = vsel %vm937, %v681, %v1193
  %v1450 = vsel %vm938, %v682, %v1194
  %v1451 = vsel %vm939, %v683, %v1195
  %v1452 = vsel %vm940, %v684, %v1196
  %v1453 = vsel %vm941, %v685, %v1197
  %v1454 = vsel %vm942, %v686, %v1198
  %v1455 = vsel %vm943, %v687, %v1199
  %v1456 = vsel %vm944, %v688, %v1200
  %v1457 = vsel %vm945, %v689, %v1201
  %v1458 = vsel %vm946, %v690, %v1202
  %v1459 = vsel %vm947, %v691, %v1203
  %v1460 = vsel %vm948, %v692, %v1204
  %v1461 = vsel %vm949, %v693, %v1205
  %v1462 = vsel %vm950, %v694, %v1206
  %v1463 = vsel %vm951, %v695, %v1207
  %v1464 = vsel %vm952, %v696, %v1208
  %v1465 = vsel %vm953, %v697, %v1209
  %v1466 = vsel %vm954, %v698, %v1210
  %v1467 = vsel %vm955, %v699, %v1211
  %v1468 = vsel %vm956, %v700, %v1212
  %v1469 = vsel %vm957, %v701, %v1213
  %v1470 = vsel %vm958, %v702, %v1214
  %v1471 = vsel %vm959, %v703, %v1215
  %v1472 = vsel %vm960, %v704, %v1216
  %v1473 = vsel %vm961, %v705, %v1217
  %v1474 = vsel %vm962, %v706, %v1218
  %v1475 = vsel %vm963, %v707, %v1219
  %v1476 = vsel %vm964, %v708, %v1220
  %v1477 = vsel %vm965, %v709, %v1221
  %v1478 = vsel %vm966, %v710, %v1222
  %v1479 = vsel %vm967, %v711, %v1223
  %v1480 = vsel %vm968, %v712, %v1224
  %v1481 = vsel %vm969, %v713, %v1225
  %v1482 = vsel %vm970, %v714, %v1226
  %v1483 = vsel %vm971, %v715, %v1227
  %v1484 = vsel %vm972, %v716, %v1228
  %v1485 = vsel %vm973, %v717, %v1229
  %v1486 = vsel %vm974, %v718, %v1230
  %v1487 = vsel %vm975, %v719, %v1231
  %v1488 = vsel %vm976, %v720, %v1232
  %v1489 = vsel %vm977, %v721, %v1233
  %v1490 = vsel %vm978, %v722, %v1234
  %v1491 = vsel %vm979, %v723, %v1235
  %v1492 = vsel %vm980, %v724, %v1236
  %v1493 = vsel %vm981, %v725, %v1237
  %v1494 = vsel %vm982, %v726, %v1238
  %v1495 = vsel %vm983, %v727, %v1239
  %v1496 = vsel %vm984, %v728, %v1240
  %v1497 = vsel %vm985, %v729, %v1241
  %v1498 = vsel %vm986, %v730, %v1242
  %v1499 = vsel %vm987, %v731, %v1243
  %v1500 = vsel %vm988, %v732, %v1244
  %v1501 = vsel %vm989, %v733, %v1245
  %v1502 = vsel %vm990, %v734, %v1246
  %v1503 = vsel %vm991, %v735, %v1247
  %v1504 = vsel %vm992, %v736, %v1248
  %v1505 = vsel %vm993, %v737, %v1249
  %v1506 = vsel %vm994, %v738, %v1250
  %v1507 = vsel %vm995, %v739, %v1251
  %v1508 = vsel %vm996, %v740, %v1252
  %v1509 = vsel %vm997, %v741, %v1253
  %v1510 = vsel %vm998, %v742, %v1254
  %v1511 = vsel %vm999, %v743, %v1255
  %v1512 = vsel %vm1000, %v744, %v1256
  %v1513 = vsel %vm1001, %v745, %v1257
  %v1514 = vsel %vm1002, %v746, %v1258
  %v1515 = vsel %vm1003, %v747, %v1259
  %v1516 = vsel %vm1004, %v748, %v1260
  %v1517 = vsel %vm1005, %v749, %v1261
  %v1518 = vsel %vm1006, %v750, %v1262
  %v1519 = vsel %vm1007, %v751, %v1263
  %v1520 = vsel %vm1008, %v752, %v1264
  %v1521 = vsel %vm1009, %v753, %v1265
  %v1522 = vsel %vm1010, %v754, %v1266
  %v1523 = vsel %vm1011, %v755, %v1267
  %v1524 = vsel %vm1012, %v756, %v1268
  %v1525 = vsel %vm1013, %v757, %v1269
  %v1526 = vsel %vm1014, %v758, %v1270
  %v1527 = vsel %vm1015, %v759, %v1271
  %v1528 = vsel %vm1016, %v760, %v1272
  %v1529 = vsel %vm1017, %v761, %v1273
  %v1530 = vsel %vm1018, %v762, %v1274
  %v1531 = vsel %vm1019, %v763, %v1275
  %v1532 = vsel %vm1020, %v764, %v1276
  %v1533 = vsel %vm1021, %v765, %v1277
  %v1534 = vsel %vm1022, %v766, %v1278
  %v1535 = vsel %vm1023, %v767, %v1279
  %v1536 = vsel %vm1024, %v768, %v1280
  %v1537 = vsel %vm1025, %v769, %v1281
  %v1538 = vsel %vm1026, %v770, %v1282
  %v1539 = vsel %vm1027, %v771, %v1283
  %v1540 = vsel %vm1028, %v772, %v1284
  %v1541 = vsel %vm1029, %v773, %v1285
  %v1542 = vsel %vm1030, %v774, %v1286
  %v1543 = vsel %vm1031, %v775, %v1287
  %v1544 = vsel %vm1032, %v776, %v1288
  %v1545 = vsel %vm1033, %v777, %v1289
  %v1546 = vsel %vm1034, %v778, %v1290
  %v1547 = vsel %vm1035, %v779, %v1291
  %v1548 = vsel %vm1036, %v780, %v1292
  %v1549 = vsel %vm1037, %v781, %v1293
  %v1550 = vsel %vm1038, %v782, %v1294
  %v1551 = vsel %vm1039, %v783, %v1295
  %v1552 = vsel %vm1040, %v784, %v1296
  %v1553 = vsel %vm1041, %v785, %v1297
  %v1554 = vsel %vm1042, %v786, %v1298
  %v1555 = vsel %vm1043, %v787, %v1299
  %v1556 = vsel %vm1044, %v788, %v1300
  %v1557 = vsel %vm1045, %v789, %v1301
  %v1558 = vsel %vm1046, %v790, %v1302
  %v1559 = vsel %vm1047, %v791, %v1303
  %v1560 = vsel %vm1048, %v792, %v1304
  %v1561 = vsel %vm1049, %v793, %v1305
  %v1562 = vsel %vm1050, %v794, %v1306
  %v1563 = vsel %vm1051, %v795, %v1307
  %v1564 = vsel %vm1052, %v796, %v1308
  %v1565 = vsel %vm1053, %v797, %v1309
  %v1566 = vsel %vm1054, %v798, %v1310
  %v1567 = vsel %vm1055, %v799, %v1311
  %v1568 = vsel %vm1056, %v800, %v1312
  %v1569 = vsel %vm1057, %v801, %v1313
  %v1570 = vsel %vm1058, %v802, %v1314
  %v1571 = vsel %vm1059, %v803, %v1315
  %v1572 = vsel %vm1060, %v804, %v1316
  %v1573 = vsel %vm1061, %v805, %v1317
  %v1574 = vsel %vm1062, %v806, %v1318
  %v1575 = vsel %vm1063, %v807, %v1319
  %v1576 = vsel %vm1064, %v808, %v1320
  %v1577 = vsel %vm1065, %v809, %v1321
  %v1578 = vsel %vm1066, %v810, %v1322
  %v1579 = vsel %vm1067, %v811, %v1323
  %v1580 = vsel %vm1068, %v812, %v1324
  %v1581 = vsel %vm1069, %v813, %v1325
  %v1582 = vsel %vm1070, %v814, %v1326
  %v1583 = vsel %vm1071, %v815, %v1327
  %v1584 = vsel %vm1072, %v816, %v1328
  %v1585 = vsel %vm1073, %v817, %v1329
  %v1586 = vsel %vm1074, %v818, %v1330
  %v1587 = vsel %vm1075, %v819, %v1331
  %v1588 = vsel %vm1076, %v820, %v1332
  %v1589 = vsel %vm1077, %v821, %v1333
  %v1590 = vsel %vm1078, %v822, %v1334
  %v1591 = vsel %vm1079, %v823, %v1335
  %v1592 = vsel %vm1080, %v824, %v1336
  %v1593 = vsel %vm1081, %v825, %v1337
  %v1594 = vsel %vm1082, %v826, %v1338
  %v1595 = vsel %vm1083, %v827, %v1339
  %v1596 = vsel %vm1084, %v828, %v1340
  %v1597 = vsel %vm1085, %v829, %v1341
  %v1598 = vsel %vm1086, %v830, %v1342
  %v1599 = vsel %vm1087, %v831, %v1343
  %v1600 = vsel %vm1088, %v832, %v1344
  %v1601 = vsel %vm1089, %v833, %v1345
  %v1602 = vsel %vm1090, %v834, %v1346
  %v1603 = vsel %vm1091, %v835, %v1347
  %v1604 = vsel %vm1092, %v836, %v1348
  %v1605 = vsel %vm1093, %v837, %v1349
  %v1606 = vsel %vm1094, %v838, %v1350
  %v1607 = vsel %vm1095, %v839, %v1351
  %v1608 = vsel %vm1096, %v840, %v1352
  %v1609 = vsel %vm1097, %v841, %v1353
  %v1610 = vsel %vm1098, %v842, %v1354
  %v1611 = vsel %vm1099, %v843, %v1355
  %v1612 = vsel %vm1100, %v844, %v1356
  %v1613 = vsel %vm1101, %v845, %v1357
  %v1614 = vsel %vm1102, %v846, %v1358
  %v1615 = vsel %vm1103, %v847, %v1359
  %v1616 = vsel %vm1104, %v848, %v1360
  %v1617 = vsel %vm1105, %v849, %v1361
  %v1618 = vsel %vm1106, %v850, %v1362
  %v1619 = vsel %vm1107, %v851, %v1363
  %v1620 = vsel %vm1108, %v852, %v1364
  %v1621 = vsel %vm1109, %v853, %v1365
  %v1622 = vsel %vm1110, %v854, %v1366
  %v1623 = vsel %vm1111, %v855, %v1367
  %v1624 = vsel %vm1112, %v856, %v1368
  %v1625 = vsel %vm1113, %v857, %v1369
  %v1626 = vsel %vm1114, %v858, %v1370
  %v1627 = vsel %vm1115, %v859, %v1371
  %v1628 = vsel %vm1116, %v860, %v1372
  %v1629 = vsel %vm1117, %v861, %v1373
  %v1630 = vsel %vm1118, %v862, %v1374
  %v1631 = vsel %vm1119, %v863, %v1375
  %v1632 = vsel %vm1120, %v864, %v1376
  %v1633 = vsel %vm1121, %v865, %v1377
  %v1634 = vsel %vm1122, %v866, %v1378
  %v1635 = vsel %vm1123, %v867, %v1379
  %v1636 = vsel %vm1124, %v868, %v1380
  %v1637 = vsel %vm1125, %v869, %v1381
  %v1638 = vsel %vm1126, %v870, %v1382
  %v1639 = vsel %vm1127, %v871, %v1383
  %v1640 = vsel %vm1128, %v872, %v1384
  %v1641 = vsel %vm1129, %v873, %v1385
  %v1642 = vsel %vm1130, %v874, %v1386
  %v1643 = vsel %vm1131, %v875, %v1387
  %v1644 = vsel %vm1132, %v876, %v1388
  %v1645 = vsel %vm1133, %v877, %v1389
  %v1646 = vsel %vm1134, %v878, %v1390
  %v1647 = vsel %vm1135, %v879, %v1391
  %v1648 = vsel %vm1136, %v880, %v1392
  %v1649 = vsel %vm1137, %v881, %v1393
  %v1650 = vsel %vm1138, %v882, %v1394
  %v1651 = vsel %vm1139, %v883, %v1395
  %v1652 = vsel %vm1140, %v884, %v1396
  %v1653 = vsel %vm1141, %v885, %v1397
  %v1654 = vsel %vm1142, %v886, %v1398
  %v1655 = vsel %vm1143, %v887, %v1399
  %v1656 = vsel %vm1144, %v888, %v1400
  %v1657 = vsel %vm1145, %v889, %v1401
  %v1658 = vsel %vm1146, %v890, %v1402
  %v1659 = vsel %vm1147, %v891, %v1403
  %v1660 = vsel %vm1148, %v892, %v1404
  %v1661 = vsel %vm1149, %v893, %v1405
  %v1662 = vsel %vm1150, %v894, %v1406
  %v1663 = vsel %vm1151, %v895, %v1407
  %v1664 = vsel %vm1152, %v896, %v1408
  %v1665 = vsel %vm1153, %v897, %v1409
  %v1666 = vsel %vm1154, %v898, %v1410
  %v1667 = vsel %vm1155, %v899, %v1411
  %v1668 = vsel %vm1156, %v900, %v1412
  %v1669 = vsel %vm1157, %v901, %v1413
  %v1670 = vsel %vm1158, %v902, %v1414
  %v1671 = vsel %vm1159, %v903, %v1415
  %v1672 = vsel %vm1160, %v904, %v1416
  %v1673 = vsel %vm1161, %v905, %v1417
  %v1674 = vsel %vm1162, %v906, %v1418
  %v1675 = vsel %vm1163, %v907, %v1419
  %v1676 = vsel %vm1164, %v908, %v1420
  %v1677 = vsel %vm1165, %v909, %v1421
  %v1678 = vsel %vm1166, %v910, %v1422
  %v1679 = vsel %vm1167, %v911, %v1423
  %v1680 = vsel %vm1168, %v912, %v1424
  %v1681 = vsel %vm1169, %v913, %v1425
  %v1682 = vsel %vm1170, %v914, %v1426
  %v1683 = vsel %vm1171, %v915, %v1427
  %v1684 = vsel %vm1172, %v916, %v1428
  %v1685 = vsel %vm1173, %v917, %v1429
  %v1686 = vsel %vm1174, %v918, %v1430
  %v1687 = vsel %vm1175, %v919, %v1431
  %v1688 = vsel %vm1176, %v920, %v1432
  %v1689 = vsel %vm1177, %v921, %v1433
  %v1690 = vsel %vm1178, %v922, %v1434
  %v1691 = vsel %vm1179, %v923, %v1435
  %v1692 = vsel %vm1180, %v924, %v1436
  %v1693 = vsel %vm1181, %v925, %v1437
  %v1694 = vsel %vm1182, %v926, %v1438
  %v1695 = vsel %vm1183, %v927, %v1439
  %v1696 = vsel %vm1184, %v928, %v1440
  %v1697 = vsel %vm1185, %v929, %v1441
  %v1698 = vsel %vm1186, %v930, %v1442
  %v1699 = vsel %vm1187, %v931, %v1443
  %v1700 = vsel %vm1188, %v932, %v1444
  %v1701 = vsel %vm1189, %v933, %v1445
  %v1702 = vsel %vm1190, %v934, %v1446
  %v1703 = vpack.c.bf16 %v1451, %v1447
  %v1704 = vpack.c.bf16 %v1452, %v1448
  %v1705 = vpack.c.bf16 %v1453, %v1449
  %v1706 = vpack.c.bf16 %v1454, %v1450
  %v1707 = vpack.c.bf16 %v1459, %v1455
  %v1708 = vpack.c.bf16 %v1460, %v1456
  %v1709 = vpack.c.bf16 %v1461, %v1457
  %v1710 = vpack.c.bf16 %v1462, %v1458
  %v1711 = vpack.c.bf16 %v1467, %v1463
  %v1712 = vpack.c.bf16 %v1468, %v1464
  %v1713 = vpack.c.bf16 %v1469, %v1465
  %v1714 = vpack.c.bf16 %v1470, %v1466
  %v1715 = vpack.c.bf16 %v1475, %v1471
  %v1716 = vpack.c.bf16 %v1476, %v1472
  %v1717 = vpack.c.bf16 %v1477, %v1473
  %v1718 = vpack.c.bf16 %v1478, %v1474
  %v1719 = vpack.c.bf16 %v1483, %v1479
  %v1720 = vpack.c.bf16 %v1484, %v1480
  %v1721 = vpack.c.bf16 %v1485, %v1481
  %v1722 = vpack.c.bf16 %v1486, %v1482
  %v1723 = vpack.c.bf16 %v1491, %v1487
  %v1724 = vpack.c.bf16 %v1492, %v1488
  %v1725 = vpack.c.bf16 %v1493, %v1489
  %v1726 = vpack.c.bf16 %v1494, %v1490
  %v1727 = vpack.c.bf16 %v1499, %v1495
  %v1728 = vpack.c.bf16 %v1500, %v1496
  %v1729 = vpack.c.bf16 %v1501, %v1497
  %v1730 = vpack.c.bf16 %v1502, %v1498
  %v1731 = vpack.c.bf16 %v1507, %v1503
  %v1732 = vpack.c.bf16 %v1508, %v1504
  %v1733 = vpack.c.bf16 %v1509, %v1505
  %v1734 = vpack.c.bf16 %v1510, %v1506
  %v1735 = vpack.c.bf16 %v1515, %v1511
  %v1736 = vpack.c.bf16 %v1516, %v1512
  %v1737 = vpack.c.bf16 %v1517, %v1513
  %v1738 = vpack.c.bf16 %v1518, %v1514
  %v1739 = vpack.c.bf16 %v1523, %v1519
  %v1740 = vpack.c.bf16 %v1524, %v1520
  %v1741 = vpack.c.bf16 %v1525, %v1521
  %v1742 = vpack.c.bf16 %v1526, %v1522
  %v1743 = vpack.c.bf16 %v1531, %v1527
  %v1744 = vpack.c.bf16 %v1532, %v1528
  %v1745 = vpack.c.bf16 %v1533, %v1529
  %v1746 = vpack.c.bf16 %v1534, %v1530
  %v1747 = vpack.c.bf16 %v1539, %v1535
  %v1748 = vpack.c.bf16 %v1540, %v1536
  %v1749 = vpack.c.bf16 %v1541, %v1537
  %v1750 = vpack.c.bf16 %v1542, %v1538
  %v1751 = vpack.c.bf16 %v1547, %v1543
  %v1752 = vpack.c.bf16 %v1548, %v1544
  %v1753 = vpack.c.bf16 %v1549, %v1545
  %v1754 = vpack.c.bf16 %v1550, %v1546
  %v1755 = vpack.c.bf16 %v1555, %v1551
  %v1756 = vpack.c.bf16 %v1556, %v1552
  %v1757 = vpack.c.bf16 %v1557, %v1553
  %v1758 = vpack.c.bf16 %v1558, %v1554
  %v1759 = vpack.c.bf16 %v1563, %v1559
  %v1760 = vpack.c.bf16 %v1564, %v1560
  %v1761 = vpack.c.bf16 %v1565, %v1561
  %v1762 = vpack.c.bf16 %v1566, %v1562
  %v1763 = vpack.c.bf16 %v1571, %v1567
  %v1764 = vpack.c.bf16 %v1572, %v1568
  %v1765 = vpack.c.bf16 %v1573, %v1569
  %v1766 = vpack.c.bf16 %v1574, %v1570
  %v1767 = vpack.c.bf16 %v1579, %v1575
  %v1768 = vpack.c.bf16 %v1580, %v1576
  %v1769 = vpack.c.bf16 %v1581, %v1577
  %v1770 = vpack.c.bf16 %v1582, %v1578
  %v1771 = vpack.c.bf16 %v1587, %v1583
  %v1772 = vpack.c.bf16 %v1588, %v1584
  %v1773 = vpack.c.bf16 %v1589, %v1585
  %v1774 = vpack.c.bf16 %v1590, %v1586
  %v1775 = vpack.c.bf16 %v1595, %v1591
  %v1776 = vpack.c.bf16 %v1596, %v1592
  %v1777 = vpack.c.bf16 %v1597, %v1593
  %v1778 = vpack.c.bf16 %v1598, %v1594
  %v1779 = vpack.c.bf16 %v1603, %v1599
  %v1780 = vpack.c.bf16 %v1604, %v1600
  %v1781 = vpack.c.bf16 %v1605, %v1601
  %v1782 = vpack.c.bf16 %v1606, %v1602
  %v1783 = vpack.c.bf16 %v1611, %v1607
  %v1784 = vpack.c.bf16 %v1612, %v1608
  %v1785 = vpack.c.bf16 %v1613, %v1609
  %v1786 = vpack.c.bf16 %v1614, %v1610
  %v1787 = vpack.c.bf16 %v1619, %v1615
  %v1788 = vpack.c.bf16 %v1620, %v1616
  %v1789 = vpack.c.bf16 %v1621, %v1617
  %v1790 = vpack.c.bf16 %v1622, %v1618
  %v1791 = vpack.c.bf16 %v1627, %v1623
  %v1792 = vpack.c.bf16 %v1628, %v1624
  %v1793 = vpack.c.bf16 %v1629, %v1625
  %v1794 = vpack.c.bf16 %v1630, %v1626
  %v1795 = vpack.c.bf16 %v1635, %v1631
  %v1796 = vpack.c.bf16 %v1636, %v1632
  %v1797 = vpack.c.bf16 %v1637, %v1633
  %v1798 = vpack.c.bf16 %v1638, %v1634
  %v1799 = vpack.c.bf16 %v1643, %v1639
  %v1800 = vpack.c.bf16 %v1644, %v1640
  %v1801 = vpack.c.bf16 %v1645, %v1641
  %v1802 = vpack.c.bf16 %v1646, %v1642
  %v1803 = vpack.c.bf16 %v1651, %v1647
  %v1804 = vpack.c.bf16 %v1652, %v1648
  %v1805 = vpack.c.bf16 %v1653, %v1649
  %v1806 = vpack.c.bf16 %v1654, %v1650
  %v1807 = vpack.c.bf16 %v1659, %v1655
  %v1808 = vpack.c.bf16 %v1660, %v1656
  %v1809 = vpack.c.bf16 %v1661, %v1657
  %v1810 = vpack.c.bf16 %v1662, %v1658
  %v1811 = vpack.c.bf16 %v1667, %v1663
  %v1812 = vpack.c.bf16 %v1668, %v1664
  %v1813 = vpack.c.bf16 %v1669, %v1665
  %v1814 = vpack.c.bf16 %v1670, %v1666
  %v1815 = vpack.c.bf16 %v1675, %v1671
  %v1816 = vpack.c.bf16 %v1676, %v1672
  %v1817 = vpack.c.bf16 %v1677, %v1673
  %v1818 = vpack.c.bf16 %v1678, %v1674
  %v1819 = vpack.c.bf16 %v1683, %v1679
  %v1820 = vpack.c.bf16 %v1684, %v1680
  %v1821 = vpack.c.bf16 %v1685, %v1681
  %v1822 = vpack.c.bf16 %v1686, %v1682
  %v1823 = vpack.c.bf16 %v1691, %v1687
  %v1824 = vpack.c.bf16 %v1692, %v1688
  %v1825 = vpack.c.bf16 %v1693, %v1689
  %v1826 = vpack.c.bf16 %v1694, %v1690
  %v1827 = vpack.c.bf16 %v1699, %v1695
  %v1828 = vpack.c.bf16 %v1700, %v1696
  %v1829 = vpack.c.bf16 %v1701, %v1697
  %v1830 = vpack.c.bf16 %v1702, %v1698
  %v1831 = vld [vmem:[%s3] sm:$0xf]
  %v1832 = vld [vmem:[%s3 + $0x4] sm:$0xf]
  %v1833 = vld [vmem:[%s3 + $0x8] sm:$0xf]
  %v1834 = vld [vmem:[%s3 + $0xc] sm:$0xf]
  %v1835 = vld [vmem:[%s3 + $0x10] sm:$0xf]
  %v1836 = vld [vmem:[%s3 + $0x14] sm:$0xf]
  %v1837 = vld [vmem:[%s3 + $0x18] sm:$0xf]
  %v1838 = vld [vmem:[%s3 + $0x1c] sm:$0xf]
  %v1839 = vld [vmem:[%s3 + $0x20] sm:$0xf]
  %v1840 = vld [vmem:[%s3 + $0x24] sm:$0xf]
  %v1841 = vld [vmem:[%s3 + $0x28] sm:$0xf]
  %v1842 = vld [vmem:[%s3 + $0x2c] sm:$0xf]
  %v1843 = vld [vmem:[%s3 + $0x30] sm:$0xf]
  %v1844 = vld [vmem:[%s3 + $0x34] sm:$0xf]
  %v1845 = vld [vmem:[%s3 + $0x38] sm:$0xf]
  %v1846 = vld [vmem:[%s3 + $0x3c] sm:$0xf]
  %v1847 = vld [vmem:[%s3 + $0x40] sm:$0xf]
  %v1848 = vld [vmem:[%s3 + $0x44] sm:$0xf]
  %v1849 = vld [vmem:[%s3 + $0x48] sm:$0xf]
  %v1850 = vld [vmem:[%s3 + $0x4c] sm:$0xf]
  %v1851 = vld [vmem:[%s3 + $0x50] sm:$0xf]
  %v1852 = vld [vmem:[%s3 + $0x54] sm:$0xf]
  %v1853 = vld [vmem:[%s3 + $0x58] sm:$0xf]
  %v1854 = vld [vmem:[%s3 + $0x5c] sm:$0xf]
  %v1855 = vld [vmem:[%s3 + $0x60] sm:$0xf]
  %v1856 = vld [vmem:[%s3 + $0x64] sm:$0xf]
  %v1857 = vld [vmem:[%s3 + $0x68] sm:$0xf]
  %v1858 = vld [vmem:[%s3 + $0x6c] sm:$0xf]
  %v1859 = vld [vmem:[%s3 + $0x70] sm:$0xf]
  %v1860 = vld [vmem:[%s3 + $0x74] sm:$0xf]
  %v1861 = vld [vmem:[%s3 + $0x78] sm:$0xf]
  %v1862 = vld [vmem:[%s3 + $0x7c] sm:$0xf]
  %v1863 = vld [vmem:[%s3 + $0x80] sm:$0xf]
  %v1864 = vld [vmem:[%s3 + $0x84] sm:$0xf]
  %v1865 = vld [vmem:[%s3 + $0x88] sm:$0xf]
  %v1866 = vld [vmem:[%s3 + $0x8c] sm:$0xf]
  %v1867 = vld [vmem:[%s3 + $0x90] sm:$0xf]
  %v1868 = vld [vmem:[%s3 + $0x94] sm:$0xf]
  %v1869 = vld [vmem:[%s3 + $0x98] sm:$0xf]
  %v1870 = vld [vmem:[%s3 + $0x9c] sm:$0xf]
  %v1871 = vld [vmem:[%s3 + $0xa0] sm:$0xf]
  %v1872 = vld [vmem:[%s3 + $0xa4] sm:$0xf]
  %v1873 = vld [vmem:[%s3 + $0xa8] sm:$0xf]
  %v1874 = vld [vmem:[%s3 + $0xac] sm:$0xf]
  %v1875 = vld [vmem:[%s3 + $0xb0] sm:$0xf]
  %v1876 = vld [vmem:[%s3 + $0xb4] sm:$0xf]
  %v1877 = vld [vmem:[%s3 + $0xb8] sm:$0xf]
  %v1878 = vld [vmem:[%s3 + $0xbc] sm:$0xf]
  %v1879 = vld [vmem:[%s3 + $0xc0] sm:$0xf]
  %v1880 = vld [vmem:[%s3 + $0xc4] sm:$0xf]
  %v1881 = vld [vmem:[%s3 + $0xc8] sm:$0xf]
  %v1882 = vld [vmem:[%s3 + $0xcc] sm:$0xf]
  %v1883 = vld [vmem:[%s3 + $0xd0] sm:$0xf]
  %v1884 = vld [vmem:[%s3 + $0xd4] sm:$0xf]
  %v1885 = vld [vmem:[%s3 + $0xd8] sm:$0xf]
  %v1886 = vld [vmem:[%s3 + $0xdc] sm:$0xf]
  %v1887 = vld [vmem:[%s3 + $0xe0] sm:$0xf]
  %v1888 = vld [vmem:[%s3 + $0xe4] sm:$0xf]
  %v1889 = vld [vmem:[%s3 + $0xe8] sm:$0xf]
  %v1890 = vld [vmem:[%s3 + $0xec] sm:$0xf]
  %v1891 = vld [vmem:[%s3 + $0xf0] sm:$0xf]
  %v1892 = vld [vmem:[%s3 + $0xf4] sm:$0xf]
  %v1893 = vld [vmem:[%s3 + $0xf8] sm:$0xf]
  %v1894 = vld [vmem:[%s3 + $0xfc] sm:$0xf]
  %v1959 = vunpack.c.l.b16 %v1831
  %v1960 = vunpack.c.l.b16 %v1832
  %v1961 = vunpack.c.l.b16 %v1833
  %v1962 = vunpack.c.l.b16 %v1834
  %v1963 = vunpack.c.l.b16 %v1835
  %v1964 = vunpack.c.l.b16 %v1836
  %v1965 = vunpack.c.l.b16 %v1837
  %v1966 = vunpack.c.l.b16 %v1838
  %v1967 = vunpack.c.l.b16 %v1839
  %v1968 = vunpack.c.l.b16 %v1840
  %v1969 = vunpack.c.l.b16 %v1841
  %v1970 = vunpack.c.l.b16 %v1842
  %v1971 = vunpack.c.l.b16 %v1843
  %v1972 = vunpack.c.l.b16 %v1844
  %v1973 = vunpack.c.l.b16 %v1845
  %v1974 = vunpack.c.l.b16 %v1846
  %v1975 = vunpack.c.l.b16 %v1847
  %v1976 = vunpack.c.l.b16 %v1848
  %v1977 = vunpack.c.l.b16 %v1849
  %v1978 = vunpack.c.l.b16 %v1850
  %v1979 = vunpack.c.l.b16 %v1851
  %v1980 = vunpack.c.l.b16 %v1852
  %v1981 = vunpack.c.l.b16 %v1853
  %v1982 = vunpack.c.l.b16 %v1854
  %v1983 = vunpack.c.l.b16 %v1855
  %v1984 = vunpack.c.l.b16 %v1856
  %v1985 = vunpack.c.l.b16 %v1857
  %v1986 = vunpack.c.l.b16 %v1858
  %v1987 = vunpack.c.l.b16 %v1859
  %v1988 = vunpack.c.l.b16 %v1860
  %v1989 = vunpack.c.l.b16 %v1861
  %v1990 = vunpack.c.l.b16 %v1862
  %v1991 = vunpack.c.l.b16 %v1863
  %v1992 = vunpack.c.l.b16 %v1864
  %v1993 = vunpack.c.l.b16 %v1865
  %v1994 = vunpack.c.l.b16 %v1866
  %v1995 = vunpack.c.l.b16 %v1867
  %v1996 = vunpack.c.l.b16 %v1868
  %v1997 = vunpack.c.l.b16 %v1869
  %v1998 = vunpack.c.l.b16 %v1870
  %v1999 = vunpack.c.l.b16 %v1871
  %v2000 = vunpack.c.l.b16 %v1872
  %v2001 = vunpack.c.l.b16 %v1873
  %v2002 = vunpack.c.l.b16 %v1874
  %v2003 = vunpack.c.l.b16 %v1875
  %v2004 = vunpack.c.l.b16 %v1876
  %v2005 = vunpack.c.l.b16 %v1877
  %v2006 = vunpack.c.l.b16 %v1878
  %v2007 = vunpack.c.l.b16 %v1879
  %v2008 = vunpack.c.l.b16 %v1880
  %v2009 = vunpack.c.l.b16 %v1881
  %v2010 = vunpack.c.l.b16 %v1882
  %v2011 = vunpack.c.l.b16 %v1883
  %v2012 = vunpack.c.l.b16 %v1884
  %v2013 = vunpack.c.l.b16 %v1885
  %v2014 = vunpack.c.l.b16 %v1886
  %v2015 = vunpack.c.l.b16 %v1887
  %v2016 = vunpack.c.l.b16 %v1888
  %v2017 = vunpack.c.l.b16 %v1889
  %v2018 = vunpack.c.l.b16 %v1890
  %v2019 = vunpack.c.l.b16 %v1891
  %v2020 = vunpack.c.l.b16 %v1892
  %v2021 = vunpack.c.l.b16 %v1893
  %v2022 = vunpack.c.l.b16 %v1894
  %v2023 = vpack.c.b16 %v1960, %v1959
  %v2024 = vpack.c.b16 %v1962, %v1961
  %v2025 = vpack.c.b16 %v1964, %v1963
  %v2026 = vpack.c.b16 %v1966, %v1965
  %v2027 = vpack.c.b16 %v1968, %v1967
  %v2028 = vpack.c.b16 %v1970, %v1969
  %v2029 = vpack.c.b16 %v1972, %v1971
  %v2030 = vpack.c.b16 %v1974, %v1973
  %v2031 = vpack.c.b16 %v1976, %v1975
  %v2032 = vpack.c.b16 %v1978, %v1977
  %v2033 = vpack.c.b16 %v1980, %v1979
  %v2034 = vpack.c.b16 %v1982, %v1981
  %v2035 = vpack.c.b16 %v1984, %v1983
  %v2036 = vpack.c.b16 %v1986, %v1985
  %v2037 = vpack.c.b16 %v1988, %v1987
  %v2038 = vpack.c.b16 %v1990, %v1989
  %v2039 = vpack.c.b16 %v1992, %v1991
  %v2040 = vpack.c.b16 %v1994, %v1993
  %v2041 = vpack.c.b16 %v1996, %v1995
  %v2042 = vpack.c.b16 %v1998, %v1997
  %v2043 = vpack.c.b16 %v2000, %v1999
  %v2044 = vpack.c.b16 %v2002, %v2001
  %v2045 = vpack.c.b16 %v2004, %v2003
  %v2046 = vpack.c.b16 %v2006, %v2005
  %v2047 = vpack.c.b16 %v2008, %v2007
  %v2048 = vpack.c.b16 %v2010, %v2009
  %v2049 = vpack.c.b16 %v2012, %v2011
  %v2050 = vpack.c.b16 %v2014, %v2013
  %v2051 = vpack.c.b16 %v2016, %v2015
  %v2052 = vpack.c.b16 %v2018, %v2017
  %v2053 = vpack.c.b16 %v2020, %v2019
  %v2054 = vpack.c.b16 %v2022, %v2021
  %2087 = vmatpush.bf16.msra.mxu0 %v2030
  %2088 = vmatpush.bf16.msra.mxu0 %v2029
  %2089 = vmatpush.bf16.msra.mxu0 %v2028
  %2090 = vmatpush.bf16.msra.mxu0 %v2027
  %2091 = vmatpush.bf16.msra.mxu0 %v2026
  %2092 = vmatpush.bf16.msra.mxu0 %v2025
  %2093 = vmatpush.bf16.msra.mxu0 %v2024
  %2094 = vmatpush.bf16.msra.mxu0 %v2023
  %2095 = vmatmul.bf16.gmra.mxu0 %v1703
  %v2096 = vpop.f32.mrf.mxu0
  %v2097 = vadd.f32 0.0, %v2096
  %v2098 = vpop.f32.mrf.mxu0
  %v2099 = vadd.f32 0.0, %v2098
  %2100 = vmatmul.bf16.gmra.mxu0 %v1707
  %v2101 = vpop.f32.mrf.mxu0
  %v2102 = vadd.f32 0.0, %v2101
  %v2103 = vpop.f32.mrf.mxu0
  %v2104 = vadd.f32 0.0, %v2103
  %2105 = vmatmul.bf16.gmra.mxu0 %v1711
  %v2106 = vpop.f32.mrf.mxu0
  %v2107 = vadd.f32 0.0, %v2106
  %v2108 = vpop.f32.mrf.mxu0
  %v2109 = vadd.f32 0.0, %v2108
  %2110 = vmatmul.bf16.gmra.mxu0 %v1715
  %v2111 = vpop.f32.mrf.mxu0
  %v2112 = vadd.f32 0.0, %v2111
  %v2113 = vpop.f32.mrf.mxu0
  %v2114 = vadd.f32 0.0, %v2113
  %2115 = vmatmul.bf16.gmra.mxu0 %v1719
  %v2116 = vpop.f32.mrf.mxu0
  %v2117 = vadd.f32 0.0, %v2116
  %v2118 = vpop.f32.mrf.mxu0
  %v2119 = vadd.f32 0.0, %v2118
  %2120 = vmatmul.bf16.gmra.mxu0 %v1723
  %v2121 = vpop.f32.mrf.mxu0
  %v2122 = vadd.f32 0.0, %v2121
  %v2123 = vpop.f32.mrf.mxu0
  %v2124 = vadd.f32 0.0, %v2123
  %2125 = vmatmul.bf16.gmra.mxu0 %v1727
  %v2126 = vpop.f32.mrf.mxu0
  %v2127 = vadd.f32 0.0, %v2126
  %v2128 = vpop.f32.mrf.mxu0
  %v2129 = vadd.f32 0.0, %v2128
  %2130 = vmatmul.bf16.gmra.mxu0 %v1731
  %v2131 = vpop.f32.mrf.mxu0
  %v2132 = vadd.f32 0.0, %v2131
  %v2133 = vpop.f32.mrf.mxu0
  %v2134 = vadd.f32 0.0, %v2133
  %2135 = vmatmul.bf16.gmra.mxu0 %v1735
  %v2136 = vpop.f32.mrf.mxu0
  %v2137 = vadd.f32 0.0, %v2136
  %v2138 = vpop.f32.mrf.mxu0
  %v2139 = vadd.f32 0.0, %v2138
  %2140 = vmatmul.bf16.gmra.mxu0 %v1739
  %v2141 = vpop.f32.mrf.mxu0
  %v2142 = vadd.f32 0.0, %v2141
  %v2143 = vpop.f32.mrf.mxu0
  %v2144 = vadd.f32 0.0, %v2143
  %2145 = vmatmul.bf16.gmra.mxu0 %v1743
  %v2146 = vpop.f32.mrf.mxu0
  %v2147 = vadd.f32 0.0, %v2146
  %v2148 = vpop.f32.mrf.mxu0
  %v2149 = vadd.f32 0.0, %v2148
  %2150 = vmatmul.bf16.gmra.mxu0 %v1747
  %v2151 = vpop.f32.mrf.mxu0
  %v2152 = vadd.f32 0.0, %v2151
  %v2153 = vpop.f32.mrf.mxu0
  %v2154 = vadd.f32 0.0, %v2153
  %2155 = vmatmul.bf16.gmra.mxu0 %v1751
  %v2156 = vpop.f32.mrf.mxu0
  %v2157 = vadd.f32 0.0, %v2156
  %v2158 = vpop.f32.mrf.mxu0
  %v2159 = vadd.f32 0.0, %v2158
  %2160 = vmatmul.bf16.gmra.mxu0 %v1755
  %v2161 = vpop.f32.mrf.mxu0
  %v2162 = vadd.f32 0.0, %v2161
  %v2163 = vpop.f32.mrf.mxu0
  %v2164 = vadd.f32 0.0, %v2163
  %2165 = vmatmul.bf16.gmra.mxu0 %v1759
  %v2166 = vpop.f32.mrf.mxu0
  %v2167 = vadd.f32 0.0, %v2166
  %v2168 = vpop.f32.mrf.mxu0
  %v2169 = vadd.f32 0.0, %v2168
  %2170 = vmatmul.bf16.gmra.mxu0 %v1763
  %v2171 = vpop.f32.mrf.mxu0
  %v2172 = vadd.f32 0.0, %v2171
  %v2173 = vpop.f32.mrf.mxu0
  %v2174 = vadd.f32 0.0, %v2173
  %2175 = vmatmul.bf16.gmra.mxu0 %v1767
  %v2176 = vpop.f32.mrf.mxu0
  %v2177 = vadd.f32 0.0, %v2176
  %v2178 = vpop.f32.mrf.mxu0
  %v2179 = vadd.f32 0.0, %v2178
  %2180 = vmatmul.bf16.gmra.mxu0 %v1771
  %v2181 = vpop.f32.mrf.mxu0
  %v2182 = vadd.f32 0.0, %v2181
  %v2183 = vpop.f32.mrf.mxu0
  %v2184 = vadd.f32 0.0, %v2183
  %2185 = vmatmul.bf16.gmra.mxu0 %v1775
  %v2186 = vpop.f32.mrf.mxu0
  %v2187 = vadd.f32 0.0, %v2186
  %v2188 = vpop.f32.mrf.mxu0
  %v2189 = vadd.f32 0.0, %v2188
  %2190 = vmatmul.bf16.gmra.mxu0 %v1779
  %v2191 = vpop.f32.mrf.mxu0
  %v2192 = vadd.f32 0.0, %v2191
  %v2193 = vpop.f32.mrf.mxu0
  %v2194 = vadd.f32 0.0, %v2193
  %2195 = vmatmul.bf16.gmra.mxu0 %v1783
  %v2196 = vpop.f32.mrf.mxu0
  %v2197 = vadd.f32 0.0, %v2196
  %v2198 = vpop.f32.mrf.mxu0
  %v2199 = vadd.f32 0.0, %v2198
  %2200 = vmatmul.bf16.gmra.mxu0 %v1787
  %v2201 = vpop.f32.mrf.mxu0
  %v2202 = vadd.f32 0.0, %v2201
  %v2203 = vpop.f32.mrf.mxu0
  %v2204 = vadd.f32 0.0, %v2203
  %2205 = vmatmul.bf16.gmra.mxu0 %v1791
  %v2206 = vpop.f32.mrf.mxu0
  %v2207 = vadd.f32 0.0, %v2206
  %v2208 = vpop.f32.mrf.mxu0
  %v2209 = vadd.f32 0.0, %v2208
  %2210 = vmatmul.bf16.gmra.mxu0 %v1795
  %v2211 = vpop.f32.mrf.mxu0
  %v2212 = vadd.f32 0.0, %v2211
  %v2213 = vpop.f32.mrf.mxu0
  %v2214 = vadd.f32 0.0, %v2213
  %2215 = vmatmul.bf16.gmra.mxu0 %v1799
  %v2216 = vpop.f32.mrf.mxu0
  %v2217 = vadd.f32 0.0, %v2216
  %v2218 = vpop.f32.mrf.mxu0
  %v2219 = vadd.f32 0.0, %v2218
  %2220 = vmatmul.bf16.gmra.mxu0 %v1803
  %v2221 = vpop.f32.mrf.mxu0
  %v2222 = vadd.f32 0.0, %v2221
  %v2223 = vpop.f32.mrf.mxu0
  %v2224 = vadd.f32 0.0, %v2223
  %2225 = vmatmul.bf16.gmra.mxu0 %v1807
  %v2226 = vpop.f32.mrf.mxu0
  %v2227 = vadd.f32 0.0, %v2226
  %v2228 = vpop.f32.mrf.mxu0
  %v2229 = vadd.f32 0.0, %v2228
  %2230 = vmatmul.bf16.gmra.mxu0 %v1811
  %v2231 = vpop.f32.mrf.mxu0
  %v2232 = vadd.f32 0.0, %v2231
  %v2233 = vpop.f32.mrf.mxu0
  %v2234 = vadd.f32 0.0, %v2233
  %2235 = vmatmul.bf16.gmra.mxu0 %v1815
  %v2236 = vpop.f32.mrf.mxu0
  %v2237 = vadd.f32 0.0, %v2236
  %v2238 = vpop.f32.mrf.mxu0
  %v2239 = vadd.f32 0.0, %v2238
  %2240 = vmatmul.bf16.gmra.mxu0 %v1819
  %v2241 = vpop.f32.mrf.mxu0
  %v2242 = vadd.f32 0.0, %v2241
  %v2243 = vpop.f32.mrf.mxu0
  %v2244 = vadd.f32 0.0, %v2243
  %2245 = vmatmul.bf16.gmra.mxu0 %v1823
  %v2246 = vpop.f32.mrf.mxu0
  %v2247 = vadd.f32 0.0, %v2246
  %v2248 = vpop.f32.mrf.mxu0
  %v2249 = vadd.f32 0.0, %v2248
  %2250 = vmatmul.bf16.gmra.mxu0 %v1827
  %v2251 = vpop.f32.mrf.mxu0
  %v2252 = vadd.f32 0.0, %v2251
  %v2253 = vpop.f32.mrf.mxu0
  %v2254 = vadd.f32 0.0, %v2253
  %2255 = vdwg.mxu0
  %2256 = vmatpush.bf16.msra.mxu0 %v2038
  %2257 = vmatpush.bf16.msra.mxu0 %v2037
  %2258 = vmatpush.bf16.msra.mxu0 %v2036
  %2259 = vmatpush.bf16.msra.mxu0 %v2035
  %2260 = vmatpush.bf16.msra.mxu0 %v2034
  %2261 = vmatpush.bf16.msra.mxu0 %v2033
  %2262 = vmatpush.bf16.msra.mxu0 %v2032
  %2263 = vmatpush.bf16.msra.mxu0 %v2031
  %2264 = vmatmul.bf16.gmra.mxu0 %v1704
  %v2265 = vpop.f32.mrf.mxu0
  %v2266 = vadd.f32 %v2097, %v2265
  %v2267 = vpop.f32.mrf.mxu0
  %v2268 = vadd.f32 %v2099, %v2267
  %2269 = vmatmul.bf16.gmra.mxu0 %v1708
  %v2270 = vpop.f32.mrf.mxu0
  %v2271 = vadd.f32 %v2102, %v2270
  %v2272 = vpop.f32.mrf.mxu0
  %v2273 = vadd.f32 %v2104, %v2272
  %2274 = vmatmul.bf16.gmra.mxu0 %v1712
  %v2275 = vpop.f32.mrf.mxu0
  %v2276 = vadd.f32 %v2107, %v2275
  %v2277 = vpop.f32.mrf.mxu0
  %v2278 = vadd.f32 %v2109, %v2277
  %2279 = vmatmul.bf16.gmra.mxu0 %v1716
  %v2280 = vpop.f32.mrf.mxu0
  %v2281 = vadd.f32 %v2112, %v2280
  %v2282 = vpop.f32.mrf.mxu0
  %v2283 = vadd.f32 %v2114, %v2282
  %2284 = vmatmul.bf16.gmra.mxu0 %v1720
  %v2285 = vpop.f32.mrf.mxu0
  %v2286 = vadd.f32 %v2117, %v2285
  %v2287 = vpop.f32.mrf.mxu0
  %v2288 = vadd.f32 %v2119, %v2287
  %2289 = vmatmul.bf16.gmra.mxu0 %v1724
  %v2290 = vpop.f32.mrf.mxu0
  %v2291 = vadd.f32 %v2122, %v2290
  %v2292 = vpop.f32.mrf.mxu0
  %v2293 = vadd.f32 %v2124, %v2292
  %2294 = vmatmul.bf16.gmra.mxu0 %v1728
  %v2295 = vpop.f32.mrf.mxu0
  %v2296 = vadd.f32 %v2127, %v2295
  %v2297 = vpop.f32.mrf.mxu0
  %v2298 = vadd.f32 %v2129, %v2297
  %2299 = vmatmul.bf16.gmra.mxu0 %v1732
  %v2300 = vpop.f32.mrf.mxu0
  %v2301 = vadd.f32 %v2132, %v2300
  %v2302 = vpop.f32.mrf.mxu0
  %v2303 = vadd.f32 %v2134, %v2302
  %2304 = vmatmul.bf16.gmra.mxu0 %v1736
  %v2305 = vpop.f32.mrf.mxu0
  %v2306 = vadd.f32 %v2137, %v2305
  %v2307 = vpop.f32.mrf.mxu0
  %v2308 = vadd.f32 %v2139, %v2307
  %2309 = vmatmul.bf16.gmra.mxu0 %v1740
  %v2310 = vpop.f32.mrf.mxu0
  %v2311 = vadd.f32 %v2142, %v2310
  %v2312 = vpop.f32.mrf.mxu0
  %v2313 = vadd.f32 %v2144, %v2312
  %2314 = vmatmul.bf16.gmra.mxu0 %v1744
  %v2315 = vpop.f32.mrf.mxu0
  %v2316 = vadd.f32 %v2147, %v2315
  %v2317 = vpop.f32.mrf.mxu0
  %v2318 = vadd.f32 %v2149, %v2317
  %2319 = vmatmul.bf16.gmra.mxu0 %v1748
  %v2320 = vpop.f32.mrf.mxu0
  %v2321 = vadd.f32 %v2152, %v2320
  %v2322 = vpop.f32.mrf.mxu0
  %v2323 = vadd.f32 %v2154, %v2322
  %2324 = vmatmul.bf16.gmra.mxu0 %v1752
  %v2325 = vpop.f32.mrf.mxu0
  %v2326 = vadd.f32 %v2157, %v2325
  %v2327 = vpop.f32.mrf.mxu0
  %v2328 = vadd.f32 %v2159, %v2327
  %2329 = vmatmul.bf16.gmra.mxu0 %v1756
  %v2330 = vpop.f32.mrf.mxu0
  %v2331 = vadd.f32 %v2162, %v2330
  %v2332 = vpop.f32.mrf.mxu0
  %v2333 = vadd.f32 %v2164, %v2332
  %2334 = vmatmul.bf16.gmra.mxu0 %v1760
  %v2335 = vpop.f32.mrf.mxu0
  %v2336 = vadd.f32 %v2167, %v2335
  %v2337 = vpop.f32.mrf.mxu0
  %v2338 = vadd.f32 %v2169, %v2337
  %2339 = vmatmul.bf16.gmra.mxu0 %v1764
  %v2340 = vpop.f32.mrf.mxu0
  %v2341 = vadd.f32 %v2172, %v2340
  %v2342 = vpop.f32.mrf.mxu0
  %v2343 = vadd.f32 %v2174, %v2342
  %2344 = vmatmul.bf16.gmra.mxu0 %v1768
  %v2345 = vpop.f32.mrf.mxu0
  %v2346 = vadd.f32 %v2177, %v2345
  %v2347 = vpop.f32.mrf.mxu0
  %v2348 = vadd.f32 %v2179, %v2347
  %2349 = vmatmul.bf16.gmra.mxu0 %v1772
  %v2350 = vpop.f32.mrf.mxu0
  %v2351 = vadd.f32 %v2182, %v2350
  %v2352 = vpop.f32.mrf.mxu0
  %v2353 = vadd.f32 %v2184, %v2352
  %2354 = vmatmul.bf16.gmra.mxu0 %v1776
  %v2355 = vpop.f32.mrf.mxu0
  %v2356 = vadd.f32 %v2187, %v2355
  %v2357 = vpop.f32.mrf.mxu0
  %v2358 = vadd.f32 %v2189, %v2357
  %2359 = vmatmul.bf16.gmra.mxu0 %v1780
  %v2360 = vpop.f32.mrf.mxu0
  %v2361 = vadd.f32 %v2192, %v2360
  %v2362 = vpop.f32.mrf.mxu0
  %v2363 = vadd.f32 %v2194, %v2362
  %2364 = vmatmul.bf16.gmra.mxu0 %v1784
  %v2365 = vpop.f32.mrf.mxu0
  %v2366 = vadd.f32 %v2197, %v2365
  %v2367 = vpop.f32.mrf.mxu0
  %v2368 = vadd.f32 %v2199, %v2367
  %2369 = vmatmul.bf16.gmra.mxu0 %v1788
  %v2370 = vpop.f32.mrf.mxu0
  %v2371 = vadd.f32 %v2202, %v2370
  %v2372 = vpop.f32.mrf.mxu0
  %v2373 = vadd.f32 %v2204, %v2372
  %2374 = vmatmul.bf16.gmra.mxu0 %v1792
  %v2375 = vpop.f32.mrf.mxu0
  %v2376 = vadd.f32 %v2207, %v2375
  %v2377 = vpop.f32.mrf.mxu0
  %v2378 = vadd.f32 %v2209, %v2377
  %2379 = vmatmul.bf16.gmra.mxu0 %v1796
  %v2380 = vpop.f32.mrf.mxu0
  %v2381 = vadd.f32 %v2212, %v2380
  %v2382 = vpop.f32.mrf.mxu0
  %v2383 = vadd.f32 %v2214, %v2382
  %2384 = vmatmul.bf16.gmra.mxu0 %v1800
  %v2385 = vpop.f32.mrf.mxu0
  %v2386 = vadd.f32 %v2217, %v2385
  %v2387 = vpop.f32.mrf.mxu0
  %v2388 = vadd.f32 %v2219, %v2387
  %2389 = vmatmul.bf16.gmra.mxu0 %v1804
  %v2390 = vpop.f32.mrf.mxu0
  %v2391 = vadd.f32 %v2222, %v2390
  %v2392 = vpop.f32.mrf.mxu0
  %v2393 = vadd.f32 %v2224, %v2392
  %2394 = vmatmul.bf16.gmra.mxu0 %v1808
  %v2395 = vpop.f32.mrf.mxu0
  %v2396 = vadd.f32 %v2227, %v2395
  %v2397 = vpop.f32.mrf.mxu0
  %v2398 = vadd.f32 %v2229, %v2397
  %2399 = vmatmul.bf16.gmra.mxu0 %v1812
  %v2400 = vpop.f32.mrf.mxu0
  %v2401 = vadd.f32 %v2232, %v2400
  %v2402 = vpop.f32.mrf.mxu0
  %v2403 = vadd.f32 %v2234, %v2402
  %2404 = vmatmul.bf16.gmra.mxu0 %v1816
  %v2405 = vpop.f32.mrf.mxu0
  %v2406 = vadd.f32 %v2237, %v2405
  %v2407 = vpop.f32.mrf.mxu0
  %v2408 = vadd.f32 %v2239, %v2407
  %2409 = vmatmul.bf16.gmra.mxu0 %v1820
  %v2410 = vpop.f32.mrf.mxu0
  %v2411 = vadd.f32 %v2242, %v2410
  %v2412 = vpop.f32.mrf.mxu0
  %v2413 = vadd.f32 %v2244, %v2412
  %2414 = vmatmul.bf16.gmra.mxu0 %v1824
  %v2415 = vpop.f32.mrf.mxu0
  %v2416 = vadd.f32 %v2247, %v2415
  %v2417 = vpop.f32.mrf.mxu0
  %v2418 = vadd.f32 %v2249, %v2417
  %2419 = vmatmul.bf16.gmra.mxu0 %v1828
  %v2420 = vpop.f32.mrf.mxu0
  %v2421 = vadd.f32 %v2252, %v2420
  %v2422 = vpop.f32.mrf.mxu0
  %v2423 = vadd.f32 %v2254, %v2422
  %2424 = vdwg.mxu0
  %2425 = vmatpush.bf16.msra.mxu0 %v2046
  %2426 = vmatpush.bf16.msra.mxu0 %v2045
  %2427 = vmatpush.bf16.msra.mxu0 %v2044
  %2428 = vmatpush.bf16.msra.mxu0 %v2043
  %2429 = vmatpush.bf16.msra.mxu0 %v2042
  %2430 = vmatpush.bf16.msra.mxu0 %v2041
  %2431 = vmatpush.bf16.msra.mxu0 %v2040
  %2432 = vmatpush.bf16.msra.mxu0 %v2039
  %2433 = vmatmul.bf16.gmra.mxu0 %v1705
  %v2434 = vpop.f32.mrf.mxu0
  %v2435 = vadd.f32 %v2266, %v2434
  %v2436 = vpop.f32.mrf.mxu0
  %v2437 = vadd.f32 %v2268, %v2436
  %2438 = vmatmul.bf16.gmra.mxu0 %v1709
  %v2439 = vpop.f32.mrf.mxu0
  %v2440 = vadd.f32 %v2271, %v2439
  %v2441 = vpop.f32.mrf.mxu0
  %v2442 = vadd.f32 %v2273, %v2441
  %2443 = vmatmul.bf16.gmra.mxu0 %v1713
  %v2444 = vpop.f32.mrf.mxu0
  %v2445 = vadd.f32 %v2276, %v2444
  %v2446 = vpop.f32.mrf.mxu0
  %v2447 = vadd.f32 %v2278, %v2446
  %2448 = vmatmul.bf16.gmra.mxu0 %v1717
  %v2449 = vpop.f32.mrf.mxu0
  %v2450 = vadd.f32 %v2281, %v2449
  %v2451 = vpop.f32.mrf.mxu0
  %v2452 = vadd.f32 %v2283, %v2451
  %2453 = vmatmul.bf16.gmra.mxu0 %v1721
  %v2454 = vpop.f32.mrf.mxu0
  %v2455 = vadd.f32 %v2286, %v2454
  %v2456 = vpop.f32.mrf.mxu0
  %v2457 = vadd.f32 %v2288, %v2456
  %2458 = vmatmul.bf16.gmra.mxu0 %v1725
  %v2459 = vpop.f32.mrf.mxu0
  %v2460 = vadd.f32 %v2291, %v2459
  %v2461 = vpop.f32.mrf.mxu0
  %v2462 = vadd.f32 %v2293, %v2461
  %2463 = vmatmul.bf16.gmra.mxu0 %v1729
  %v2464 = vpop.f32.mrf.mxu0
  %v2465 = vadd.f32 %v2296, %v2464
  %v2466 = vpop.f32.mrf.mxu0
  %v2467 = vadd.f32 %v2298, %v2466
  %2468 = vmatmul.bf16.gmra.mxu0 %v1733
  %v2469 = vpop.f32.mrf.mxu0
  %v2470 = vadd.f32 %v2301, %v2469
  %v2471 = vpop.f32.mrf.mxu0
  %v2472 = vadd.f32 %v2303, %v2471
  %2473 = vmatmul.bf16.gmra.mxu0 %v1737
  %v2474 = vpop.f32.mrf.mxu0
  %v2475 = vadd.f32 %v2306, %v2474
  %v2476 = vpop.f32.mrf.mxu0
  %v2477 = vadd.f32 %v2308, %v2476
  %2478 = vmatmul.bf16.gmra.mxu0 %v1741
  %v2479 = vpop.f32.mrf.mxu0
  %v2480 = vadd.f32 %v2311, %v2479
  %v2481 = vpop.f32.mrf.mxu0
  %v2482 = vadd.f32 %v2313, %v2481
  %2483 = vmatmul.bf16.gmra.mxu0 %v1745
  %v2484 = vpop.f32.mrf.mxu0
  %v2485 = vadd.f32 %v2316, %v2484
  %v2486 = vpop.f32.mrf.mxu0
  %v2487 = vadd.f32 %v2318, %v2486
  %2488 = vmatmul.bf16.gmra.mxu0 %v1749
  %v2489 = vpop.f32.mrf.mxu0
  %v2490 = vadd.f32 %v2321, %v2489
  %v2491 = vpop.f32.mrf.mxu0
  %v2492 = vadd.f32 %v2323, %v2491
  %2493 = vmatmul.bf16.gmra.mxu0 %v1753
  %v2494 = vpop.f32.mrf.mxu0
  %v2495 = vadd.f32 %v2326, %v2494
  %v2496 = vpop.f32.mrf.mxu0
  %v2497 = vadd.f32 %v2328, %v2496
  %2498 = vmatmul.bf16.gmra.mxu0 %v1757
  %v2499 = vpop.f32.mrf.mxu0
  %v2500 = vadd.f32 %v2331, %v2499
  %v2501 = vpop.f32.mrf.mxu0
  %v2502 = vadd.f32 %v2333, %v2501
  %2503 = vmatmul.bf16.gmra.mxu0 %v1761
  %v2504 = vpop.f32.mrf.mxu0
  %v2505 = vadd.f32 %v2336, %v2504
  %v2506 = vpop.f32.mrf.mxu0
  %v2507 = vadd.f32 %v2338, %v2506
  %2508 = vmatmul.bf16.gmra.mxu0 %v1765
  %v2509 = vpop.f32.mrf.mxu0
  %v2510 = vadd.f32 %v2341, %v2509
  %v2511 = vpop.f32.mrf.mxu0
  %v2512 = vadd.f32 %v2343, %v2511
  %2513 = vmatmul.bf16.gmra.mxu0 %v1769
  %v2514 = vpop.f32.mrf.mxu0
  %v2515 = vadd.f32 %v2346, %v2514
  %v2516 = vpop.f32.mrf.mxu0
  %v2517 = vadd.f32 %v2348, %v2516
  %2518 = vmatmul.bf16.gmra.mxu0 %v1773
  %v2519 = vpop.f32.mrf.mxu0
  %v2520 = vadd.f32 %v2351, %v2519
  %v2521 = vpop.f32.mrf.mxu0
  %v2522 = vadd.f32 %v2353, %v2521
  %2523 = vmatmul.bf16.gmra.mxu0 %v1777
  %v2524 = vpop.f32.mrf.mxu0
  %v2525 = vadd.f32 %v2356, %v2524
  %v2526 = vpop.f32.mrf.mxu0
  %v2527 = vadd.f32 %v2358, %v2526
  %2528 = vmatmul.bf16.gmra.mxu0 %v1781
  %v2529 = vpop.f32.mrf.mxu0
  %v2530 = vadd.f32 %v2361, %v2529
  %v2531 = vpop.f32.mrf.mxu0
  %v2532 = vadd.f32 %v2363, %v2531
  %2533 = vmatmul.bf16.gmra.mxu0 %v1785
  %v2534 = vpop.f32.mrf.mxu0
  %v2535 = vadd.f32 %v2366, %v2534
  %v2536 = vpop.f32.mrf.mxu0
  %v2537 = vadd.f32 %v2368, %v2536
  %2538 = vmatmul.bf16.gmra.mxu0 %v1789
  %v2539 = vpop.f32.mrf.mxu0
  %v2540 = vadd.f32 %v2371, %v2539
  %v2541 = vpop.f32.mrf.mxu0
  %v2542 = vadd.f32 %v2373, %v2541
  %2543 = vmatmul.bf16.gmra.mxu0 %v1793
  %v2544 = vpop.f32.mrf.mxu0
  %v2545 = vadd.f32 %v2376, %v2544
  %v2546 = vpop.f32.mrf.mxu0
  %v2547 = vadd.f32 %v2378, %v2546
  %2548 = vmatmul.bf16.gmra.mxu0 %v1797
  %v2549 = vpop.f32.mrf.mxu0
  %v2550 = vadd.f32 %v2381, %v2549
  %v2551 = vpop.f32.mrf.mxu0
  %v2552 = vadd.f32 %v2383, %v2551
  %2553 = vmatmul.bf16.gmra.mxu0 %v1801
  %v2554 = vpop.f32.mrf.mxu0
  %v2555 = vadd.f32 %v2386, %v2554
  %v2556 = vpop.f32.mrf.mxu0
  %v2557 = vadd.f32 %v2388, %v2556
  %2558 = vmatmul.bf16.gmra.mxu0 %v1805
  %v2559 = vpop.f32.mrf.mxu0
  %v2560 = vadd.f32 %v2391, %v2559
  %v2561 = vpop.f32.mrf.mxu0
  %v2562 = vadd.f32 %v2393, %v2561
  %2563 = vmatmul.bf16.gmra.mxu0 %v1809
  %v2564 = vpop.f32.mrf.mxu0
  %v2565 = vadd.f32 %v2396, %v2564
  %v2566 = vpop.f32.mrf.mxu0
  %v2567 = vadd.f32 %v2398, %v2566
  %2568 = vmatmul.bf16.gmra.mxu0 %v1813
  %v2569 = vpop.f32.mrf.mxu0
  %v2570 = vadd.f32 %v2401, %v2569
  %v2571 = vpop.f32.mrf.mxu0
  %v2572 = vadd.f32 %v2403, %v2571
  %2573 = vmatmul.bf16.gmra.mxu0 %v1817
  %v2574 = vpop.f32.mrf.mxu0
  %v2575 = vadd.f32 %v2406, %v2574
  %v2576 = vpop.f32.mrf.mxu0
  %v2577 = vadd.f32 %v2408, %v2576
  %2578 = vmatmul.bf16.gmra.mxu0 %v1821
  %v2579 = vpop.f32.mrf.mxu0
  %v2580 = vadd.f32 %v2411, %v2579
  %v2581 = vpop.f32.mrf.mxu0
  %v2582 = vadd.f32 %v2413, %v2581
  %2583 = vmatmul.bf16.gmra.mxu0 %v1825
  %v2584 = vpop.f32.mrf.mxu0
  %v2585 = vadd.f32 %v2416, %v2584
  %v2586 = vpop.f32.mrf.mxu0
  %v2587 = vadd.f32 %v2418, %v2586
  %2588 = vmatmul.bf16.gmra.mxu0 %v1829
  %v2589 = vpop.f32.mrf.mxu0
  %v2590 = vadd.f32 %v2421, %v2589
  %v2591 = vpop.f32.mrf.mxu0
  %v2592 = vadd.f32 %v2423, %v2591
  %2593 = vdwg.mxu0
  %2594 = vmatpush.bf16.msra.mxu0 %v2054
  %2595 = vmatpush.bf16.msra.mxu0 %v2053
  %2596 = vmatpush.bf16.msra.mxu0 %v2052
  %2597 = vmatpush.bf16.msra.mxu0 %v2051
  %2598 = vmatpush.bf16.msra.mxu0 %v2050
  %2599 = vmatpush.bf16.msra.mxu0 %v2049
  %2600 = vmatpush.bf16.msra.mxu0 %v2048
  %2601 = vmatpush.bf16.msra.mxu0 %v2047
  %2602 = vmatmul.bf16.gmra.mxu0 %v1706
  %v2603 = vpop.f32.mrf.mxu0
  %v2604 = vadd.f32 %v2435, %v2603
  %v2605 = vpop.f32.mrf.mxu0
  %v2606 = vadd.f32 %v2437, %v2605
  %2607 = vmatmul.bf16.gmra.mxu0 %v1710
  %v2608 = vpop.f32.mrf.mxu0
  %v2609 = vadd.f32 %v2440, %v2608
  %v2610 = vpop.f32.mrf.mxu0
  %v2611 = vadd.f32 %v2442, %v2610
  %2612 = vmatmul.bf16.gmra.mxu0 %v1714
  %v2613 = vpop.f32.mrf.mxu0
  %v2614 = vadd.f32 %v2445, %v2613
  %v2615 = vpop.f32.mrf.mxu0
  %v2616 = vadd.f32 %v2447, %v2615
  %2617 = vmatmul.bf16.gmra.mxu0 %v1718
  %v2618 = vpop.f32.mrf.mxu0
  %v2619 = vadd.f32 %v2450, %v2618
  %v2620 = vpop.f32.mrf.mxu0
  %v2621 = vadd.f32 %v2452, %v2620
  %2622 = vmatmul.bf16.gmra.mxu0 %v1722
  %v2623 = vpop.f32.mrf.mxu0
  %v2624 = vadd.f32 %v2455, %v2623
  %v2625 = vpop.f32.mrf.mxu0
  %v2626 = vadd.f32 %v2457, %v2625
  %2627 = vmatmul.bf16.gmra.mxu0 %v1726
  %v2628 = vpop.f32.mrf.mxu0
  %v2629 = vadd.f32 %v2460, %v2628
  %v2630 = vpop.f32.mrf.mxu0
  %v2631 = vadd.f32 %v2462, %v2630
  %2632 = vmatmul.bf16.gmra.mxu0 %v1730
  %v2633 = vpop.f32.mrf.mxu0
  %v2634 = vadd.f32 %v2465, %v2633
  %v2635 = vpop.f32.mrf.mxu0
  %v2636 = vadd.f32 %v2467, %v2635
  %2637 = vmatmul.bf16.gmra.mxu0 %v1734
  %v2638 = vpop.f32.mrf.mxu0
  %v2639 = vadd.f32 %v2470, %v2638
  %v2640 = vpop.f32.mrf.mxu0
  %v2641 = vadd.f32 %v2472, %v2640
  %2642 = vmatmul.bf16.gmra.mxu0 %v1738
  %v2643 = vpop.f32.mrf.mxu0
  %v2644 = vadd.f32 %v2475, %v2643
  %v2645 = vpop.f32.mrf.mxu0
  %v2646 = vadd.f32 %v2477, %v2645
  %2647 = vmatmul.bf16.gmra.mxu0 %v1742
  %v2648 = vpop.f32.mrf.mxu0
  %v2649 = vadd.f32 %v2480, %v2648
  %v2650 = vpop.f32.mrf.mxu0
  %v2651 = vadd.f32 %v2482, %v2650
  %2652 = vmatmul.bf16.gmra.mxu0 %v1746
  %v2653 = vpop.f32.mrf.mxu0
  %v2654 = vadd.f32 %v2485, %v2653
  %v2655 = vpop.f32.mrf.mxu0
  %v2656 = vadd.f32 %v2487, %v2655
  %2657 = vmatmul.bf16.gmra.mxu0 %v1750
  %v2658 = vpop.f32.mrf.mxu0
  %v2659 = vadd.f32 %v2490, %v2658
  %v2660 = vpop.f32.mrf.mxu0
  %v2661 = vadd.f32 %v2492, %v2660
  %2662 = vmatmul.bf16.gmra.mxu0 %v1754
  %v2663 = vpop.f32.mrf.mxu0
  %v2664 = vadd.f32 %v2495, %v2663
  %v2665 = vpop.f32.mrf.mxu0
  %v2666 = vadd.f32 %v2497, %v2665
  %2667 = vmatmul.bf16.gmra.mxu0 %v1758
  %v2668 = vpop.f32.mrf.mxu0
  %v2669 = vadd.f32 %v2500, %v2668
  %v2670 = vpop.f32.mrf.mxu0
  %v2671 = vadd.f32 %v2502, %v2670
  %2672 = vmatmul.bf16.gmra.mxu0 %v1762
  %v2673 = vpop.f32.mrf.mxu0
  %v2674 = vadd.f32 %v2505, %v2673
  %v2675 = vpop.f32.mrf.mxu0
  %v2676 = vadd.f32 %v2507, %v2675
  %2677 = vmatmul.bf16.gmra.mxu0 %v1766
  %v2678 = vpop.f32.mrf.mxu0
  %v2679 = vadd.f32 %v2510, %v2678
  %v2680 = vpop.f32.mrf.mxu0
  %v2681 = vadd.f32 %v2512, %v2680
  %2682 = vmatmul.bf16.gmra.mxu0 %v1770
  %v2683 = vpop.f32.mrf.mxu0
  %v2684 = vadd.f32 %v2515, %v2683
  %v2685 = vpop.f32.mrf.mxu0
  %v2686 = vadd.f32 %v2517, %v2685
  %2687 = vmatmul.bf16.gmra.mxu0 %v1774
  %v2688 = vpop.f32.mrf.mxu0
  %v2689 = vadd.f32 %v2520, %v2688
  %v2690 = vpop.f32.mrf.mxu0
  %v2691 = vadd.f32 %v2522, %v2690
  %2692 = vmatmul.bf16.gmra.mxu0 %v1778
  %v2693 = vpop.f32.mrf.mxu0
  %v2694 = vadd.f32 %v2525, %v2693
  %v2695 = vpop.f32.mrf.mxu0
  %v2696 = vadd.f32 %v2527, %v2695
  %2697 = vmatmul.bf16.gmra.mxu0 %v1782
  %v2698 = vpop.f32.mrf.mxu0
  %v2699 = vadd.f32 %v2530, %v2698
  %v2700 = vpop.f32.mrf.mxu0
  %v2701 = vadd.f32 %v2532, %v2700
  %2702 = vmatmul.bf16.gmra.mxu0 %v1786
  %v2703 = vpop.f32.mrf.mxu0
  %v2704 = vadd.f32 %v2535, %v2703
  %v2705 = vpop.f32.mrf.mxu0
  %v2706 = vadd.f32 %v2537, %v2705
  %2707 = vmatmul.bf16.gmra.mxu0 %v1790
  %v2708 = vpop.f32.mrf.mxu0
  %v2709 = vadd.f32 %v2540, %v2708
  %v2710 = vpop.f32.mrf.mxu0
  %v2711 = vadd.f32 %v2542, %v2710
  %2712 = vmatmul.bf16.gmra.mxu0 %v1794
  %v2713 = vpop.f32.mrf.mxu0
  %v2714 = vadd.f32 %v2545, %v2713
  %v2715 = vpop.f32.mrf.mxu0
  %v2716 = vadd.f32 %v2547, %v2715
  %2717 = vmatmul.bf16.gmra.mxu0 %v1798
  %v2718 = vpop.f32.mrf.mxu0
  %v2719 = vadd.f32 %v2550, %v2718
  %v2720 = vpop.f32.mrf.mxu0
  %v2721 = vadd.f32 %v2552, %v2720
  %2722 = vmatmul.bf16.gmra.mxu0 %v1802
  %v2723 = vpop.f32.mrf.mxu0
  %v2724 = vadd.f32 %v2555, %v2723
  %v2725 = vpop.f32.mrf.mxu0
  %v2726 = vadd.f32 %v2557, %v2725
  %2727 = vmatmul.bf16.gmra.mxu0 %v1806
  %v2728 = vpop.f32.mrf.mxu0
  %v2729 = vadd.f32 %v2560, %v2728
  %v2730 = vpop.f32.mrf.mxu0
  %v2731 = vadd.f32 %v2562, %v2730
  %2732 = vmatmul.bf16.gmra.mxu0 %v1810
  %v2733 = vpop.f32.mrf.mxu0
  %v2734 = vadd.f32 %v2565, %v2733
  %v2735 = vpop.f32.mrf.mxu0
  %v2736 = vadd.f32 %v2567, %v2735
  %2737 = vmatmul.bf16.gmra.mxu0 %v1814
  %v2738 = vpop.f32.mrf.mxu0
  %v2739 = vadd.f32 %v2570, %v2738
  %v2740 = vpop.f32.mrf.mxu0
  %v2741 = vadd.f32 %v2572, %v2740
  %2742 = vmatmul.bf16.gmra.mxu0 %v1818
  %v2743 = vpop.f32.mrf.mxu0
  %v2744 = vadd.f32 %v2575, %v2743
  %v2745 = vpop.f32.mrf.mxu0
  %v2746 = vadd.f32 %v2577, %v2745
  %2747 = vmatmul.bf16.gmra.mxu0 %v1822
  %v2748 = vpop.f32.mrf.mxu0
  %v2749 = vadd.f32 %v2580, %v2748
  %v2750 = vpop.f32.mrf.mxu0
  %v2751 = vadd.f32 %v2582, %v2750
  %2752 = vmatmul.bf16.gmra.mxu0 %v1826
  %v2753 = vpop.f32.mrf.mxu0
  %v2754 = vadd.f32 %v2585, %v2753
  %v2755 = vpop.f32.mrf.mxu0
  %v2756 = vadd.f32 %v2587, %v2755
  %2757 = vmatmul.bf16.gmra.mxu0 %v1830
  %v2758 = vpop.f32.mrf.mxu0
  %v2759 = vadd.f32 %v2590, %v2758
  %v2760 = vpop.f32.mrf.mxu0
  %v2761 = vadd.f32 %v2592, %v2760
  %2762 = vdwg.mxu0
  %v2763 = vpack.c.bf16 %v2604, %v2604
  %v2764 = vpack.c.bf16 %v2606, %v2606
  %v2765 = vpack.c.bf16 %v2609, %v2609
  %v2766 = vpack.c.bf16 %v2611, %v2611
  %v2767 = vpack.c.bf16 %v2614, %v2614
  %v2768 = vpack.c.bf16 %v2616, %v2616
  %v2769 = vpack.c.bf16 %v2619, %v2619
  %v2770 = vpack.c.bf16 %v2621, %v2621
  %v2771 = vpack.c.bf16 %v2624, %v2624
  %v2772 = vpack.c.bf16 %v2626, %v2626
  %v2773 = vpack.c.bf16 %v2629, %v2629
  %v2774 = vpack.c.bf16 %v2631, %v2631
  %v2775 = vpack.c.bf16 %v2634, %v2634
  %v2776 = vpack.c.bf16 %v2636, %v2636
  %v2777 = vpack.c.bf16 %v2639, %v2639
  %v2778 = vpack.c.bf16 %v2641, %v2641
  %v2779 = vpack.c.bf16 %v2644, %v2644
  %v2780 = vpack.c.bf16 %v2646, %v2646
  %v2781 = vpack.c.bf16 %v2649, %v2649
  %v2782 = vpack.c.bf16 %v2651, %v2651
  %v2783 = vpack.c.bf16 %v2654, %v2654
  %v2784 = vpack.c.bf16 %v2656, %v2656
  %v2785 = vpack.c.bf16 %v2659, %v2659
  %v2786 = vpack.c.bf16 %v2661, %v2661
  %v2787 = vpack.c.bf16 %v2664, %v2664
  %v2788 = vpack.c.bf16 %v2666, %v2666
  %v2789 = vpack.c.bf16 %v2669, %v2669
  %v2790 = vpack.c.bf16 %v2671, %v2671
  %v2791 = vpack.c.bf16 %v2674, %v2674
  %v2792 = vpack.c.bf16 %v2676, %v2676
  %v2793 = vpack.c.bf16 %v2679, %v2679
  %v2794 = vpack.c.bf16 %v2681, %v2681
  %v2795 = vpack.c.bf16 %v2684, %v2684
  %v2796 = vpack.c.bf16 %v2686, %v2686
  %v2797 = vpack.c.bf16 %v2689, %v2689
  %v2798 = vpack.c.bf16 %v2691, %v2691
  %v2799 = vpack.c.bf16 %v2694, %v2694
  %v2800 = vpack.c.bf16 %v2696, %v2696
  %v2801 = vpack.c.bf16 %v2699, %v2699
  %v2802 = vpack.c.bf16 %v2701, %v2701
  %v2803 = vpack.c.bf16 %v2704, %v2704
  %v2804 = vpack.c.bf16 %v2706, %v2706
  %v2805 = vpack.c.bf16 %v2709, %v2709
  %v2806 = vpack.c.bf16 %v2711, %v2711
  %v2807 = vpack.c.bf16 %v2714, %v2714
  %v2808 = vpack.c.bf16 %v2716, %v2716
  %v2809 = vpack.c.bf16 %v2719, %v2719
  %v2810 = vpack.c.bf16 %v2721, %v2721
  %v2811 = vpack.c.bf16 %v2724, %v2724
  %v2812 = vpack.c.bf16 %v2726, %v2726
  %v2813 = vpack.c.bf16 %v2729, %v2729
  %v2814 = vpack.c.bf16 %v2731, %v2731
  %v2815 = vpack.c.bf16 %v2734, %v2734
  %v2816 = vpack.c.bf16 %v2736, %v2736
  %v2817 = vpack.c.bf16 %v2739, %v2739
  %v2818 = vpack.c.bf16 %v2741, %v2741
  %v2819 = vpack.c.bf16 %v2744, %v2744
  %v2820 = vpack.c.bf16 %v2746, %v2746
  %v2821 = vpack.c.bf16 %v2749, %v2749
  %v2822 = vpack.c.bf16 %v2751, %v2751
  %v2823 = vpack.c.bf16 %v2754, %v2754
  %v2824 = vpack.c.bf16 %v2756, %v2756
  %v2825 = vpack.c.bf16 %v2759, %v2759
  %v2826 = vpack.c.bf16 %v2761, %v2761
  %vm2827 = vcmask 519168
  %2828 = vst.msk [vmem:[%s4] sm:$0xf] %vm2827, %v2763
  %2829 = vst.msk [vmem:[%s4 + $0x4] sm:$0xf] %vm2827, %v2764
  %2830 = vst.msk [vmem:[%s4 + $0x8] sm:$0xf] %vm2827, %v2765
  %2831 = vst.msk [vmem:[%s4 + $0xc] sm:$0xf] %vm2827, %v2766
  %2832 = vst.msk [vmem:[%s4 + $0x10] sm:$0xf] %vm2827, %v2767
  %2833 = vst.msk [vmem:[%s4 + $0x14] sm:$0xf] %vm2827, %v2768
  %2834 = vst.msk [vmem:[%s4 + $0x18] sm:$0xf] %vm2827, %v2769
  %2835 = vst.msk [vmem:[%s4 + $0x1c] sm:$0xf] %vm2827, %v2770
  %2836 = vst.msk [vmem:[%s4 + $0x20] sm:$0xf] %vm2827, %v2771
  %2837 = vst.msk [vmem:[%s4 + $0x24] sm:$0xf] %vm2827, %v2772
  %2838 = vst.msk [vmem:[%s4 + $0x28] sm:$0xf] %vm2827, %v2773
  %2839 = vst.msk [vmem:[%s4 + $0x2c] sm:$0xf] %vm2827, %v2774
  %2840 = vst.msk [vmem:[%s4 + $0x30] sm:$0xf] %vm2827, %v2775
  %2841 = vst.msk [vmem:[%s4 + $0x34] sm:$0xf] %vm2827, %v2776
  %2842 = vst.msk [vmem:[%s4 + $0x38] sm:$0xf] %vm2827, %v2777
  %2843 = vst.msk [vmem:[%s4 + $0x3c] sm:$0xf] %vm2827, %v2778
  %2844 = vst.msk [vmem:[%s4 + $0x40] sm:$0xf] %vm2827, %v2779
  %2845 = vst.msk [vmem:[%s4 + $0x44] sm:$0xf] %vm2827, %v2780
  %2846 = vst.msk [vmem:[%s4 + $0x48] sm:$0xf] %vm2827, %v2781
  %2847 = vst.msk [vmem:[%s4 + $0x4c] sm:$0xf] %vm2827, %v2782
  %2848 = vst.msk [vmem:[%s4 + $0x50] sm:$0xf] %vm2827, %v2783
  %2849 = vst.msk [vmem:[%s4 + $0x54] sm:$0xf] %vm2827, %v2784
  %2850 = vst.msk [vmem:[%s4 + $0x58] sm:$0xf] %vm2827, %v2785
  %2851 = vst.msk [vmem:[%s4 + $0x5c] sm:$0xf] %vm2827, %v2786
  %2852 = vst.msk [vmem:[%s4 + $0x60] sm:$0xf] %vm2827, %v2787
  %2853 = vst.msk [vmem:[%s4 + $0x64] sm:$0xf] %vm2827, %v2788
  %2854 = vst.msk [vmem:[%s4 + $0x68] sm:$0xf] %vm2827, %v2789
  %2855 = vst.msk [vmem:[%s4 + $0x6c] sm:$0xf] %vm2827, %v2790
  %2856 = vst.msk [vmem:[%s4 + $0x70] sm:$0xf] %vm2827, %v2791
  %2857 = vst.msk [vmem:[%s4 + $0x74] sm:$0xf] %vm2827, %v2792
  %2858 = vst.msk [vmem:[%s4 + $0x78] sm:$0xf] %vm2827, %v2793
  %2859 = vst.msk [vmem:[%s4 + $0x7c] sm:$0xf] %vm2827, %v2794
  %2860 = vst.msk [vmem:[%s4 + $0x80] sm:$0xf] %vm2827, %v2795
  %2861 = vst.msk [vmem:[%s4 + $0x84] sm:$0xf] %vm2827, %v2796
  %2862 = vst.msk [vmem:[%s4 + $0x88] sm:$0xf] %vm2827, %v2797
  %2863 = vst.msk [vmem:[%s4 + $0x8c] sm:$0xf] %vm2827, %v2798
  %2864 = vst.msk [vmem:[%s4 + $0x90] sm:$0xf] %vm2827, %v2799
  %2865 = vst.msk [vmem:[%s4 + $0x94] sm:$0xf] %vm2827, %v2800
  %2866 = vst.msk [vmem:[%s4 + $0x98] sm:$0xf] %vm2827, %v2801
  %2867 = vst.msk [vmem:[%s4 + $0x9c] sm:$0xf] %vm2827, %v2802
  %2868 = vst.msk [vmem:[%s4 + $0xa0] sm:$0xf] %vm2827, %v2803
  %2869 = vst.msk [vmem:[%s4 + $0xa4] sm:$0xf] %vm2827, %v2804
  %2870 = vst.msk [vmem:[%s4 + $0xa8] sm:$0xf] %vm2827, %v2805
  %2871 = vst.msk [vmem:[%s4 + $0xac] sm:$0xf] %vm2827, %v2806
  %2872 = vst.msk [vmem:[%s4 + $0xb0] sm:$0xf] %vm2827, %v2807
  %2873 = vst.msk [vmem:[%s4 + $0xb4] sm:$0xf] %vm2827, %v2808
  %2874 = vst.msk [vmem:[%s4 + $0xb8] sm:$0xf] %vm2827, %v2809
  %2875 = vst.msk [vmem:[%s4 + $0xbc] sm:$0xf] %vm2827, %v2810
  %2876 = vst.msk [vmem:[%s4 + $0xc0] sm:$0xf] %vm2827, %v2811
  %2877 = vst.msk [vmem:[%s4 + $0xc4] sm:$0xf] %vm2827, %v2812
  %2878 = vst.msk [vmem:[%s4 + $0xc8] sm:$0xf] %vm2827, %v2813
  %2879 = vst.msk [vmem:[%s4 + $0xcc] sm:$0xf] %vm2827, %v2814
  %2880 = vst.msk [vmem:[%s4 + $0xd0] sm:$0xf] %vm2827, %v2815
  %2881 = vst.msk [vmem:[%s4 + $0xd4] sm:$0xf] %vm2827, %v2816
  %2882 = vst.msk [vmem:[%s4 + $0xd8] sm:$0xf] %vm2827, %v2817
  %2883 = vst.msk [vmem:[%s4 + $0xdc] sm:$0xf] %vm2827, %v2818
  %2884 = vst.msk [vmem:[%s4 + $0xe0] sm:$0xf] %vm2827, %v2819
  %2885 = vst.msk [vmem:[%s4 + $0xe4] sm:$0xf] %vm2827, %v2820
  %2886 = vst.msk [vmem:[%s4 + $0xe8] sm:$0xf] %vm2827, %v2821
  %2887 = vst.msk [vmem:[%s4 + $0xec] sm:$0xf] %vm2827, %v2822
  %2888 = vst.msk [vmem:[%s4 + $0xf0] sm:$0xf] %vm2827, %v2823
  %2889 = vst.msk [vmem:[%s4 + $0xf4] sm:$0xf] %vm2827, %v2824
  %2890 = vst.msk [vmem:[%s4 + $0xf8] sm:$0xf] %vm2827, %v2825
  %2891 = vst.msk [vmem:[%s4 + $0xfc] sm:$0xf] %vm2827, %v2826
  %vm2892 = vcmask 523264
  %v2893 = vsel %vm2892, %v2604, 0.0
  %v2894 = vsel %vm2892, %v2606, 0.0
  %v2895 = vadd.f32 %v2893, %v2894
  %v2896 = vsel %vm2892, %v2609, 0.0
  %v2897 = vadd.f32 %v2895, %v2896
  %v2898 = vsel %vm2892, %v2611, 0.0
  %v2899 = vadd.f32 %v2897, %v2898
  %v2900 = vsel %vm2892, %v2614, 0.0
  %v2901 = vadd.f32 %v2899, %v2900
  %v2902 = vsel %vm2892, %v2616, 0.0
  %v2903 = vadd.f32 %v2901, %v2902
  %v2904 = vsel %vm2892, %v2619, 0.0
  %v2905 = vadd.f32 %v2903, %v2904
  %v2906 = vsel %vm2892, %v2621, 0.0
  %v2907 = vadd.f32 %v2905, %v2906
  %v2908 = vsel %vm2892, %v2624, 0.0
  %v2909 = vadd.f32 %v2907, %v2908
  %v2910 = vsel %vm2892, %v2626, 0.0
  %v2911 = vadd.f32 %v2909, %v2910
  %v2912 = vsel %vm2892, %v2629, 0.0
  %v2913 = vadd.f32 %v2911, %v2912
  %v2914 = vsel %vm2892, %v2631, 0.0
  %v2915 = vadd.f32 %v2913, %v2914
  %v2916 = vsel %vm2892, %v2634, 0.0
  %v2917 = vadd.f32 %v2915, %v2916
  %v2918 = vsel %vm2892, %v2636, 0.0
  %v2919 = vadd.f32 %v2917, %v2918
  %v2920 = vsel %vm2892, %v2639, 0.0
  %v2921 = vadd.f32 %v2919, %v2920
  %v2922 = vsel %vm2892, %v2641, 0.0
  %v2923 = vadd.f32 %v2921, %v2922
  %v2924 = vsel %vm2892, %v2644, 0.0
  %v2925 = vadd.f32 %v2923, %v2924
  %v2926 = vsel %vm2892, %v2646, 0.0
  %v2927 = vadd.f32 %v2925, %v2926
  %v2928 = vsel %vm2892, %v2649, 0.0
  %v2929 = vadd.f32 %v2927, %v2928
  %v2930 = vsel %vm2892, %v2651, 0.0
  %v2931 = vadd.f32 %v2929, %v2930
  %v2932 = vsel %vm2892, %v2654, 0.0
  %v2933 = vadd.f32 %v2931, %v2932
  %v2934 = vsel %vm2892, %v2656, 0.0
  %v2935 = vadd.f32 %v2933, %v2934
  %v2936 = vsel %vm2892, %v2659, 0.0
  %v2937 = vadd.f32 %v2935, %v2936
  %v2938 = vsel %vm2892, %v2661, 0.0
  %v2939 = vadd.f32 %v2937, %v2938
  %v2940 = vsel %vm2892, %v2664, 0.0
  %v2941 = vadd.f32 %v2939, %v2940
  %v2942 = vsel %vm2892, %v2666, 0.0
  %v2943 = vadd.f32 %v2941, %v2942
  %v2944 = vsel %vm2892, %v2669, 0.0
  %v2945 = vadd.f32 %v2943, %v2944
  %v2946 = vsel %vm2892, %v2671, 0.0
  %v2947 = vadd.f32 %v2945, %v2946
  %v2948 = vsel %vm2892, %v2674, 0.0
  %v2949 = vadd.f32 %v2947, %v2948
  %v2950 = vsel %vm2892, %v2676, 0.0
  %v2951 = vadd.f32 %v2949, %v2950
  %v2952 = vsel %vm2892, %v2679, 0.0
  %v2953 = vadd.f32 %v2951, %v2952
  %v2954 = vsel %vm2892, %v2681, 0.0
  %v2955 = vadd.f32 %v2953, %v2954
  %v2956 = vsel %vm2892, %v2684, 0.0
  %v2957 = vadd.f32 %v2955, %v2956
  %v2958 = vsel %vm2892, %v2686, 0.0
  %v2959 = vadd.f32 %v2957, %v2958
  %v2960 = vsel %vm2892, %v2689, 0.0
  %v2961 = vadd.f32 %v2959, %v2960
  %v2962 = vsel %vm2892, %v2691, 0.0
  %v2963 = vadd.f32 %v2961, %v2962
  %v2964 = vsel %vm2892, %v2694, 0.0
  %v2965 = vadd.f32 %v2963, %v2964
  %v2966 = vsel %vm2892, %v2696, 0.0
  %v2967 = vadd.f32 %v2965, %v2966
  %v2968 = vsel %vm2892, %v2699, 0.0
  %v2969 = vadd.f32 %v2967, %v2968
  %v2970 = vsel %vm2892, %v2701, 0.0
  %v2971 = vadd.f32 %v2969, %v2970
  %v2972 = vsel %vm2892, %v2704, 0.0
  %v2973 = vadd.f32 %v2971, %v2972
  %v2974 = vsel %vm2892, %v2706, 0.0
  %v2975 = vadd.f32 %v2973, %v2974
  %v2976 = vsel %vm2892, %v2709, 0.0
  %v2977 = vadd.f32 %v2975, %v2976
  %v2978 = vsel %vm2892, %v2711, 0.0
  %v2979 = vadd.f32 %v2977, %v2978
  %v2980 = vsel %vm2892, %v2714, 0.0
  %v2981 = vadd.f32 %v2979, %v2980
  %v2982 = vsel %vm2892, %v2716, 0.0
  %v2983 = vadd.f32 %v2981, %v2982
  %v2984 = vsel %vm2892, %v2719, 0.0
  %v2985 = vadd.f32 %v2983, %v2984
  %v2986 = vsel %vm2892, %v2721, 0.0
  %v2987 = vadd.f32 %v2985, %v2986
  %v2988 = vsel %vm2892, %v2724, 0.0
  %v2989 = vadd.f32 %v2987, %v2988
  %v2990 = vsel %vm2892, %v2726, 0.0
  %v2991 = vadd.f32 %v2989, %v2990
  %v2992 = vsel %vm2892, %v2729, 0.0
  %v2993 = vadd.f32 %v2991, %v2992
  %v2994 = vsel %vm2892, %v2731, 0.0
  %v2995 = vadd.f32 %v2993, %v2994
  %v2996 = vsel %vm2892, %v2734, 0.0
  %v2997 = vadd.f32 %v2995, %v2996
  %v2998 = vsel %vm2892, %v2736, 0.0
  %v2999 = vadd.f32 %v2997, %v2998
  %v3000 = vsel %vm2892, %v2739, 0.0
  %v3001 = vadd.f32 %v2999, %v3000
  %v3002 = vsel %vm2892, %v2741, 0.0
  %v3003 = vadd.f32 %v3001, %v3002
  %v3004 = vsel %vm2892, %v2744, 0.0
  %v3005 = vadd.f32 %v3003, %v3004
  %v3006 = vsel %vm2892, %v2746, 0.0
  %v3007 = vadd.f32 %v3005, %v3006
  %v3008 = vsel %vm2892, %v2749, 0.0
  %v3009 = vadd.f32 %v3007, %v3008
  %v3010 = vsel %vm2892, %v2751, 0.0
  %v3011 = vadd.f32 %v3009, %v3010
  %v3012 = vsel %vm2892, %v2754, 0.0
  %v3013 = vadd.f32 %v3011, %v3012
  %v3014 = vsel %vm2892, %v2756, 0.0
  %v3015 = vadd.f32 %v3013, %v3014
  %v3016 = vsel %vm2892, %v2759, 0.0
  %v3017 = vadd.f32 %v3015, %v3016
  %v3018 = vsel %vm2892, %v2761, 0.0
  %v3019 = vadd.f32 %v3017, %v3018
  %v3020 = vrot.slane %v3019, 4
  %v3021 = vadd.f32 %v3019, %v3020
  %v3022 = vrot.slane %v3021, 2
  %v3023 = vadd.f32 %v3021, %v3022
  %v3024 = vrot.slane %v3023, 1
  %v3025 = vadd.f32 %v3023, %v3024
  %v3026 = vmul.f32 %v2604, %v2604
  %v3027 = vmul.f32 %v2606, %v2606
  %v3028 = vmul.f32 %v2609, %v2609
  %v3029 = vmul.f32 %v2611, %v2611
  %v3030 = vmul.f32 %v2614, %v2614
  %v3031 = vmul.f32 %v2616, %v2616
  %v3032 = vmul.f32 %v2619, %v2619
  %v3033 = vmul.f32 %v2621, %v2621
  %v3034 = vmul.f32 %v2624, %v2624
  %v3035 = vmul.f32 %v2626, %v2626
  %v3036 = vmul.f32 %v2629, %v2629
  %v3037 = vmul.f32 %v2631, %v2631
  %v3038 = vmul.f32 %v2634, %v2634
  %v3039 = vmul.f32 %v2636, %v2636
  %v3040 = vmul.f32 %v2639, %v2639
  %v3041 = vmul.f32 %v2641, %v2641
  %v3042 = vmul.f32 %v2644, %v2644
  %v3043 = vmul.f32 %v2646, %v2646
  %v3044 = vmul.f32 %v2649, %v2649
  %v3045 = vmul.f32 %v2651, %v2651
  %v3046 = vmul.f32 %v2654, %v2654
  %v3047 = vmul.f32 %v2656, %v2656
  %v3048 = vmul.f32 %v2659, %v2659
  %v3049 = vmul.f32 %v2661, %v2661
  %v3050 = vmul.f32 %v2664, %v2664
  %v3051 = vmul.f32 %v2666, %v2666
  %v3052 = vmul.f32 %v2669, %v2669
  %v3053 = vmul.f32 %v2671, %v2671
  %v3054 = vmul.f32 %v2674, %v2674
  %v3055 = vmul.f32 %v2676, %v2676
  %v3056 = vmul.f32 %v2679, %v2679
  %v3057 = vmul.f32 %v2681, %v2681
  %v3058 = vmul.f32 %v2684, %v2684
  %v3059 = vmul.f32 %v2686, %v2686
  %v3060 = vmul.f32 %v2689, %v2689
  %v3061 = vmul.f32 %v2691, %v2691
  %v3062 = vmul.f32 %v2694, %v2694
  %v3063 = vmul.f32 %v2696, %v2696
  %v3064 = vmul.f32 %v2699, %v2699
  %v3065 = vmul.f32 %v2701, %v2701
  %v3066 = vmul.f32 %v2704, %v2704
  %v3067 = vmul.f32 %v2706, %v2706
  %v3068 = vmul.f32 %v2709, %v2709
  %v3069 = vmul.f32 %v2711, %v2711
  %v3070 = vmul.f32 %v2714, %v2714
  %v3071 = vmul.f32 %v2716, %v2716
  %v3072 = vmul.f32 %v2719, %v2719
  %v3073 = vmul.f32 %v2721, %v2721
  %v3074 = vmul.f32 %v2724, %v2724
  %v3075 = vmul.f32 %v2726, %v2726
  %v3076 = vmul.f32 %v2729, %v2729
  %v3077 = vmul.f32 %v2731, %v2731
  %v3078 = vmul.f32 %v2734, %v2734
  %v3079 = vmul.f32 %v2736, %v2736
  %v3080 = vmul.f32 %v2739, %v2739
  %v3081 = vmul.f32 %v2741, %v2741
  %v3082 = vmul.f32 %v2744, %v2744
  %v3083 = vmul.f32 %v2746, %v2746
  %v3084 = vmul.f32 %v2749, %v2749
  %v3085 = vmul.f32 %v2751, %v2751
  %v3086 = vmul.f32 %v2754, %v2754
  %v3087 = vmul.f32 %v2756, %v2756
  %v3088 = vmul.f32 %v2759, %v2759
  %v3089 = vmul.f32 %v2761, %v2761
  %v3090 = vsel %vm2892, %v3026, 0.0
  %v3091 = vsel %vm2892, %v3027, 0.0
  %v3092 = vadd.f32 %v3090, %v3091
  %v3093 = vsel %vm2892, %v3028, 0.0
  %v3094 = vadd.f32 %v3092, %v3093
  %v3095 = vsel %vm2892, %v3029, 0.0
  %v3096 = vadd.f32 %v3094, %v3095
  %v3097 = vsel %vm2892, %v3030, 0.0
  %v3098 = vadd.f32 %v3096, %v3097
  %v3099 = vsel %vm2892, %v3031, 0.0
  %v3100 = vadd.f32 %v3098, %v3099
  %v3101 = vsel %vm2892, %v3032, 0.0
  %v3102 = vadd.f32 %v3100, %v3101
  %v3103 = vsel %vm2892, %v3033, 0.0
  %v3104 = vadd.f32 %v3102, %v3103
  %v3105 = vsel %vm2892, %v3034, 0.0
  %v3106 = vadd.f32 %v3104, %v3105
  %v3107 = vsel %vm2892, %v3035, 0.0
  %v3108 = vadd.f32 %v3106, %v3107
  %v3109 = vsel %vm2892, %v3036, 0.0
  %v3110 = vadd.f32 %v3108, %v3109
  %v3111 = vsel %vm2892, %v3037, 0.0
  %v3112 = vadd.f32 %v3110, %v3111
  %v3113 = vsel %vm2892, %v3038, 0.0
  %v3114 = vadd.f32 %v3112, %v3113
  %v3115 = vsel %vm2892, %v3039, 0.0
  %v3116 = vadd.f32 %v3114, %v3115
  %v3117 = vsel %vm2892, %v3040, 0.0
  %v3118 = vadd.f32 %v3116, %v3117
  %v3119 = vsel %vm2892, %v3041, 0.0
  %v3120 = vadd.f32 %v3118, %v3119
  %v3121 = vsel %vm2892, %v3042, 0.0
  %v3122 = vadd.f32 %v3120, %v3121
  %v3123 = vsel %vm2892, %v3043, 0.0
  %v3124 = vadd.f32 %v3122, %v3123
  %v3125 = vsel %vm2892, %v3044, 0.0
  %v3126 = vadd.f32 %v3124, %v3125
  %v3127 = vsel %vm2892, %v3045, 0.0
  %v3128 = vadd.f32 %v3126, %v3127
  %v3129 = vsel %vm2892, %v3046, 0.0
  %v3130 = vadd.f32 %v3128, %v3129
  %v3131 = vsel %vm2892, %v3047, 0.0
  %v3132 = vadd.f32 %v3130, %v3131
  %v3133 = vsel %vm2892, %v3048, 0.0
  %v3134 = vadd.f32 %v3132, %v3133
  %v3135 = vsel %vm2892, %v3049, 0.0
  %v3136 = vadd.f32 %v3134, %v3135
  %v3137 = vsel %vm2892, %v3050, 0.0
  %v3138 = vadd.f32 %v3136, %v3137
  %v3139 = vsel %vm2892, %v3051, 0.0
  %v3140 = vadd.f32 %v3138, %v3139
  %v3141 = vsel %vm2892, %v3052, 0.0
  %v3142 = vadd.f32 %v3140, %v3141
  %v3143 = vsel %vm2892, %v3053, 0.0
  %v3144 = vadd.f32 %v3142, %v3143
  %v3145 = vsel %vm2892, %v3054, 0.0
  %v3146 = vadd.f32 %v3144, %v3145
  %v3147 = vsel %vm2892, %v3055, 0.0
  %v3148 = vadd.f32 %v3146, %v3147
  %v3149 = vsel %vm2892, %v3056, 0.0
  %v3150 = vadd.f32 %v3148, %v3149
  %v3151 = vsel %vm2892, %v3057, 0.0
  %v3152 = vadd.f32 %v3150, %v3151
  %v3153 = vsel %vm2892, %v3058, 0.0
  %v3154 = vadd.f32 %v3152, %v3153
  %v3155 = vsel %vm2892, %v3059, 0.0
  %v3156 = vadd.f32 %v3154, %v3155
  %v3157 = vsel %vm2892, %v3060, 0.0
  %v3158 = vadd.f32 %v3156, %v3157
  %v3159 = vsel %vm2892, %v3061, 0.0
  %v3160 = vadd.f32 %v3158, %v3159
  %v3161 = vsel %vm2892, %v3062, 0.0
  %v3162 = vadd.f32 %v3160, %v3161
  %v3163 = vsel %vm2892, %v3063, 0.0
  %v3164 = vadd.f32 %v3162, %v3163
  %v3165 = vsel %vm2892, %v3064, 0.0
  %v3166 = vadd.f32 %v3164, %v3165
  %v3167 = vsel %vm2892, %v3065, 0.0
  %v3168 = vadd.f32 %v3166, %v3167
  %v3169 = vsel %vm2892, %v3066, 0.0
  %v3170 = vadd.f32 %v3168, %v3169
  %v3171 = vsel %vm2892, %v3067, 0.0
  %v3172 = vadd.f32 %v3170, %v3171
  %v3173 = vsel %vm2892, %v3068, 0.0
  %v3174 = vadd.f32 %v3172, %v3173
  %v3175 = vsel %vm2892, %v3069, 0.0
  %v3176 = vadd.f32 %v3174, %v3175
  %v3177 = vsel %vm2892, %v3070, 0.0
  %v3178 = vadd.f32 %v3176, %v3177
  %v3179 = vsel %vm2892, %v3071, 0.0
  %v3180 = vadd.f32 %v3178, %v3179
  %v3181 = vsel %vm2892, %v3072, 0.0
  %v3182 = vadd.f32 %v3180, %v3181
  %v3183 = vsel %vm2892, %v3073, 0.0
  %v3184 = vadd.f32 %v3182, %v3183
  %v3185 = vsel %vm2892, %v3074, 0.0
  %v3186 = vadd.f32 %v3184, %v3185
  %v3187 = vsel %vm2892, %v3075, 0.0
  %v3188 = vadd.f32 %v3186, %v3187
  %v3189 = vsel %vm2892, %v3076, 0.0
  %v3190 = vadd.f32 %v3188, %v3189
  %v3191 = vsel %vm2892, %v3077, 0.0
  %v3192 = vadd.f32 %v3190, %v3191
  %v3193 = vsel %vm2892, %v3078, 0.0
  %v3194 = vadd.f32 %v3192, %v3193
  %v3195 = vsel %vm2892, %v3079, 0.0
  %v3196 = vadd.f32 %v3194, %v3195
  %v3197 = vsel %vm2892, %v3080, 0.0
  %v3198 = vadd.f32 %v3196, %v3197
  %v3199 = vsel %vm2892, %v3081, 0.0
  %v3200 = vadd.f32 %v3198, %v3199
  %v3201 = vsel %vm2892, %v3082, 0.0
  %v3202 = vadd.f32 %v3200, %v3201
  %v3203 = vsel %vm2892, %v3083, 0.0
  %v3204 = vadd.f32 %v3202, %v3203
  %v3205 = vsel %vm2892, %v3084, 0.0
  %v3206 = vadd.f32 %v3204, %v3205
  %v3207 = vsel %vm2892, %v3085, 0.0
  %v3208 = vadd.f32 %v3206, %v3207
  %v3209 = vsel %vm2892, %v3086, 0.0
  %v3210 = vadd.f32 %v3208, %v3209
  %v3211 = vsel %vm2892, %v3087, 0.0
  %v3212 = vadd.f32 %v3210, %v3211
  %v3213 = vsel %vm2892, %v3088, 0.0
  %v3214 = vadd.f32 %v3212, %v3213
  %v3215 = vsel %vm2892, %v3089, 0.0
  %v3216 = vadd.f32 %v3214, %v3215
  %v3217 = vrot.slane %v3216, 4
  %v3218 = vadd.f32 %v3216, %v3217
  %v3219 = vrot.slane %v3218, 2
  %v3220 = vadd.f32 %v3218, %v3219
  %v3221 = vrot.slane %v3220, 1
  %v3222 = vadd.f32 %v3220, %v3221
  %vm3223 = vcmask 1040384
  %v3224 = vsel %vm3223, %v3025, %v3222
  %vm3225 = vcmask 517120
  %3226 = vst.msk [vmem:[%s5] sm:$0x3] %vm3225, %v3224
  // Predicated region
  $region18: #{discriminator_forward.6} parent=0 // pred_check
    _
  $region19: #{discriminator_forward.6} parent=0 // pred_check_branch
    %3228 = sbr.rel (0) target = $region21
  $region20: #{discriminator_forward.6} parent=0 // pred_region
    _
  $region21: #{discriminator_forward.6} parent=0 // pred_fallthru
    _
  // Predicated region
  $region22: #{discriminator_forward.6} parent=0 // pred_check
    _
  $region23: #{discriminator_forward.6} parent=0 // pred_check_branch
    %3230 = sbr.rel (0) target = $region25
  $region24: #{discriminator_forward.6} parent=0 // pred_region
    _
  $region25: #{discriminator_forward.6} parent=0 // pred_fallthru
    _
  // Predicated region
  $region26: #{discriminator_forward.6} parent=0 // pred_check
    _
  $region27: #{discriminator_forward.6} parent=0 // pred_check_branch
    %3232 = sbr.rel (0) target = $region29
  $region28: #{discriminator_forward.6} parent=0 // pred_region
    _
  $region29: #{discriminator_forward.6} parent=0 // pred_fallthru
    _
  // Predicated region
  $region30: #{discriminator_forward.6} parent=0 // pred_check
    _
  $region31: #{discriminator_forward.6} parent=0 // pred_check_branch
    %3234 = sbr.rel (0) target = $region33
  $region32: #{discriminator_forward.6} parent=0 // pred_region
    _
  $region33: #{discriminator_forward.6} parent=0 // pred_fallthru
    _

// kernel: discriminator_forward.7
$region0: #{discriminator_forward.7}
  #allocation0 [shape = 'u32[]', space=smem, size = 0x4, offset = 0x4, fixed_abs, tag = 'smem constant byte address 0x4 - core index']
  #allocation1 [shape = 'u32[72,128]{1,0:T(1,128)}', space=vmem, size = 0x9000, scoped, tag = 'internal scratch']
  %s0 = inlined_call_operand.vmem [shape: f32[1,1024], index: 0, kind: input, shape index: {}]
  %s1 = inlined_call_operand.vmem [shape: f32[1,1024], index: 1, kind: input, shape index: {}]
  %s2 = inlined_call_operand.vmem [shape: bf16[128,1024], index: 2, kind: input, shape index: {}]
  %s3 = inlined_call_operand.vmem [shape: bf16[1024,128], index: 3, kind: input, shape index: {}]
  %s4 = inlined_call_operand.vmem [shape: bf16[128,128], index: 4, kind: output, shape index: {0}]
  %s5 = inlined_call_operand.vmem [shape: f32[1,2,128], index: 5, kind: output, shape index: {1}]
  %6 = xla_tuple %s4, %s5
  %s7 = sld [smem:[#allocation0]]
  $region34: #{discriminator_forward.7} parent=0
    _
  %s9 = ssub.s32 1, %s7
  %s10 = scalar_select 0, %s9, %s7
  // Predicated region
  $region2: #{discriminator_forward.7} parent=0 // pred_check
    _
  $region3: #{discriminator_forward.7} parent=0 // pred_check_branch
    %12 = sbr.rel (0) target = $region5
  $region4: #{discriminator_forward.7} parent=0 // pred_region
    _
  $region5: #{discriminator_forward.7} parent=0 // pred_fallthru
    _
  // Predicated region
  $region6: #{discriminator_forward.7} parent=0 // pred_check
    _
  $region7: #{discriminator_forward.7} parent=0 // pred_check_branch
    %14 = sbr.rel (0) target = $region9
  $region8: #{discriminator_forward.7} parent=0 // pred_region
    _
  $region9: #{discriminator_forward.7} parent=0 // pred_fallthru
    _
  // Predicated region
  $region10: #{discriminator_forward.7} parent=0 // pred_check
    _
  $region11: #{discriminator_forward.7} parent=0 // pred_check_branch
    %16 = sbr.rel (0) target = $region13
  $region12: #{discriminator_forward.7} parent=0 // pred_region
    _
  $region13: #{discriminator_forward.7} parent=0 // pred_fallthru
    _
  // Predicated region
  $region14: #{discriminator_forward.7} parent=0 // pred_check
    _
  $region15: #{discriminator_forward.7} parent=0 // pred_check_branch
    %18 = sbr.rel (0) target = $region17
  $region16: #{discriminator_forward.7} parent=0 // pred_region
    _
  $region17: #{discriminator_forward.7} parent=0 // pred_fallthru
    _
  %v19 = vld [vmem:[%s2] sm:$0xff]
  %v20 = vld [vmem:[%s2 + $0x8] sm:$0xff]
  %v21 = vld [vmem:[%s2 + $0x10] sm:$0xff]
  %v22 = vld [vmem:[%s2 + $0x18] sm:$0xff]
  %v23 = vld [vmem:[%s2 + $0x20] sm:$0xff]
  %v24 = vld [vmem:[%s2 + $0x28] sm:$0xff]
  %v25 = vld [vmem:[%s2 + $0x30] sm:$0xff]
  %v26 = vld [vmem:[%s2 + $0x38] sm:$0xff]
  %v27 = vld [vmem:[%s2 + $0x40] sm:$0xff]
  %v28 = vld [vmem:[%s2 + $0x48] sm:$0xff]
  %v29 = vld [vmem:[%s2 + $0x50] sm:$0xff]
  %v30 = vld [vmem:[%s2 + $0x58] sm:$0xff]
  %v31 = vld [vmem:[%s2 + $0x60] sm:$0xff]
  %v32 = vld [vmem:[%s2 + $0x68] sm:$0xff]
  %v33 = vld [vmem:[%s2 + $0x70] sm:$0xff]
  %v34 = vld [vmem:[%s2 + $0x78] sm:$0xff]
  %v35 = vld [vmem:[%s2 + $0x80] sm:$0xff]
  %v36 = vld [vmem:[%s2 + $0x88] sm:$0xff]
  %v37 = vld [vmem:[%s2 + $0x90] sm:$0xff]
  %v38 = vld [vmem:[%s2 + $0x98] sm:$0xff]
  %v39 = vld [vmem:[%s2 + $0xa0] sm:$0xff]
  %v40 = vld [vmem:[%s2 + $0xa8] sm:$0xff]
  %v41 = vld [vmem:[%s2 + $0xb0] sm:$0xff]
  %v42 = vld [vmem:[%s2 + $0xb8] sm:$0xff]
  %v43 = vld [vmem:[%s2 + $0xc0] sm:$0xff]
  %v44 = vld [vmem:[%s2 + $0xc8] sm:$0xff]
  %v45 = vld [vmem:[%s2 + $0xd0] sm:$0xff]
  %v46 = vld [vmem:[%s2 + $0xd8] sm:$0xff]
  %v47 = vld [vmem:[%s2 + $0xe0] sm:$0xff]
  %v48 = vld [vmem:[%s2 + $0xe8] sm:$0xff]
  %v49 = vld [vmem:[%s2 + $0xf0] sm:$0xff]
  %v50 = vld [vmem:[%s2 + $0xf8] sm:$0xff]
  %v51 = vld [vmem:[%s2 + $0x100] sm:$0xff]
  %v52 = vld [vmem:[%s2 + $0x108] sm:$0xff]
  %v53 = vld [vmem:[%s2 + $0x110] sm:$0xff]
  %v54 = vld [vmem:[%s2 + $0x118] sm:$0xff]
  %v55 = vld [vmem:[%s2 + $0x120] sm:$0xff]
  %v56 = vld [vmem:[%s2 + $0x128] sm:$0xff]
  %v57 = vld [vmem:[%s2 + $0x130] sm:$0xff]
  %v58 = vld [vmem:[%s2 + $0x138] sm:$0xff]
  %v59 = vld [vmem:[%s2 + $0x140] sm:$0xff]
  %v60 = vld [vmem:[%s2 + $0x148] sm:$0xff]
  %v61 = vld [vmem:[%s2 + $0x150] sm:$0xff]
  %v62 = vld [vmem:[%s2 + $0x158] sm:$0xff]
  %v63 = vld [vmem:[%s2 + $0x160] sm:$0xff]
  %v64 = vld [vmem:[%s2 + $0x168] sm:$0xff]
  %v65 = vld [vmem:[%s2 + $0x170] sm:$0xff]
  %v66 = vld [vmem:[%s2 + $0x178] sm:$0xff]
  %v67 = vld [vmem:[%s2 + $0x180] sm:$0xff]
  %v68 = vld [vmem:[%s2 + $0x188] sm:$0xff]
  %v69 = vld [vmem:[%s2 + $0x190] sm:$0xff]
  %v70 = vld [vmem:[%s2 + $0x198] sm:$0xff]
  %v71 = vld [vmem:[%s2 + $0x1a0] sm:$0xff]
  %v72 = vld [vmem:[%s2 + $0x1a8] sm:$0xff]
  %v73 = vld [vmem:[%s2 + $0x1b0] sm:$0xff]
  %v74 = vld [vmem:[%s2 + $0x1b8] sm:$0xff]
  %v75 = vld [vmem:[%s2 + $0x1c0] sm:$0xff]
  %v76 = vld [vmem:[%s2 + $0x1c8] sm:$0xff]
  %v77 = vld [vmem:[%s2 + $0x1d0] sm:$0xff]
  %v78 = vld [vmem:[%s2 + $0x1d8] sm:$0xff]
  %v79 = vld [vmem:[%s2 + $0x1e0] sm:$0xff]
  %v80 = vld [vmem:[%s2 + $0x1e8] sm:$0xff]
  %v81 = vld [vmem:[%s2 + $0x1f0] sm:$0xff]
  %v82 = vld [vmem:[%s2 + $0x1f8] sm:$0xff]
  %v83 = vunpack.c.l.bf16 %v19
  %v84 = vunpack.c.h.bf16 %v19
  %v85 = vunpack.c.l.bf16 %v20
  %v86 = vunpack.c.h.bf16 %v20
  %v87 = vunpack.c.l.bf16 %v21
  %v88 = vunpack.c.h.bf16 %v21
  %v89 = vunpack.c.l.bf16 %v22
  %v90 = vunpack.c.h.bf16 %v22
  %v91 = vunpack.c.l.bf16 %v23
  %v92 = vunpack.c.h.bf16 %v23
  %v93 = vunpack.c.l.bf16 %v24
  %v94 = vunpack.c.h.bf16 %v24
  %v95 = vunpack.c.l.bf16 %v25
  %v96 = vunpack.c.h.bf16 %v25
  %v97 = vunpack.c.l.bf16 %v26
  %v98 = vunpack.c.h.bf16 %v26
  %v99 = vunpack.c.l.bf16 %v27
  %v100 = vunpack.c.h.bf16 %v27
  %v101 = vunpack.c.l.bf16 %v28
  %v102 = vunpack.c.h.bf16 %v28
  %v103 = vunpack.c.l.bf16 %v29
  %v104 = vunpack.c.h.bf16 %v29
  %v105 = vunpack.c.l.bf16 %v30
  %v106 = vunpack.c.h.bf16 %v30
  %v107 = vunpack.c.l.bf16 %v31
  %v108 = vunpack.c.h.bf16 %v31
  %v109 = vunpack.c.l.bf16 %v32
  %v110 = vunpack.c.h.bf16 %v32
  %v111 = vunpack.c.l.bf16 %v33
  %v112 = vunpack.c.h.bf16 %v33
  %v113 = vunpack.c.l.bf16 %v34
  %v114 = vunpack.c.h.bf16 %v34
  %v115 = vunpack.c.l.bf16 %v35
  %v116 = vunpack.c.h.bf16 %v35
  %v117 = vunpack.c.l.bf16 %v36
  %v118 = vunpack.c.h.bf16 %v36
  %v119 = vunpack.c.l.bf16 %v37
  %v120 = vunpack.c.h.bf16 %v37
  %v121 = vunpack.c.l.bf16 %v38
  %v122 = vunpack.c.h.bf16 %v38
  %v123 = vunpack.c.l.bf16 %v39
  %v124 = vunpack.c.h.bf16 %v39
  %v125 = vunpack.c.l.bf16 %v40
  %v126 = vunpack.c.h.bf16 %v40
  %v127 = vunpack.c.l.bf16 %v41
  %v128 = vunpack.c.h.bf16 %v41
  %v129 = vunpack.c.l.bf16 %v42
  %v130 = vunpack.c.h.bf16 %v42
  %v131 = vunpack.c.l.bf16 %v43
  %v132 = vunpack.c.h.bf16 %v43
  %v133 = vunpack.c.l.bf16 %v44
  %v134 = vunpack.c.h.bf16 %v44
  %v135 = vunpack.c.l.bf16 %v45
  %v136 = vunpack.c.h.bf16 %v45
  %v137 = vunpack.c.l.bf16 %v46
  %v138 = vunpack.c.h.bf16 %v46
  %v139 = vunpack.c.l.bf16 %v47
  %v140 = vunpack.c.h.bf16 %v47
  %v141 = vunpack.c.l.bf16 %v48
  %v142 = vunpack.c.h.bf16 %v48
  %v143 = vunpack.c.l.bf16 %v49
  %v144 = vunpack.c.h.bf16 %v49
  %v145 = vunpack.c.l.bf16 %v50
  %v146 = vunpack.c.h.bf16 %v50
  %v147 = vunpack.c.l.bf16 %v51
  %v148 = vunpack.c.h.bf16 %v51
  %v149 = vunpack.c.l.bf16 %v52
  %v150 = vunpack.c.h.bf16 %v52
  %v151 = vunpack.c.l.bf16 %v53
  %v152 = vunpack.c.h.bf16 %v53
  %v153 = vunpack.c.l.bf16 %v54
  %v154 = vunpack.c.h.bf16 %v54
  %v155 = vunpack.c.l.bf16 %v55
  %v156 = vunpack.c.h.bf16 %v55
  %v157 = vunpack.c.l.bf16 %v56
  %v158 = vunpack.c.h.bf16 %v56
  %v159 = vunpack.c.l.bf16 %v57
  %v160 = vunpack.c.h.bf16 %v57
  %v161 = vunpack.c.l.bf16 %v58
  %v162 = vunpack.c.h.bf16 %v58
  %v163 = vunpack.c.l.bf16 %v59
  %v164 = vunpack.c.h.bf16 %v59
  %v165 = vunpack.c.l.bf16 %v60
  %v166 = vunpack.c.h.bf16 %v60
  %v167 = vunpack.c.l.bf16 %v61
  %v168 = vunpack.c.h.bf16 %v61
  %v169 = vunpack.c.l.bf16 %v62
  %v170 = vunpack.c.h.bf16 %v62
  %v171 = vunpack.c.l.bf16 %v63
  %v172 = vunpack.c.h.bf16 %v63
  %v173 = vunpack.c.l.bf16 %v64
  %v174 = vunpack.c.h.bf16 %v64
  %v175 = vunpack.c.l.bf16 %v65
  %v176 = vunpack.c.h.bf16 %v65
  %v177 = vunpack.c.l.bf16 %v66
  %v178 = vunpack.c.h.bf16 %v66
  %v179 = vunpack.c.l.bf16 %v67
  %v180 = vunpack.c.h.bf16 %v67
  %v181 = vunpack.c.l.bf16 %v68
  %v182 = vunpack.c.h.bf16 %v68
  %v183 = vunpack.c.l.bf16 %v69
  %v184 = vunpack.c.h.bf16 %v69
  %v185 = vunpack.c.l.bf16 %v70
  %v186 = vunpack.c.h.bf16 %v70
  %v187 = vunpack.c.l.bf16 %v71
  %v188 = vunpack.c.h.bf16 %v71
  %v189 = vunpack.c.l.bf16 %v72
  %v190 = vunpack.c.h.bf16 %v72
  %v191 = vunpack.c.l.bf16 %v73
  %v192 = vunpack.c.h.bf16 %v73
  %v193 = vunpack.c.l.bf16 %v74
  %v194 = vunpack.c.h.bf16 %v74
  %v195 = vunpack.c.l.bf16 %v75
  %v196 = vunpack.c.h.bf16 %v75
  %v197 = vunpack.c.l.bf16 %v76
  %v198 = vunpack.c.h.bf16 %v76
  %v199 = vunpack.c.l.bf16 %v77
  %v200 = vunpack.c.h.bf16 %v77
  %v201 = vunpack.c.l.bf16 %v78
  %v202 = vunpack.c.h.bf16 %v78
  %v203 = vunpack.c.l.bf16 %v79
  %v204 = vunpack.c.h.bf16 %v79
  %v205 = vunpack.c.l.bf16 %v80
  %v206 = vunpack.c.h.bf16 %v80
  %v207 = vunpack.c.l.bf16 %v81
  %v208 = vunpack.c.h.bf16 %v81
  %v209 = vunpack.c.l.bf16 %v82
  %v210 = vunpack.c.h.bf16 %v82
  %v211 = vld [vmem:[%s0] sm:$0xff]
  %v213 = vperm.slane %v211, 0
  %v214 = vperm.slane %v211, 1
  %v215 = vperm.slane %v211, 2
  %v216 = vperm.slane %v211, 3
  %v217 = vperm.slane %v211, 4
  %v218 = vperm.slane %v211, 5
  %v219 = vperm.slane %v211, 6
  %v220 = vperm.slane %v211, 7
  %v229 = vmul.f32 %v83, %v213
  %v230 = vmul.f32 %v84, %v214
  %v231 = vmul.f32 %v85, %v215
  %v232 = vmul.f32 %v86, %v216
  %v233 = vmul.f32 %v87, %v217
  %v234 = vmul.f32 %v88, %v218
  %v235 = vmul.f32 %v89, %v219
  %v236 = vmul.f32 %v90, %v220
  %v237 = vmul.f32 %v91, %v213
  %v238 = vmul.f32 %v92, %v214
  %v239 = vmul.f32 %v93, %v215
  %v240 = vmul.f32 %v94, %v216
  %v241 = vmul.f32 %v95, %v217
  %v242 = vmul.f32 %v96, %v218
  %v243 = vmul.f32 %v97, %v219
  %v244 = vmul.f32 %v98, %v220
  %v245 = vmul.f32 %v99, %v213
  %v246 = vmul.f32 %v100, %v214
  %v247 = vmul.f32 %v101, %v215
  %v248 = vmul.f32 %v102, %v216
  %v249 = vmul.f32 %v103, %v217
  %v250 = vmul.f32 %v104, %v218
  %v251 = vmul.f32 %v105, %v219
  %v252 = vmul.f32 %v106, %v220
  %v253 = vmul.f32 %v107, %v213
  %v254 = vmul.f32 %v108, %v214
  %v255 = vmul.f32 %v109, %v215
  %v256 = vmul.f32 %v110, %v216
  %v257 = vmul.f32 %v111, %v217
  %v258 = vmul.f32 %v112, %v218
  %v259 = vmul.f32 %v113, %v219
  %v260 = vmul.f32 %v114, %v220
  %v261 = vmul.f32 %v115, %v213
  %v262 = vmul.f32 %v116, %v214
  %v263 = vmul.f32 %v117, %v215
  %v264 = vmul.f32 %v118, %v216
  %v265 = vmul.f32 %v119, %v217
  %v266 = vmul.f32 %v120, %v218
  %v267 = vmul.f32 %v121, %v219
  %v268 = vmul.f32 %v122, %v220
  %v269 = vmul.f32 %v123, %v213
  %v270 = vmul.f32 %v124, %v214
  %v271 = vmul.f32 %v125, %v215
  %v272 = vmul.f32 %v126, %v216
  %v273 = vmul.f32 %v127, %v217
  %v274 = vmul.f32 %v128, %v218
  %v275 = vmul.f32 %v129, %v219
  %v276 = vmul.f32 %v130, %v220
  %v277 = vmul.f32 %v131, %v213
  %v278 = vmul.f32 %v132, %v214
  %v279 = vmul.f32 %v133, %v215
  %v280 = vmul.f32 %v134, %v216
  %v281 = vmul.f32 %v135, %v217
  %v282 = vmul.f32 %v136, %v218
  %v283 = vmul.f32 %v137, %v219
  %v284 = vmul.f32 %v138, %v220
  %v285 = vmul.f32 %v139, %v213
  %v286 = vmul.f32 %v140, %v214
  %v287 = vmul.f32 %v141, %v215
  %v288 = vmul.f32 %v142, %v216
  %v289 = vmul.f32 %v143, %v217
  %v290 = vmul.f32 %v144, %v218
  %v291 = vmul.f32 %v145, %v219
  %v292 = vmul.f32 %v146, %v220
  %v293 = vmul.f32 %v147, %v213
  %v294 = vmul.f32 %v148, %v214
  %v295 = vmul.f32 %v149, %v215
  %v296 = vmul.f32 %v150, %v216
  %v297 = vmul.f32 %v151, %v217
  %v298 = vmul.f32 %v152, %v218
  %v299 = vmul.f32 %v153, %v219
  %v300 = vmul.f32 %v154, %v220
  %v301 = vmul.f32 %v155, %v213
  %v302 = vmul.f32 %v156, %v214
  %v303 = vmul.f32 %v157, %v215
  %v304 = vmul.f32 %v158, %v216
  %v305 = vmul.f32 %v159, %v217
  %v306 = vmul.f32 %v160, %v218
  %v307 = vmul.f32 %v161, %v219
  %v308 = vmul.f32 %v162, %v220
  %v309 = vmul.f32 %v163, %v213
  %v310 = vmul.f32 %v164, %v214
  %v311 = vmul.f32 %v165, %v215
  %v312 = vmul.f32 %v166, %v216
  %v313 = vmul.f32 %v167, %v217
  %v314 = vmul.f32 %v168, %v218
  %v315 = vmul.f32 %v169, %v219
  %v316 = vmul.f32 %v170, %v220
  %v317 = vmul.f32 %v171, %v213
  %v318 = vmul.f32 %v172, %v214
  %v319 = vmul.f32 %v173, %v215
  %v320 = vmul.f32 %v174, %v216
  %v321 = vmul.f32 %v175, %v217
  %v322 = vmul.f32 %v176, %v218
  %v323 = vmul.f32 %v177, %v219
  %v324 = vmul.f32 %v178, %v220
  %v325 = vmul.f32 %v179, %v213
  %v326 = vmul.f32 %v180, %v214
  %v327 = vmul.f32 %v181, %v215
  %v328 = vmul.f32 %v182, %v216
  %v329 = vmul.f32 %v183, %v217
  %v330 = vmul.f32 %v184, %v218
  %v331 = vmul.f32 %v185, %v219
  %v332 = vmul.f32 %v186, %v220
  %v333 = vmul.f32 %v187, %v213
  %v334 = vmul.f32 %v188, %v214
  %v335 = vmul.f32 %v189, %v215
  %v336 = vmul.f32 %v190, %v216
  %v337 = vmul.f32 %v191, %v217
  %v338 = vmul.f32 %v192, %v218
  %v339 = vmul.f32 %v193, %v219
  %v340 = vmul.f32 %v194, %v220
  %v341 = vmul.f32 %v195, %v213
  %v342 = vmul.f32 %v196, %v214
  %v343 = vmul.f32 %v197, %v215
  %v344 = vmul.f32 %v198, %v216
  %v345 = vmul.f32 %v199, %v217
  %v346 = vmul.f32 %v200, %v218
  %v347 = vmul.f32 %v201, %v219
  %v348 = vmul.f32 %v202, %v220
  %v349 = vmul.f32 %v203, %v213
  %v350 = vmul.f32 %v204, %v214
  %v351 = vmul.f32 %v205, %v215
  %v352 = vmul.f32 %v206, %v216
  %v353 = vmul.f32 %v207, %v217
  %v354 = vmul.f32 %v208, %v218
  %v355 = vmul.f32 %v209, %v219
  %v356 = vmul.f32 %v210, %v220
  %v357 = vld [vmem:[%s1] sm:$0xff]
  %v359 = vperm.slane %v357, 0
  %v360 = vperm.slane %v357, 1
  %v361 = vperm.slane %v357, 2
  %v362 = vperm.slane %v357, 3
  %v363 = vperm.slane %v357, 4
  %v364 = vperm.slane %v357, 5
  %v365 = vperm.slane %v357, 6
  %v366 = vperm.slane %v357, 7
  %v375 = vadd.f32 %v229, %v359
  %v376 = vadd.f32 %v230, %v360
  %v377 = vadd.f32 %v231, %v361
  %v378 = vadd.f32 %v232, %v362
  %v379 = vadd.f32 %v233, %v363
  %v380 = vadd.f32 %v234, %v364
  %v381 = vadd.f32 %v235, %v365
  %v382 = vadd.f32 %v236, %v366
  %v383 = vadd.f32 %v237, %v359
  %v384 = vadd.f32 %v238, %v360
  %v385 = vadd.f32 %v239, %v361
  %v386 = vadd.f32 %v240, %v362
  %v387 = vadd.f32 %v241, %v363
  %v388 = vadd.f32 %v242, %v364
  %v389 = vadd.f32 %v243, %v365
  %v390 = vadd.f32 %v244, %v366
  %v391 = vadd.f32 %v245, %v359
  %v392 = vadd.f32 %v246, %v360
  %v393 = vadd.f32 %v247, %v361
  %v394 = vadd.f32 %v248, %v362
  %v395 = vadd.f32 %v249, %v363
  %v396 = vadd.f32 %v250, %v364
  %v397 = vadd.f32 %v251, %v365
  %v398 = vadd.f32 %v252, %v366
  %v399 = vadd.f32 %v253, %v359
  %v400 = vadd.f32 %v254, %v360
  %v401 = vadd.f32 %v255, %v361
  %v402 = vadd.f32 %v256, %v362
  %v403 = vadd.f32 %v257, %v363
  %v404 = vadd.f32 %v258, %v364
  %v405 = vadd.f32 %v259, %v365
  %v406 = vadd.f32 %v260, %v366
  %v407 = vadd.f32 %v261, %v359
  %v408 = vadd.f32 %v262, %v360
  %v409 = vadd.f32 %v263, %v361
  %v410 = vadd.f32 %v264, %v362
  %v411 = vadd.f32 %v265, %v363
  %v412 = vadd.f32 %v266, %v364
  %v413 = vadd.f32 %v267, %v365
  %v414 = vadd.f32 %v268, %v366
  %v415 = vadd.f32 %v269, %v359
  %v416 = vadd.f32 %v270, %v360
  %v417 = vadd.f32 %v271, %v361
  %v418 = vadd.f32 %v272, %v362
  %v419 = vadd.f32 %v273, %v363
  %v420 = vadd.f32 %v274, %v364
  %v421 = vadd.f32 %v275, %v365
  %v422 = vadd.f32 %v276, %v366
  %v423 = vadd.f32 %v277, %v359
  %v424 = vadd.f32 %v278, %v360
  %v425 = vadd.f32 %v279, %v361
  %v426 = vadd.f32 %v280, %v362
  %v427 = vadd.f32 %v281, %v363
  %v428 = vadd.f32 %v282, %v364
  %v429 = vadd.f32 %v283, %v365
  %v430 = vadd.f32 %v284, %v366
  %v431 = vadd.f32 %v285, %v359
  %v432 = vadd.f32 %v286, %v360
  %v433 = vadd.f32 %v287, %v361
  %v434 = vadd.f32 %v288, %v362
  %v435 = vadd.f32 %v289, %v363
  %v436 = vadd.f32 %v290, %v364
  %v437 = vadd.f32 %v291, %v365
  %v438 = vadd.f32 %v292, %v366
  %v439 = vadd.f32 %v293, %v359
  %v440 = vadd.f32 %v294, %v360
  %v441 = vadd.f32 %v295, %v361
  %v442 = vadd.f32 %v296, %v362
  %v443 = vadd.f32 %v297, %v363
  %v444 = vadd.f32 %v298, %v364
  %v445 = vadd.f32 %v299, %v365
  %v446 = vadd.f32 %v300, %v366
  %v447 = vadd.f32 %v301, %v359
  %v448 = vadd.f32 %v302, %v360
  %v449 = vadd.f32 %v303, %v361
  %v450 = vadd.f32 %v304, %v362
  %v451 = vadd.f32 %v305, %v363
  %v452 = vadd.f32 %v306, %v364
  %v453 = vadd.f32 %v307, %v365
  %v454 = vadd.f32 %v308, %v366
  %v455 = vadd.f32 %v309, %v359
  %v456 = vadd.f32 %v310, %v360
  %v457 = vadd.f32 %v311, %v361
  %v458 = vadd.f32 %v312, %v362
  %v459 = vadd.f32 %v313, %v363
  %v460 = vadd.f32 %v314, %v364
  %v461 = vadd.f32 %v315, %v365
  %v462 = vadd.f32 %v316, %v366
  %v463 = vadd.f32 %v317, %v359
  %v464 = vadd.f32 %v318, %v360
  %v465 = vadd.f32 %v319, %v361
  %v466 = vadd.f32 %v320, %v362
  %v467 = vadd.f32 %v321, %v363
  %v468 = vadd.f32 %v322, %v364
  %v469 = vadd.f32 %v323, %v365
  %v470 = vadd.f32 %v324, %v366
  %v471 = vadd.f32 %v325, %v359
  %v472 = vadd.f32 %v326, %v360
  %v473 = vadd.f32 %v327, %v361
  %v474 = vadd.f32 %v328, %v362
  %v475 = vadd.f32 %v329, %v363
  %v476 = vadd.f32 %v330, %v364
  %v477 = vadd.f32 %v331, %v365
  %v478 = vadd.f32 %v332, %v366
  %v479 = vadd.f32 %v333, %v359
  %v480 = vadd.f32 %v334, %v360
  %v481 = vadd.f32 %v335, %v361
  %v482 = vadd.f32 %v336, %v362
  %v483 = vadd.f32 %v337, %v363
  %v484 = vadd.f32 %v338, %v364
  %v485 = vadd.f32 %v339, %v365
  %v486 = vadd.f32 %v340, %v366
  %v487 = vadd.f32 %v341, %v359
  %v488 = vadd.f32 %v342, %v360
  %v489 = vadd.f32 %v343, %v361
  %v490 = vadd.f32 %v344, %v362
  %v491 = vadd.f32 %v345, %v363
  %v492 = vadd.f32 %v346, %v364
  %v493 = vadd.f32 %v347, %v365
  %v494 = vadd.f32 %v348, %v366
  %v495 = vadd.f32 %v349, %v359
  %v496 = vadd.f32 %v350, %v360
  %v497 = vadd.f32 %v351, %v361
  %v498 = vadd.f32 %v352, %v362
  %v499 = vadd.f32 %v353, %v363
  %v500 = vadd.f32 %v354, %v364
  %v501 = vadd.f32 %v355, %v365
  %v502 = vadd.f32 %v356, %v366
  %vm503 = vcmp.ge.f32.partialorder %v375, 0.0
  %vm504 = vcmp.ge.f32.partialorder %v376, 0.0
  %vm505 = vcmp.ge.f32.partialorder %v377, 0.0
  %vm506 = vcmp.ge.f32.partialorder %v378, 0.0
  %vm507 = vcmp.ge.f32.partialorder %v379, 0.0
  %vm508 = vcmp.ge.f32.partialorder %v380, 0.0
  %vm509 = vcmp.ge.f32.partialorder %v381, 0.0
  %vm510 = vcmp.ge.f32.partialorder %v382, 0.0
  %vm511 = vcmp.ge.f32.partialorder %v383, 0.0
  %vm512 = vcmp.ge.f32.partialorder %v384, 0.0
  %vm513 = vcmp.ge.f32.partialorder %v385, 0.0
  %vm514 = vcmp.ge.f32.partialorder %v386, 0.0
  %vm515 = vcmp.ge.f32.partialorder %v387, 0.0
  %vm516 = vcmp.ge.f32.partialorder %v388, 0.0
  %vm517 = vcmp.ge.f32.partialorder %v389, 0.0
  %vm518 = vcmp.ge.f32.partialorder %v390, 0.0
  %vm519 = vcmp.ge.f32.partialorder %v391, 0.0
  %vm520 = vcmp.ge.f32.partialorder %v392, 0.0
  %vm521 = vcmp.ge.f32.partialorder %v393, 0.0
  %vm522 = vcmp.ge.f32.partialorder %v394, 0.0
  %vm523 = vcmp.ge.f32.partialorder %v395, 0.0
  %vm524 = vcmp.ge.f32.partialorder %v396, 0.0
  %vm525 = vcmp.ge.f32.partialorder %v397, 0.0
  %vm526 = vcmp.ge.f32.partialorder %v398, 0.0
  %vm527 = vcmp.ge.f32.partialorder %v399, 0.0
  %vm528 = vcmp.ge.f32.partialorder %v400, 0.0
  %vm529 = vcmp.ge.f32.partialorder %v401, 0.0
  %vm530 = vcmp.ge.f32.partialorder %v402, 0.0
  %vm531 = vcmp.ge.f32.partialorder %v403, 0.0
  %vm532 = vcmp.ge.f32.partialorder %v404, 0.0
  %vm533 = vcmp.ge.f32.partialorder %v405, 0.0
  %vm534 = vcmp.ge.f32.partialorder %v406, 0.0
  %vm535 = vcmp.ge.f32.partialorder %v407, 0.0
  %vm536 = vcmp.ge.f32.partialorder %v408, 0.0
  %vm537 = vcmp.ge.f32.partialorder %v409, 0.0
  %vm538 = vcmp.ge.f32.partialorder %v410, 0.0
  %vm539 = vcmp.ge.f32.partialorder %v411, 0.0
  %vm540 = vcmp.ge.f32.partialorder %v412, 0.0
  %vm541 = vcmp.ge.f32.partialorder %v413, 0.0
  %vm542 = vcmp.ge.f32.partialorder %v414, 0.0
  %vm543 = vcmp.ge.f32.partialorder %v415, 0.0
  %vm544 = vcmp.ge.f32.partialorder %v416, 0.0
  %vm545 = vcmp.ge.f32.partialorder %v417, 0.0
  %vm546 = vcmp.ge.f32.partialorder %v418, 0.0
  %vm547 = vcmp.ge.f32.partialorder %v419, 0.0
  %vm548 = vcmp.ge.f32.partialorder %v420, 0.0
  %vm549 = vcmp.ge.f32.partialorder %v421, 0.0
  %vm550 = vcmp.ge.f32.partialorder %v422, 0.0
  %vm551 = vcmp.ge.f32.partialorder %v423, 0.0
  %vm552 = vcmp.ge.f32.partialorder %v424, 0.0
  %vm553 = vcmp.ge.f32.partialorder %v425, 0.0
  %vm554 = vcmp.ge.f32.partialorder %v426, 0.0
  %vm555 = vcmp.ge.f32.partialorder %v427, 0.0
  %vm556 = vcmp.ge.f32.partialorder %v428, 0.0
  %vm557 = vcmp.ge.f32.partialorder %v429, 0.0
  %vm558 = vcmp.ge.f32.partialorder %v430, 0.0
  %vm559 = vcmp.ge.f32.partialorder %v431, 0.0
  %vm560 = vcmp.ge.f32.partialorder %v432, 0.0
  %vm561 = vcmp.ge.f32.partialorder %v433, 0.0
  %vm562 = vcmp.ge.f32.partialorder %v434, 0.0
  %vm563 = vcmp.ge.f32.partialorder %v435, 0.0
  %vm564 = vcmp.ge.f32.partialorder %v436, 0.0
  %vm565 = vcmp.ge.f32.partialorder %v437, 0.0
  %vm566 = vcmp.ge.f32.partialorder %v438, 0.0
  %vm567 = vcmp.ge.f32.partialorder %v439, 0.0
  %vm568 = vcmp.ge.f32.partialorder %v440, 0.0
  %vm569 = vcmp.ge.f32.partialorder %v441, 0.0
  %vm570 = vcmp.ge.f32.partialorder %v442, 0.0
  %vm571 = vcmp.ge.f32.partialorder %v443, 0.0
  %vm572 = vcmp.ge.f32.partialorder %v444, 0.0
  %vm573 = vcmp.ge.f32.partialorder %v445, 0.0
  %vm574 = vcmp.ge.f32.partialorder %v446, 0.0
  %vm575 = vcmp.ge.f32.partialorder %v447, 0.0
  %vm576 = vcmp.ge.f32.partialorder %v448, 0.0
  %vm577 = vcmp.ge.f32.partialorder %v449, 0.0
  %vm578 = vcmp.ge.f32.partialorder %v450, 0.0
  %vm579 = vcmp.ge.f32.partialorder %v451, 0.0
  %vm580 = vcmp.ge.f32.partialorder %v452, 0.0
  %vm581 = vcmp.ge.f32.partialorder %v453, 0.0
  %vm582 = vcmp.ge.f32.partialorder %v454, 0.0
  %vm583 = vcmp.ge.f32.partialorder %v455, 0.0
  %vm584 = vcmp.ge.f32.partialorder %v456, 0.0
  %vm585 = vcmp.ge.f32.partialorder %v457, 0.0
  %vm586 = vcmp.ge.f32.partialorder %v458, 0.0
  %vm587 = vcmp.ge.f32.partialorder %v459, 0.0
  %vm588 = vcmp.ge.f32.partialorder %v460, 0.0
  %vm589 = vcmp.ge.f32.partialorder %v461, 0.0
  %vm590 = vcmp.ge.f32.partialorder %v462, 0.0
  %vm591 = vcmp.ge.f32.partialorder %v463, 0.0
  %vm592 = vcmp.ge.f32.partialorder %v464, 0.0
  %vm593 = vcmp.ge.f32.partialorder %v465, 0.0
  %vm594 = vcmp.ge.f32.partialorder %v466, 0.0
  %vm595 = vcmp.ge.f32.partialorder %v467, 0.0
  %vm596 = vcmp.ge.f32.partialorder %v468, 0.0
  %vm597 = vcmp.ge.f32.partialorder %v469, 0.0
  %vm598 = vcmp.ge.f32.partialorder %v470, 0.0
  %vm599 = vcmp.ge.f32.partialorder %v471, 0.0
  %vm600 = vcmp.ge.f32.partialorder %v472, 0.0
  %vm601 = vcmp.ge.f32.partialorder %v473, 0.0
  %vm602 = vcmp.ge.f32.partialorder %v474, 0.0
  %vm603 = vcmp.ge.f32.partialorder %v475, 0.0
  %vm604 = vcmp.ge.f32.partialorder %v476, 0.0
  %vm605 = vcmp.ge.f32.partialorder %v477, 0.0
  %vm606 = vcmp.ge.f32.partialorder %v478, 0.0
  %vm607 = vcmp.ge.f32.partialorder %v479, 0.0
  %vm608 = vcmp.ge.f32.partialorder %v480, 0.0
  %vm609 = vcmp.ge.f32.partialorder %v481, 0.0
  %vm610 = vcmp.ge.f32.partialorder %v482, 0.0
  %vm611 = vcmp.ge.f32.partialorder %v483, 0.0
  %vm612 = vcmp.ge.f32.partialorder %v484, 0.0
  %vm613 = vcmp.ge.f32.partialorder %v485, 0.0
  %vm614 = vcmp.ge.f32.partialorder %v486, 0.0
  %vm615 = vcmp.ge.f32.partialorder %v487, 0.0
  %vm616 = vcmp.ge.f32.partialorder %v488, 0.0
  %vm617 = vcmp.ge.f32.partialorder %v489, 0.0
  %vm618 = vcmp.ge.f32.partialorder %v490, 0.0
  %vm619 = vcmp.ge.f32.partialorder %v491, 0.0
  %vm620 = vcmp.ge.f32.partialorder %v492, 0.0
  %vm621 = vcmp.ge.f32.partialorder %v493, 0.0
  %vm622 = vcmp.ge.f32.partialorder %v494, 0.0
  %vm623 = vcmp.ge.f32.partialorder %v495, 0.0
  %vm624 = vcmp.ge.f32.partialorder %v496, 0.0
  %vm625 = vcmp.ge.f32.partialorder %v497, 0.0
  %vm626 = vcmp.ge.f32.partialorder %v498, 0.0
  %vm627 = vcmp.ge.f32.partialorder %v499, 0.0
  %vm628 = vcmp.ge.f32.partialorder %v500, 0.0
  %vm629 = vcmp.ge.f32.partialorder %v501, 0.0
  %vm630 = vcmp.ge.f32.partialorder %v502, 0.0
  %v631 = vmul.f32 %v375, 0.2
  %v632 = vmul.f32 %v376, 0.2
  %v633 = vmul.f32 %v377, 0.2
  %v634 = vmul.f32 %v378, 0.2
  %v635 = vmul.f32 %v379, 0.2
  %v636 = vmul.f32 %v380, 0.2
  %v637 = vmul.f32 %v381, 0.2
  %v638 = vmul.f32 %v382, 0.2
  %v639 = vmul.f32 %v383, 0.2
  %v640 = vmul.f32 %v384, 0.2
  %v641 = vmul.f32 %v385, 0.2
  %v642 = vmul.f32 %v386, 0.2
  %v643 = vmul.f32 %v387, 0.2
  %v644 = vmul.f32 %v388, 0.2
  %v645 = vmul.f32 %v389, 0.2
  %v646 = vmul.f32 %v390, 0.2
  %v647 = vmul.f32 %v391, 0.2
  %v648 = vmul.f32 %v392, 0.2
  %v649 = vmul.f32 %v393, 0.2
  %v650 = vmul.f32 %v394, 0.2
  %v651 = vmul.f32 %v395, 0.2
  %v652 = vmul.f32 %v396, 0.2
  %v653 = vmul.f32 %v397, 0.2
  %v654 = vmul.f32 %v398, 0.2
  %v655 = vmul.f32 %v399, 0.2
  %v656 = vmul.f32 %v400, 0.2
  %v657 = vmul.f32 %v401, 0.2
  %v658 = vmul.f32 %v402, 0.2
  %v659 = vmul.f32 %v403, 0.2
  %v660 = vmul.f32 %v404, 0.2
  %v661 = vmul.f32 %v405, 0.2
  %v662 = vmul.f32 %v406, 0.2
  %v663 = vmul.f32 %v407, 0.2
  %v664 = vmul.f32 %v408, 0.2
  %v665 = vmul.f32 %v409, 0.2
  %v666 = vmul.f32 %v410, 0.2
  %v667 = vmul.f32 %v411, 0.2
  %v668 = vmul.f32 %v412, 0.2
  %v669 = vmul.f32 %v413, 0.2
  %v670 = vmul.f32 %v414, 0.2
  %v671 = vmul.f32 %v415, 0.2
  %v672 = vmul.f32 %v416, 0.2
  %v673 = vmul.f32 %v417, 0.2
  %v674 = vmul.f32 %v418, 0.2
  %v675 = vmul.f32 %v419, 0.2
  %v676 = vmul.f32 %v420, 0.2
  %v677 = vmul.f32 %v421, 0.2
  %v678 = vmul.f32 %v422, 0.2
  %v679 = vmul.f32 %v423, 0.2
  %v680 = vmul.f32 %v424, 0.2
  %v681 = vmul.f32 %v425, 0.2
  %v682 = vmul.f32 %v426, 0.2
  %v683 = vmul.f32 %v427, 0.2
  %v684 = vmul.f32 %v428, 0.2
  %v685 = vmul.f32 %v429, 0.2
  %v686 = vmul.f32 %v430, 0.2
  %v687 = vmul.f32 %v431, 0.2
  %v688 = vmul.f32 %v432, 0.2
  %v689 = vmul.f32 %v433, 0.2
  %v690 = vmul.f32 %v434, 0.2
  %v691 = vmul.f32 %v435, 0.2
  %v692 = vmul.f32 %v436, 0.2
  %v693 = vmul.f32 %v437, 0.2
  %v694 = vmul.f32 %v438, 0.2
  %v695 = vmul.f32 %v439, 0.2
  %v696 = vmul.f32 %v440, 0.2
  %v697 = vmul.f32 %v441, 0.2
  %v698 = vmul.f32 %v442, 0.2
  %v699 = vmul.f32 %v443, 0.2
  %v700 = vmul.f32 %v444, 0.2
  %v701 = vmul.f32 %v445, 0.2
  %v702 = vmul.f32 %v446, 0.2
  %v703 = vmul.f32 %v447, 0.2
  %v704 = vmul.f32 %v448, 0.2
  %v705 = vmul.f32 %v449, 0.2
  %v706 = vmul.f32 %v450, 0.2
  %v707 = vmul.f32 %v451, 0.2
  %v708 = vmul.f32 %v452, 0.2
  %v709 = vmul.f32 %v453, 0.2
  %v710 = vmul.f32 %v454, 0.2
  %v711 = vmul.f32 %v455, 0.2
  %v712 = vmul.f32 %v456, 0.2
  %v713 = vmul.f32 %v457, 0.2
  %v714 = vmul.f32 %v458, 0.2
  %v715 = vmul.f32 %v459, 0.2
  %v716 = vmul.f32 %v460, 0.2
  %v717 = vmul.f32 %v461, 0.2
  %v718 = vmul.f32 %v462, 0.2
  %v719 = vmul.f32 %v463, 0.2
  %v720 = vmul.f32 %v464, 0.2
  %v721 = vmul.f32 %v465, 0.2
  %v722 = vmul.f32 %v466, 0.2
  %v723 = vmul.f32 %v467, 0.2
  %v724 = vmul.f32 %v468, 0.2
  %v725 = vmul.f32 %v469, 0.2
  %v726 = vmul.f32 %v470, 0.2
  %v727 = vmul.f32 %v471, 0.2
  %v728 = vmul.f32 %v472, 0.2
  %v729 = vmul.f32 %v473, 0.2
  %v730 = vmul.f32 %v474, 0.2
  %v731 = vmul.f32 %v475, 0.2
  %v732 = vmul.f32 %v476, 0.2
  %v733 = vmul.f32 %v477, 0.2
  %v734 = vmul.f32 %v478, 0.2
  %v735 = vmul.f32 %v479, 0.2
  %v736 = vmul.f32 %v480, 0.2
  %v737 = vmul.f32 %v481, 0.2
  %v738 = vmul.f32 %v482, 0.2
  %v739 = vmul.f32 %v483, 0.2
  %v740 = vmul.f32 %v484, 0.2
  %v741 = vmul.f32 %v485, 0.2
  %v742 = vmul.f32 %v486, 0.2
  %v743 = vmul.f32 %v487, 0.2
  %v744 = vmul.f32 %v488, 0.2
  %v745 = vmul.f32 %v489, 0.2
  %v746 = vmul.f32 %v490, 0.2
  %v747 = vmul.f32 %v491, 0.2
  %v748 = vmul.f32 %v492, 0.2
  %v749 = vmul.f32 %v493, 0.2
  %v750 = vmul.f32 %v494, 0.2
  %v751 = vmul.f32 %v495, 0.2
  %v752 = vmul.f32 %v496, 0.2
  %v753 = vmul.f32 %v497, 0.2
  %v754 = vmul.f32 %v498, 0.2
  %v755 = vmul.f32 %v499, 0.2
  %v756 = vmul.f32 %v500, 0.2
  %v757 = vmul.f32 %v501, 0.2
  %v758 = vmul.f32 %v502, 0.2
  %v759 = vsel %vm503, %v375, %v631
  %v760 = vsel %vm504, %v376, %v632
  %v761 = vsel %vm505, %v377, %v633
  %v762 = vsel %vm506, %v378, %v634
  %v763 = vsel %vm507, %v379, %v635
  %v764 = vsel %vm508, %v380, %v636
  %v765 = vsel %vm509, %v381, %v637
  %v766 = vsel %vm510, %v382, %v638
  %v767 = vsel %vm511, %v383, %v639
  %v768 = vsel %vm512, %v384, %v640
  %v769 = vsel %vm513, %v385, %v641
  %v770 = vsel %vm514, %v386, %v642
  %v771 = vsel %vm515, %v387, %v643
  %v772 = vsel %vm516, %v388, %v644
  %v773 = vsel %vm517, %v389, %v645
  %v774 = vsel %vm518, %v390, %v646
  %v775 = vsel %vm519, %v391, %v647
  %v776 = vsel %vm520, %v392, %v648
  %v777 = vsel %vm521, %v393, %v649
  %v778 = vsel %vm522, %v394, %v650
  %v779 = vsel %vm523, %v395, %v651
  %v780 = vsel %vm524, %v396, %v652
  %v781 = vsel %vm525, %v397, %v653
  %v782 = vsel %vm526, %v398, %v654
  %v783 = vsel %vm527, %v399, %v655
  %v784 = vsel %vm528, %v400, %v656
  %v785 = vsel %vm529, %v401, %v657
  %v786 = vsel %vm530, %v402, %v658
  %v787 = vsel %vm531, %v403, %v659
  %v788 = vsel %vm532, %v404, %v660
  %v789 = vsel %vm533, %v405, %v661
  %v790 = vsel %vm534, %v406, %v662
  %v791 = vsel %vm535, %v407, %v663
  %v792 = vsel %vm536, %v408, %v664
  %v793 = vsel %vm537, %v409, %v665
  %v794 = vsel %vm538, %v410, %v666
  %v795 = vsel %vm539, %v411, %v667
  %v796 = vsel %vm540, %v412, %v668
  %v797 = vsel %vm541, %v413, %v669
  %v798 = vsel %vm542, %v414, %v670
  %v799 = vsel %vm543, %v415, %v671
  %v800 = vsel %vm544, %v416, %v672
  %v801 = vsel %vm545, %v417, %v673
  %v802 = vsel %vm546, %v418, %v674
  %v803 = vsel %vm547, %v419, %v675
  %v804 = vsel %vm548, %v420, %v676
  %v805 = vsel %vm549, %v421, %v677
  %v806 = vsel %vm550, %v422, %v678
  %v807 = vsel %vm551, %v423, %v679
  %v808 = vsel %vm552, %v424, %v680
  %v809 = vsel %vm553, %v425, %v681
  %v810 = vsel %vm554, %v426, %v682
  %v811 = vsel %vm555, %v427, %v683
  %v812 = vsel %vm556, %v428, %v684
  %v813 = vsel %vm557, %v429, %v685
  %v814 = vsel %vm558, %v430, %v686
  %v815 = vsel %vm559, %v431, %v687
  %v816 = vsel %vm560, %v432, %v688
  %v817 = vsel %vm561, %v433, %v689
  %v818 = vsel %vm562, %v434, %v690
  %v819 = vsel %vm563, %v435, %v691
  %v820 = vsel %vm564, %v436, %v692
  %v821 = vsel %vm565, %v437, %v693
  %v822 = vsel %vm566, %v438, %v694
  %v823 = vsel %vm567, %v439, %v695
  %v824 = vsel %vm568, %v440, %v696
  %v825 = vsel %vm569, %v441, %v697
  %v826 = vsel %vm570, %v442, %v698
  %v827 = vsel %vm571, %v443, %v699
  %v828 = vsel %vm572, %v444, %v700
  %v829 = vsel %vm573, %v445, %v701
  %v830 = vsel %vm574, %v446, %v702
  %v831 = vsel %vm575, %v447, %v703
  %v832 = vsel %vm576, %v448, %v704
  %v833 = vsel %vm577, %v449, %v705
  %v834 = vsel %vm578, %v450, %v706
  %v835 = vsel %vm579, %v451, %v707
  %v836 = vsel %vm580, %v452, %v708
  %v837 = vsel %vm581, %v453, %v709
  %v838 = vsel %vm582, %v454, %v710
  %v839 = vsel %vm583, %v455, %v711
  %v840 = vsel %vm584, %v456, %v712
  %v841 = vsel %vm585, %v457, %v713
  %v842 = vsel %vm586, %v458, %v714
  %v843 = vsel %vm587, %v459, %v715
  %v844 = vsel %vm588, %v460, %v716
  %v845 = vsel %vm589, %v461, %v717
  %v846 = vsel %vm590, %v462, %v718
  %v847 = vsel %vm591, %v463, %v719
  %v848 = vsel %vm592, %v464, %v720
  %v849 = vsel %vm593, %v465, %v721
  %v850 = vsel %vm594, %v466, %v722
  %v851 = vsel %vm595, %v467, %v723
  %v852 = vsel %vm596, %v468, %v724
  %v853 = vsel %vm597, %v469, %v725
  %v854 = vsel %vm598, %v470, %v726
  %v855 = vsel %vm599, %v471, %v727
  %v856 = vsel %vm600, %v472, %v728
  %v857 = vsel %vm601, %v473, %v729
  %v858 = vsel %vm602, %v474, %v730
  %v859 = vsel %vm603, %v475, %v731
  %v860 = vsel %vm604, %v476, %v732
  %v861 = vsel %vm605, %v477, %v733
  %v862 = vsel %vm606, %v478, %v734
  %v863 = vsel %vm607, %v479, %v735
  %v864 = vsel %vm608, %v480, %v736
  %v865 = vsel %vm609, %v481, %v737
  %v866 = vsel %vm610, %v482, %v738
  %v867 = vsel %vm611, %v483, %v739
  %v868 = vsel %vm612, %v484, %v740
  %v869 = vsel %vm613, %v485, %v741
  %v870 = vsel %vm614, %v486, %v742
  %v871 = vsel %vm615, %v487, %v743
  %v872 = vsel %vm616, %v488, %v744
  %v873 = vsel %vm617, %v489, %v745
  %v874 = vsel %vm618, %v490, %v746
  %v875 = vsel %vm619, %v491, %v747
  %v876 = vsel %vm620, %v492, %v748
  %v877 = vsel %vm621, %v493, %v749
  %v878 = vsel %vm622, %v494, %v750
  %v879 = vsel %vm623, %v495, %v751
  %v880 = vsel %vm624, %v496, %v752
  %v881 = vsel %vm625, %v497, %v753
  %v882 = vsel %vm626, %v498, %v754
  %v883 = vsel %vm627, %v499, %v755
  %v884 = vsel %vm628, %v500, %v756
  %v885 = vsel %vm629, %v501, %v757
  %v886 = vsel %vm630, %v502, %v758
  %v887 = vpack.c.bf16 %v767, %v759
  %v888 = vpack.c.bf16 %v768, %v760
  %v889 = vpack.c.bf16 %v769, %v761
  %v890 = vpack.c.bf16 %v770, %v762
  %v891 = vpack.c.bf16 %v771, %v763
  %v892 = vpack.c.bf16 %v772, %v764
  %v893 = vpack.c.bf16 %v773, %v765
  %v894 = vpack.c.bf16 %v774, %v766
  %v895 = vpack.c.bf16 %v783, %v775
  %v896 = vpack.c.bf16 %v784, %v776
  %v897 = vpack.c.bf16 %v785, %v777
  %v898 = vpack.c.bf16 %v786, %v778
  %v899 = vpack.c.bf16 %v787, %v779
  %v900 = vpack.c.bf16 %v788, %v780
  %v901 = vpack.c.bf16 %v789, %v781
  %v902 = vpack.c.bf16 %v790, %v782
  %v903 = vpack.c.bf16 %v799, %v791
  %v904 = vpack.c.bf16 %v800, %v792
  %v905 = vpack.c.bf16 %v801, %v793
  %v906 = vpack.c.bf16 %v802, %v794
  %v907 = vpack.c.bf16 %v803, %v795
  %v908 = vpack.c.bf16 %v804, %v796
  %v909 = vpack.c.bf16 %v805, %v797
  %v910 = vpack.c.bf16 %v806, %v798
  %v911 = vpack.c.bf16 %v815, %v807
  %v912 = vpack.c.bf16 %v816, %v808
  %v913 = vpack.c.bf16 %v817, %v809
  %v914 = vpack.c.bf16 %v818, %v810
  %v915 = vpack.c.bf16 %v819, %v811
  %v916 = vpack.c.bf16 %v820, %v812
  %v917 = vpack.c.bf16 %v821, %v813
  %v918 = vpack.c.bf16 %v822, %v814
  %v919 = vpack.c.bf16 %v831, %v823
  %v920 = vpack.c.bf16 %v832, %v824
  %v921 = vpack.c.bf16 %v833, %v825
  %v922 = vpack.c.bf16 %v834, %v826
  %v923 = vpack.c.bf16 %v835, %v827
  %v924 = vpack.c.bf16 %v836, %v828
  %v925 = vpack.c.bf16 %v837, %v829
  %v926 = vpack.c.bf16 %v838, %v830
  %v927 = vpack.c.bf16 %v847, %v839
  %v928 = vpack.c.bf16 %v848, %v840
  %v929 = vpack.c.bf16 %v849, %v841
  %v930 = vpack.c.bf16 %v850, %v842
  %v931 = vpack.c.bf16 %v851, %v843
  %v932 = vpack.c.bf16 %v852, %v844
  %v933 = vpack.c.bf16 %v853, %v845
  %v934 = vpack.c.bf16 %v854, %v846
  %v935 = vpack.c.bf16 %v863, %v855
  %v936 = vpack.c.bf16 %v864, %v856
  %v937 = vpack.c.bf16 %v865, %v857
  %v938 = vpack.c.bf16 %v866, %v858
  %v939 = vpack.c.bf16 %v867, %v859
  %v940 = vpack.c.bf16 %v868, %v860
  %v941 = vpack.c.bf16 %v869, %v861
  %v942 = vpack.c.bf16 %v870, %v862
  %v943 = vpack.c.bf16 %v879, %v871
  %v944 = vpack.c.bf16 %v880, %v872
  %v945 = vpack.c.bf16 %v881, %v873
  %v946 = vpack.c.bf16 %v882, %v874
  %v947 = vpack.c.bf16 %v883, %v875
  %v948 = vpack.c.bf16 %v884, %v876
  %v949 = vpack.c.bf16 %v885, %v877
  %v950 = vpack.c.bf16 %v886, %v878
  %v951 = vld [vmem:[%s3] sm:$0xf]
  %v952 = vld [vmem:[%s3 + $0x4] sm:$0xf]
  %v953 = vld [vmem:[%s3 + $0x8] sm:$0xf]
  %v954 = vld [vmem:[%s3 + $0xc] sm:$0xf]
  %v955 = vld [vmem:[%s3 + $0x10] sm:$0xf]
  %v956 = vld [vmem:[%s3 + $0x14] sm:$0xf]
  %v957 = vld [vmem:[%s3 + $0x18] sm:$0xf]
  %v958 = vld [vmem:[%s3 + $0x1c] sm:$0xf]
  %v959 = vld [vmem:[%s3 + $0x20] sm:$0xf]
  %v960 = vld [vmem:[%s3 + $0x24] sm:$0xf]
  %v961 = vld [vmem:[%s3 + $0x28] sm:$0xf]
  %v962 = vld [vmem:[%s3 + $0x2c] sm:$0xf]
  %v963 = vld [vmem:[%s3 + $0x30] sm:$0xf]
  %v964 = vld [vmem:[%s3 + $0x34] sm:$0xf]
  %v965 = vld [vmem:[%s3 + $0x38] sm:$0xf]
  %v966 = vld [vmem:[%s3 + $0x3c] sm:$0xf]
  %v967 = vld [vmem:[%s3 + $0x40] sm:$0xf]
  %v968 = vld [vmem:[%s3 + $0x44] sm:$0xf]
  %v969 = vld [vmem:[%s3 + $0x48] sm:$0xf]
  %v970 = vld [vmem:[%s3 + $0x4c] sm:$0xf]
  %v971 = vld [vmem:[%s3 + $0x50] sm:$0xf]
  %v972 = vld [vmem:[%s3 + $0x54] sm:$0xf]
  %v973 = vld [vmem:[%s3 + $0x58] sm:$0xf]
  %v974 = vld [vmem:[%s3 + $0x5c] sm:$0xf]
  %v975 = vld [vmem:[%s3 + $0x60] sm:$0xf]
  %v976 = vld [vmem:[%s3 + $0x64] sm:$0xf]
  %v977 = vld [vmem:[%s3 + $0x68] sm:$0xf]
  %v978 = vld [vmem:[%s3 + $0x6c] sm:$0xf]
  %v979 = vld [vmem:[%s3 + $0x70] sm:$0xf]
  %v980 = vld [vmem:[%s3 + $0x74] sm:$0xf]
  %v981 = vld [vmem:[%s3 + $0x78] sm:$0xf]
  %v982 = vld [vmem:[%s3 + $0x7c] sm:$0xf]
  %v983 = vld [vmem:[%s3 + $0x80] sm:$0xf]
  %v984 = vld [vmem:[%s3 + $0x84] sm:$0xf]
  %v985 = vld [vmem:[%s3 + $0x88] sm:$0xf]
  %v986 = vld [vmem:[%s3 + $0x8c] sm:$0xf]
  %v987 = vld [vmem:[%s3 + $0x90] sm:$0xf]
  %v988 = vld [vmem:[%s3 + $0x94] sm:$0xf]
  %v989 = vld [vmem:[%s3 + $0x98] sm:$0xf]
  %v990 = vld [vmem:[%s3 + $0x9c] sm:$0xf]
  %v991 = vld [vmem:[%s3 + $0xa0] sm:$0xf]
  %v992 = vld [vmem:[%s3 + $0xa4] sm:$0xf]
  %v993 = vld [vmem:[%s3 + $0xa8] sm:$0xf]
  %v994 = vld [vmem:[%s3 + $0xac] sm:$0xf]
  %v995 = vld [vmem:[%s3 + $0xb0] sm:$0xf]
  %v996 = vld [vmem:[%s3 + $0xb4] sm:$0xf]
  %v997 = vld [vmem:[%s3 + $0xb8] sm:$0xf]
  %v998 = vld [vmem:[%s3 + $0xbc] sm:$0xf]
  %v999 = vld [vmem:[%s3 + $0xc0] sm:$0xf]
  %v1000 = vld [vmem:[%s3 + $0xc4] sm:$0xf]
  %v1001 = vld [vmem:[%s3 + $0xc8] sm:$0xf]
  %v1002 = vld [vmem:[%s3 + $0xcc] sm:$0xf]
  %v1003 = vld [vmem:[%s3 + $0xd0] sm:$0xf]
  %v1004 = vld [vmem:[%s3 + $0xd4] sm:$0xf]
  %v1005 = vld [vmem:[%s3 + $0xd8] sm:$0xf]
  %v1006 = vld [vmem:[%s3 + $0xdc] sm:$0xf]
  %v1007 = vld [vmem:[%s3 + $0xe0] sm:$0xf]
  %v1008 = vld [vmem:[%s3 + $0xe4] sm:$0xf]
  %v1009 = vld [vmem:[%s3 + $0xe8] sm:$0xf]
  %v1010 = vld [vmem:[%s3 + $0xec] sm:$0xf]
  %v1011 = vld [vmem:[%s3 + $0xf0] sm:$0xf]
  %v1012 = vld [vmem:[%s3 + $0xf4] sm:$0xf]
  %v1013 = vld [vmem:[%s3 + $0xf8] sm:$0xf]
  %v1014 = vld [vmem:[%s3 + $0xfc] sm:$0xf]
  %v1015 = vld [vmem:[%s3 + $0x100] sm:$0xf]
  %v1016 = vld [vmem:[%s3 + $0x104] sm:$0xf]
  %v1017 = vld [vmem:[%s3 + $0x108] sm:$0xf]
  %v1018 = vld [vmem:[%s3 + $0x10c] sm:$0xf]
  %v1019 = vld [vmem:[%s3 + $0x110] sm:$0xf]
  %v1020 = vld [vmem:[%s3 + $0x114] sm:$0xf]
  %v1021 = vld [vmem:[%s3 + $0x118] sm:$0xf]
  %v1022 = vld [vmem:[%s3 + $0x11c] sm:$0xf]
  %v1023 = vld [vmem:[%s3 + $0x120] sm:$0xf]
  %v1024 = vld [vmem:[%s3 + $0x124] sm:$0xf]
  %v1025 = vld [vmem:[%s3 + $0x128] sm:$0xf]
  %v1026 = vld [vmem:[%s3 + $0x12c] sm:$0xf]
  %v1027 = vld [vmem:[%s3 + $0x130] sm:$0xf]
  %v1028 = vld [vmem:[%s3 + $0x134] sm:$0xf]
  %v1029 = vld [vmem:[%s3 + $0x138] sm:$0xf]
  %v1030 = vld [vmem:[%s3 + $0x13c] sm:$0xf]
  %v1031 = vld [vmem:[%s3 + $0x140] sm:$0xf]
  %v1032 = vld [vmem:[%s3 + $0x144] sm:$0xf]
  %v1033 = vld [vmem:[%s3 + $0x148] sm:$0xf]
  %v1034 = vld [vmem:[%s3 + $0x14c] sm:$0xf]
  %v1035 = vld [vmem:[%s3 + $0x150] sm:$0xf]
  %v1036 = vld [vmem:[%s3 + $0x154] sm:$0xf]
  %v1037 = vld [vmem:[%s3 + $0x158] sm:$0xf]
  %v1038 = vld [vmem:[%s3 + $0x15c] sm:$0xf]
  %v1039 = vld [vmem:[%s3 + $0x160] sm:$0xf]
  %v1040 = vld [vmem:[%s3 + $0x164] sm:$0xf]
  %v1041 = vld [vmem:[%s3 + $0x168] sm:$0xf]
  %v1042 = vld [vmem:[%s3 + $0x16c] sm:$0xf]
  %v1043 = vld [vmem:[%s3 + $0x170] sm:$0xf]
  %v1044 = vld [vmem:[%s3 + $0x174] sm:$0xf]
  %v1045 = vld [vmem:[%s3 + $0x178] sm:$0xf]
  %v1046 = vld [vmem:[%s3 + $0x17c] sm:$0xf]
  %v1047 = vld [vmem:[%s3 + $0x180] sm:$0xf]
  %v1048 = vld [vmem:[%s3 + $0x184] sm:$0xf]
  %v1049 = vld [vmem:[%s3 + $0x188] sm:$0xf]
  %v1050 = vld [vmem:[%s3 + $0x18c] sm:$0xf]
  %v1051 = vld [vmem:[%s3 + $0x190] sm:$0xf]
  %v1052 = vld [vmem:[%s3 + $0x194] sm:$0xf]
  %v1053 = vld [vmem:[%s3 + $0x198] sm:$0xf]
  %v1054 = vld [vmem:[%s3 + $0x19c] sm:$0xf]
  %v1055 = vld [vmem:[%s3 + $0x1a0] sm:$0xf]
  %v1056 = vld [vmem:[%s3 + $0x1a4] sm:$0xf]
  %v1057 = vld [vmem:[%s3 + $0x1a8] sm:$0xf]
  %v1058 = vld [vmem:[%s3 + $0x1ac] sm:$0xf]
  %v1059 = vld [vmem:[%s3 + $0x1b0] sm:$0xf]
  %v1060 = vld [vmem:[%s3 + $0x1b4] sm:$0xf]
  %v1061 = vld [vmem:[%s3 + $0x1b8] sm:$0xf]
  %v1062 = vld [vmem:[%s3 + $0x1bc] sm:$0xf]
  %v1063 = vld [vmem:[%s3 + $0x1c0] sm:$0xf]
  %v1064 = vld [vmem:[%s3 + $0x1c4] sm:$0xf]
  %v1065 = vld [vmem:[%s3 + $0x1c8] sm:$0xf]
  %v1066 = vld [vmem:[%s3 + $0x1cc] sm:$0xf]
  %v1067 = vld [vmem:[%s3 + $0x1d0] sm:$0xf]
  %v1068 = vld [vmem:[%s3 + $0x1d4] sm:$0xf]
  %v1069 = vld [vmem:[%s3 + $0x1d8] sm:$0xf]
  %v1070 = vld [vmem:[%s3 + $0x1dc] sm:$0xf]
  %v1071 = vld [vmem:[%s3 + $0x1e0] sm:$0xf]
  %v1072 = vld [vmem:[%s3 + $0x1e4] sm:$0xf]
  %v1073 = vld [vmem:[%s3 + $0x1e8] sm:$0xf]
  %v1074 = vld [vmem:[%s3 + $0x1ec] sm:$0xf]
  %v1075 = vld [vmem:[%s3 + $0x1f0] sm:$0xf]
  %v1076 = vld [vmem:[%s3 + $0x1f4] sm:$0xf]
  %v1077 = vld [vmem:[%s3 + $0x1f8] sm:$0xf]
  %v1078 = vld [vmem:[%s3 + $0x1fc] sm:$0xf]
  %v1207 = vunpack.c.l.b16 %v951
  %v1208 = vunpack.c.l.b16 %v952
  %v1209 = vunpack.c.l.b16 %v953
  %v1210 = vunpack.c.l.b16 %v954
  %v1211 = vunpack.c.l.b16 %v955
  %v1212 = vunpack.c.l.b16 %v956
  %v1213 = vunpack.c.l.b16 %v957
  %v1214 = vunpack.c.l.b16 %v958
  %v1215 = vunpack.c.l.b16 %v959
  %v1216 = vunpack.c.l.b16 %v960
  %v1217 = vunpack.c.l.b16 %v961
  %v1218 = vunpack.c.l.b16 %v962
  %v1219 = vunpack.c.l.b16 %v963
  %v1220 = vunpack.c.l.b16 %v964
  %v1221 = vunpack.c.l.b16 %v965
  %v1222 = vunpack.c.l.b16 %v966
  %v1223 = vunpack.c.l.b16 %v967
  %v1224 = vunpack.c.l.b16 %v968
  %v1225 = vunpack.c.l.b16 %v969
  %v1226 = vunpack.c.l.b16 %v970
  %v1227 = vunpack.c.l.b16 %v971
  %v1228 = vunpack.c.l.b16 %v972
  %v1229 = vunpack.c.l.b16 %v973
  %v1230 = vunpack.c.l.b16 %v974
  %v1231 = vunpack.c.l.b16 %v975
  %v1232 = vunpack.c.l.b16 %v976
  %v1233 = vunpack.c.l.b16 %v977
  %v1234 = vunpack.c.l.b16 %v978
  %v1235 = vunpack.c.l.b16 %v979
  %v1236 = vunpack.c.l.b16 %v980
  %v1237 = vunpack.c.l.b16 %v981
  %v1238 = vunpack.c.l.b16 %v982
  %v1239 = vunpack.c.l.b16 %v983
  %v1240 = vunpack.c.l.b16 %v984
  %v1241 = vunpack.c.l.b16 %v985
  %v1242 = vunpack.c.l.b16 %v986
  %v1243 = vunpack.c.l.b16 %v987
  %v1244 = vunpack.c.l.b16 %v988
  %v1245 = vunpack.c.l.b16 %v989
  %v1246 = vunpack.c.l.b16 %v990
  %v1247 = vunpack.c.l.b16 %v991
  %v1248 = vunpack.c.l.b16 %v992
  %v1249 = vunpack.c.l.b16 %v993
  %v1250 = vunpack.c.l.b16 %v994
  %v1251 = vunpack.c.l.b16 %v995
  %v1252 = vunpack.c.l.b16 %v996
  %v1253 = vunpack.c.l.b16 %v997
  %v1254 = vunpack.c.l.b16 %v998
  %v1255 = vunpack.c.l.b16 %v999
  %v1256 = vunpack.c.l.b16 %v1000
  %v1257 = vunpack.c.l.b16 %v1001
  %v1258 = vunpack.c.l.b16 %v1002
  %v1259 = vunpack.c.l.b16 %v1003
  %v1260 = vunpack.c.l.b16 %v1004
  %v1261 = vunpack.c.l.b16 %v1005
  %v1262 = vunpack.c.l.b16 %v1006
  %v1263 = vunpack.c.l.b16 %v1007
  %v1264 = vunpack.c.l.b16 %v1008
  %v1265 = vunpack.c.l.b16 %v1009
  %v1266 = vunpack.c.l.b16 %v1010
  %v1267 = vunpack.c.l.b16 %v1011
  %v1268 = vunpack.c.l.b16 %v1012
  %v1269 = vunpack.c.l.b16 %v1013
  %v1270 = vunpack.c.l.b16 %v1014
  %v1271 = vunpack.c.l.b16 %v1015
  %v1272 = vunpack.c.l.b16 %v1016
  %v1273 = vunpack.c.l.b16 %v1017
  %v1274 = vunpack.c.l.b16 %v1018
  %v1275 = vunpack.c.l.b16 %v1019
  %v1276 = vunpack.c.l.b16 %v1020
  %v1277 = vunpack.c.l.b16 %v1021
  %v1278 = vunpack.c.l.b16 %v1022
  %v1279 = vunpack.c.l.b16 %v1023
  %v1280 = vunpack.c.l.b16 %v1024
  %v1281 = vunpack.c.l.b16 %v1025
  %v1282 = vunpack.c.l.b16 %v1026
  %v1283 = vunpack.c.l.b16 %v1027
  %v1284 = vunpack.c.l.b16 %v1028
  %v1285 = vunpack.c.l.b16 %v1029
  %v1286 = vunpack.c.l.b16 %v1030
  %v1287 = vunpack.c.l.b16 %v1031
  %v1288 = vunpack.c.l.b16 %v1032
  %v1289 = vunpack.c.l.b16 %v1033
  %v1290 = vunpack.c.l.b16 %v1034
  %v1291 = vunpack.c.l.b16 %v1035
  %v1292 = vunpack.c.l.b16 %v1036
  %v1293 = vunpack.c.l.b16 %v1037
  %v1294 = vunpack.c.l.b16 %v1038
  %v1295 = vunpack.c.l.b16 %v1039
  %v1296 = vunpack.c.l.b16 %v1040
  %v1297 = vunpack.c.l.b16 %v1041
  %v1298 = vunpack.c.l.b16 %v1042
  %v1299 = vunpack.c.l.b16 %v1043
  %v1300 = vunpack.c.l.b16 %v1044
  %v1301 = vunpack.c.l.b16 %v1045
  %v1302 = vunpack.c.l.b16 %v1046
  %v1303 = vunpack.c.l.b16 %v1047
  %v1304 = vunpack.c.l.b16 %v1048
  %v1305 = vunpack.c.l.b16 %v1049
  %v1306 = vunpack.c.l.b16 %v1050
  %v1307 = vunpack.c.l.b16 %v1051
  %v1308 = vunpack.c.l.b16 %v1052
  %v1309 = vunpack.c.l.b16 %v1053
  %v1310 = vunpack.c.l.b16 %v1054
  %v1311 = vunpack.c.l.b16 %v1055
  %v1312 = vunpack.c.l.b16 %v1056
  %v1313 = vunpack.c.l.b16 %v1057
  %v1314 = vunpack.c.l.b16 %v1058
  %v1315 = vunpack.c.l.b16 %v1059
  %v1316 = vunpack.c.l.b16 %v1060
  %v1317 = vunpack.c.l.b16 %v1061
  %v1318 = vunpack.c.l.b16 %v1062
  %v1319 = vunpack.c.l.b16 %v1063
  %v1320 = vunpack.c.l.b16 %v1064
  %v1321 = vunpack.c.l.b16 %v1065
  %v1322 = vunpack.c.l.b16 %v1066
  %v1323 = vunpack.c.l.b16 %v1067
  %v1324 = vunpack.c.l.b16 %v1068
  %v1325 = vunpack.c.l.b16 %v1069
  %v1326 = vunpack.c.l.b16 %v1070
  %v1327 = vunpack.c.l.b16 %v1071
  %v1328 = vunpack.c.l.b16 %v1072
  %v1329 = vunpack.c.l.b16 %v1073
  %v1330 = vunpack.c.l.b16 %v1074
  %v1331 = vunpack.c.l.b16 %v1075
  %v1332 = vunpack.c.l.b16 %v1076
  %v1333 = vunpack.c.l.b16 %v1077
  %v1334 = vunpack.c.l.b16 %v1078
  %v1335 = vpack.c.b16 %v1208, %v1207
  %v1336 = vpack.c.b16 %v1210, %v1209
  %v1337 = vpack.c.b16 %v1212, %v1211
  %v1338 = vpack.c.b16 %v1214, %v1213
  %v1339 = vpack.c.b16 %v1216, %v1215
  %v1340 = vpack.c.b16 %v1218, %v1217
  %v1341 = vpack.c.b16 %v1220, %v1219
  %v1342 = vpack.c.b16 %v1222, %v1221
  %v1343 = vpack.c.b16 %v1224, %v1223
  %v1344 = vpack.c.b16 %v1226, %v1225
  %v1345 = vpack.c.b16 %v1228, %v1227
  %v1346 = vpack.c.b16 %v1230, %v1229
  %v1347 = vpack.c.b16 %v1232, %v1231
  %v1348 = vpack.c.b16 %v1234, %v1233
  %v1349 = vpack.c.b16 %v1236, %v1235
  %v1350 = vpack.c.b16 %v1238, %v1237
  %v1351 = vpack.c.b16 %v1240, %v1239
  %v1352 = vpack.c.b16 %v1242, %v1241
  %v1353 = vpack.c.b16 %v1244, %v1243
  %v1354 = vpack.c.b16 %v1246, %v1245
  %v1355 = vpack.c.b16 %v1248, %v1247
  %v1356 = vpack.c.b16 %v1250, %v1249
  %v1357 = vpack.c.b16 %v1252, %v1251
  %v1358 = vpack.c.b16 %v1254, %v1253
  %v1359 = vpack.c.b16 %v1256, %v1255
  %v1360 = vpack.c.b16 %v1258, %v1257
  %v1361 = vpack.c.b16 %v1260, %v1259
  %v1362 = vpack.c.b16 %v1262, %v1261
  %v1363 = vpack.c.b16 %v1264, %v1263
  %v1364 = vpack.c.b16 %v1266, %v1265
  %v1365 = vpack.c.b16 %v1268, %v1267
  %v1366 = vpack.c.b16 %v1270, %v1269
  %v1367 = vpack.c.b16 %v1272, %v1271
  %v1368 = vpack.c.b16 %v1274, %v1273
  %v1369 = vpack.c.b16 %v1276, %v1275
  %v1370 = vpack.c.b16 %v1278, %v1277
  %v1371 = vpack.c.b16 %v1280, %v1279
  %v1372 = vpack.c.b16 %v1282, %v1281
  %v1373 = vpack.c.b16 %v1284, %v1283
  %v1374 = vpack.c.b16 %v1286, %v1285
  %v1375 = vpack.c.b16 %v1288, %v1287
  %v1376 = vpack.c.b16 %v1290, %v1289
  %v1377 = vpack.c.b16 %v1292, %v1291
  %v1378 = vpack.c.b16 %v1294, %v1293
  %v1379 = vpack.c.b16 %v1296, %v1295
  %v1380 = vpack.c.b16 %v1298, %v1297
  %v1381 = vpack.c.b16 %v1300, %v1299
  %v1382 = vpack.c.b16 %v1302, %v1301
  %v1383 = vpack.c.b16 %v1304, %v1303
  %v1384 = vpack.c.b16 %v1306, %v1305
  %v1385 = vpack.c.b16 %v1308, %v1307
  %v1386 = vpack.c.b16 %v1310, %v1309
  %v1387 = vpack.c.b16 %v1312, %v1311
  %v1388 = vpack.c.b16 %v1314, %v1313
  %v1389 = vpack.c.b16 %v1316, %v1315
  %v1390 = vpack.c.b16 %v1318, %v1317
  %v1391 = vpack.c.b16 %v1320, %v1319
  %v1392 = vpack.c.b16 %v1322, %v1321
  %v1393 = vpack.c.b16 %v1324, %v1323
  %v1394 = vpack.c.b16 %v1326, %v1325
  %v1395 = vpack.c.b16 %v1328, %v1327
  %v1396 = vpack.c.b16 %v1330, %v1329
  %v1397 = vpack.c.b16 %v1332, %v1331
  %v1398 = vpack.c.b16 %v1334, %v1333
  %1463 = vmatpush.bf16.msra.mxu0 %v1342
  %1464 = vmatpush.bf16.msra.mxu0 %v1341
  %1465 = vmatpush.bf16.msra.mxu0 %v1340
  %1466 = vmatpush.bf16.msra.mxu0 %v1339
  %1467 = vmatpush.bf16.msra.mxu0 %v1338
  %1468 = vmatpush.bf16.msra.mxu0 %v1337
  %1469 = vmatpush.bf16.msra.mxu0 %v1336
  %1470 = vmatpush.bf16.msra.mxu0 %v1335
  %1471 = vmatmul.bf16.gmra.mxu0 %v887
  %v1472 = vpop.f32.mrf.mxu0
  %v1473 = vadd.f32 0.0, %v1472
  %v1474 = vpop.f32.mrf.mxu0
  %v1475 = vadd.f32 0.0, %v1474
  %1476 = vmatmul.bf16.gmra.mxu0 %v895
  %v1477 = vpop.f32.mrf.mxu0
  %v1478 = vadd.f32 0.0, %v1477
  %v1479 = vpop.f32.mrf.mxu0
  %v1480 = vadd.f32 0.0, %v1479
  %1481 = vmatmul.bf16.gmra.mxu0 %v903
  %v1482 = vpop.f32.mrf.mxu0
  %v1483 = vadd.f32 0.0, %v1482
  %v1484 = vpop.f32.mrf.mxu0
  %v1485 = vadd.f32 0.0, %v1484
  %1486 = vmatmul.bf16.gmra.mxu0 %v911
  %v1487 = vpop.f32.mrf.mxu0
  %v1488 = vadd.f32 0.0, %v1487
  %v1489 = vpop.f32.mrf.mxu0
  %v1490 = vadd.f32 0.0, %v1489
  %1491 = vmatmul.bf16.gmra.mxu0 %v919
  %v1492 = vpop.f32.mrf.mxu0
  %v1493 = vadd.f32 0.0, %v1492
  %v1494 = vpop.f32.mrf.mxu0
  %v1495 = vadd.f32 0.0, %v1494
  %1496 = vmatmul.bf16.gmra.mxu0 %v927
  %v1497 = vpop.f32.mrf.mxu0
  %v1498 = vadd.f32 0.0, %v1497
  %v1499 = vpop.f32.mrf.mxu0
  %v1500 = vadd.f32 0.0, %v1499
  %1501 = vmatmul.bf16.gmra.mxu0 %v935
  %v1502 = vpop.f32.mrf.mxu0
  %v1503 = vadd.f32 0.0, %v1502
  %v1504 = vpop.f32.mrf.mxu0
  %v1505 = vadd.f32 0.0, %v1504
  %1506 = vmatmul.bf16.gmra.mxu0 %v943
  %v1507 = vpop.f32.mrf.mxu0
  %v1508 = vadd.f32 0.0, %v1507
  %v1509 = vpop.f32.mrf.mxu0
  %v1510 = vadd.f32 0.0, %v1509
  %1511 = vdwg.mxu0
  %1512 = vmatpush.bf16.msra.mxu0 %v1350
  %1513 = vmatpush.bf16.msra.mxu0 %v1349
  %1514 = vmatpush.bf16.msra.mxu0 %v1348
  %1515 = vmatpush.bf16.msra.mxu0 %v1347
  %1516 = vmatpush.bf16.msra.mxu0 %v1346
  %1517 = vmatpush.bf16.msra.mxu0 %v1345
  %1518 = vmatpush.bf16.msra.mxu0 %v1344
  %1519 = vmatpush.bf16.msra.mxu0 %v1343
  %1520 = vmatmul.bf16.gmra.mxu0 %v888
  %v1521 = vpop.f32.mrf.mxu0
  %v1522 = vadd.f32 %v1473, %v1521
  %v1523 = vpop.f32.mrf.mxu0
  %v1524 = vadd.f32 %v1475, %v1523
  %1525 = vmatmul.bf16.gmra.mxu0 %v896
  %v1526 = vpop.f32.mrf.mxu0
  %v1527 = vadd.f32 %v1478, %v1526
  %v1528 = vpop.f32.mrf.mxu0
  %v1529 = vadd.f32 %v1480, %v1528
  %1530 = vmatmul.bf16.gmra.mxu0 %v904
  %v1531 = vpop.f32.mrf.mxu0
  %v1532 = vadd.f32 %v1483, %v1531
  %v1533 = vpop.f32.mrf.mxu0
  %v1534 = vadd.f32 %v1485, %v1533
  %1535 = vmatmul.bf16.gmra.mxu0 %v912
  %v1536 = vpop.f32.mrf.mxu0
  %v1537 = vadd.f32 %v1488, %v1536
  %v1538 = vpop.f32.mrf.mxu0
  %v1539 = vadd.f32 %v1490, %v1538
  %1540 = vmatmul.bf16.gmra.mxu0 %v920
  %v1541 = vpop.f32.mrf.mxu0
  %v1542 = vadd.f32 %v1493, %v1541
  %v1543 = vpop.f32.mrf.mxu0
  %v1544 = vadd.f32 %v1495, %v1543
  %1545 = vmatmul.bf16.gmra.mxu0 %v928
  %v1546 = vpop.f32.mrf.mxu0
  %v1547 = vadd.f32 %v1498, %v1546
  %v1548 = vpop.f32.mrf.mxu0
  %v1549 = vadd.f32 %v1500, %v1548
  %1550 = vmatmul.bf16.gmra.mxu0 %v936
  %v1551 = vpop.f32.mrf.mxu0
  %v1552 = vadd.f32 %v1503, %v1551
  %v1553 = vpop.f32.mrf.mxu0
  %v1554 = vadd.f32 %v1505, %v1553
  %1555 = vmatmul.bf16.gmra.mxu0 %v944
  %v1556 = vpop.f32.mrf.mxu0
  %v1557 = vadd.f32 %v1508, %v1556
  %v1558 = vpop.f32.mrf.mxu0
  %v1559 = vadd.f32 %v1510, %v1558
  %1560 = vdwg.mxu0
  %1561 = vmatpush.bf16.msra.mxu0 %v1358
  %1562 = vmatpush.bf16.msra.mxu0 %v1357
  %1563 = vmatpush.bf16.msra.mxu0 %v1356
  %1564 = vmatpush.bf16.msra.mxu0 %v1355
  %1565 = vmatpush.bf16.msra.mxu0 %v1354
  %1566 = vmatpush.bf16.msra.mxu0 %v1353
  %1567 = vmatpush.bf16.msra.mxu0 %v1352
  %1568 = vmatpush.bf16.msra.mxu0 %v1351
  %1569 = vmatmul.bf16.gmra.mxu0 %v889
  %v1570 = vpop.f32.mrf.mxu0
  %v1571 = vadd.f32 %v1522, %v1570
  %v1572 = vpop.f32.mrf.mxu0
  %v1573 = vadd.f32 %v1524, %v1572
  %1574 = vmatmul.bf16.gmra.mxu0 %v897
  %v1575 = vpop.f32.mrf.mxu0
  %v1576 = vadd.f32 %v1527, %v1575
  %v1577 = vpop.f32.mrf.mxu0
  %v1578 = vadd.f32 %v1529, %v1577
  %1579 = vmatmul.bf16.gmra.mxu0 %v905
  %v1580 = vpop.f32.mrf.mxu0
  %v1581 = vadd.f32 %v1532, %v1580
  %v1582 = vpop.f32.mrf.mxu0
  %v1583 = vadd.f32 %v1534, %v1582
  %1584 = vmatmul.bf16.gmra.mxu0 %v913
  %v1585 = vpop.f32.mrf.mxu0
  %v1586 = vadd.f32 %v1537, %v1585
  %v1587 = vpop.f32.mrf.mxu0
  %v1588 = vadd.f32 %v1539, %v1587
  %1589 = vmatmul.bf16.gmra.mxu0 %v921
  %v1590 = vpop.f32.mrf.mxu0
  %v1591 = vadd.f32 %v1542, %v1590
  %v1592 = vpop.f32.mrf.mxu0
  %v1593 = vadd.f32 %v1544, %v1592
  %1594 = vmatmul.bf16.gmra.mxu0 %v929
  %v1595 = vpop.f32.mrf.mxu0
  %v1596 = vadd.f32 %v1547, %v1595
  %v1597 = vpop.f32.mrf.mxu0
  %v1598 = vadd.f32 %v1549, %v1597
  %1599 = vmatmul.bf16.gmra.mxu0 %v937
  %v1600 = vpop.f32.mrf.mxu0
  %v1601 = vadd.f32 %v1552, %v1600
  %v1602 = vpop.f32.mrf.mxu0
  %v1603 = vadd.f32 %v1554, %v1602
  %1604 = vmatmul.bf16.gmra.mxu0 %v945
  %v1605 = vpop.f32.mrf.mxu0
  %v1606 = vadd.f32 %v1557, %v1605
  %v1607 = vpop.f32.mrf.mxu0
  %v1608 = vadd.f32 %v1559, %v1607
  %1609 = vdwg.mxu0
  %1610 = vmatpush.bf16.msra.mxu0 %v1366
  %1611 = vmatpush.bf16.msra.mxu0 %v1365
  %1612 = vmatpush.bf16.msra.mxu0 %v1364
  %1613 = vmatpush.bf16.msra.mxu0 %v1363
  %1614 = vmatpush.bf16.msra.mxu0 %v1362
  %1615 = vmatpush.bf16.msra.mxu0 %v1361
  %1616 = vmatpush.bf16.msra.mxu0 %v1360
  %1617 = vmatpush.bf16.msra.mxu0 %v1359
  %1618 = vmatmul.bf16.gmra.mxu0 %v890
  %v1619 = vpop.f32.mrf.mxu0
  %v1620 = vadd.f32 %v1571, %v1619
  %v1621 = vpop.f32.mrf.mxu0
  %v1622 = vadd.f32 %v1573, %v1621
  %1623 = vmatmul.bf16.gmra.mxu0 %v898
  %v1624 = vpop.f32.mrf.mxu0
  %v1625 = vadd.f32 %v1576, %v1624
  %v1626 = vpop.f32.mrf.mxu0
  %v1627 = vadd.f32 %v1578, %v1626
  %1628 = vmatmul.bf16.gmra.mxu0 %v906
  %v1629 = vpop.f32.mrf.mxu0
  %v1630 = vadd.f32 %v1581, %v1629
  %v1631 = vpop.f32.mrf.mxu0
  %v1632 = vadd.f32 %v1583, %v1631
  %1633 = vmatmul.bf16.gmra.mxu0 %v914
  %v1634 = vpop.f32.mrf.mxu0
  %v1635 = vadd.f32 %v1586, %v1634
  %v1636 = vpop.f32.mrf.mxu0
  %v1637 = vadd.f32 %v1588, %v1636
  %1638 = vmatmul.bf16.gmra.mxu0 %v922
  %v1639 = vpop.f32.mrf.mxu0
  %v1640 = vadd.f32 %v1591, %v1639
  %v1641 = vpop.f32.mrf.mxu0
  %v1642 = vadd.f32 %v1593, %v1641
  %1643 = vmatmul.bf16.gmra.mxu0 %v930
  %v1644 = vpop.f32.mrf.mxu0
  %v1645 = vadd.f32 %v1596, %v1644
  %v1646 = vpop.f32.mrf.mxu0
  %v1647 = vadd.f32 %v1598, %v1646
  %1648 = vmatmul.bf16.gmra.mxu0 %v938
  %v1649 = vpop.f32.mrf.mxu0
  %v1650 = vadd.f32 %v1601, %v1649
  %v1651 = vpop.f32.mrf.mxu0
  %v1652 = vadd.f32 %v1603, %v1651
  %1653 = vmatmul.bf16.gmra.mxu0 %v946
  %v1654 = vpop.f32.mrf.mxu0
  %v1655 = vadd.f32 %v1606, %v1654
  %v1656 = vpop.f32.mrf.mxu0
  %v1657 = vadd.f32 %v1608, %v1656
  %1658 = vdwg.mxu0
  %1659 = vmatpush.bf16.msra.mxu0 %v1374
  %1660 = vmatpush.bf16.msra.mxu0 %v1373
  %1661 = vmatpush.bf16.msra.mxu0 %v1372
  %1662 = vmatpush.bf16.msra.mxu0 %v1371
  %1663 = vmatpush.bf16.msra.mxu0 %v1370
  %1664 = vmatpush.bf16.msra.mxu0 %v1369
  %1665 = vmatpush.bf16.msra.mxu0 %v1368
  %1666 = vmatpush.bf16.msra.mxu0 %v1367
  %1667 = vmatmul.bf16.gmra.mxu0 %v891
  %v1668 = vpop.f32.mrf.mxu0
  %v1669 = vadd.f32 %v1620, %v1668
  %v1670 = vpop.f32.mrf.mxu0
  %v1671 = vadd.f32 %v1622, %v1670
  %1672 = vmatmul.bf16.gmra.mxu0 %v899
  %v1673 = vpop.f32.mrf.mxu0
  %v1674 = vadd.f32 %v1625, %v1673
  %v1675 = vpop.f32.mrf.mxu0
  %v1676 = vadd.f32 %v1627, %v1675
  %1677 = vmatmul.bf16.gmra.mxu0 %v907
  %v1678 = vpop.f32.mrf.mxu0
  %v1679 = vadd.f32 %v1630, %v1678
  %v1680 = vpop.f32.mrf.mxu0
  %v1681 = vadd.f32 %v1632, %v1680
  %1682 = vmatmul.bf16.gmra.mxu0 %v915
  %v1683 = vpop.f32.mrf.mxu0
  %v1684 = vadd.f32 %v1635, %v1683
  %v1685 = vpop.f32.mrf.mxu0
  %v1686 = vadd.f32 %v1637, %v1685
  %1687 = vmatmul.bf16.gmra.mxu0 %v923
  %v1688 = vpop.f32.mrf.mxu0
  %v1689 = vadd.f32 %v1640, %v1688
  %v1690 = vpop.f32.mrf.mxu0
  %v1691 = vadd.f32 %v1642, %v1690
  %1692 = vmatmul.bf16.gmra.mxu0 %v931
  %v1693 = vpop.f32.mrf.mxu0
  %v1694 = vadd.f32 %v1645, %v1693
  %v1695 = vpop.f32.mrf.mxu0
  %v1696 = vadd.f32 %v1647, %v1695
  %1697 = vmatmul.bf16.gmra.mxu0 %v939
  %v1698 = vpop.f32.mrf.mxu0
  %v1699 = vadd.f32 %v1650, %v1698
  %v1700 = vpop.f32.mrf.mxu0
  %v1701 = vadd.f32 %v1652, %v1700
  %1702 = vmatmul.bf16.gmra.mxu0 %v947
  %v1703 = vpop.f32.mrf.mxu0
  %v1704 = vadd.f32 %v1655, %v1703
  %v1705 = vpop.f32.mrf.mxu0
  %v1706 = vadd.f32 %v1657, %v1705
  %1707 = vdwg.mxu0
  %1708 = vmatpush.bf16.msra.mxu0 %v1382
  %1709 = vmatpush.bf16.msra.mxu0 %v1381
  %1710 = vmatpush.bf16.msra.mxu0 %v1380
  %1711 = vmatpush.bf16.msra.mxu0 %v1379
  %1712 = vmatpush.bf16.msra.mxu0 %v1378
  %1713 = vmatpush.bf16.msra.mxu0 %v1377
  %1714 = vmatpush.bf16.msra.mxu0 %v1376
  %1715 = vmatpush.bf16.msra.mxu0 %v1375
  %1716 = vmatmul.bf16.gmra.mxu0 %v892
  %v1717 = vpop.f32.mrf.mxu0
  %v1718 = vadd.f32 %v1669, %v1717
  %v1719 = vpop.f32.mrf.mxu0
  %v1720 = vadd.f32 %v1671, %v1719
  %1721 = vmatmul.bf16.gmra.mxu0 %v900
  %v1722 = vpop.f32.mrf.mxu0
  %v1723 = vadd.f32 %v1674, %v1722
  %v1724 = vpop.f32.mrf.mxu0
  %v1725 = vadd.f32 %v1676, %v1724
  %1726 = vmatmul.bf16.gmra.mxu0 %v908
  %v1727 = vpop.f32.mrf.mxu0
  %v1728 = vadd.f32 %v1679, %v1727
  %v1729 = vpop.f32.mrf.mxu0
  %v1730 = vadd.f32 %v1681, %v1729
  %1731 = vmatmul.bf16.gmra.mxu0 %v916
  %v1732 = vpop.f32.mrf.mxu0
  %v1733 = vadd.f32 %v1684, %v1732
  %v1734 = vpop.f32.mrf.mxu0
  %v1735 = vadd.f32 %v1686, %v1734
  %1736 = vmatmul.bf16.gmra.mxu0 %v924
  %v1737 = vpop.f32.mrf.mxu0
  %v1738 = vadd.f32 %v1689, %v1737
  %v1739 = vpop.f32.mrf.mxu0
  %v1740 = vadd.f32 %v1691, %v1739
  %1741 = vmatmul.bf16.gmra.mxu0 %v932
  %v1742 = vpop.f32.mrf.mxu0
  %v1743 = vadd.f32 %v1694, %v1742
  %v1744 = vpop.f32.mrf.mxu0
  %v1745 = vadd.f32 %v1696, %v1744
  %1746 = vmatmul.bf16.gmra.mxu0 %v940
  %v1747 = vpop.f32.mrf.mxu0
  %v1748 = vadd.f32 %v1699, %v1747
  %v1749 = vpop.f32.mrf.mxu0
  %v1750 = vadd.f32 %v1701, %v1749
  %1751 = vmatmul.bf16.gmra.mxu0 %v948
  %v1752 = vpop.f32.mrf.mxu0
  %v1753 = vadd.f32 %v1704, %v1752
  %v1754 = vpop.f32.mrf.mxu0
  %v1755 = vadd.f32 %v1706, %v1754
  %1756 = vdwg.mxu0
  %1757 = vmatpush.bf16.msra.mxu0 %v1390
  %1758 = vmatpush.bf16.msra.mxu0 %v1389
  %1759 = vmatpush.bf16.msra.mxu0 %v1388
  %1760 = vmatpush.bf16.msra.mxu0 %v1387
  %1761 = vmatpush.bf16.msra.mxu0 %v1386
  %1762 = vmatpush.bf16.msra.mxu0 %v1385
  %1763 = vmatpush.bf16.msra.mxu0 %v1384
  %1764 = vmatpush.bf16.msra.mxu0 %v1383
  %1765 = vmatmul.bf16.gmra.mxu0 %v893
  %v1766 = vpop.f32.mrf.mxu0
  %v1767 = vadd.f32 %v1718, %v1766
  %v1768 = vpop.f32.mrf.mxu0
  %v1769 = vadd.f32 %v1720, %v1768
  %1770 = vmatmul.bf16.gmra.mxu0 %v901
  %v1771 = vpop.f32.mrf.mxu0
  %v1772 = vadd.f32 %v1723, %v1771
  %v1773 = vpop.f32.mrf.mxu0
  %v1774 = vadd.f32 %v1725, %v1773
  %1775 = vmatmul.bf16.gmra.mxu0 %v909
  %v1776 = vpop.f32.mrf.mxu0
  %v1777 = vadd.f32 %v1728, %v1776
  %v1778 = vpop.f32.mrf.mxu0
  %v1779 = vadd.f32 %v1730, %v1778
  %1780 = vmatmul.bf16.gmra.mxu0 %v917
  %v1781 = vpop.f32.mrf.mxu0
  %v1782 = vadd.f32 %v1733, %v1781
  %v1783 = vpop.f32.mrf.mxu0
  %v1784 = vadd.f32 %v1735, %v1783
  %1785 = vmatmul.bf16.gmra.mxu0 %v925
  %v1786 = vpop.f32.mrf.mxu0
  %v1787 = vadd.f32 %v1738, %v1786
  %v1788 = vpop.f32.mrf.mxu0
  %v1789 = vadd.f32 %v1740, %v1788
  %1790 = vmatmul.bf16.gmra.mxu0 %v933
  %v1791 = vpop.f32.mrf.mxu0
  %v1792 = vadd.f32 %v1743, %v1791
  %v1793 = vpop.f32.mrf.mxu0
  %v1794 = vadd.f32 %v1745, %v1793
  %1795 = vmatmul.bf16.gmra.mxu0 %v941
  %v1796 = vpop.f32.mrf.mxu0
  %v1797 = vadd.f32 %v1748, %v1796
  %v1798 = vpop.f32.mrf.mxu0
  %v1799 = vadd.f32 %v1750, %v1798
  %1800 = vmatmul.bf16.gmra.mxu0 %v949
  %v1801 = vpop.f32.mrf.mxu0
  %v1802 = vadd.f32 %v1753, %v1801
  %v1803 = vpop.f32.mrf.mxu0
  %v1804 = vadd.f32 %v1755, %v1803
  %1805 = vdwg.mxu0
  %1806 = vmatpush.bf16.msra.mxu0 %v1398
  %1807 = vmatpush.bf16.msra.mxu0 %v1397
  %1808 = vmatpush.bf16.msra.mxu0 %v1396
  %1809 = vmatpush.bf16.msra.mxu0 %v1395
  %1810 = vmatpush.bf16.msra.mxu0 %v1394
  %1811 = vmatpush.bf16.msra.mxu0 %v1393
  %1812 = vmatpush.bf16.msra.mxu0 %v1392
  %1813 = vmatpush.bf16.msra.mxu0 %v1391
  %1814 = vmatmul.bf16.gmra.mxu0 %v894
  %v1815 = vpop.f32.mrf.mxu0
  %v1816 = vadd.f32 %v1767, %v1815
  %v1817 = vpop.f32.mrf.mxu0
  %v1818 = vadd.f32 %v1769, %v1817
  %1819 = vmatmul.bf16.gmra.mxu0 %v902
  %v1820 = vpop.f32.mrf.mxu0
  %v1821 = vadd.f32 %v1772, %v1820
  %v1822 = vpop.f32.mrf.mxu0
  %v1823 = vadd.f32 %v1774, %v1822
  %1824 = vmatmul.bf16.gmra.mxu0 %v910
  %v1825 = vpop.f32.mrf.mxu0
  %v1826 = vadd.f32 %v1777, %v1825
  %v1827 = vpop.f32.mrf.mxu0
  %v1828 = vadd.f32 %v1779, %v1827
  %1829 = vmatmul.bf16.gmra.mxu0 %v918
  %v1830 = vpop.f32.mrf.mxu0
  %v1831 = vadd.f32 %v1782, %v1830
  %v1832 = vpop.f32.mrf.mxu0
  %v1833 = vadd.f32 %v1784, %v1832
  %1834 = vmatmul.bf16.gmra.mxu0 %v926
  %v1835 = vpop.f32.mrf.mxu0
  %v1836 = vadd.f32 %v1787, %v1835
  %v1837 = vpop.f32.mrf.mxu0
  %v1838 = vadd.f32 %v1789, %v1837
  %1839 = vmatmul.bf16.gmra.mxu0 %v934
  %v1840 = vpop.f32.mrf.mxu0
  %v1841 = vadd.f32 %v1792, %v1840
  %v1842 = vpop.f32.mrf.mxu0
  %v1843 = vadd.f32 %v1794, %v1842
  %1844 = vmatmul.bf16.gmra.mxu0 %v942
  %v1845 = vpop.f32.mrf.mxu0
  %v1846 = vadd.f32 %v1797, %v1845
  %v1847 = vpop.f32.mrf.mxu0
  %v1848 = vadd.f32 %v1799, %v1847
  %1849 = vmatmul.bf16.gmra.mxu0 %v950
  %v1850 = vpop.f32.mrf.mxu0
  %v1851 = vadd.f32 %v1802, %v1850
  %v1852 = vpop.f32.mrf.mxu0
  %v1853 = vadd.f32 %v1804, %v1852
  %1854 = vdwg.mxu0
  %v1855 = vpack.c.bf16 %v1816, %v1816
  %v1856 = vpack.c.bf16 %v1818, %v1818
  %v1857 = vpack.c.bf16 %v1821, %v1821
  %v1858 = vpack.c.bf16 %v1823, %v1823
  %v1859 = vpack.c.bf16 %v1826, %v1826
  %v1860 = vpack.c.bf16 %v1828, %v1828
  %v1861 = vpack.c.bf16 %v1831, %v1831
  %v1862 = vpack.c.bf16 %v1833, %v1833
  %v1863 = vpack.c.bf16 %v1836, %v1836
  %v1864 = vpack.c.bf16 %v1838, %v1838
  %v1865 = vpack.c.bf16 %v1841, %v1841
  %v1866 = vpack.c.bf16 %v1843, %v1843
  %v1867 = vpack.c.bf16 %v1846, %v1846
  %v1868 = vpack.c.bf16 %v1848, %v1848
  %v1869 = vpack.c.bf16 %v1851, %v1851
  %v1870 = vpack.c.bf16 %v1853, %v1853
  %1871 = vst [vmem:[%s4] sm:$0xf] %v1855
  %1872 = vst [vmem:[%s4 + $0x4] sm:$0xf] %v1856
  %1873 = vst [vmem:[%s4 + $0x8] sm:$0xf] %v1857
  %1874 = vst [vmem:[%s4 + $0xc] sm:$0xf] %v1858
  %1875 = vst [vmem:[%s4 + $0x10] sm:$0xf] %v1859
  %1876 = vst [vmem:[%s4 + $0x14] sm:$0xf] %v1860
  %1877 = vst [vmem:[%s4 + $0x18] sm:$0xf] %v1861
  %1878 = vst [vmem:[%s4 + $0x1c] sm:$0xf] %v1862
  %1879 = vst [vmem:[%s4 + $0x20] sm:$0xf] %v1863
  %1880 = vst [vmem:[%s4 + $0x24] sm:$0xf] %v1864
  %1881 = vst [vmem:[%s4 + $0x28] sm:$0xf] %v1865
  %1882 = vst [vmem:[%s4 + $0x2c] sm:$0xf] %v1866
  %1883 = vst [vmem:[%s4 + $0x30] sm:$0xf] %v1867
  %1884 = vst [vmem:[%s4 + $0x34] sm:$0xf] %v1868
  %1885 = vst [vmem:[%s4 + $0x38] sm:$0xf] %v1869
  %1886 = vst [vmem:[%s4 + $0x3c] sm:$0xf] %v1870
  %v1887 = vadd.f32 %v1816, %v1818
  %v1888 = vadd.f32 %v1887, %v1821
  %v1889 = vadd.f32 %v1888, %v1823
  %v1890 = vadd.f32 %v1889, %v1826
  %v1891 = vadd.f32 %v1890, %v1828
  %v1892 = vadd.f32 %v1891, %v1831
  %v1893 = vadd.f32 %v1892, %v1833
  %v1894 = vadd.f32 %v1893, %v1836
  %v1895 = vadd.f32 %v1894, %v1838
  %v1896 = vadd.f32 %v1895, %v1841
  %v1897 = vadd.f32 %v1896, %v1843
  %v1898 = vadd.f32 %v1897, %v1846
  %v1899 = vadd.f32 %v1898, %v1848
  %v1900 = vadd.f32 %v1899, %v1851
  %v1901 = vadd.f32 %v1900, %v1853
  %v1902 = vrot.slane %v1901, 4
  %v1903 = vadd.f32 %v1901, %v1902
  %v1904 = vrot.slane %v1903, 2
  %v1905 = vadd.f32 %v1903, %v1904
  %v1906 = vrot.slane %v1905, 1
  %v1907 = vadd.f32 %v1905, %v1906
  %v1908 = vmul.f32 %v1816, %v1816
  %v1909 = vmul.f32 %v1818, %v1818
  %v1910 = vmul.f32 %v1821, %v1821
  %v1911 = vmul.f32 %v1823, %v1823
  %v1912 = vmul.f32 %v1826, %v1826
  %v1913 = vmul.f32 %v1828, %v1828
  %v1914 = vmul.f32 %v1831, %v1831
  %v1915 = vmul.f32 %v1833, %v1833
  %v1916 = vmul.f32 %v1836, %v1836
  %v1917 = vmul.f32 %v1838, %v1838
  %v1918 = vmul.f32 %v1841, %v1841
  %v1919 = vmul.f32 %v1843, %v1843
  %v1920 = vmul.f32 %v1846, %v1846
  %v1921 = vmul.f32 %v1848, %v1848
  %v1922 = vmul.f32 %v1851, %v1851
  %v1923 = vmul.f32 %v1853, %v1853
  %v1924 = vadd.f32 %v1908, %v1909
  %v1925 = vadd.f32 %v1924, %v1910
  %v1926 = vadd.f32 %v1925, %v1911
  %v1927 = vadd.f32 %v1926, %v1912
  %v1928 = vadd.f32 %v1927, %v1913
  %v1929 = vadd.f32 %v1928, %v1914
  %v1930 = vadd.f32 %v1929, %v1915
  %v1931 = vadd.f32 %v1930, %v1916
  %v1932 = vadd.f32 %v1931, %v1917
  %v1933 = vadd.f32 %v1932, %v1918
  %v1934 = vadd.f32 %v1933, %v1919
  %v1935 = vadd.f32 %v1934, %v1920
  %v1936 = vadd.f32 %v1935, %v1921
  %v1937 = vadd.f32 %v1936, %v1922
  %v1938 = vadd.f32 %v1937, %v1923
  %v1939 = vrot.slane %v1938, 4
  %v1940 = vadd.f32 %v1938, %v1939
  %v1941 = vrot.slane %v1940, 2
  %v1942 = vadd.f32 %v1940, %v1941
  %v1943 = vrot.slane %v1942, 1
  %v1944 = vadd.f32 %v1942, %v1943
  %vm1945 = vcmask 1040384
  %v1946 = vsel %vm1945, %v1907, %v1944
  %1947 = vst [vmem:[%s5] sm:$0x3] %v1946
  // Predicated region
  $region18: #{discriminator_forward.7} parent=0 // pred_check
    _
  $region19: #{discriminator_forward.7} parent=0 // pred_check_branch
    %1949 = sbr.rel (0) target = $region21
  $region20: #{discriminator_forward.7} parent=0 // pred_region
    _
  $region21: #{discriminator_forward.7} parent=0 // pred_fallthru
    _
  // Predicated region
  $region22: #{discriminator_forward.7} parent=0 // pred_check
    _
  $region23: #{discriminator_forward.7} parent=0 // pred_check_branch
    %1951 = sbr.rel (0) target = $region25
  $region24: #{discriminator_forward.7} parent=0 // pred_region
    _
  $region25: #{discriminator_forward.7} parent=0 // pred_fallthru
    _
  // Predicated region
  $region26: #{discriminator_forward.7} parent=0 // pred_check
    _
  $region27: #{discriminator_forward.7} parent=0 // pred_check_branch
    %1953 = sbr.rel (0) target = $region29
  $region28: #{discriminator_forward.7} parent=0 // pred_region
    _
  $region29: #{discriminator_forward.7} parent=0 // pred_fallthru
    _
  // Predicated region
  $region30: #{discriminator_forward.7} parent=0 // pred_check
    _
  $region31: #{discriminator_forward.7} parent=0 // pred_check_branch
    %1955 = sbr.rel (0) target = $region33
  $region32: #{discriminator_forward.7} parent=0 // pred_region
    _
  $region33: #{discriminator_forward.7} parent=0 // pred_fallthru
    _

// kernel: tile.63
$region0: #{tile.63}
  #allocation0 [shape = 's32[1]{0}', space=sflag, size = 0x4, scoped, tag = 'scoped memory for tile.63']
  %s0 = inlined_call_operand.vmem [shape: f32[128], index: 0, kind: input, shape index: {}]
  %s1 = inlined_call_operand.vmem [shape: f32[16,128], index: 1, kind: output, shape index: {}]
  // Predicated region
  $region2: #{tile.63} parent=0 // pred_check
    _
  $region3: #{tile.63} parent=0 // pred_check_branch
    %3 = sbr.rel (0) target = $region5
  $region4: #{tile.63} parent=0 // pred_region
    _
  $region5: #{tile.63} parent=0 // pred_fallthru
    _
  %v4 = vld [vmem:[%s0] ss:$0 sm:$0xff]
  %5 = vst [vmem:[%s1] sm:$0xff] %v4
  %s6 = scalar_lea.vmem %s1, 8
  %7 = vst [vmem:[%s6] sm:$0xff] %v4

// kernel: discriminator_forward.8
$region0: #{discriminator_forward.8}
  #allocation0 [shape = 'u32[]', space=smem, size = 0x4, offset = 0x4, fixed_abs, tag = 'smem constant byte address 0x4 - core index']
  #allocation1 [shape = 'u32[72,128]{1,0:T(1,128)}', space=vmem, size = 0x9000, scoped, tag = 'internal scratch']
  %s0 = inlined_call_operand.vmem [shape: f32[1,2048], index: 0, kind: input, shape index: {}]
  %s1 = inlined_call_operand.vmem [shape: f32[1,2048], index: 1, kind: input, shape index: {}]
  %s2 = inlined_call_operand.vmem [shape: bf16[32,2048], index: 2, kind: input, shape index: {}]
  %s3 = inlined_call_operand.vmem [shape: bf16[2048,256], index: 3, kind: input, shape index: {}]
  %s4 = inlined_call_operand.vmem [shape: bf16[32,256], index: 4, kind: output, shape index: {0}]
  %s5 = inlined_call_operand.vmem [shape: f32[1,2,256], index: 5, kind: output, shape index: {1}]
  %6 = xla_tuple %s4, %s5
  %s7 = sld [smem:[#allocation0]]
  $region34: #{discriminator_forward.8} parent=0
    _
  %s9 = ssub.s32 1, %s7
  %s10 = scalar_select 0, %s9, %s7
  // Predicated region
  $region2: #{discriminator_forward.8} parent=0 // pred_check
    _
  $region3: #{discriminator_forward.8} parent=0 // pred_check_branch
    %12 = sbr.rel (0) target = $region5
  $region4: #{discriminator_forward.8} parent=0 // pred_region
    _
  $region5: #{discriminator_forward.8} parent=0 // pred_fallthru
    _
  // Predicated region
  $region6: #{discriminator_forward.8} parent=0 // pred_check
    _
  $region7: #{discriminator_forward.8} parent=0 // pred_check_branch
    %14 = sbr.rel (0) target = $region9
  $region8: #{discriminator_forward.8} parent=0 // pred_region
    _
  $region9: #{discriminator_forward.8} parent=0 // pred_fallthru
    _
  // Predicated region
  $region10: #{discriminator_forward.8} parent=0 // pred_check
    _
  $region11: #{discriminator_forward.8} parent=0 // pred_check_branch
    %16 = sbr.rel (0) target = $region13
  $region12: #{discriminator_forward.8} parent=0 // pred_region
    _
  $region13: #{discriminator_forward.8} parent=0 // pred_fallthru
    _
  // Predicated region
  $region14: #{discriminator_forward.8} parent=0 // pred_check
    _
  $region15: #{discriminator_forward.8} parent=0 // pred_check_branch
    %18 = sbr.rel (0) target = $region17
  $region16: #{discriminator_forward.8} parent=0 // pred_region
    _
  $region17: #{discriminator_forward.8} parent=0 // pred_fallthru
    _
  %v19 = vld [vmem:[%s2] sm:$0xff]
  %v20 = vld [vmem:[%s2 + $0x8] sm:$0xff]
  %v21 = vld [vmem:[%s2 + $0x10] sm:$0xff]
  %v22 = vld [vmem:[%s2 + $0x18] sm:$0xff]
  %v23 = vld [vmem:[%s2 + $0x20] sm:$0xff]
  %v24 = vld [vmem:[%s2 + $0x28] sm:$0xff]
  %v25 = vld [vmem:[%s2 + $0x30] sm:$0xff]
  %v26 = vld [vmem:[%s2 + $0x38] sm:$0xff]
  %v27 = vld [vmem:[%s2 + $0x40] sm:$0xff]
  %v28 = vld [vmem:[%s2 + $0x48] sm:$0xff]
  %v29 = vld [vmem:[%s2 + $0x50] sm:$0xff]
  %v30 = vld [vmem:[%s2 + $0x58] sm:$0xff]
  %v31 = vld [vmem:[%s2 + $0x60] sm:$0xff]
  %v32 = vld [vmem:[%s2 + $0x68] sm:$0xff]
  %v33 = vld [vmem:[%s2 + $0x70] sm:$0xff]
  %v34 = vld [vmem:[%s2 + $0x78] sm:$0xff]
  %v35 = vld [vmem:[%s2 + $0x80] sm:$0xff]
  %v36 = vld [vmem:[%s2 + $0x88] sm:$0xff]
  %v37 = vld [vmem:[%s2 + $0x90] sm:$0xff]
  %v38 = vld [vmem:[%s2 + $0x98] sm:$0xff]
  %v39 = vld [vmem:[%s2 + $0xa0] sm:$0xff]
  %v40 = vld [vmem:[%s2 + $0xa8] sm:$0xff]
  %v41 = vld [vmem:[%s2 + $0xb0] sm:$0xff]
  %v42 = vld [vmem:[%s2 + $0xb8] sm:$0xff]
  %v43 = vld [vmem:[%s2 + $0xc0] sm:$0xff]
  %v44 = vld [vmem:[%s2 + $0xc8] sm:$0xff]
  %v45 = vld [vmem:[%s2 + $0xd0] sm:$0xff]
  %v46 = vld [vmem:[%s2 + $0xd8] sm:$0xff]
  %v47 = vld [vmem:[%s2 + $0xe0] sm:$0xff]
  %v48 = vld [vmem:[%s2 + $0xe8] sm:$0xff]
  %v49 = vld [vmem:[%s2 + $0xf0] sm:$0xff]
  %v50 = vld [vmem:[%s2 + $0xf8] sm:$0xff]
  %v51 = vunpack.c.l.bf16 %v19
  %v52 = vunpack.c.h.bf16 %v19
  %v53 = vunpack.c.l.bf16 %v20
  %v54 = vunpack.c.h.bf16 %v20
  %v55 = vunpack.c.l.bf16 %v21
  %v56 = vunpack.c.h.bf16 %v21
  %v57 = vunpack.c.l.bf16 %v22
  %v58 = vunpack.c.h.bf16 %v22
  %v59 = vunpack.c.l.bf16 %v23
  %v60 = vunpack.c.h.bf16 %v23
  %v61 = vunpack.c.l.bf16 %v24
  %v62 = vunpack.c.h.bf16 %v24
  %v63 = vunpack.c.l.bf16 %v25
  %v64 = vunpack.c.h.bf16 %v25
  %v65 = vunpack.c.l.bf16 %v26
  %v66 = vunpack.c.h.bf16 %v26
  %v67 = vunpack.c.l.bf16 %v27
  %v68 = vunpack.c.h.bf16 %v27
  %v69 = vunpack.c.l.bf16 %v28
  %v70 = vunpack.c.h.bf16 %v28
  %v71 = vunpack.c.l.bf16 %v29
  %v72 = vunpack.c.h.bf16 %v29
  %v73 = vunpack.c.l.bf16 %v30
  %v74 = vunpack.c.h.bf16 %v30
  %v75 = vunpack.c.l.bf16 %v31
  %v76 = vunpack.c.h.bf16 %v31
  %v77 = vunpack.c.l.bf16 %v32
  %v78 = vunpack.c.h.bf16 %v32
  %v79 = vunpack.c.l.bf16 %v33
  %v80 = vunpack.c.h.bf16 %v33
  %v81 = vunpack.c.l.bf16 %v34
  %v82 = vunpack.c.h.bf16 %v34
  %v83 = vunpack.c.l.bf16 %v35
  %v84 = vunpack.c.h.bf16 %v35
  %v85 = vunpack.c.l.bf16 %v36
  %v86 = vunpack.c.h.bf16 %v36
  %v87 = vunpack.c.l.bf16 %v37
  %v88 = vunpack.c.h.bf16 %v37
  %v89 = vunpack.c.l.bf16 %v38
  %v90 = vunpack.c.h.bf16 %v38
  %v91 = vunpack.c.l.bf16 %v39
  %v92 = vunpack.c.h.bf16 %v39
  %v93 = vunpack.c.l.bf16 %v40
  %v94 = vunpack.c.h.bf16 %v40
  %v95 = vunpack.c.l.bf16 %v41
  %v96 = vunpack.c.h.bf16 %v41
  %v97 = vunpack.c.l.bf16 %v42
  %v98 = vunpack.c.h.bf16 %v42
  %v99 = vunpack.c.l.bf16 %v43
  %v100 = vunpack.c.h.bf16 %v43
  %v101 = vunpack.c.l.bf16 %v44
  %v102 = vunpack.c.h.bf16 %v44
  %v103 = vunpack.c.l.bf16 %v45
  %v104 = vunpack.c.h.bf16 %v45
  %v105 = vunpack.c.l.bf16 %v46
  %v106 = vunpack.c.h.bf16 %v46
  %v107 = vunpack.c.l.bf16 %v47
  %v108 = vunpack.c.h.bf16 %v47
  %v109 = vunpack.c.l.bf16 %v48
  %v110 = vunpack.c.h.bf16 %v48
  %v111 = vunpack.c.l.bf16 %v49
  %v112 = vunpack.c.h.bf16 %v49
  %v113 = vunpack.c.l.bf16 %v50
  %v114 = vunpack.c.h.bf16 %v50
  %v115 = vld [vmem:[%s0] sm:$0xff]
  %v116 = vld [vmem:[%s0 + $0x8] sm:$0xff]
  %v119 = vperm.slane %v115, 0
  %v120 = vperm.slane %v115, 1
  %v121 = vperm.slane %v115, 2
  %v122 = vperm.slane %v115, 3
  %v123 = vperm.slane %v115, 4
  %v124 = vperm.slane %v115, 5
  %v125 = vperm.slane %v115, 6
  %v126 = vperm.slane %v115, 7
  %v127 = vperm.slane %v116, 0
  %v128 = vperm.slane %v116, 1
  %v129 = vperm.slane %v116, 2
  %v130 = vperm.slane %v116, 3
  %v131 = vperm.slane %v116, 4
  %v132 = vperm.slane %v116, 5
  %v133 = vperm.slane %v116, 6
  %v134 = vperm.slane %v116, 7
  %v151 = vmul.f32 %v51, %v119
  %v152 = vmul.f32 %v52, %v120
  %v153 = vmul.f32 %v53, %v121
  %v154 = vmul.f32 %v54, %v122
  %v155 = vmul.f32 %v55, %v123
  %v156 = vmul.f32 %v56, %v124
  %v157 = vmul.f32 %v57, %v125
  %v158 = vmul.f32 %v58, %v126
  %v159 = vmul.f32 %v59, %v127
  %v160 = vmul.f32 %v60, %v128
  %v161 = vmul.f32 %v61, %v129
  %v162 = vmul.f32 %v62, %v130
  %v163 = vmul.f32 %v63, %v131
  %v164 = vmul.f32 %v64, %v132
  %v165 = vmul.f32 %v65, %v133
  %v166 = vmul.f32 %v66, %v134
  %v167 = vmul.f32 %v67, %v119
  %v168 = vmul.f32 %v68, %v120
  %v169 = vmul.f32 %v69, %v121
  %v170 = vmul.f32 %v70, %v122
  %v171 = vmul.f32 %v71, %v123
  %v172 = vmul.f32 %v72, %v124
  %v173 = vmul.f32 %v73, %v125
  %v174 = vmul.f32 %v74, %v126
  %v175 = vmul.f32 %v75, %v127
  %v176 = vmul.f32 %v76, %v128
  %v177 = vmul.f32 %v77, %v129
  %v178 = vmul.f32 %v78, %v130
  %v179 = vmul.f32 %v79, %v131
  %v180 = vmul.f32 %v80, %v132
  %v181 = vmul.f32 %v81, %v133
  %v182 = vmul.f32 %v82, %v134
  %v183 = vmul.f32 %v83, %v119
  %v184 = vmul.f32 %v84, %v120
  %v185 = vmul.f32 %v85, %v121
  %v186 = vmul.f32 %v86, %v122
  %v187 = vmul.f32 %v87, %v123
  %v188 = vmul.f32 %v88, %v124
  %v189 = vmul.f32 %v89, %v125
  %v190 = vmul.f32 %v90, %v126
  %v191 = vmul.f32 %v91, %v127
  %v192 = vmul.f32 %v92, %v128
  %v193 = vmul.f32 %v93, %v129
  %v194 = vmul.f32 %v94, %v130
  %v195 = vmul.f32 %v95, %v131
  %v196 = vmul.f32 %v96, %v132
  %v197 = vmul.f32 %v97, %v133
  %v198 = vmul.f32 %v98, %v134
  %v199 = vmul.f32 %v99, %v119
  %v200 = vmul.f32 %v100, %v120
  %v201 = vmul.f32 %v101, %v121
  %v202 = vmul.f32 %v102, %v122
  %v203 = vmul.f32 %v103, %v123
  %v204 = vmul.f32 %v104, %v124
  %v205 = vmul.f32 %v105, %v125
  %v206 = vmul.f32 %v106, %v126
  %v207 = vmul.f32 %v107, %v127
  %v208 = vmul.f32 %v108, %v128
  %v209 = vmul.f32 %v109, %v129
  %v210 = vmul.f32 %v110, %v130
  %v211 = vmul.f32 %v111, %v131
  %v212 = vmul.f32 %v112, %v132
  %v213 = vmul.f32 %v113, %v133
  %v214 = vmul.f32 %v114, %v134
  %v215 = vld [vmem:[%s1] sm:$0xff]
  %v216 = vld [vmem:[%s1 + $0x8] sm:$0xff]
  %v219 = vperm.slane %v215, 0
  %v220 = vperm.slane %v215, 1
  %v221 = vperm.slane %v215, 2
  %v222 = vperm.slane %v215, 3
  %v223 = vperm.slane %v215, 4
  %v224 = vperm.slane %v215, 5
  %v225 = vperm.slane %v215, 6
  %v226 = vperm.slane %v215, 7
  %v227 = vperm.slane %v216, 0
  %v228 = vperm.slane %v216, 1
  %v229 = vperm.slane %v216, 2
  %v230 = vperm.slane %v216, 3
  %v231 = vperm.slane %v216, 4
  %v232 = vperm.slane %v216, 5
  %v233 = vperm.slane %v216, 6
  %v234 = vperm.slane %v216, 7
  %v251 = vadd.f32 %v151, %v219
  %v252 = vadd.f32 %v152, %v220
  %v253 = vadd.f32 %v153, %v221
  %v254 = vadd.f32 %v154, %v222
  %v255 = vadd.f32 %v155, %v223
  %v256 = vadd.f32 %v156, %v224
  %v257 = vadd.f32 %v157, %v225
  %v258 = vadd.f32 %v158, %v226
  %v259 = vadd.f32 %v159, %v227
  %v260 = vadd.f32 %v160, %v228
  %v261 = vadd.f32 %v161, %v229
  %v262 = vadd.f32 %v162, %v230
  %v263 = vadd.f32 %v163, %v231
  %v264 = vadd.f32 %v164, %v232
  %v265 = vadd.f32 %v165, %v233
  %v266 = vadd.f32 %v166, %v234
  %v267 = vadd.f32 %v167, %v219
  %v268 = vadd.f32 %v168, %v220
  %v269 = vadd.f32 %v169, %v221
  %v270 = vadd.f32 %v170, %v222
  %v271 = vadd.f32 %v171, %v223
  %v272 = vadd.f32 %v172, %v224
  %v273 = vadd.f32 %v173, %v225
  %v274 = vadd.f32 %v174, %v226
  %v275 = vadd.f32 %v175, %v227
  %v276 = vadd.f32 %v176, %v228
  %v277 = vadd.f32 %v177, %v229
  %v278 = vadd.f32 %v178, %v230
  %v279 = vadd.f32 %v179, %v231
  %v280 = vadd.f32 %v180, %v232
  %v281 = vadd.f32 %v181, %v233
  %v282 = vadd.f32 %v182, %v234
  %v283 = vadd.f32 %v183, %v219
  %v284 = vadd.f32 %v184, %v220
  %v285 = vadd.f32 %v185, %v221
  %v286 = vadd.f32 %v186, %v222
  %v287 = vadd.f32 %v187, %v223
  %v288 = vadd.f32 %v188, %v224
  %v289 = vadd.f32 %v189, %v225
  %v290 = vadd.f32 %v190, %v226
  %v291 = vadd.f32 %v191, %v227
  %v292 = vadd.f32 %v192, %v228
  %v293 = vadd.f32 %v193, %v229
  %v294 = vadd.f32 %v194, %v230
  %v295 = vadd.f32 %v195, %v231
  %v296 = vadd.f32 %v196, %v232
  %v297 = vadd.f32 %v197, %v233
  %v298 = vadd.f32 %v198, %v234
  %v299 = vadd.f32 %v199, %v219
  %v300 = vadd.f32 %v200, %v220
  %v301 = vadd.f32 %v201, %v221
  %v302 = vadd.f32 %v202, %v222
  %v303 = vadd.f32 %v203, %v223
  %v304 = vadd.f32 %v204, %v224
  %v305 = vadd.f32 %v205, %v225
  %v306 = vadd.f32 %v206, %v226
  %v307 = vadd.f32 %v207, %v227
  %v308 = vadd.f32 %v208, %v228
  %v309 = vadd.f32 %v209, %v229
  %v310 = vadd.f32 %v210, %v230
  %v311 = vadd.f32 %v211, %v231
  %v312 = vadd.f32 %v212, %v232
  %v313 = vadd.f32 %v213, %v233
  %v314 = vadd.f32 %v214, %v234
  %vm315 = vcmp.ge.f32.partialorder %v251, 0.0
  %vm316 = vcmp.ge.f32.partialorder %v252, 0.0
  %vm317 = vcmp.ge.f32.partialorder %v253, 0.0
  %vm318 = vcmp.ge.f32.partialorder %v254, 0.0
  %vm319 = vcmp.ge.f32.partialorder %v255, 0.0
  %vm320 = vcmp.ge.f32.partialorder %v256, 0.0
  %vm321 = vcmp.ge.f32.partialorder %v257, 0.0
  %vm322 = vcmp.ge.f32.partialorder %v258, 0.0
  %vm323 = vcmp.ge.f32.partialorder %v259, 0.0
  %vm324 = vcmp.ge.f32.partialorder %v260, 0.0
  %vm325 = vcmp.ge.f32.partialorder %v261, 0.0
  %vm326 = vcmp.ge.f32.partialorder %v262, 0.0
  %vm327 = vcmp.ge.f32.partialorder %v263, 0.0
  %vm328 = vcmp.ge.f32.partialorder %v264, 0.0
  %vm329 = vcmp.ge.f32.partialorder %v265, 0.0
  %vm330 = vcmp.ge.f32.partialorder %v266, 0.0
  %vm331 = vcmp.ge.f32.partialorder %v267, 0.0
  %vm332 = vcmp.ge.f32.partialorder %v268, 0.0
  %vm333 = vcmp.ge.f32.partialorder %v269, 0.0
  %vm334 = vcmp.ge.f32.partialorder %v270, 0.0
  %vm335 = vcmp.ge.f32.partialorder %v271, 0.0
  %vm336 = vcmp.ge.f32.partialorder %v272, 0.0
  %vm337 = vcmp.ge.f32.partialorder %v273, 0.0
  %vm338 = vcmp.ge.f32.partialorder %v274, 0.0
  %vm339 = vcmp.ge.f32.partialorder %v275, 0.0
  %vm340 = vcmp.ge.f32.partialorder %v276, 0.0
  %vm341 = vcmp.ge.f32.partialorder %v277, 0.0
  %vm342 = vcmp.ge.f32.partialorder %v278, 0.0
  %vm343 = vcmp.ge.f32.partialorder %v279, 0.0
  %vm344 = vcmp.ge.f32.partialorder %v280, 0.0
  %vm345 = vcmp.ge.f32.partialorder %v281, 0.0
  %vm346 = vcmp.ge.f32.partialorder %v282, 0.0
  %vm347 = vcmp.ge.f32.partialorder %v283, 0.0
  %vm348 = vcmp.ge.f32.partialorder %v284, 0.0
  %vm349 = vcmp.ge.f32.partialorder %v285, 0.0
  %vm350 = vcmp.ge.f32.partialorder %v286, 0.0
  %vm351 = vcmp.ge.f32.partialorder %v287, 0.0
  %vm352 = vcmp.ge.f32.partialorder %v288, 0.0
  %vm353 = vcmp.ge.f32.partialorder %v289, 0.0
  %vm354 = vcmp.ge.f32.partialorder %v290, 0.0
  %vm355 = vcmp.ge.f32.partialorder %v291, 0.0
  %vm356 = vcmp.ge.f32.partialorder %v292, 0.0
  %vm357 = vcmp.ge.f32.partialorder %v293, 0.0
  %vm358 = vcmp.ge.f32.partialorder %v294, 0.0
  %vm359 = vcmp.ge.f32.partialorder %v295, 0.0
  %vm360 = vcmp.ge.f32.partialorder %v296, 0.0
  %vm361 = vcmp.ge.f32.partialorder %v297, 0.0
  %vm362 = vcmp.ge.f32.partialorder %v298, 0.0
  %vm363 = vcmp.ge.f32.partialorder %v299, 0.0
  %vm364 = vcmp.ge.f32.partialorder %v300, 0.0
  %vm365 = vcmp.ge.f32.partialorder %v301, 0.0
  %vm366 = vcmp.ge.f32.partialorder %v302, 0.0
  %vm367 = vcmp.ge.f32.partialorder %v303, 0.0
  %vm368 = vcmp.ge.f32.partialorder %v304, 0.0
  %vm369 = vcmp.ge.f32.partialorder %v305, 0.0
  %vm370 = vcmp.ge.f32.partialorder %v306, 0.0
  %vm371 = vcmp.ge.f32.partialorder %v307, 0.0
  %vm372 = vcmp.ge.f32.partialorder %v308, 0.0
  %vm373 = vcmp.ge.f32.partialorder %v309, 0.0
  %vm374 = vcmp.ge.f32.partialorder %v310, 0.0
  %vm375 = vcmp.ge.f32.partialorder %v311, 0.0
  %vm376 = vcmp.ge.f32.partialorder %v312, 0.0
  %vm377 = vcmp.ge.f32.partialorder %v313, 0.0
  %vm378 = vcmp.ge.f32.partialorder %v314, 0.0
  %v379 = vmul.f32 %v251, 0.2
  %v380 = vmul.f32 %v252, 0.2
  %v381 = vmul.f32 %v253, 0.2
  %v382 = vmul.f32 %v254, 0.2
  %v383 = vmul.f32 %v255, 0.2
  %v384 = vmul.f32 %v256, 0.2
  %v385 = vmul.f32 %v257, 0.2
  %v386 = vmul.f32 %v258, 0.2
  %v387 = vmul.f32 %v259, 0.2
  %v388 = vmul.f32 %v260, 0.2
  %v389 = vmul.f32 %v261, 0.2
  %v390 = vmul.f32 %v262, 0.2
  %v391 = vmul.f32 %v263, 0.2
  %v392 = vmul.f32 %v264, 0.2
  %v393 = vmul.f32 %v265, 0.2
  %v394 = vmul.f32 %v266, 0.2
  %v395 = vmul.f32 %v267, 0.2
  %v396 = vmul.f32 %v268, 0.2
  %v397 = vmul.f32 %v269, 0.2
  %v398 = vmul.f32 %v270, 0.2
  %v399 = vmul.f32 %v271, 0.2
  %v400 = vmul.f32 %v272, 0.2
  %v401 = vmul.f32 %v273, 0.2
  %v402 = vmul.f32 %v274, 0.2
  %v403 = vmul.f32 %v275, 0.2
  %v404 = vmul.f32 %v276, 0.2
  %v405 = vmul.f32 %v277, 0.2
  %v406 = vmul.f32 %v278, 0.2
  %v407 = vmul.f32 %v279, 0.2
  %v408 = vmul.f32 %v280, 0.2
  %v409 = vmul.f32 %v281, 0.2
  %v410 = vmul.f32 %v282, 0.2
  %v411 = vmul.f32 %v283, 0.2
  %v412 = vmul.f32 %v284, 0.2
  %v413 = vmul.f32 %v285, 0.2
  %v414 = vmul.f32 %v286, 0.2
  %v415 = vmul.f32 %v287, 0.2
  %v416 = vmul.f32 %v288, 0.2
  %v417 = vmul.f32 %v289, 0.2
  %v418 = vmul.f32 %v290, 0.2
  %v419 = vmul.f32 %v291, 0.2
  %v420 = vmul.f32 %v292, 0.2
  %v421 = vmul.f32 %v293, 0.2
  %v422 = vmul.f32 %v294, 0.2
  %v423 = vmul.f32 %v295, 0.2
  %v424 = vmul.f32 %v296, 0.2
  %v425 = vmul.f32 %v297, 0.2
  %v426 = vmul.f32 %v298, 0.2
  %v427 = vmul.f32 %v299, 0.2
  %v428 = vmul.f32 %v300, 0.2
  %v429 = vmul.f32 %v301, 0.2
  %v430 = vmul.f32 %v302, 0.2
  %v431 = vmul.f32 %v303, 0.2
  %v432 = vmul.f32 %v304, 0.2
  %v433 = vmul.f32 %v305, 0.2
  %v434 = vmul.f32 %v306, 0.2
  %v435 = vmul.f32 %v307, 0.2
  %v436 = vmul.f32 %v308, 0.2
  %v437 = vmul.f32 %v309, 0.2
  %v438 = vmul.f32 %v310, 0.2
  %v439 = vmul.f32 %v311, 0.2
  %v440 = vmul.f32 %v312, 0.2
  %v441 = vmul.f32 %v313, 0.2
  %v442 = vmul.f32 %v314, 0.2
  %v443 = vsel %vm315, %v251, %v379
  %v444 = vsel %vm316, %v252, %v380
  %v445 = vsel %vm317, %v253, %v381
  %v446 = vsel %vm318, %v254, %v382
  %v447 = vsel %vm319, %v255, %v383
  %v448 = vsel %vm320, %v256, %v384
  %v449 = vsel %vm321, %v257, %v385
  %v450 = vsel %vm322, %v258, %v386
  %v451 = vsel %vm323, %v259, %v387
  %v452 = vsel %vm324, %v260, %v388
  %v453 = vsel %vm325, %v261, %v389
  %v454 = vsel %vm326, %v262, %v390
  %v455 = vsel %vm327, %v263, %v391
  %v456 = vsel %vm328, %v264, %v392
  %v457 = vsel %vm329, %v265, %v393
  %v458 = vsel %vm330, %v266, %v394
  %v459 = vsel %vm331, %v267, %v395
  %v460 = vsel %vm332, %v268, %v396
  %v461 = vsel %vm333, %v269, %v397
  %v462 = vsel %vm334, %v270, %v398
  %v463 = vsel %vm335, %v271, %v399
  %v464 = vsel %vm336, %v272, %v400
  %v465 = vsel %vm337, %v273, %v401
  %v466 = vsel %vm338, %v274, %v402
  %v467 = vsel %vm339, %v275, %v403
  %v468 = vsel %vm340, %v276, %v404
  %v469 = vsel %vm341, %v277, %v405
  %v470 = vsel %vm342, %v278, %v406
  %v471 = vsel %vm343, %v279, %v407
  %v472 = vsel %vm344, %v280, %v408
  %v473 = vsel %vm345, %v281, %v409
  %v474 = vsel %vm346, %v282, %v410
  %v475 = vsel %vm347, %v283, %v411
  %v476 = vsel %vm348, %v284, %v412
  %v477 = vsel %vm349, %v285, %v413
  %v478 = vsel %vm350, %v286, %v414
  %v479 = vsel %vm351, %v287, %v415
  %v480 = vsel %vm352, %v288, %v416
  %v481 = vsel %vm353, %v289, %v417
  %v482 = vsel %vm354, %v290, %v418
  %v483 = vsel %vm355, %v291, %v419
  %v484 = vsel %vm356, %v292, %v420
  %v485 = vsel %vm357, %v293, %v421
  %v486 = vsel %vm358, %v294, %v422
  %v487 = vsel %vm359, %v295, %v423
  %v488 = vsel %vm360, %v296, %v424
  %v489 = vsel %vm361, %v297, %v425
  %v490 = vsel %vm362, %v298, %v426
  %v491 = vsel %vm363, %v299, %v427
  %v492 = vsel %vm364, %v300, %v428
  %v493 = vsel %vm365, %v301, %v429
  %v494 = vsel %vm366, %v302, %v430
  %v495 = vsel %vm367, %v303, %v431
  %v496 = vsel %vm368, %v304, %v432
  %v497 = vsel %vm369, %v305, %v433
  %v498 = vsel %vm370, %v306, %v434
  %v499 = vsel %vm371, %v307, %v435
  %v500 = vsel %vm372, %v308, %v436
  %v501 = vsel %vm373, %v309, %v437
  %v502 = vsel %vm374, %v310, %v438
  %v503 = vsel %vm375, %v311, %v439
  %v504 = vsel %vm376, %v312, %v440
  %v505 = vsel %vm377, %v313, %v441
  %v506 = vsel %vm378, %v314, %v442
  %v507 = vpack.c.bf16 %v459, %v443
  %v508 = vpack.c.bf16 %v460, %v444
  %v509 = vpack.c.bf16 %v461, %v445
  %v510 = vpack.c.bf16 %v462, %v446
  %v511 = vpack.c.bf16 %v463, %v447
  %v512 = vpack.c.bf16 %v464, %v448
  %v513 = vpack.c.bf16 %v465, %v449
  %v514 = vpack.c.bf16 %v466, %v450
  %v515 = vpack.c.bf16 %v467, %v451
  %v516 = vpack.c.bf16 %v468, %v452
  %v517 = vpack.c.bf16 %v469, %v453
  %v518 = vpack.c.bf16 %v470, %v454
  %v519 = vpack.c.bf16 %v471, %v455
  %v520 = vpack.c.bf16 %v472, %v456
  %v521 = vpack.c.bf16 %v473, %v457
  %v522 = vpack.c.bf16 %v474, %v458
  %v523 = vpack.c.bf16 %v491, %v475
  %v524 = vpack.c.bf16 %v492, %v476
  %v525 = vpack.c.bf16 %v493, %v477
  %v526 = vpack.c.bf16 %v494, %v478
  %v527 = vpack.c.bf16 %v495, %v479
  %v528 = vpack.c.bf16 %v496, %v480
  %v529 = vpack.c.bf16 %v497, %v481
  %v530 = vpack.c.bf16 %v498, %v482
  %v531 = vpack.c.bf16 %v499, %v483
  %v532 = vpack.c.bf16 %v500, %v484
  %v533 = vpack.c.bf16 %v501, %v485
  %v534 = vpack.c.bf16 %v502, %v486
  %v535 = vpack.c.bf16 %v503, %v487
  %v536 = vpack.c.bf16 %v504, %v488
  %v537 = vpack.c.bf16 %v505, %v489
  %v538 = vpack.c.bf16 %v506, %v490
  %v539 = vld [vmem:[%s3] sm:$0xff]
  %v540 = vld [vmem:[%s3 + $0x8] sm:$0xff]
  %v541 = vld [vmem:[%s3 + $0x10] sm:$0xff]
  %v542 = vld [vmem:[%s3 + $0x18] sm:$0xff]
  %v543 = vld [vmem:[%s3 + $0x20] sm:$0xff]
  %v544 = vld [vmem:[%s3 + $0x28] sm:$0xff]
  %v545 = vld [vmem:[%s3 + $0x30] sm:$0xff]
  %v546 = vld [vmem:[%s3 + $0x38] sm:$0xff]
  %v547 = vld [vmem:[%s3 + $0x40] sm:$0xff]
  %v548 = vld [vmem:[%s3 + $0x48] sm:$0xff]
  %v549 = vld [vmem:[%s3 + $0x50] sm:$0xff]
  %v550 = vld [vmem:[%s3 + $0x58] sm:$0xff]
  %v551 = vld [vmem:[%s3 + $0x60] sm:$0xff]
  %v552 = vld [vmem:[%s3 + $0x68] sm:$0xff]
  %v553 = vld [vmem:[%s3 + $0x70] sm:$0xff]
  %v554 = vld [vmem:[%s3 + $0x78] sm:$0xff]
  %v555 = vld [vmem:[%s3 + $0x80] sm:$0xff]
  %v556 = vld [vmem:[%s3 + $0x88] sm:$0xff]
  %v557 = vld [vmem:[%s3 + $0x90] sm:$0xff]
  %v558 = vld [vmem:[%s3 + $0x98] sm:$0xff]
  %v559 = vld [vmem:[%s3 + $0xa0] sm:$0xff]
  %v560 = vld [vmem:[%s3 + $0xa8] sm:$0xff]
  %v561 = vld [vmem:[%s3 + $0xb0] sm:$0xff]
  %v562 = vld [vmem:[%s3 + $0xb8] sm:$0xff]
  %v563 = vld [vmem:[%s3 + $0xc0] sm:$0xff]
  %v564 = vld [vmem:[%s3 + $0xc8] sm:$0xff]
  %v565 = vld [vmem:[%s3 + $0xd0] sm:$0xff]
  %v566 = vld [vmem:[%s3 + $0xd8] sm:$0xff]
  %v567 = vld [vmem:[%s3 + $0xe0] sm:$0xff]
  %v568 = vld [vmem:[%s3 + $0xe8] sm:$0xff]
  %v569 = vld [vmem:[%s3 + $0xf0] sm:$0xff]
  %v570 = vld [vmem:[%s3 + $0xf8] sm:$0xff]
  %v571 = vld [vmem:[%s3 + $0x100] sm:$0xff]
  %v572 = vld [vmem:[%s3 + $0x108] sm:$0xff]
  %v573 = vld [vmem:[%s3 + $0x110] sm:$0xff]
  %v574 = vld [vmem:[%s3 + $0x118] sm:$0xff]
  %v575 = vld [vmem:[%s3 + $0x120] sm:$0xff]
  %v576 = vld [vmem:[%s3 + $0x128] sm:$0xff]
  %v577 = vld [vmem:[%s3 + $0x130] sm:$0xff]
  %v578 = vld [vmem:[%s3 + $0x138] sm:$0xff]
  %v579 = vld [vmem:[%s3 + $0x140] sm:$0xff]
  %v580 = vld [vmem:[%s3 + $0x148] sm:$0xff]
  %v581 = vld [vmem:[%s3 + $0x150] sm:$0xff]
  %v582 = vld [vmem:[%s3 + $0x158] sm:$0xff]
  %v583 = vld [vmem:[%s3 + $0x160] sm:$0xff]
  %v584 = vld [vmem:[%s3 + $0x168] sm:$0xff]
  %v585 = vld [vmem:[%s3 + $0x170] sm:$0xff]
  %v586 = vld [vmem:[%s3 + $0x178] sm:$0xff]
  %v587 = vld [vmem:[%s3 + $0x180] sm:$0xff]
  %v588 = vld [vmem:[%s3 + $0x188] sm:$0xff]
  %v589 = vld [vmem:[%s3 + $0x190] sm:$0xff]
  %v590 = vld [vmem:[%s3 + $0x198] sm:$0xff]
  %v591 = vld [vmem:[%s3 + $0x1a0] sm:$0xff]
  %v592 = vld [vmem:[%s3 + $0x1a8] sm:$0xff]
  %v593 = vld [vmem:[%s3 + $0x1b0] sm:$0xff]
  %v594 = vld [vmem:[%s3 + $0x1b8] sm:$0xff]
  %v595 = vld [vmem:[%s3 + $0x1c0] sm:$0xff]
  %v596 = vld [vmem:[%s3 + $0x1c8] sm:$0xff]
  %v597 = vld [vmem:[%s3 + $0x1d0] sm:$0xff]
  %v598 = vld [vmem:[%s3 + $0x1d8] sm:$0xff]
  %v599 = vld [vmem:[%s3 + $0x1e0] sm:$0xff]
  %v600 = vld [vmem:[%s3 + $0x1e8] sm:$0xff]
  %v601 = vld [vmem:[%s3 + $0x1f0] sm:$0xff]
  %v602 = vld [vmem:[%s3 + $0x1f8] sm:$0xff]
  %v603 = vld [vmem:[%s3 + $0x200] sm:$0xff]
  %v604 = vld [vmem:[%s3 + $0x208] sm:$0xff]
  %v605 = vld [vmem:[%s3 + $0x210] sm:$0xff]
  %v606 = vld [vmem:[%s3 + $0x218] sm:$0xff]
  %v607 = vld [vmem:[%s3 + $0x220] sm:$0xff]
  %v608 = vld [vmem:[%s3 + $0x228] sm:$0xff]
  %v609 = vld [vmem:[%s3 + $0x230] sm:$0xff]
  %v610 = vld [vmem:[%s3 + $0x238] sm:$0xff]
  %v611 = vld [vmem:[%s3 + $0x240] sm:$0xff]
  %v612 = vld [vmem:[%s3 + $0x248] sm:$0xff]
  %v613 = vld [vmem:[%s3 + $0x250] sm:$0xff]
  %v614 = vld [vmem:[%s3 + $0x258] sm:$0xff]
  %v615 = vld [vmem:[%s3 + $0x260] sm:$0xff]
  %v616 = vld [vmem:[%s3 + $0x268] sm:$0xff]
  %v617 = vld [vmem:[%s3 + $0x270] sm:$0xff]
  %v618 = vld [vmem:[%s3 + $0x278] sm:$0xff]
  %v619 = vld [vmem:[%s3 + $0x280] sm:$0xff]
  %v620 = vld [vmem:[%s3 + $0x288] sm:$0xff]
  %v621 = vld [vmem:[%s3 + $0x290] sm:$0xff]
  %v622 = vld [vmem:[%s3 + $0x298] sm:$0xff]
  %v623 = vld [vmem:[%s3 + $0x2a0] sm:$0xff]
  %v624 = vld [vmem:[%s3 + $0x2a8] sm:$0xff]
  %v625 = vld [vmem:[%s3 + $0x2b0] sm:$0xff]
  %v626 = vld [vmem:[%s3 + $0x2b8] sm:$0xff]
  %v627 = vld [vmem:[%s3 + $0x2c0] sm:$0xff]
  %v628 = vld [vmem:[%s3 + $0x2c8] sm:$0xff]
  %v629 = vld [vmem:[%s3 + $0x2d0] sm:$0xff]
  %v630 = vld [vmem:[%s3 + $0x2d8] sm:$0xff]
  %v631 = vld [vmem:[%s3 + $0x2e0] sm:$0xff]
  %v632 = vld [vmem:[%s3 + $0x2e8] sm:$0xff]
  %v633 = vld [vmem:[%s3 + $0x2f0] sm:$0xff]
  %v634 = vld [vmem:[%s3 + $0x2f8] sm:$0xff]
  %v635 = vld [vmem:[%s3 + $0x300] sm:$0xff]
  %v636 = vld [vmem:[%s3 + $0x308] sm:$0xff]
  %v637 = vld [vmem:[%s3 + $0x310] sm:$0xff]
  %v638 = vld [vmem:[%s3 + $0x318] sm:$0xff]
  %v639 = vld [vmem:[%s3 + $0x320] sm:$0xff]
  %v640 = vld [vmem:[%s3 + $0x328] sm:$0xff]
  %v641 = vld [vmem:[%s3 + $0x330] sm:$0xff]
  %v642 = vld [vmem:[%s3 + $0x338] sm:$0xff]
  %v643 = vld [vmem:[%s3 + $0x340] sm:$0xff]
  %v644 = vld [vmem:[%s3 + $0x348] sm:$0xff]
  %v645 = vld [vmem:[%s3 + $0x350] sm:$0xff]
  %v646 = vld [vmem:[%s3 + $0x358] sm:$0xff]
  %v647 = vld [vmem:[%s3 + $0x360] sm:$0xff]
  %v648 = vld [vmem:[%s3 + $0x368] sm:$0xff]
  %v649 = vld [vmem:[%s3 + $0x370] sm:$0xff]
  %v650 = vld [vmem:[%s3 + $0x378] sm:$0xff]
  %v651 = vld [vmem:[%s3 + $0x380] sm:$0xff]
  %v652 = vld [vmem:[%s3 + $0x388] sm:$0xff]
  %v653 = vld [vmem:[%s3 + $0x390] sm:$0xff]
  %v654 = vld [vmem:[%s3 + $0x398] sm:$0xff]
  %v655 = vld [vmem:[%s3 + $0x3a0] sm:$0xff]
  %v656 = vld [vmem:[%s3 + $0x3a8] sm:$0xff]
  %v657 = vld [vmem:[%s3 + $0x3b0] sm:$0xff]
  %v658 = vld [vmem:[%s3 + $0x3b8] sm:$0xff]
  %v659 = vld [vmem:[%s3 + $0x3c0] sm:$0xff]
  %v660 = vld [vmem:[%s3 + $0x3c8] sm:$0xff]
  %v661 = vld [vmem:[%s3 + $0x3d0] sm:$0xff]
  %v662 = vld [vmem:[%s3 + $0x3d8] sm:$0xff]
  %v663 = vld [vmem:[%s3 + $0x3e0] sm:$0xff]
  %v664 = vld [vmem:[%s3 + $0x3e8] sm:$0xff]
  %v665 = vld [vmem:[%s3 + $0x3f0] sm:$0xff]
  %v666 = vld [vmem:[%s3 + $0x3f8] sm:$0xff]
  %v667 = vld [vmem:[%s3 + $0x400] sm:$0xff]
  %v668 = vld [vmem:[%s3 + $0x408] sm:$0xff]
  %v669 = vld [vmem:[%s3 + $0x410] sm:$0xff]
  %v670 = vld [vmem:[%s3 + $0x418] sm:$0xff]
  %v671 = vld [vmem:[%s3 + $0x420] sm:$0xff]
  %v672 = vld [vmem:[%s3 + $0x428] sm:$0xff]
  %v673 = vld [vmem:[%s3 + $0x430] sm:$0xff]
  %v674 = vld [vmem:[%s3 + $0x438] sm:$0xff]
  %v675 = vld [vmem:[%s3 + $0x440] sm:$0xff]
  %v676 = vld [vmem:[%s3 + $0x448] sm:$0xff]
  %v677 = vld [vmem:[%s3 + $0x450] sm:$0xff]
  %v678 = vld [vmem:[%s3 + $0x458] sm:$0xff]
  %v679 = vld [vmem:[%s3 + $0x460] sm:$0xff]
  %v680 = vld [vmem:[%s3 + $0x468] sm:$0xff]
  %v681 = vld [vmem:[%s3 + $0x470] sm:$0xff]
  %v682 = vld [vmem:[%s3 + $0x478] sm:$0xff]
  %v683 = vld [vmem:[%s3 + $0x480] sm:$0xff]
  %v684 = vld [vmem:[%s3 + $0x488] sm:$0xff]
  %v685 = vld [vmem:[%s3 + $0x490] sm:$0xff]
  %v686 = vld [vmem:[%s3 + $0x498] sm:$0xff]
  %v687 = vld [vmem:[%s3 + $0x4a0] sm:$0xff]
  %v688 = vld [vmem:[%s3 + $0x4a8] sm:$0xff]
  %v689 = vld [vmem:[%s3 + $0x4b0] sm:$0xff]
  %v690 = vld [vmem:[%s3 + $0x4b8] sm:$0xff]
  %v691 = vld [vmem:[%s3 + $0x4c0] sm:$0xff]
  %v692 = vld [vmem:[%s3 + $0x4c8] sm:$0xff]
  %v693 = vld [vmem:[%s3 + $0x4d0] sm:$0xff]
  %v694 = vld [vmem:[%s3 + $0x4d8] sm:$0xff]
  %v695 = vld [vmem:[%s3 + $0x4e0] sm:$0xff]
  %v696 = vld [vmem:[%s3 + $0x4e8] sm:$0xff]
  %v697 = vld [vmem:[%s3 + $0x4f0] sm:$0xff]
  %v698 = vld [vmem:[%s3 + $0x4f8] sm:$0xff]
  %v699 = vld [vmem:[%s3 + $0x500] sm:$0xff]
  %v700 = vld [vmem:[%s3 + $0x508] sm:$0xff]
  %v701 = vld [vmem:[%s3 + $0x510] sm:$0xff]
  %v702 = vld [vmem:[%s3 + $0x518] sm:$0xff]
  %v703 = vld [vmem:[%s3 + $0x520] sm:$0xff]
  %v704 = vld [vmem:[%s3 + $0x528] sm:$0xff]
  %v705 = vld [vmem:[%s3 + $0x530] sm:$0xff]
  %v706 = vld [vmem:[%s3 + $0x538] sm:$0xff]
  %v707 = vld [vmem:[%s3 + $0x540] sm:$0xff]
  %v708 = vld [vmem:[%s3 + $0x548] sm:$0xff]
  %v709 = vld [vmem:[%s3 + $0x550] sm:$0xff]
  %v710 = vld [vmem:[%s3 + $0x558] sm:$0xff]
  %v711 = vld [vmem:[%s3 + $0x560] sm:$0xff]
  %v712 = vld [vmem:[%s3 + $0x568] sm:$0xff]
  %v713 = vld [vmem:[%s3 + $0x570] sm:$0xff]
  %v714 = vld [vmem:[%s3 + $0x578] sm:$0xff]
  %v715 = vld [vmem:[%s3 + $0x580] sm:$0xff]
  %v716 = vld [vmem:[%s3 + $0x588] sm:$0xff]
  %v717 = vld [vmem:[%s3 + $0x590] sm:$0xff]
  %v718 = vld [vmem:[%s3 + $0x598] sm:$0xff]
  %v719 = vld [vmem:[%s3 + $0x5a0] sm:$0xff]
  %v720 = vld [vmem:[%s3 + $0x5a8] sm:$0xff]
  %v721 = vld [vmem:[%s3 + $0x5b0] sm:$0xff]
  %v722 = vld [vmem:[%s3 + $0x5b8] sm:$0xff]
  %v723 = vld [vmem:[%s3 + $0x5c0] sm:$0xff]
  %v724 = vld [vmem:[%s3 + $0x5c8] sm:$0xff]
  %v725 = vld [vmem:[%s3 + $0x5d0] sm:$0xff]
  %v726 = vld [vmem:[%s3 + $0x5d8] sm:$0xff]
  %v727 = vld [vmem:[%s3 + $0x5e0] sm:$0xff]
  %v728 = vld [vmem:[%s3 + $0x5e8] sm:$0xff]
  %v729 = vld [vmem:[%s3 + $0x5f0] sm:$0xff]
  %v730 = vld [vmem:[%s3 + $0x5f8] sm:$0xff]
  %v731 = vld [vmem:[%s3 + $0x600] sm:$0xff]
  %v732 = vld [vmem:[%s3 + $0x608] sm:$0xff]
  %v733 = vld [vmem:[%s3 + $0x610] sm:$0xff]
  %v734 = vld [vmem:[%s3 + $0x618] sm:$0xff]
  %v735 = vld [vmem:[%s3 + $0x620] sm:$0xff]
  %v736 = vld [vmem:[%s3 + $0x628] sm:$0xff]
  %v737 = vld [vmem:[%s3 + $0x630] sm:$0xff]
  %v738 = vld [vmem:[%s3 + $0x638] sm:$0xff]
  %v739 = vld [vmem:[%s3 + $0x640] sm:$0xff]
  %v740 = vld [vmem:[%s3 + $0x648] sm:$0xff]
  %v741 = vld [vmem:[%s3 + $0x650] sm:$0xff]
  %v742 = vld [vmem:[%s3 + $0x658] sm:$0xff]
  %v743 = vld [vmem:[%s3 + $0x660] sm:$0xff]
  %v744 = vld [vmem:[%s3 + $0x668] sm:$0xff]
  %v745 = vld [vmem:[%s3 + $0x670] sm:$0xff]
  %v746 = vld [vmem:[%s3 + $0x678] sm:$0xff]
  %v747 = vld [vmem:[%s3 + $0x680] sm:$0xff]
  %v748 = vld [vmem:[%s3 + $0x688] sm:$0xff]
  %v749 = vld [vmem:[%s3 + $0x690] sm:$0xff]
  %v750 = vld [vmem:[%s3 + $0x698] sm:$0xff]
  %v751 = vld [vmem:[%s3 + $0x6a0] sm:$0xff]
  %v752 = vld [vmem:[%s3 + $0x6a8] sm:$0xff]
  %v753 = vld [vmem:[%s3 + $0x6b0] sm:$0xff]
  %v754 = vld [vmem:[%s3 + $0x6b8] sm:$0xff]
  %v755 = vld [vmem:[%s3 + $0x6c0] sm:$0xff]
  %v756 = vld [vmem:[%s3 + $0x6c8] sm:$0xff]
  %v757 = vld [vmem:[%s3 + $0x6d0] sm:$0xff]
  %v758 = vld [vmem:[%s3 + $0x6d8] sm:$0xff]
  %v759 = vld [vmem:[%s3 + $0x6e0] sm:$0xff]
  %v760 = vld [vmem:[%s3 + $0x6e8] sm:$0xff]
  %v761 = vld [vmem:[%s3 + $0x6f0] sm:$0xff]
  %v762 = vld [vmem:[%s3 + $0x6f8] sm:$0xff]
  %v763 = vld [vmem:[%s3 + $0x700] sm:$0xff]
  %v764 = vld [vmem:[%s3 + $0x708] sm:$0xff]
  %v765 = vld [vmem:[%s3 + $0x710] sm:$0xff]
  %v766 = vld [vmem:[%s3 + $0x718] sm:$0xff]
  %v767 = vld [vmem:[%s3 + $0x720] sm:$0xff]
  %v768 = vld [vmem:[%s3 + $0x728] sm:$0xff]
  %v769 = vld [vmem:[%s3 + $0x730] sm:$0xff]
  %v770 = vld [vmem:[%s3 + $0x738] sm:$0xff]
  %v771 = vld [vmem:[%s3 + $0x740] sm:$0xff]
  %v772 = vld [vmem:[%s3 + $0x748] sm:$0xff]
  %v773 = vld [vmem:[%s3 + $0x750] sm:$0xff]
  %v774 = vld [vmem:[%s3 + $0x758] sm:$0xff]
  %v775 = vld [vmem:[%s3 + $0x760] sm:$0xff]
  %v776 = vld [vmem:[%s3 + $0x768] sm:$0xff]
  %v777 = vld [vmem:[%s3 + $0x770] sm:$0xff]
  %v778 = vld [vmem:[%s3 + $0x778] sm:$0xff]
  %v779 = vld [vmem:[%s3 + $0x780] sm:$0xff]
  %v780 = vld [vmem:[%s3 + $0x788] sm:$0xff]
  %v781 = vld [vmem:[%s3 + $0x790] sm:$0xff]
  %v782 = vld [vmem:[%s3 + $0x798] sm:$0xff]
  %v783 = vld [vmem:[%s3 + $0x7a0] sm:$0xff]
  %v784 = vld [vmem:[%s3 + $0x7a8] sm:$0xff]
  %v785 = vld [vmem:[%s3 + $0x7b0] sm:$0xff]
  %v786 = vld [vmem:[%s3 + $0x7b8] sm:$0xff]
  %v787 = vld [vmem:[%s3 + $0x7c0] sm:$0xff]
  %v788 = vld [vmem:[%s3 + $0x7c8] sm:$0xff]
  %v789 = vld [vmem:[%s3 + $0x7d0] sm:$0xff]
  %v790 = vld [vmem:[%s3 + $0x7d8] sm:$0xff]
  %v791 = vld [vmem:[%s3 + $0x7e0] sm:$0xff]
  %v792 = vld [vmem:[%s3 + $0x7e8] sm:$0xff]
  %v793 = vld [vmem:[%s3 + $0x7f0] sm:$0xff]
  %v794 = vld [vmem:[%s3 + $0x7f8] sm:$0xff]
  %v1051 = vunpack.c.l.b16 %v539
  %v1052 = vunpack.c.h.b16 %v539
  %v1053 = vunpack.c.l.b16 %v540
  %v1054 = vunpack.c.h.b16 %v540
  %v1055 = vunpack.c.l.b16 %v541
  %v1056 = vunpack.c.h.b16 %v541
  %v1057 = vunpack.c.l.b16 %v542
  %v1058 = vunpack.c.h.b16 %v542
  %v1059 = vunpack.c.l.b16 %v543
  %v1060 = vunpack.c.h.b16 %v543
  %v1061 = vunpack.c.l.b16 %v544
  %v1062 = vunpack.c.h.b16 %v544
  %v1063 = vunpack.c.l.b16 %v545
  %v1064 = vunpack.c.h.b16 %v545
  %v1065 = vunpack.c.l.b16 %v546
  %v1066 = vunpack.c.h.b16 %v546
  %v1067 = vunpack.c.l.b16 %v547
  %v1068 = vunpack.c.h.b16 %v547
  %v1069 = vunpack.c.l.b16 %v548
  %v1070 = vunpack.c.h.b16 %v548
  %v1071 = vunpack.c.l.b16 %v549
  %v1072 = vunpack.c.h.b16 %v549
  %v1073 = vunpack.c.l.b16 %v550
  %v1074 = vunpack.c.h.b16 %v550
  %v1075 = vunpack.c.l.b16 %v551
  %v1076 = vunpack.c.h.b16 %v551
  %v1077 = vunpack.c.l.b16 %v552
  %v1078 = vunpack.c.h.b16 %v552
  %v1079 = vunpack.c.l.b16 %v553
  %v1080 = vunpack.c.h.b16 %v553
  %v1081 = vunpack.c.l.b16 %v554
  %v1082 = vunpack.c.h.b16 %v554
  %v1083 = vunpack.c.l.b16 %v555
  %v1084 = vunpack.c.h.b16 %v555
  %v1085 = vunpack.c.l.b16 %v556
  %v1086 = vunpack.c.h.b16 %v556
  %v1087 = vunpack.c.l.b16 %v557
  %v1088 = vunpack.c.h.b16 %v557
  %v1089 = vunpack.c.l.b16 %v558
  %v1090 = vunpack.c.h.b16 %v558
  %v1091 = vunpack.c.l.b16 %v559
  %v1092 = vunpack.c.h.b16 %v559
  %v1093 = vunpack.c.l.b16 %v560
  %v1094 = vunpack.c.h.b16 %v560
  %v1095 = vunpack.c.l.b16 %v561
  %v1096 = vunpack.c.h.b16 %v561
  %v1097 = vunpack.c.l.b16 %v562
  %v1098 = vunpack.c.h.b16 %v562
  %v1099 = vunpack.c.l.b16 %v563
  %v1100 = vunpack.c.h.b16 %v563
  %v1101 = vunpack.c.l.b16 %v564
  %v1102 = vunpack.c.h.b16 %v564
  %v1103 = vunpack.c.l.b16 %v565
  %v1104 = vunpack.c.h.b16 %v565
  %v1105 = vunpack.c.l.b16 %v566
  %v1106 = vunpack.c.h.b16 %v566
  %v1107 = vunpack.c.l.b16 %v567
  %v1108 = vunpack.c.h.b16 %v567
  %v1109 = vunpack.c.l.b16 %v568
  %v1110 = vunpack.c.h.b16 %v568
  %v1111 = vunpack.c.l.b16 %v569
  %v1112 = vunpack.c.h.b16 %v569
  %v1113 = vunpack.c.l.b16 %v570
  %v1114 = vunpack.c.h.b16 %v570
  %v1115 = vunpack.c.l.b16 %v571
  %v1116 = vunpack.c.h.b16 %v571
  %v1117 = vunpack.c.l.b16 %v572
  %v1118 = vunpack.c.h.b16 %v572
  %v1119 = vunpack.c.l.b16 %v573
  %v1120 = vunpack.c.h.b16 %v573
  %v1121 = vunpack.c.l.b16 %v574
  %v1122 = vunpack.c.h.b16 %v574
  %v1123 = vunpack.c.l.b16 %v575
  %v1124 = vunpack.c.h.b16 %v575
  %v1125 = vunpack.c.l.b16 %v576
  %v1126 = vunpack.c.h.b16 %v576
  %v1127 = vunpack.c.l.b16 %v577
  %v1128 = vunpack.c.h.b16 %v577
  %v1129 = vunpack.c.l.b16 %v578
  %v1130 = vunpack.c.h.b16 %v578
  %v1131 = vunpack.c.l.b16 %v579
  %v1132 = vunpack.c.h.b16 %v579
  %v1133 = vunpack.c.l.b16 %v580
  %v1134 = vunpack.c.h.b16 %v580
  %v1135 = vunpack.c.l.b16 %v581
  %v1136 = vunpack.c.h.b16 %v581
  %v1137 = vunpack.c.l.b16 %v582
  %v1138 = vunpack.c.h.b16 %v582
  %v1139 = vunpack.c.l.b16 %v583
  %v1140 = vunpack.c.h.b16 %v583
  %v1141 = vunpack.c.l.b16 %v584
  %v1142 = vunpack.c.h.b16 %v584
  %v1143 = vunpack.c.l.b16 %v585
  %v1144 = vunpack.c.h.b16 %v585
  %v1145 = vunpack.c.l.b16 %v586
  %v1146 = vunpack.c.h.b16 %v586
  %v1147 = vunpack.c.l.b16 %v587
  %v1148 = vunpack.c.h.b16 %v587
  %v1149 = vunpack.c.l.b16 %v588
  %v1150 = vunpack.c.h.b16 %v588
  %v1151 = vunpack.c.l.b16 %v589
  %v1152 = vunpack.c.h.b16 %v589
  %v1153 = vunpack.c.l.b16 %v590
  %v1154 = vunpack.c.h.b16 %v590
  %v1155 = vunpack.c.l.b16 %v591
  %v1156 = vunpack.c.h.b16 %v591
  %v1157 = vunpack.c.l.b16 %v592
  %v1158 = vunpack.c.h.b16 %v592
  %v1159 = vunpack.c.l.b16 %v593
  %v1160 = vunpack.c.h.b16 %v593
  %v1161 = vunpack.c.l.b16 %v594
  %v1162 = vunpack.c.h.b16 %v594
  %v1163 = vunpack.c.l.b16 %v595
  %v1164 = vunpack.c.h.b16 %v595
  %v1165 = vunpack.c.l.b16 %v596
  %v1166 = vunpack.c.h.b16 %v596
  %v1167 = vunpack.c.l.b16 %v597
  %v1168 = vunpack.c.h.b16 %v597
  %v1169 = vunpack.c.l.b16 %v598
  %v1170 = vunpack.c.h.b16 %v598
  %v1171 = vunpack.c.l.b16 %v599
  %v1172 = vunpack.c.h.b16 %v599
  %v1173 = vunpack.c.l.b16 %v600
  %v1174 = vunpack.c.h.b16 %v600
  %v1175 = vunpack.c.l.b16 %v601
  %v1176 = vunpack.c.h.b16 %v601
  %v1177 = vunpack.c.l.b16 %v602
  %v1178 = vunpack.c.h.b16 %v602
  %v1179 = vunpack.c.l.b16 %v603
  %v1180 = vunpack.c.h.b16 %v603
  %v1181 = vunpack.c.l.b16 %v604
  %v1182 = vunpack.c.h.b16 %v604
  %v1183 = vunpack.c.l.b16 %v605
  %v1184 = vunpack.c.h.b16 %v605
  %v1185 = vunpack.c.l.b16 %v606
  %v1186 = vunpack.c.h.b16 %v606
  %v1187 = vunpack.c.l.b16 %v607
  %v1188 = vunpack.c.h.b16 %v607
  %v1189 = vunpack.c.l.b16 %v608
  %v1190 = vunpack.c.h.b16 %v608
  %v1191 = vunpack.c.l.b16 %v609
  %v1192 = vunpack.c.h.b16 %v609
  %v1193 = vunpack.c.l.b16 %v610
  %v1194 = vunpack.c.h.b16 %v610
  %v1195 = vunpack.c.l.b16 %v611
  %v1196 = vunpack.c.h.b16 %v611
  %v1197 = vunpack.c.l.b16 %v612
  %v1198 = vunpack.c.h.b16 %v612
  %v1199 = vunpack.c.l.b16 %v613
  %v1200 = vunpack.c.h.b16 %v613
  %v1201 = vunpack.c.l.b16 %v614
  %v1202 = vunpack.c.h.b16 %v614
  %v1203 = vunpack.c.l.b16 %v615
  %v1204 = vunpack.c.h.b16 %v615
  %v1205 = vunpack.c.l.b16 %v616
  %v1206 = vunpack.c.h.b16 %v616
  %v1207 = vunpack.c.l.b16 %v617
  %v1208 = vunpack.c.h.b16 %v617
  %v1209 = vunpack.c.l.b16 %v618
  %v1210 = vunpack.c.h.b16 %v618
  %v1211 = vunpack.c.l.b16 %v619
  %v1212 = vunpack.c.h.b16 %v619
  %v1213 = vunpack.c.l.b16 %v620
  %v1214 = vunpack.c.h.b16 %v620
  %v1215 = vunpack.c.l.b16 %v621
  %v1216 = vunpack.c.h.b16 %v621
  %v1217 = vunpack.c.l.b16 %v622
  %v1218 = vunpack.c.h.b16 %v622
  %v1219 = vunpack.c.l.b16 %v623
  %v1220 = vunpack.c.h.b16 %v623
  %v1221 = vunpack.c.l.b16 %v624
  %v1222 = vunpack.c.h.b16 %v624
  %v1223 = vunpack.c.l.b16 %v625
  %v1224 = vunpack.c.h.b16 %v625
  %v1225 = vunpack.c.l.b16 %v626
  %v1226 = vunpack.c.h.b16 %v626
  %v1227 = vunpack.c.l.b16 %v627
  %v1228 = vunpack.c.h.b16 %v627
  %v1229 = vunpack.c.l.b16 %v628
  %v1230 = vunpack.c.h.b16 %v628
  %v1231 = vunpack.c.l.b16 %v629
  %v1232 = vunpack.c.h.b16 %v629
  %v1233 = vunpack.c.l.b16 %v630
  %v1234 = vunpack.c.h.b16 %v630
  %v1235 = vunpack.c.l.b16 %v631
  %v1236 = vunpack.c.h.b16 %v631
  %v1237 = vunpack.c.l.b16 %v632
  %v1238 = vunpack.c.h.b16 %v632
  %v1239 = vunpack.c.l.b16 %v633
  %v1240 = vunpack.c.h.b16 %v633
  %v1241 = vunpack.c.l.b16 %v634
  %v1242 = vunpack.c.h.b16 %v634
  %v1243 = vunpack.c.l.b16 %v635
  %v1244 = vunpack.c.h.b16 %v635
  %v1245 = vunpack.c.l.b16 %v636
  %v1246 = vunpack.c.h.b16 %v636
  %v1247 = vunpack.c.l.b16 %v637
  %v1248 = vunpack.c.h.b16 %v637
  %v1249 = vunpack.c.l.b16 %v638
  %v1250 = vunpack.c.h.b16 %v638
  %v1251 = vunpack.c.l.b16 %v639
  %v1252 = vunpack.c.h.b16 %v639
  %v1253 = vunpack.c.l.b16 %v640
  %v1254 = vunpack.c.h.b16 %v640
  %v1255 = vunpack.c.l.b16 %v641
  %v1256 = vunpack.c.h.b16 %v641
  %v1257 = vunpack.c.l.b16 %v642
  %v1258 = vunpack.c.h.b16 %v642
  %v1259 = vunpack.c.l.b16 %v643
  %v1260 = vunpack.c.h.b16 %v643
  %v1261 = vunpack.c.l.b16 %v644
  %v1262 = vunpack.c.h.b16 %v644
  %v1263 = vunpack.c.l.b16 %v645
  %v1264 = vunpack.c.h.b16 %v645
  %v1265 = vunpack.c.l.b16 %v646
  %v1266 = vunpack.c.h.b16 %v646
  %v1267 = vunpack.c.l.b16 %v647
  %v1268 = vunpack.c.h.b16 %v647
  %v1269 = vunpack.c.l.b16 %v648
  %v1270 = vunpack.c.h.b16 %v648
  %v1271 = vunpack.c.l.b16 %v649
  %v1272 = vunpack.c.h.b16 %v649
  %v1273 = vunpack.c.l.b16 %v650
  %v1274 = vunpack.c.h.b16 %v650
  %v1275 = vunpack.c.l.b16 %v651
  %v1276 = vunpack.c.h.b16 %v651
  %v1277 = vunpack.c.l.b16 %v652
  %v1278 = vunpack.c.h.b16 %v652
  %v1279 = vunpack.c.l.b16 %v653
  %v1280 = vunpack.c.h.b16 %v653
  %v1281 = vunpack.c.l.b16 %v654
  %v1282 = vunpack.c.h.b16 %v654
  %v1283 = vunpack.c.l.b16 %v655
  %v1284 = vunpack.c.h.b16 %v655
  %v1285 = vunpack.c.l.b16 %v656
  %v1286 = vunpack.c.h.b16 %v656
  %v1287 = vunpack.c.l.b16 %v657
  %v1288 = vunpack.c.h.b16 %v657
  %v1289 = vunpack.c.l.b16 %v658
  %v1290 = vunpack.c.h.b16 %v658
  %v1291 = vunpack.c.l.b16 %v659
  %v1292 = vunpack.c.h.b16 %v659
  %v1293 = vunpack.c.l.b16 %v660
  %v1294 = vunpack.c.h.b16 %v660
  %v1295 = vunpack.c.l.b16 %v661
  %v1296 = vunpack.c.h.b16 %v661
  %v1297 = vunpack.c.l.b16 %v662
  %v1298 = vunpack.c.h.b16 %v662
  %v1299 = vunpack.c.l.b16 %v663
  %v1300 = vunpack.c.h.b16 %v663
  %v1301 = vunpack.c.l.b16 %v664
  %v1302 = vunpack.c.h.b16 %v664
  %v1303 = vunpack.c.l.b16 %v665
  %v1304 = vunpack.c.h.b16 %v665
  %v1305 = vunpack.c.l.b16 %v666
  %v1306 = vunpack.c.h.b16 %v666
  %v1307 = vunpack.c.l.b16 %v667
  %v1308 = vunpack.c.h.b16 %v667
  %v1309 = vunpack.c.l.b16 %v668
  %v1310 = vunpack.c.h.b16 %v668
  %v1311 = vunpack.c.l.b16 %v669
  %v1312 = vunpack.c.h.b16 %v669
  %v1313 = vunpack.c.l.b16 %v670
  %v1314 = vunpack.c.h.b16 %v670
  %v1315 = vunpack.c.l.b16 %v671
  %v1316 = vunpack.c.h.b16 %v671
  %v1317 = vunpack.c.l.b16 %v672
  %v1318 = vunpack.c.h.b16 %v672
  %v1319 = vunpack.c.l.b16 %v673
  %v1320 = vunpack.c.h.b16 %v673
  %v1321 = vunpack.c.l.b16 %v674
  %v1322 = vunpack.c.h.b16 %v674
  %v1323 = vunpack.c.l.b16 %v675
  %v1324 = vunpack.c.h.b16 %v675
  %v1325 = vunpack.c.l.b16 %v676
  %v1326 = vunpack.c.h.b16 %v676
  %v1327 = vunpack.c.l.b16 %v677
  %v1328 = vunpack.c.h.b16 %v677
  %v1329 = vunpack.c.l.b16 %v678
  %v1330 = vunpack.c.h.b16 %v678
  %v1331 = vunpack.c.l.b16 %v679
  %v1332 = vunpack.c.h.b16 %v679
  %v1333 = vunpack.c.l.b16 %v680
  %v1334 = vunpack.c.h.b16 %v680
  %v1335 = vunpack.c.l.b16 %v681
  %v1336 = vunpack.c.h.b16 %v681
  %v1337 = vunpack.c.l.b16 %v682
  %v1338 = vunpack.c.h.b16 %v682
  %v1339 = vunpack.c.l.b16 %v683
  %v1340 = vunpack.c.h.b16 %v683
  %v1341 = vunpack.c.l.b16 %v684
  %v1342 = vunpack.c.h.b16 %v684
  %v1343 = vunpack.c.l.b16 %v685
  %v1344 = vunpack.c.h.b16 %v685
  %v1345 = vunpack.c.l.b16 %v686
  %v1346 = vunpack.c.h.b16 %v686
  %v1347 = vunpack.c.l.b16 %v687
  %v1348 = vunpack.c.h.b16 %v687
  %v1349 = vunpack.c.l.b16 %v688
  %v1350 = vunpack.c.h.b16 %v688
  %v1351 = vunpack.c.l.b16 %v689
  %v1352 = vunpack.c.h.b16 %v689
  %v1353 = vunpack.c.l.b16 %v690
  %v1354 = vunpack.c.h.b16 %v690
  %v1355 = vunpack.c.l.b16 %v691
  %v1356 = vunpack.c.h.b16 %v691
  %v1357 = vunpack.c.l.b16 %v692
  %v1358 = vunpack.c.h.b16 %v692
  %v1359 = vunpack.c.l.b16 %v693
  %v1360 = vunpack.c.h.b16 %v693
  %v1361 = vunpack.c.l.b16 %v694
  %v1362 = vunpack.c.h.b16 %v694
  %v1363 = vunpack.c.l.b16 %v695
  %v1364 = vunpack.c.h.b16 %v695
  %v1365 = vunpack.c.l.b16 %v696
  %v1366 = vunpack.c.h.b16 %v696
  %v1367 = vunpack.c.l.b16 %v697
  %v1368 = vunpack.c.h.b16 %v697
  %v1369 = vunpack.c.l.b16 %v698
  %v1370 = vunpack.c.h.b16 %v698
  %v1371 = vunpack.c.l.b16 %v699
  %v1372 = vunpack.c.h.b16 %v699
  %v1373 = vunpack.c.l.b16 %v700
  %v1374 = vunpack.c.h.b16 %v700
  %v1375 = vunpack.c.l.b16 %v701
  %v1376 = vunpack.c.h.b16 %v701
  %v1377 = vunpack.c.l.b16 %v702
  %v1378 = vunpack.c.h.b16 %v702
  %v1379 = vunpack.c.l.b16 %v703
  %v1380 = vunpack.c.h.b16 %v703
  %v1381 = vunpack.c.l.b16 %v704
  %v1382 = vunpack.c.h.b16 %v704
  %v1383 = vunpack.c.l.b16 %v705
  %v1384 = vunpack.c.h.b16 %v705
  %v1385 = vunpack.c.l.b16 %v706
  %v1386 = vunpack.c.h.b16 %v706
  %v1387 = vunpack.c.l.b16 %v707
  %v1388 = vunpack.c.h.b16 %v707
  %v1389 = vunpack.c.l.b16 %v708
  %v1390 = vunpack.c.h.b16 %v708
  %v1391 = vunpack.c.l.b16 %v709
  %v1392 = vunpack.c.h.b16 %v709
  %v1393 = vunpack.c.l.b16 %v710
  %v1394 = vunpack.c.h.b16 %v710
  %v1395 = vunpack.c.l.b16 %v711
  %v1396 = vunpack.c.h.b16 %v711
  %v1397 = vunpack.c.l.b16 %v712
  %v1398 = vunpack.c.h.b16 %v712
  %v1399 = vunpack.c.l.b16 %v713
  %v1400 = vunpack.c.h.b16 %v713
  %v1401 = vunpack.c.l.b16 %v714
  %v1402 = vunpack.c.h.b16 %v714
  %v1403 = vunpack.c.l.b16 %v715
  %v1404 = vunpack.c.h.b16 %v715
  %v1405 = vunpack.c.l.b16 %v716
  %v1406 = vunpack.c.h.b16 %v716
  %v1407 = vunpack.c.l.b16 %v717
  %v1408 = vunpack.c.h.b16 %v717
  %v1409 = vunpack.c.l.b16 %v718
  %v1410 = vunpack.c.h.b16 %v718
  %v1411 = vunpack.c.l.b16 %v719
  %v1412 = vunpack.c.h.b16 %v719
  %v1413 = vunpack.c.l.b16 %v720
  %v1414 = vunpack.c.h.b16 %v720
  %v1415 = vunpack.c.l.b16 %v721
  %v1416 = vunpack.c.h.b16 %v721
  %v1417 = vunpack.c.l.b16 %v722
  %v1418 = vunpack.c.h.b16 %v722
  %v1419 = vunpack.c.l.b16 %v723
  %v1420 = vunpack.c.h.b16 %v723
  %v1421 = vunpack.c.l.b16 %v724
  %v1422 = vunpack.c.h.b16 %v724
  %v1423 = vunpack.c.l.b16 %v725
  %v1424 = vunpack.c.h.b16 %v725
  %v1425 = vunpack.c.l.b16 %v726
  %v1426 = vunpack.c.h.b16 %v726
  %v1427 = vunpack.c.l.b16 %v727
  %v1428 = vunpack.c.h.b16 %v727
  %v1429 = vunpack.c.l.b16 %v728
  %v1430 = vunpack.c.h.b16 %v728
  %v1431 = vunpack.c.l.b16 %v729
  %v1432 = vunpack.c.h.b16 %v729
  %v1433 = vunpack.c.l.b16 %v730
  %v1434 = vunpack.c.h.b16 %v730
  %v1435 = vunpack.c.l.b16 %v731
  %v1436 = vunpack.c.h.b16 %v731
  %v1437 = vunpack.c.l.b16 %v732
  %v1438 = vunpack.c.h.b16 %v732
  %v1439 = vunpack.c.l.b16 %v733
  %v1440 = vunpack.c.h.b16 %v733
  %v1441 = vunpack.c.l.b16 %v734
  %v1442 = vunpack.c.h.b16 %v734
  %v1443 = vunpack.c.l.b16 %v735
  %v1444 = vunpack.c.h.b16 %v735
  %v1445 = vunpack.c.l.b16 %v736
  %v1446 = vunpack.c.h.b16 %v736
  %v1447 = vunpack.c.l.b16 %v737
  %v1448 = vunpack.c.h.b16 %v737
  %v1449 = vunpack.c.l.b16 %v738
  %v1450 = vunpack.c.h.b16 %v738
  %v1451 = vunpack.c.l.b16 %v739
  %v1452 = vunpack.c.h.b16 %v739
  %v1453 = vunpack.c.l.b16 %v740
  %v1454 = vunpack.c.h.b16 %v740
  %v1455 = vunpack.c.l.b16 %v741
  %v1456 = vunpack.c.h.b16 %v741
  %v1457 = vunpack.c.l.b16 %v742
  %v1458 = vunpack.c.h.b16 %v742
  %v1459 = vunpack.c.l.b16 %v743
  %v1460 = vunpack.c.h.b16 %v743
  %v1461 = vunpack.c.l.b16 %v744
  %v1462 = vunpack.c.h.b16 %v744
  %v1463 = vunpack.c.l.b16 %v745
  %v1464 = vunpack.c.h.b16 %v745
  %v1465 = vunpack.c.l.b16 %v746
  %v1466 = vunpack.c.h.b16 %v746
  %v1467 = vunpack.c.l.b16 %v747
  %v1468 = vunpack.c.h.b16 %v747
  %v1469 = vunpack.c.l.b16 %v748
  %v1470 = vunpack.c.h.b16 %v748
  %v1471 = vunpack.c.l.b16 %v749
  %v1472 = vunpack.c.h.b16 %v749
  %v1473 = vunpack.c.l.b16 %v750
  %v1474 = vunpack.c.h.b16 %v750
  %v1475 = vunpack.c.l.b16 %v751
  %v1476 = vunpack.c.h.b16 %v751
  %v1477 = vunpack.c.l.b16 %v752
  %v1478 = vunpack.c.h.b16 %v752
  %v1479 = vunpack.c.l.b16 %v753
  %v1480 = vunpack.c.h.b16 %v753
  %v1481 = vunpack.c.l.b16 %v754
  %v1482 = vunpack.c.h.b16 %v754
  %v1483 = vunpack.c.l.b16 %v755
  %v1484 = vunpack.c.h.b16 %v755
  %v1485 = vunpack.c.l.b16 %v756
  %v1486 = vunpack.c.h.b16 %v756
  %v1487 = vunpack.c.l.b16 %v757
  %v1488 = vunpack.c.h.b16 %v757
  %v1489 = vunpack.c.l.b16 %v758
  %v1490 = vunpack.c.h.b16 %v758
  %v1491 = vunpack.c.l.b16 %v759
  %v1492 = vunpack.c.h.b16 %v759
  %v1493 = vunpack.c.l.b16 %v760
  %v1494 = vunpack.c.h.b16 %v760
  %v1495 = vunpack.c.l.b16 %v761
  %v1496 = vunpack.c.h.b16 %v761
  %v1497 = vunpack.c.l.b16 %v762
  %v1498 = vunpack.c.h.b16 %v762
  %v1499 = vunpack.c.l.b16 %v763
  %v1500 = vunpack.c.h.b16 %v763
  %v1501 = vunpack.c.l.b16 %v764
  %v1502 = vunpack.c.h.b16 %v764
  %v1503 = vunpack.c.l.b16 %v765
  %v1504 = vunpack.c.h.b16 %v765
  %v1505 = vunpack.c.l.b16 %v766
  %v1506 = vunpack.c.h.b16 %v766
  %v1507 = vunpack.c.l.b16 %v767
  %v1508 = vunpack.c.h.b16 %v767
  %v1509 = vunpack.c.l.b16 %v768
  %v1510 = vunpack.c.h.b16 %v768
  %v1511 = vunpack.c.l.b16 %v769
  %v1512 = vunpack.c.h.b16 %v769
  %v1513 = vunpack.c.l.b16 %v770
  %v1514 = vunpack.c.h.b16 %v770
  %v1515 = vunpack.c.l.b16 %v771
  %v1516 = vunpack.c.h.b16 %v771
  %v1517 = vunpack.c.l.b16 %v772
  %v1518 = vunpack.c.h.b16 %v772
  %v1519 = vunpack.c.l.b16 %v773
  %v1520 = vunpack.c.h.b16 %v773
  %v1521 = vunpack.c.l.b16 %v774
  %v1522 = vunpack.c.h.b16 %v774
  %v1523 = vunpack.c.l.b16 %v775
  %v1524 = vunpack.c.h.b16 %v775
  %v1525 = vunpack.c.l.b16 %v776
  %v1526 = vunpack.c.h.b16 %v776
  %v1527 = vunpack.c.l.b16 %v777
  %v1528 = vunpack.c.h.b16 %v777
  %v1529 = vunpack.c.l.b16 %v778
  %v1530 = vunpack.c.h.b16 %v778
  %v1531 = vunpack.c.l.b16 %v779
  %v1532 = vunpack.c.h.b16 %v779
  %v1533 = vunpack.c.l.b16 %v780
  %v1534 = vunpack.c.h.b16 %v780
  %v1535 = vunpack.c.l.b16 %v781
  %v1536 = vunpack.c.h.b16 %v781
  %v1537 = vunpack.c.l.b16 %v782
  %v1538 = vunpack.c.h.b16 %v782
  %v1539 = vunpack.c.l.b16 %v783
  %v1540 = vunpack.c.h.b16 %v783
  %v1541 = vunpack.c.l.b16 %v784
  %v1542 = vunpack.c.h.b16 %v784
  %v1543 = vunpack.c.l.b16 %v785
  %v1544 = vunpack.c.h.b16 %v785
  %v1545 = vunpack.c.l.b16 %v786
  %v1546 = vunpack.c.h.b16 %v786
  %v1547 = vunpack.c.l.b16 %v787
  %v1548 = vunpack.c.h.b16 %v787
  %v1549 = vunpack.c.l.b16 %v788
  %v1550 = vunpack.c.h.b16 %v788
  %v1551 = vunpack.c.l.b16 %v789
  %v1552 = vunpack.c.h.b16 %v789
  %v1553 = vunpack.c.l.b16 %v790
  %v1554 = vunpack.c.h.b16 %v790
  %v1555 = vunpack.c.l.b16 %v791
  %v1556 = vunpack.c.h.b16 %v791
  %v1557 = vunpack.c.l.b16 %v792
  %v1558 = vunpack.c.h.b16 %v792
  %v1559 = vunpack.c.l.b16 %v793
  %v1560 = vunpack.c.h.b16 %v793
  %v1561 = vunpack.c.l.b16 %v794
  %v1562 = vunpack.c.h.b16 %v794
  %v1563 = vpack.c.b16 %v1053, %v1051
  %v1564 = vpack.c.b16 %v1054, %v1052
  %v1565 = vpack.c.b16 %v1057, %v1055
  %v1566 = vpack.c.b16 %v1058, %v1056
  %v1567 = vpack.c.b16 %v1061, %v1059
  %v1568 = vpack.c.b16 %v1062, %v1060
  %v1569 = vpack.c.b16 %v1065, %v1063
  %v1570 = vpack.c.b16 %v1066, %v1064
  %v1571 = vpack.c.b16 %v1069, %v1067
  %v1572 = vpack.c.b16 %v1070, %v1068
  %v1573 = vpack.c.b16 %v1073, %v1071
  %v1574 = vpack.c.b16 %v1074, %v1072
  %v1575 = vpack.c.b16 %v1077, %v1075
  %v1576 = vpack.c.b16 %v1078, %v1076
  %v1577 = vpack.c.b16 %v1081, %v1079
  %v1578 = vpack.c.b16 %v1082, %v1080
  %v1579 = vpack.c.b16 %v1085, %v1083
  %v1580 = vpack.c.b16 %v1086, %v1084
  %v1581 = vpack.c.b16 %v1089, %v1087
  %v1582 = vpack.c.b16 %v1090, %v1088
  %v1583 = vpack.c.b16 %v1093, %v1091
  %v1584 = vpack.c.b16 %v1094, %v1092
  %v1585 = vpack.c.b16 %v1097, %v1095
  %v1586 = vpack.c.b16 %v1098, %v1096
  %v1587 = vpack.c.b16 %v1101, %v1099
  %v1588 = vpack.c.b16 %v1102, %v1100
  %v1589 = vpack.c.b16 %v1105, %v1103
  %v1590 = vpack.c.b16 %v1106, %v1104
  %v1591 = vpack.c.b16 %v1109, %v1107
  %v1592 = vpack.c.b16 %v1110, %v1108
  %v1593 = vpack.c.b16 %v1113, %v1111
  %v1594 = vpack.c.b16 %v1114, %v1112
  %v1595 = vpack.c.b16 %v1117, %v1115
  %v1596 = vpack.c.b16 %v1118, %v1116
  %v1597 = vpack.c.b16 %v1121, %v1119
  %v1598 = vpack.c.b16 %v1122, %v1120
  %v1599 = vpack.c.b16 %v1125, %v1123
  %v1600 = vpack.c.b16 %v1126, %v1124
  %v1601 = vpack.c.b16 %v1129, %v1127
  %v1602 = vpack.c.b16 %v1130, %v1128
  %v1603 = vpack.c.b16 %v1133, %v1131
  %v1604 = vpack.c.b16 %v1134, %v1132
  %v1605 = vpack.c.b16 %v1137, %v1135
  %v1606 = vpack.c.b16 %v1138, %v1136
  %v1607 = vpack.c.b16 %v1141, %v1139
  %v1608 = vpack.c.b16 %v1142, %v1140
  %v1609 = vpack.c.b16 %v1145, %v1143
  %v1610 = vpack.c.b16 %v1146, %v1144
  %v1611 = vpack.c.b16 %v1149, %v1147
  %v1612 = vpack.c.b16 %v1150, %v1148
  %v1613 = vpack.c.b16 %v1153, %v1151
  %v1614 = vpack.c.b16 %v1154, %v1152
  %v1615 = vpack.c.b16 %v1157, %v1155
  %v1616 = vpack.c.b16 %v1158, %v1156
  %v1617 = vpack.c.b16 %v1161, %v1159
  %v1618 = vpack.c.b16 %v1162, %v1160
  %v1619 = vpack.c.b16 %v1165, %v1163
  %v1620 = vpack.c.b16 %v1166, %v1164
  %v1621 = vpack.c.b16 %v1169, %v1167
  %v1622 = vpack.c.b16 %v1170, %v1168
  %v1623 = vpack.c.b16 %v1173, %v1171
  %v1624 = vpack.c.b16 %v1174, %v1172
  %v1625 = vpack.c.b16 %v1177, %v1175
  %v1626 = vpack.c.b16 %v1178, %v1176
  %v1627 = vpack.c.b16 %v1181, %v1179
  %v1628 = vpack.c.b16 %v1182, %v1180
  %v1629 = vpack.c.b16 %v1185, %v1183
  %v1630 = vpack.c.b16 %v1186, %v1184
  %v1631 = vpack.c.b16 %v1189, %v1187
  %v1632 = vpack.c.b16 %v1190, %v1188
  %v1633 = vpack.c.b16 %v1193, %v1191
  %v1634 = vpack.c.b16 %v1194, %v1192
  %v1635 = vpack.c.b16 %v1197, %v1195
  %v1636 = vpack.c.b16 %v1198, %v1196
  %v1637 = vpack.c.b16 %v1201, %v1199
  %v1638 = vpack.c.b16 %v1202, %v1200
  %v1639 = vpack.c.b16 %v1205, %v1203
  %v1640 = vpack.c.b16 %v1206, %v1204
  %v1641 = vpack.c.b16 %v1209, %v1207
  %v1642 = vpack.c.b16 %v1210, %v1208
  %v1643 = vpack.c.b16 %v1213, %v1211
  %v1644 = vpack.c.b16 %v1214, %v1212
  %v1645 = vpack.c.b16 %v1217, %v1215
  %v1646 = vpack.c.b16 %v1218, %v1216
  %v1647 = vpack.c.b16 %v1221, %v1219
  %v1648 = vpack.c.b16 %v1222, %v1220
  %v1649 = vpack.c.b16 %v1225, %v1223
  %v1650 = vpack.c.b16 %v1226, %v1224
  %v1651 = vpack.c.b16 %v1229, %v1227
  %v1652 = vpack.c.b16 %v1230, %v1228
  %v1653 = vpack.c.b16 %v1233, %v1231
  %v1654 = vpack.c.b16 %v1234, %v1232
  %v1655 = vpack.c.b16 %v1237, %v1235
  %v1656 = vpack.c.b16 %v1238, %v1236
  %v1657 = vpack.c.b16 %v1241, %v1239
  %v1658 = vpack.c.b16 %v1242, %v1240
  %v1659 = vpack.c.b16 %v1245, %v1243
  %v1660 = vpack.c.b16 %v1246, %v1244
  %v1661 = vpack.c.b16 %v1249, %v1247
  %v1662 = vpack.c.b16 %v1250, %v1248
  %v1663 = vpack.c.b16 %v1253, %v1251
  %v1664 = vpack.c.b16 %v1254, %v1252
  %v1665 = vpack.c.b16 %v1257, %v1255
  %v1666 = vpack.c.b16 %v1258, %v1256
  %v1667 = vpack.c.b16 %v1261, %v1259
  %v1668 = vpack.c.b16 %v1262, %v1260
  %v1669 = vpack.c.b16 %v1265, %v1263
  %v1670 = vpack.c.b16 %v1266, %v1264
  %v1671 = vpack.c.b16 %v1269, %v1267
  %v1672 = vpack.c.b16 %v1270, %v1268
  %v1673 = vpack.c.b16 %v1273, %v1271
  %v1674 = vpack.c.b16 %v1274, %v1272
  %v1675 = vpack.c.b16 %v1277, %v1275
  %v1676 = vpack.c.b16 %v1278, %v1276
  %v1677 = vpack.c.b16 %v1281, %v1279
  %v1678 = vpack.c.b16 %v1282, %v1280
  %v1679 = vpack.c.b16 %v1285, %v1283
  %v1680 = vpack.c.b16 %v1286, %v1284
  %v1681 = vpack.c.b16 %v1289, %v1287
  %v1682 = vpack.c.b16 %v1290, %v1288
  %v1683 = vpack.c.b16 %v1293, %v1291
  %v1684 = vpack.c.b16 %v1294, %v1292
  %v1685 = vpack.c.b16 %v1297, %v1295
  %v1686 = vpack.c.b16 %v1298, %v1296
  %v1687 = vpack.c.b16 %v1301, %v1299
  %v1688 = vpack.c.b16 %v1302, %v1300
  %v1689 = vpack.c.b16 %v1305, %v1303
  %v1690 = vpack.c.b16 %v1306, %v1304
  %v1691 = vpack.c.b16 %v1309, %v1307
  %v1692 = vpack.c.b16 %v1310, %v1308
  %v1693 = vpack.c.b16 %v1313, %v1311
  %v1694 = vpack.c.b16 %v1314, %v1312
  %v1695 = vpack.c.b16 %v1317, %v1315
  %v1696 = vpack.c.b16 %v1318, %v1316
  %v1697 = vpack.c.b16 %v1321, %v1319
  %v1698 = vpack.c.b16 %v1322, %v1320
  %v1699 = vpack.c.b16 %v1325, %v1323
  %v1700 = vpack.c.b16 %v1326, %v1324
  %v1701 = vpack.c.b16 %v1329, %v1327
  %v1702 = vpack.c.b16 %v1330, %v1328
  %v1703 = vpack.c.b16 %v1333, %v1331
  %v1704 = vpack.c.b16 %v1334, %v1332
  %v1705 = vpack.c.b16 %v1337, %v1335
  %v1706 = vpack.c.b16 %v1338, %v1336
  %v1707 = vpack.c.b16 %v1341, %v1339
  %v1708 = vpack.c.b16 %v1342, %v1340
  %v1709 = vpack.c.b16 %v1345, %v1343
  %v1710 = vpack.c.b16 %v1346, %v1344
  %v1711 = vpack.c.b16 %v1349, %v1347
  %v1712 = vpack.c.b16 %v1350, %v1348
  %v1713 = vpack.c.b16 %v1353, %v1351
  %v1714 = vpack.c.b16 %v1354, %v1352
  %v1715 = vpack.c.b16 %v1357, %v1355
  %v1716 = vpack.c.b16 %v1358, %v1356
  %v1717 = vpack.c.b16 %v1361, %v1359
  %v1718 = vpack.c.b16 %v1362, %v1360
  %v1719 = vpack.c.b16 %v1365, %v1363
  %v1720 = vpack.c.b16 %v1366, %v1364
  %v1721 = vpack.c.b16 %v1369, %v1367
  %v1722 = vpack.c.b16 %v1370, %v1368
  %v1723 = vpack.c.b16 %v1373, %v1371
  %v1724 = vpack.c.b16 %v1374, %v1372
  %v1725 = vpack.c.b16 %v1377, %v1375
  %v1726 = vpack.c.b16 %v1378, %v1376
  %v1727 = vpack.c.b16 %v1381, %v1379
  %v1728 = vpack.c.b16 %v1382, %v1380
  %v1729 = vpack.c.b16 %v1385, %v1383
  %v1730 = vpack.c.b16 %v1386, %v1384
  %v1731 = vpack.c.b16 %v1389, %v1387
  %v1732 = vpack.c.b16 %v1390, %v1388
  %v1733 = vpack.c.b16 %v1393, %v1391
  %v1734 = vpack.c.b16 %v1394, %v1392
  %v1735 = vpack.c.b16 %v1397, %v1395
  %v1736 = vpack.c.b16 %v1398, %v1396
  %v1737 = vpack.c.b16 %v1401, %v1399
  %v1738 = vpack.c.b16 %v1402, %v1400
  %v1739 = vpack.c.b16 %v1405, %v1403
  %v1740 = vpack.c.b16 %v1406, %v1404
  %v1741 = vpack.c.b16 %v1409, %v1407
  %v1742 = vpack.c.b16 %v1410, %v1408
  %v1743 = vpack.c.b16 %v1413, %v1411
  %v1744 = vpack.c.b16 %v1414, %v1412
  %v1745 = vpack.c.b16 %v1417, %v1415
  %v1746 = vpack.c.b16 %v1418, %v1416
  %v1747 = vpack.c.b16 %v1421, %v1419
  %v1748 = vpack.c.b16 %v1422, %v1420
  %v1749 = vpack.c.b16 %v1425, %v1423
  %v1750 = vpack.c.b16 %v1426, %v1424
  %v1751 = vpack.c.b16 %v1429, %v1427
  %v1752 = vpack.c.b16 %v1430, %v1428
  %v1753 = vpack.c.b16 %v1433, %v1431
  %v1754 = vpack.c.b16 %v1434, %v1432
  %v1755 = vpack.c.b16 %v1437, %v1435
  %v1756 = vpack.c.b16 %v1438, %v1436
  %v1757 = vpack.c.b16 %v1441, %v1439
  %v1758 = vpack.c.b16 %v1442, %v1440
  %v1759 = vpack.c.b16 %v1445, %v1443
  %v1760 = vpack.c.b16 %v1446, %v1444
  %v1761 = vpack.c.b16 %v1449, %v1447
  %v1762 = vpack.c.b16 %v1450, %v1448
  %v1763 = vpack.c.b16 %v1453, %v1451
  %v1764 = vpack.c.b16 %v1454, %v1452
  %v1765 = vpack.c.b16 %v1457, %v1455
  %v1766 = vpack.c.b16 %v1458, %v1456
  %v1767 = vpack.c.b16 %v1461, %v1459
  %v1768 = vpack.c.b16 %v1462, %v1460
  %v1769 = vpack.c.b16 %v1465, %v1463
  %v1770 = vpack.c.b16 %v1466, %v1464
  %v1771 = vpack.c.b16 %v1469, %v1467
  %v1772 = vpack.c.b16 %v1470, %v1468
  %v1773 = vpack.c.b16 %v1473, %v1471
  %v1774 = vpack.c.b16 %v1474, %v1472
  %v1775 = vpack.c.b16 %v1477, %v1475
  %v1776 = vpack.c.b16 %v1478, %v1476
  %v1777 = vpack.c.b16 %v1481, %v1479
  %v1778 = vpack.c.b16 %v1482, %v1480
  %v1779 = vpack.c.b16 %v1485, %v1483
  %v1780 = vpack.c.b16 %v1486, %v1484
  %v1781 = vpack.c.b16 %v1489, %v1487
  %v1782 = vpack.c.b16 %v1490, %v1488
  %v1783 = vpack.c.b16 %v1493, %v1491
  %v1784 = vpack.c.b16 %v1494, %v1492
  %v1785 = vpack.c.b16 %v1497, %v1495
  %v1786 = vpack.c.b16 %v1498, %v1496
  %v1787 = vpack.c.b16 %v1501, %v1499
  %v1788 = vpack.c.b16 %v1502, %v1500
  %v1789 = vpack.c.b16 %v1505, %v1503
  %v1790 = vpack.c.b16 %v1506, %v1504
  %v1791 = vpack.c.b16 %v1509, %v1507
  %v1792 = vpack.c.b16 %v1510, %v1508
  %v1793 = vpack.c.b16 %v1513, %v1511
  %v1794 = vpack.c.b16 %v1514, %v1512
  %v1795 = vpack.c.b16 %v1517, %v1515
  %v1796 = vpack.c.b16 %v1518, %v1516
  %v1797 = vpack.c.b16 %v1521, %v1519
  %v1798 = vpack.c.b16 %v1522, %v1520
  %v1799 = vpack.c.b16 %v1525, %v1523
  %v1800 = vpack.c.b16 %v1526, %v1524
  %v1801 = vpack.c.b16 %v1529, %v1527
  %v1802 = vpack.c.b16 %v1530, %v1528
  %v1803 = vpack.c.b16 %v1533, %v1531
  %v1804 = vpack.c.b16 %v1534, %v1532
  %v1805 = vpack.c.b16 %v1537, %v1535
  %v1806 = vpack.c.b16 %v1538, %v1536
  %v1807 = vpack.c.b16 %v1541, %v1539
  %v1808 = vpack.c.b16 %v1542, %v1540
  %v1809 = vpack.c.b16 %v1545, %v1543
  %v1810 = vpack.c.b16 %v1546, %v1544
  %v1811 = vpack.c.b16 %v1549, %v1547
  %v1812 = vpack.c.b16 %v1550, %v1548
  %v1813 = vpack.c.b16 %v1553, %v1551
  %v1814 = vpack.c.b16 %v1554, %v1552
  %v1815 = vpack.c.b16 %v1557, %v1555
  %v1816 = vpack.c.b16 %v1558, %v1556
  %v1817 = vpack.c.b16 %v1561, %v1559
  %v1818 = vpack.c.b16 %v1562, %v1560
  %2075 = vmatpush.bf16.msra.mxu0 %v1577
  %2076 = vmatpush.bf16.msra.mxu0 %v1575
  %2077 = vmatpush.bf16.msra.mxu0 %v1573
  %2078 = vmatpush.bf16.msra.mxu0 %v1571
  %2079 = vmatpush.bf16.msra.mxu0 %v1569
  %2080 = vmatpush.bf16.msra.mxu0 %v1567
  %2081 = vmatpush.bf16.msra.mxu0 %v1565
  %2082 = vmatpush.bf16.msra.mxu0 %v1563
  %2083 = vmatmul.bf16.gmra.mxu0 %v507
  %v2084 = vpop.f32.mrf.mxu0
  %v2085 = vadd.f32 0.0, %v2084
  %v2086 = vpop.f32.mrf.mxu0
  %v2087 = vadd.f32 0.0, %v2086
  %2088 = vmatmul.bf16.gmra.mxu0 %v523
  %v2089 = vpop.f32.mrf.mxu0
  %v2090 = vadd.f32 0.0, %v2089
  %v2091 = vpop.f32.mrf.mxu0
  %v2092 = vadd.f32 0.0, %v2091
  %2093 = vdwg.mxu0
  %2094 = vmatpush.bf16.msra.mxu0 %v1593
  %2095 = vmatpush.bf16.msra.mxu0 %v1591
  %2096 = vmatpush.bf16.msra.mxu0 %v1589
  %2097 = vmatpush.bf16.msra.mxu0 %v1587
  %2098 = vmatpush.bf16.msra.mxu0 %v1585
  %2099 = vmatpush.bf16.msra.mxu0 %v1583
  %2100 = vmatpush.bf16.msra.mxu0 %v1581
  %2101 = vmatpush.bf16.msra.mxu0 %v1579
  %2102 = vmatmul.bf16.gmra.mxu0 %v508
  %v2103 = vpop.f32.mrf.mxu0
  %v2104 = vadd.f32 %v2085, %v2103
  %v2105 = vpop.f32.mrf.mxu0
  %v2106 = vadd.f32 %v2087, %v2105
  %2107 = vmatmul.bf16.gmra.mxu0 %v524
  %v2108 = vpop.f32.mrf.mxu0
  %v2109 = vadd.f32 %v2090, %v2108
  %v2110 = vpop.f32.mrf.mxu0
  %v2111 = vadd.f32 %v2092, %v2110
  %2112 = vdwg.mxu0
  %2113 = vmatpush.bf16.msra.mxu0 %v1609
  %2114 = vmatpush.bf16.msra.mxu0 %v1607
  %2115 = vmatpush.bf16.msra.mxu0 %v1605
  %2116 = vmatpush.bf16.msra.mxu0 %v1603
  %2117 = vmatpush.bf16.msra.mxu0 %v1601
  %2118 = vmatpush.bf16.msra.mxu0 %v1599
  %2119 = vmatpush.bf16.msra.mxu0 %v1597
  %2120 = vmatpush.bf16.msra.mxu0 %v1595
  %2121 = vmatmul.bf16.gmra.mxu0 %v509
  %v2122 = vpop.f32.mrf.mxu0
  %v2123 = vadd.f32 %v2104, %v2122
  %v2124 = vpop.f32.mrf.mxu0
  %v2125 = vadd.f32 %v2106, %v2124
  %2126 = vmatmul.bf16.gmra.mxu0 %v525
  %v2127 = vpop.f32.mrf.mxu0
  %v2128 = vadd.f32 %v2109, %v2127
  %v2129 = vpop.f32.mrf.mxu0
  %v2130 = vadd.f32 %v2111, %v2129
  %2131 = vdwg.mxu0
  %2132 = vmatpush.bf16.msra.mxu0 %v1625
  %2133 = vmatpush.bf16.msra.mxu0 %v1623
  %2134 = vmatpush.bf16.msra.mxu0 %v1621
  %2135 = vmatpush.bf16.msra.mxu0 %v1619
  %2136 = vmatpush.bf16.msra.mxu0 %v1617
  %2137 = vmatpush.bf16.msra.mxu0 %v1615
  %2138 = vmatpush.bf16.msra.mxu0 %v1613
  %2139 = vmatpush.bf16.msra.mxu0 %v1611
  %2140 = vmatmul.bf16.gmra.mxu0 %v510
  %v2141 = vpop.f32.mrf.mxu0
  %v2142 = vadd.f32 %v2123, %v2141
  %v2143 = vpop.f32.mrf.mxu0
  %v2144 = vadd.f32 %v2125, %v2143
  %2145 = vmatmul.bf16.gmra.mxu0 %v526
  %v2146 = vpop.f32.mrf.mxu0
  %v2147 = vadd.f32 %v2128, %v2146
  %v2148 = vpop.f32.mrf.mxu0
  %v2149 = vadd.f32 %v2130, %v2148
  %2150 = vdwg.mxu0
  %2151 = vmatpush.bf16.msra.mxu0 %v1641
  %2152 = vmatpush.bf16.msra.mxu0 %v1639
  %2153 = vmatpush.bf16.msra.mxu0 %v1637
  %2154 = vmatpush.bf16.msra.mxu0 %v1635
  %2155 = vmatpush.bf16.msra.mxu0 %v1633
  %2156 = vmatpush.bf16.msra.mxu0 %v1631
  %2157 = vmatpush.bf16.msra.mxu0 %v1629
  %2158 = vmatpush.bf16.msra.mxu0 %v1627
  %2159 = vmatmul.bf16.gmra.mxu0 %v511
  %v2160 = vpop.f32.mrf.mxu0
  %v2161 = vadd.f32 %v2142, %v2160
  %v2162 = vpop.f32.mrf.mxu0
  %v2163 = vadd.f32 %v2144, %v2162
  %2164 = vmatmul.bf16.gmra.mxu0 %v527
  %v2165 = vpop.f32.mrf.mxu0
  %v2166 = vadd.f32 %v2147, %v2165
  %v2167 = vpop.f32.mrf.mxu0
  %v2168 = vadd.f32 %v2149, %v2167
  %2169 = vdwg.mxu0
  %2170 = vmatpush.bf16.msra.mxu0 %v1657
  %2171 = vmatpush.bf16.msra.mxu0 %v1655
  %2172 = vmatpush.bf16.msra.mxu0 %v1653
  %2173 = vmatpush.bf16.msra.mxu0 %v1651
  %2174 = vmatpush.bf16.msra.mxu0 %v1649
  %2175 = vmatpush.bf16.msra.mxu0 %v1647
  %2176 = vmatpush.bf16.msra.mxu0 %v1645
  %2177 = vmatpush.bf16.msra.mxu0 %v1643
  %2178 = vmatmul.bf16.gmra.mxu0 %v512
  %v2179 = vpop.f32.mrf.mxu0
  %v2180 = vadd.f32 %v2161, %v2179
  %v2181 = vpop.f32.mrf.mxu0
  %v2182 = vadd.f32 %v2163, %v2181
  %2183 = vmatmul.bf16.gmra.mxu0 %v528
  %v2184 = vpop.f32.mrf.mxu0
  %v2185 = vadd.f32 %v2166, %v2184
  %v2186 = vpop.f32.mrf.mxu0
  %v2187 = vadd.f32 %v2168, %v2186
  %2188 = vdwg.mxu0
  %2189 = vmatpush.bf16.msra.mxu0 %v1673
  %2190 = vmatpush.bf16.msra.mxu0 %v1671
  %2191 = vmatpush.bf16.msra.mxu0 %v1669
  %2192 = vmatpush.bf16.msra.mxu0 %v1667
  %2193 = vmatpush.bf16.msra.mxu0 %v1665
  %2194 = vmatpush.bf16.msra.mxu0 %v1663
  %2195 = vmatpush.bf16.msra.mxu0 %v1661
  %2196 = vmatpush.bf16.msra.mxu0 %v1659
  %2197 = vmatmul.bf16.gmra.mxu0 %v513
  %v2198 = vpop.f32.mrf.mxu0
  %v2199 = vadd.f32 %v2180, %v2198
  %v2200 = vpop.f32.mrf.mxu0
  %v2201 = vadd.f32 %v2182, %v2200
  %2202 = vmatmul.bf16.gmra.mxu0 %v529
  %v2203 = vpop.f32.mrf.mxu0
  %v2204 = vadd.f32 %v2185, %v2203
  %v2205 = vpop.f32.mrf.mxu0
  %v2206 = vadd.f32 %v2187, %v2205
  %2207 = vdwg.mxu0
  %2208 = vmatpush.bf16.msra.mxu0 %v1689
  %2209 = vmatpush.bf16.msra.mxu0 %v1687
  %2210 = vmatpush.bf16.msra.mxu0 %v1685
  %2211 = vmatpush.bf16.msra.mxu0 %v1683
  %2212 = vmatpush.bf16.msra.mxu0 %v1681
  %2213 = vmatpush.bf16.msra.mxu0 %v1679
  %2214 = vmatpush.bf16.msra.mxu0 %v1677
  %2215 = vmatpush.bf16.msra.mxu0 %v1675
  %2216 = vmatmul.bf16.gmra.mxu0 %v514
  %v2217 = vpop.f32.mrf.mxu0
  %v2218 = vadd.f32 %v2199, %v2217
  %v2219 = vpop.f32.mrf.mxu0
  %v2220 = vadd.f32 %v2201, %v2219
  %2221 = vmatmul.bf16.gmra.mxu0 %v530
  %v2222 = vpop.f32.mrf.mxu0
  %v2223 = vadd.f32 %v2204, %v2222
  %v2224 = vpop.f32.mrf.mxu0
  %v2225 = vadd.f32 %v2206, %v2224
  %2226 = vdwg.mxu0
  %2227 = vmatpush.bf16.msra.mxu0 %v1705
  %2228 = vmatpush.bf16.msra.mxu0 %v1703
  %2229 = vmatpush.bf16.msra.mxu0 %v1701
  %2230 = vmatpush.bf16.msra.mxu0 %v1699
  %2231 = vmatpush.bf16.msra.mxu0 %v1697
  %2232 = vmatpush.bf16.msra.mxu0 %v1695
  %2233 = vmatpush.bf16.msra.mxu0 %v1693
  %2234 = vmatpush.bf16.msra.mxu0 %v1691
  %2235 = vmatmul.bf16.gmra.mxu0 %v515
  %v2236 = vpop.f32.mrf.mxu0
  %v2237 = vadd.f32 %v2218, %v2236
  %v2238 = vpop.f32.mrf.mxu0
  %v2239 = vadd.f32 %v2220, %v2238
  %2240 = vmatmul.bf16.gmra.mxu0 %v531
  %v2241 = vpop.f32.mrf.mxu0
  %v2242 = vadd.f32 %v2223, %v2241
  %v2243 = vpop.f32.mrf.mxu0
  %v2244 = vadd.f32 %v2225, %v2243
  %2245 = vdwg.mxu0
  %2246 = vmatpush.bf16.msra.mxu0 %v1721
  %2247 = vmatpush.bf16.msra.mxu0 %v1719
  %2248 = vmatpush.bf16.msra.mxu0 %v1717
  %2249 = vmatpush.bf16.msra.mxu0 %v1715
  %2250 = vmatpush.bf16.msra.mxu0 %v1713
  %2251 = vmatpush.bf16.msra.mxu0 %v1711
  %2252 = vmatpush.bf16.msra.mxu0 %v1709
  %2253 = vmatpush.bf16.msra.mxu0 %v1707
  %2254 = vmatmul.bf16.gmra.mxu0 %v516
  %v2255 = vpop.f32.mrf.mxu0
  %v2256 = vadd.f32 %v2237, %v2255
  %v2257 = vpop.f32.mrf.mxu0
  %v2258 = vadd.f32 %v2239, %v2257
  %2259 = vmatmul.bf16.gmra.mxu0 %v532
  %v2260 = vpop.f32.mrf.mxu0
  %v2261 = vadd.f32 %v2242, %v2260
  %v2262 = vpop.f32.mrf.mxu0
  %v2263 = vadd.f32 %v2244, %v2262
  %2264 = vdwg.mxu0
  %2265 = vmatpush.bf16.msra.mxu0 %v1737
  %2266 = vmatpush.bf16.msra.mxu0 %v1735
  %2267 = vmatpush.bf16.msra.mxu0 %v1733
  %2268 = vmatpush.bf16.msra.mxu0 %v1731
  %2269 = vmatpush.bf16.msra.mxu0 %v1729
  %2270 = vmatpush.bf16.msra.mxu0 %v1727
  %2271 = vmatpush.bf16.msra.mxu0 %v1725
  %2272 = vmatpush.bf16.msra.mxu0 %v1723
  %2273 = vmatmul.bf16.gmra.mxu0 %v517
  %v2274 = vpop.f32.mrf.mxu0
  %v2275 = vadd.f32 %v2256, %v2274
  %v2276 = vpop.f32.mrf.mxu0
  %v2277 = vadd.f32 %v2258, %v2276
  %2278 = vmatmul.bf16.gmra.mxu0 %v533
  %v2279 = vpop.f32.mrf.mxu0
  %v2280 = vadd.f32 %v2261, %v2279
  %v2281 = vpop.f32.mrf.mxu0
  %v2282 = vadd.f32 %v2263, %v2281
  %2283 = vdwg.mxu0
  %2284 = vmatpush.bf16.msra.mxu0 %v1753
  %2285 = vmatpush.bf16.msra.mxu0 %v1751
  %2286 = vmatpush.bf16.msra.mxu0 %v1749
  %2287 = vmatpush.bf16.msra.mxu0 %v1747
  %2288 = vmatpush.bf16.msra.mxu0 %v1745
  %2289 = vmatpush.bf16.msra.mxu0 %v1743
  %2290 = vmatpush.bf16.msra.mxu0 %v1741
  %2291 = vmatpush.bf16.msra.mxu0 %v1739
  %2292 = vmatmul.bf16.gmra.mxu0 %v518
  %v2293 = vpop.f32.mrf.mxu0
  %v2294 = vadd.f32 %v2275, %v2293
  %v2295 = vpop.f32.mrf.mxu0
  %v2296 = vadd.f32 %v2277, %v2295
  %2297 = vmatmul.bf16.gmra.mxu0 %v534
  %v2298 = vpop.f32.mrf.mxu0
  %v2299 = vadd.f32 %v2280, %v2298
  %v2300 = vpop.f32.mrf.mxu0
  %v2301 = vadd.f32 %v2282, %v2300
  %2302 = vdwg.mxu0
  %2303 = vmatpush.bf16.msra.mxu0 %v1769
  %2304 = vmatpush.bf16.msra.mxu0 %v1767
  %2305 = vmatpush.bf16.msra.mxu0 %v1765
  %2306 = vmatpush.bf16.msra.mxu0 %v1763
  %2307 = vmatpush.bf16.msra.mxu0 %v1761
  %2308 = vmatpush.bf16.msra.mxu0 %v1759
  %2309 = vmatpush.bf16.msra.mxu0 %v1757
  %2310 = vmatpush.bf16.msra.mxu0 %v1755
  %2311 = vmatmul.bf16.gmra.mxu0 %v519
  %v2312 = vpop.f32.mrf.mxu0
  %v2313 = vadd.f32 %v2294, %v2312
  %v2314 = vpop.f32.mrf.mxu0
  %v2315 = vadd.f32 %v2296, %v2314
  %2316 = vmatmul.bf16.gmra.mxu0 %v535
  %v2317 = vpop.f32.mrf.mxu0
  %v2318 = vadd.f32 %v2299, %v2317
  %v2319 = vpop.f32.mrf.mxu0
  %v2320 = vadd.f32 %v2301, %v2319
  %2321 = vdwg.mxu0
  %2322 = vmatpush.bf16.msra.mxu0 %v1785
  %2323 = vmatpush.bf16.msra.mxu0 %v1783
  %2324 = vmatpush.bf16.msra.mxu0 %v1781
  %2325 = vmatpush.bf16.msra.mxu0 %v1779
  %2326 = vmatpush.bf16.msra.mxu0 %v1777
  %2327 = vmatpush.bf16.msra.mxu0 %v1775
  %2328 = vmatpush.bf16.msra.mxu0 %v1773
  %2329 = vmatpush.bf16.msra.mxu0 %v1771
  %2330 = vmatmul.bf16.gmra.mxu0 %v520
  %v2331 = vpop.f32.mrf.mxu0
  %v2332 = vadd.f32 %v2313, %v2331
  %v2333 = vpop.f32.mrf.mxu0
  %v2334 = vadd.f32 %v2315, %v2333
  %2335 = vmatmul.bf16.gmra.mxu0 %v536
  %v2336 = vpop.f32.mrf.mxu0
  %v2337 = vadd.f32 %v2318, %v2336
  %v2338 = vpop.f32.mrf.mxu0
  %v2339 = vadd.f32 %v2320, %v2338
  %2340 = vdwg.mxu0
  %2341 = vmatpush.bf16.msra.mxu0 %v1801
  %2342 = vmatpush.bf16.msra.mxu0 %v1799
  %2343 = vmatpush.bf16.msra.mxu0 %v1797
  %2344 = vmatpush.bf16.msra.mxu0 %v1795
  %2345 = vmatpush.bf16.msra.mxu0 %v1793
  %2346 = vmatpush.bf16.msra.mxu0 %v1791
  %2347 = vmatpush.bf16.msra.mxu0 %v1789
  %2348 = vmatpush.bf16.msra.mxu0 %v1787
  %2349 = vmatmul.bf16.gmra.mxu0 %v521
  %v2350 = vpop.f32.mrf.mxu0
  %v2351 = vadd.f32 %v2332, %v2350
  %v2352 = vpop.f32.mrf.mxu0
  %v2353 = vadd.f32 %v2334, %v2352
  %2354 = vmatmul.bf16.gmra.mxu0 %v537
  %v2355 = vpop.f32.mrf.mxu0
  %v2356 = vadd.f32 %v2337, %v2355
  %v2357 = vpop.f32.mrf.mxu0
  %v2358 = vadd.f32 %v2339, %v2357
  %2359 = vdwg.mxu0
  %2360 = vmatpush.bf16.msra.mxu0 %v1817
  %2361 = vmatpush.bf16.msra.mxu0 %v1815
  %2362 = vmatpush.bf16.msra.mxu0 %v1813
  %2363 = vmatpush.bf16.msra.mxu0 %v1811
  %2364 = vmatpush.bf16.msra.mxu0 %v1809
  %2365 = vmatpush.bf16.msra.mxu0 %v1807
  %2366 = vmatpush.bf16.msra.mxu0 %v1805
  %2367 = vmatpush.bf16.msra.mxu0 %v1803
  %2368 = vmatmul.bf16.gmra.mxu0 %v522
  %v2369 = vpop.f32.mrf.mxu0
  %v2370 = vadd.f32 %v2351, %v2369
  %v2371 = vpop.f32.mrf.mxu0
  %v2372 = vadd.f32 %v2353, %v2371
  %2373 = vmatmul.bf16.gmra.mxu0 %v538
  %v2374 = vpop.f32.mrf.mxu0
  %v2375 = vadd.f32 %v2356, %v2374
  %v2376 = vpop.f32.mrf.mxu0
  %v2377 = vadd.f32 %v2358, %v2376
  %2378 = vdwg.mxu0
  %2379 = vmatpush.bf16.msra.mxu0 %v1578
  %2380 = vmatpush.bf16.msra.mxu0 %v1576
  %2381 = vmatpush.bf16.msra.mxu0 %v1574
  %2382 = vmatpush.bf16.msra.mxu0 %v1572
  %2383 = vmatpush.bf16.msra.mxu0 %v1570
  %2384 = vmatpush.bf16.msra.mxu0 %v1568
  %2385 = vmatpush.bf16.msra.mxu0 %v1566
  %2386 = vmatpush.bf16.msra.mxu0 %v1564
  %2387 = vmatmul.bf16.gmra.mxu0 %v507
  %v2388 = vpop.f32.mrf.mxu0
  %v2389 = vadd.f32 0.0, %v2388
  %v2390 = vpop.f32.mrf.mxu0
  %v2391 = vadd.f32 0.0, %v2390
  %2392 = vmatmul.bf16.gmra.mxu0 %v523
  %v2393 = vpop.f32.mrf.mxu0
  %v2394 = vadd.f32 0.0, %v2393
  %v2395 = vpop.f32.mrf.mxu0
  %v2396 = vadd.f32 0.0, %v2395
  %2397 = vdwg.mxu0
  %2398 = vmatpush.bf16.msra.mxu0 %v1594
  %2399 = vmatpush.bf16.msra.mxu0 %v1592
  %2400 = vmatpush.bf16.msra.mxu0 %v1590
  %2401 = vmatpush.bf16.msra.mxu0 %v1588
  %2402 = vmatpush.bf16.msra.mxu0 %v1586
  %2403 = vmatpush.bf16.msra.mxu0 %v1584
  %2404 = vmatpush.bf16.msra.mxu0 %v1582
  %2405 = vmatpush.bf16.msra.mxu0 %v1580
  %2406 = vmatmul.bf16.gmra.mxu0 %v508
  %v2407 = vpop.f32.mrf.mxu0
  %v2408 = vadd.f32 %v2389, %v2407
  %v2409 = vpop.f32.mrf.mxu0
  %v2410 = vadd.f32 %v2391, %v2409
  %2411 = vmatmul.bf16.gmra.mxu0 %v524
  %v2412 = vpop.f32.mrf.mxu0
  %v2413 = vadd.f32 %v2394, %v2412
  %v2414 = vpop.f32.mrf.mxu0
  %v2415 = vadd.f32 %v2396, %v2414
  %2416 = vdwg.mxu0
  %2417 = vmatpush.bf16.msra.mxu0 %v1610
  %2418 = vmatpush.bf16.msra.mxu0 %v1608
  %2419 = vmatpush.bf16.msra.mxu0 %v1606
  %2420 = vmatpush.bf16.msra.mxu0 %v1604
  %2421 = vmatpush.bf16.msra.mxu0 %v1602
  %2422 = vmatpush.bf16.msra.mxu0 %v1600
  %2423 = vmatpush.bf16.msra.mxu0 %v1598
  %2424 = vmatpush.bf16.msra.mxu0 %v1596
  %2425 = vmatmul.bf16.gmra.mxu0 %v509
  %v2426 = vpop.f32.mrf.mxu0
  %v2427 = vadd.f32 %v2408, %v2426
  %v2428 = vpop.f32.mrf.mxu0
  %v2429 = vadd.f32 %v2410, %v2428
  %2430 = vmatmul.bf16.gmra.mxu0 %v525
  %v2431 = vpop.f32.mrf.mxu0
  %v2432 = vadd.f32 %v2413, %v2431
  %v2433 = vpop.f32.mrf.mxu0
  %v2434 = vadd.f32 %v2415, %v2433
  %2435 = vdwg.mxu0
  %2436 = vmatpush.bf16.msra.mxu0 %v1626
  %2437 = vmatpush.bf16.msra.mxu0 %v1624
  %2438 = vmatpush.bf16.msra.mxu0 %v1622
  %2439 = vmatpush.bf16.msra.mxu0 %v1620
  %2440 = vmatpush.bf16.msra.mxu0 %v1618
  %2441 = vmatpush.bf16.msra.mxu0 %v1616
  %2442 = vmatpush.bf16.msra.mxu0 %v1614
  %2443 = vmatpush.bf16.msra.mxu0 %v1612
  %2444 = vmatmul.bf16.gmra.mxu0 %v510
  %v2445 = vpop.f32.mrf.mxu0
  %v2446 = vadd.f32 %v2427, %v2445
  %v2447 = vpop.f32.mrf.mxu0
  %v2448 = vadd.f32 %v2429, %v2447
  %2449 = vmatmul.bf16.gmra.mxu0 %v526
  %v2450 = vpop.f32.mrf.mxu0
  %v2451 = vadd.f32 %v2432, %v2450
  %v2452 = vpop.f32.mrf.mxu0
  %v2453 = vadd.f32 %v2434, %v2452
  %2454 = vdwg.mxu0
  %2455 = vmatpush.bf16.msra.mxu0 %v1642
  %2456 = vmatpush.bf16.msra.mxu0 %v1640
  %2457 = vmatpush.bf16.msra.mxu0 %v1638
  %2458 = vmatpush.bf16.msra.mxu0 %v1636
  %2459 = vmatpush.bf16.msra.mxu0 %v1634
  %2460 = vmatpush.bf16.msra.mxu0 %v1632
  %2461 = vmatpush.bf16.msra.mxu0 %v1630
  %2462 = vmatpush.bf16.msra.mxu0 %v1628
  %2463 = vmatmul.bf16.gmra.mxu0 %v511
  %v2464 = vpop.f32.mrf.mxu0
  %v2465 = vadd.f32 %v2446, %v2464
  %v2466 = vpop.f32.mrf.mxu0
  %v2467 = vadd.f32 %v2448, %v2466
  %2468 = vmatmul.bf16.gmra.mxu0 %v527
  %v2469 = vpop.f32.mrf.mxu0
  %v2470 = vadd.f32 %v2451, %v2469
  %v2471 = vpop.f32.mrf.mxu0
  %v2472 = vadd.f32 %v2453, %v2471
  %2473 = vdwg.mxu0
  %2474 = vmatpush.bf16.msra.mxu0 %v1658
  %2475 = vmatpush.bf16.msra.mxu0 %v1656
  %2476 = vmatpush.bf16.msra.mxu0 %v1654
  %2477 = vmatpush.bf16.msra.mxu0 %v1652
  %2478 = vmatpush.bf16.msra.mxu0 %v1650
  %2479 = vmatpush.bf16.msra.mxu0 %v1648
  %2480 = vmatpush.bf16.msra.mxu0 %v1646
  %2481 = vmatpush.bf16.msra.mxu0 %v1644
  %2482 = vmatmul.bf16.gmra.mxu0 %v512
  %v2483 = vpop.f32.mrf.mxu0
  %v2484 = vadd.f32 %v2465, %v2483
  %v2485 = vpop.f32.mrf.mxu0
  %v2486 = vadd.f32 %v2467, %v2485
  %2487 = vmatmul.bf16.gmra.mxu0 %v528
  %v2488 = vpop.f32.mrf.mxu0
  %v2489 = vadd.f32 %v2470, %v2488
  %v2490 = vpop.f32.mrf.mxu0
  %v2491 = vadd.f32 %v2472, %v2490
  %2492 = vdwg.mxu0
  %2493 = vmatpush.bf16.msra.mxu0 %v1674
  %2494 = vmatpush.bf16.msra.mxu0 %v1672
  %2495 = vmatpush.bf16.msra.mxu0 %v1670
  %2496 = vmatpush.bf16.msra.mxu0 %v1668
  %2497 = vmatpush.bf16.msra.mxu0 %v1666
  %2498 = vmatpush.bf16.msra.mxu0 %v1664
  %2499 = vmatpush.bf16.msra.mxu0 %v1662
  %2500 = vmatpush.bf16.msra.mxu0 %v1660
  %2501 = vmatmul.bf16.gmra.mxu0 %v513
  %v2502 = vpop.f32.mrf.mxu0
  %v2503 = vadd.f32 %v2484, %v2502
  %v2504 = vpop.f32.mrf.mxu0
  %v2505 = vadd.f32 %v2486, %v2504
  %2506 = vmatmul.bf16.gmra.mxu0 %v529
  %v2507 = vpop.f32.mrf.mxu0
  %v2508 = vadd.f32 %v2489, %v2507
  %v2509 = vpop.f32.mrf.mxu0
  %v2510 = vadd.f32 %v2491, %v2509
  %2511 = vdwg.mxu0
  %2512 = vmatpush.bf16.msra.mxu0 %v1690
  %2513 = vmatpush.bf16.msra.mxu0 %v1688
  %2514 = vmatpush.bf16.msra.mxu0 %v1686
  %2515 = vmatpush.bf16.msra.mxu0 %v1684
  %2516 = vmatpush.bf16.msra.mxu0 %v1682
  %2517 = vmatpush.bf16.msra.mxu0 %v1680
  %2518 = vmatpush.bf16.msra.mxu0 %v1678
  %2519 = vmatpush.bf16.msra.mxu0 %v1676
  %2520 = vmatmul.bf16.gmra.mxu0 %v514
  %v2521 = vpop.f32.mrf.mxu0
  %v2522 = vadd.f32 %v2503, %v2521
  %v2523 = vpop.f32.mrf.mxu0
  %v2524 = vadd.f32 %v2505, %v2523
  %2525 = vmatmul.bf16.gmra.mxu0 %v530
  %v2526 = vpop.f32.mrf.mxu0
  %v2527 = vadd.f32 %v2508, %v2526
  %v2528 = vpop.f32.mrf.mxu0
  %v2529 = vadd.f32 %v2510, %v2528
  %2530 = vdwg.mxu0
  %2531 = vmatpush.bf16.msra.mxu0 %v1706
  %2532 = vmatpush.bf16.msra.mxu0 %v1704
  %2533 = vmatpush.bf16.msra.mxu0 %v1702
  %2534 = vmatpush.bf16.msra.mxu0 %v1700
  %2535 = vmatpush.bf16.msra.mxu0 %v1698
  %2536 = vmatpush.bf16.msra.mxu0 %v1696
  %2537 = vmatpush.bf16.msra.mxu0 %v1694
  %2538 = vmatpush.bf16.msra.mxu0 %v1692
  %2539 = vmatmul.bf16.gmra.mxu0 %v515
  %v2540 = vpop.f32.mrf.mxu0
  %v2541 = vadd.f32 %v2522, %v2540
  %v2542 = vpop.f32.mrf.mxu0
  %v2543 = vadd.f32 %v2524, %v2542
  %2544 = vmatmul.bf16.gmra.mxu0 %v531
  %v2545 = vpop.f32.mrf.mxu0
  %v2546 = vadd.f32 %v2527, %v2545
  %v2547 = vpop.f32.mrf.mxu0
  %v2548 = vadd.f32 %v2529, %v2547
  %2549 = vdwg.mxu0
  %2550 = vmatpush.bf16.msra.mxu0 %v1722
  %2551 = vmatpush.bf16.msra.mxu0 %v1720
  %2552 = vmatpush.bf16.msra.mxu0 %v1718
  %2553 = vmatpush.bf16.msra.mxu0 %v1716
  %2554 = vmatpush.bf16.msra.mxu0 %v1714
  %2555 = vmatpush.bf16.msra.mxu0 %v1712
  %2556 = vmatpush.bf16.msra.mxu0 %v1710
  %2557 = vmatpush.bf16.msra.mxu0 %v1708
  %2558 = vmatmul.bf16.gmra.mxu0 %v516
  %v2559 = vpop.f32.mrf.mxu0
  %v2560 = vadd.f32 %v2541, %v2559
  %v2561 = vpop.f32.mrf.mxu0
  %v2562 = vadd.f32 %v2543, %v2561
  %2563 = vmatmul.bf16.gmra.mxu0 %v532
  %v2564 = vpop.f32.mrf.mxu0
  %v2565 = vadd.f32 %v2546, %v2564
  %v2566 = vpop.f32.mrf.mxu0
  %v2567 = vadd.f32 %v2548, %v2566
  %2568 = vdwg.mxu0
  %2569 = vmatpush.bf16.msra.mxu0 %v1738
  %2570 = vmatpush.bf16.msra.mxu0 %v1736
  %2571 = vmatpush.bf16.msra.mxu0 %v1734
  %2572 = vmatpush.bf16.msra.mxu0 %v1732
  %2573 = vmatpush.bf16.msra.mxu0 %v1730
  %2574 = vmatpush.bf16.msra.mxu0 %v1728
  %2575 = vmatpush.bf16.msra.mxu0 %v1726
  %2576 = vmatpush.bf16.msra.mxu0 %v1724
  %2577 = vmatmul.bf16.gmra.mxu0 %v517
  %v2578 = vpop.f32.mrf.mxu0
  %v2579 = vadd.f32 %v2560, %v2578
  %v2580 = vpop.f32.mrf.mxu0
  %v2581 = vadd.f32 %v2562, %v2580
  %2582 = vmatmul.bf16.gmra.mxu0 %v533
  %v2583 = vpop.f32.mrf.mxu0
  %v2584 = vadd.f32 %v2565, %v2583
  %v2585 = vpop.f32.mrf.mxu0
  %v2586 = vadd.f32 %v2567, %v2585
  %2587 = vdwg.mxu0
  %2588 = vmatpush.bf16.msra.mxu0 %v1754
  %2589 = vmatpush.bf16.msra.mxu0 %v1752
  %2590 = vmatpush.bf16.msra.mxu0 %v1750
  %2591 = vmatpush.bf16.msra.mxu0 %v1748
  %2592 = vmatpush.bf16.msra.mxu0 %v1746
  %2593 = vmatpush.bf16.msra.mxu0 %v1744
  %2594 = vmatpush.bf16.msra.mxu0 %v1742
  %2595 = vmatpush.bf16.msra.mxu0 %v1740
  %2596 = vmatmul.bf16.gmra.mxu0 %v518
  %v2597 = vpop.f32.mrf.mxu0
  %v2598 = vadd.f32 %v2579, %v2597
  %v2599 = vpop.f32.mrf.mxu0
  %v2600 = vadd.f32 %v2581, %v2599
  %2601 = vmatmul.bf16.gmra.mxu0 %v534
  %v2602 = vpop.f32.mrf.mxu0
  %v2603 = vadd.f32 %v2584, %v2602
  %v2604 = vpop.f32.mrf.mxu0
  %v2605 = vadd.f32 %v2586, %v2604
  %2606 = vdwg.mxu0
  %2607 = vmatpush.bf16.msra.mxu0 %v1770
  %2608 = vmatpush.bf16.msra.mxu0 %v1768
  %2609 = vmatpush.bf16.msra.mxu0 %v1766
  %2610 = vmatpush.bf16.msra.mxu0 %v1764
  %2611 = vmatpush.bf16.msra.mxu0 %v1762
  %2612 = vmatpush.bf16.msra.mxu0 %v1760
  %2613 = vmatpush.bf16.msra.mxu0 %v1758
  %2614 = vmatpush.bf16.msra.mxu0 %v1756
  %2615 = vmatmul.bf16.gmra.mxu0 %v519
  %v2616 = vpop.f32.mrf.mxu0
  %v2617 = vadd.f32 %v2598, %v2616
  %v2618 = vpop.f32.mrf.mxu0
  %v2619 = vadd.f32 %v2600, %v2618
  %2620 = vmatmul.bf16.gmra.mxu0 %v535
  %v2621 = vpop.f32.mrf.mxu0
  %v2622 = vadd.f32 %v2603, %v2621
  %v2623 = vpop.f32.mrf.mxu0
  %v2624 = vadd.f32 %v2605, %v2623
  %2625 = vdwg.mxu0
  %2626 = vmatpush.bf16.msra.mxu0 %v1786
  %2627 = vmatpush.bf16.msra.mxu0 %v1784
  %2628 = vmatpush.bf16.msra.mxu0 %v1782
  %2629 = vmatpush.bf16.msra.mxu0 %v1780
  %2630 = vmatpush.bf16.msra.mxu0 %v1778
  %2631 = vmatpush.bf16.msra.mxu0 %v1776
  %2632 = vmatpush.bf16.msra.mxu0 %v1774
  %2633 = vmatpush.bf16.msra.mxu0 %v1772
  %2634 = vmatmul.bf16.gmra.mxu0 %v520
  %v2635 = vpop.f32.mrf.mxu0
  %v2636 = vadd.f32 %v2617, %v2635
  %v2637 = vpop.f32.mrf.mxu0
  %v2638 = vadd.f32 %v2619, %v2637
  %2639 = vmatmul.bf16.gmra.mxu0 %v536
  %v2640 = vpop.f32.mrf.mxu0
  %v2641 = vadd.f32 %v2622, %v2640
  %v2642 = vpop.f32.mrf.mxu0
  %v2643 = vadd.f32 %v2624, %v2642
  %2644 = vdwg.mxu0
  %2645 = vmatpush.bf16.msra.mxu0 %v1802
  %2646 = vmatpush.bf16.msra.mxu0 %v1800
  %2647 = vmatpush.bf16.msra.mxu0 %v1798
  %2648 = vmatpush.bf16.msra.mxu0 %v1796
  %2649 = vmatpush.bf16.msra.mxu0 %v1794
  %2650 = vmatpush.bf16.msra.mxu0 %v1792
  %2651 = vmatpush.bf16.msra.mxu0 %v1790
  %2652 = vmatpush.bf16.msra.mxu0 %v1788
  %2653 = vmatmul.bf16.gmra.mxu0 %v521
  %v2654 = vpop.f32.mrf.mxu0
  %v2655 = vadd.f32 %v2636, %v2654
  %v2656 = vpop.f32.mrf.mxu0
  %v2657 = vadd.f32 %v2638, %v2656
  %2658 = vmatmul.bf16.gmra.mxu0 %v537
  %v2659 = vpop.f32.mrf.mxu0
  %v2660 = vadd.f32 %v2641, %v2659
  %v2661 = vpop.f32.mrf.mxu0
  %v2662 = vadd.f32 %v2643, %v2661
  %2663 = vdwg.mxu0
  %2664 = vmatpush.bf16.msra.mxu0 %v1818
  %2665 = vmatpush.bf16.msra.mxu0 %v1816
  %2666 = vmatpush.bf16.msra.mxu0 %v1814
  %2667 = vmatpush.bf16.msra.mxu0 %v1812
  %2668 = vmatpush.bf16.msra.mxu0 %v1810
  %2669 = vmatpush.bf16.msra.mxu0 %v1808
  %2670 = vmatpush.bf16.msra.mxu0 %v1806
  %2671 = vmatpush.bf16.msra.mxu0 %v1804
  %2672 = vmatmul.bf16.gmra.mxu0 %v522
  %v2673 = vpop.f32.mrf.mxu0
  %v2674 = vadd.f32 %v2655, %v2673
  %v2675 = vpop.f32.mrf.mxu0
  %v2676 = vadd.f32 %v2657, %v2675
  %2677 = vmatmul.bf16.gmra.mxu0 %v538
  %v2678 = vpop.f32.mrf.mxu0
  %v2679 = vadd.f32 %v2660, %v2678
  %v2680 = vpop.f32.mrf.mxu0
  %v2681 = vadd.f32 %v2662, %v2680
  %2682 = vdwg.mxu0
  %v2683 = vpack.c.bf16 %v2674, %v2370
  %v2684 = vpack.c.bf16 %v2676, %v2372
  %v2685 = vpack.c.bf16 %v2679, %v2375
  %v2686 = vpack.c.bf16 %v2681, %v2377
  %2687 = vst [vmem:[%s4] sm:$0xff] %v2683
  %2688 = vst [vmem:[%s4 + $0x8] sm:$0xff] %v2684
  %2689 = vst [vmem:[%s4 + $0x10] sm:$0xff] %v2685
  %2690 = vst [vmem:[%s4 + $0x18] sm:$0xff] %v2686
  %v2691 = vadd.f32 %v2370, %v2372
  %v2692 = vadd.f32 %v2691, %v2375
  %v2693 = vadd.f32 %v2692, %v2377
  %v2694 = vrot.slane %v2693, 4
  %v2695 = vadd.f32 %v2693, %v2694
  %v2696 = vrot.slane %v2695, 2
  %v2697 = vadd.f32 %v2695, %v2696
  %v2698 = vrot.slane %v2697, 1
  %v2699 = vadd.f32 %v2697, %v2698
  %v2700 = vadd.f32 %v2674, %v2676
  %v2701 = vadd.f32 %v2700, %v2679
  %v2702 = vadd.f32 %v2701, %v2681
  %v2703 = vrot.slane %v2702, 4
  %v2704 = vadd.f32 %v2702, %v2703
  %v2705 = vrot.slane %v2704, 2
  %v2706 = vadd.f32 %v2704, %v2705
  %v2707 = vrot.slane %v2706, 1
  %v2708 = vadd.f32 %v2706, %v2707
  %v2709 = vmul.f32 %v2370, %v2370
  %v2710 = vmul.f32 %v2674, %v2674
  %v2711 = vmul.f32 %v2372, %v2372
  %v2712 = vmul.f32 %v2676, %v2676
  %v2713 = vmul.f32 %v2375, %v2375
  %v2714 = vmul.f32 %v2679, %v2679
  %v2715 = vmul.f32 %v2377, %v2377
  %v2716 = vmul.f32 %v2681, %v2681
  %v2717 = vadd.f32 %v2709, %v2711
  %v2718 = vadd.f32 %v2717, %v2713
  %v2719 = vadd.f32 %v2718, %v2715
  %v2720 = vrot.slane %v2719, 4
  %v2721 = vadd.f32 %v2719, %v2720
  %v2722 = vrot.slane %v2721, 2
  %v2723 = vadd.f32 %v2721, %v2722
  %v2724 = vrot.slane %v2723, 1
  %v2725 = vadd.f32 %v2723, %v2724
  %v2726 = vadd.f32 %v2710, %v2712
  %v2727 = vadd.f32 %v2726, %v2714
  %v2728 = vadd.f32 %v2727, %v2716
  %v2729 = vrot.slane %v2728, 4
  %v2730 = vadd.f32 %v2728, %v2729
  %v2731 = vrot.slane %v2730, 2
  %v2732 = vadd.f32 %v2730, %v2731
  %v2733 = vrot.slane %v2732, 1
  %v2734 = vadd.f32 %v2732, %v2733
  %vm2735 = vcmask 1040384
  %v2736 = vsel %vm2735, %v2699, %v2725
  %v2737 = vsel %vm2735, %v2708, %v2734
  %v2740 = vrot.slane %v2737, 6
  %vm2741 = vcmask 1041408
  %v2742 = vsel %vm2741, %v2736, %v2740
  %2744 = vst [vmem:[%s5] sm:$0xf] %v2742
  // Predicated region
  $region18: #{discriminator_forward.8} parent=0 // pred_check
    _
  $region19: #{discriminator_forward.8} parent=0 // pred_check_branch
    %2746 = sbr.rel (0) target = $region21
  $region20: #{discriminator_forward.8} parent=0 // pred_region
    _
  $region21: #{discriminator_forward.8} parent=0 // pred_fallthru
    _
  // Predicated region
  $region22: #{discriminator_forward.8} parent=0 // pred_check
    _
  $region23: #{discriminator_forward.8} parent=0 // pred_check_branch
    %2748 = sbr.rel (0) target = $region25
  $region24: #{discriminator_forward.8} parent=0 // pred_region
    _
  $region25: #{discriminator_forward.8} parent=0 // pred_fallthru
    _
  // Predicated region
  $region26: #{discriminator_forward.8} parent=0 // pred_check
    _
  $region27: #{discriminator_forward.8} parent=0 // pred_check_branch
    %2750 = sbr.rel (0) target = $region29
  $region28: #{discriminator_forward.8} parent=0 // pred_region
    _
  $region29: #{discriminator_forward.8} parent=0 // pred_fallthru
    _
  // Predicated region
  $region30: #{discriminator_forward.8} parent=0 // pred_check
    _
  $region31: #{discriminator_forward.8} parent=0 // pred_check_branch
    %2752 = sbr.rel (0) target = $region33
  $region32: #{discriminator_forward.8} parent=0 // pred_region
    _
  $region33: #{discriminator_forward.8} parent=0 // pred_fallthru
    _

// kernel: discriminator_forward.9
$region0: #{discriminator_forward.9}
  #allocation0 [shape = 'u32[]', space=smem, size = 0x4, offset = 0x4, fixed_abs, tag = 'smem constant byte address 0x4 - core index']
  #allocation1 [shape = 'u32[72,128]{1,0:T(1,128)}', space=vmem, size = 0x9000, scoped, tag = 'internal scratch']
  %s0 = inlined_call_operand.vmem [shape: f32[1,4096], index: 0, kind: input, shape index: {}]
  %s1 = inlined_call_operand.vmem [shape: f32[1,4096], index: 1, kind: input, shape index: {}]
  %s2 = inlined_call_operand.vmem [shape: bf16[8,4096], index: 2, kind: input, shape index: {}]
  %s3 = inlined_call_operand.vmem [shape: bf16[4096,128], index: 3, kind: input, shape index: {}]
  %s4 = inlined_call_operand.vmem [shape: f32[8,128], index: 4, kind: output, shape index: {}]
  %s5 = sld [smem:[#allocation0]]
  $region26: #{discriminator_forward.9} parent=0
    _
  %s7 = ssub.s32 1, %s5
  %s8 = scalar_select 0, %s7, %s5
  // Predicated region
  $region2: #{discriminator_forward.9} parent=0 // pred_check
    _
  $region3: #{discriminator_forward.9} parent=0 // pred_check_branch
    %10 = sbr.rel (0) target = $region5
  $region4: #{discriminator_forward.9} parent=0 // pred_region
    _
  $region5: #{discriminator_forward.9} parent=0 // pred_fallthru
    _
  // Predicated region
  $region6: #{discriminator_forward.9} parent=0 // pred_check
    _
  $region7: #{discriminator_forward.9} parent=0 // pred_check_branch
    %12 = sbr.rel (0) target = $region9
  $region8: #{discriminator_forward.9} parent=0 // pred_region
    _
  $region9: #{discriminator_forward.9} parent=0 // pred_fallthru
    _
  // Predicated region
  $region10: #{discriminator_forward.9} parent=0 // pred_check
    _
  $region11: #{discriminator_forward.9} parent=0 // pred_check_branch
    %14 = sbr.rel (0) target = $region13
  $region12: #{discriminator_forward.9} parent=0 // pred_region
    _
  $region13: #{discriminator_forward.9} parent=0 // pred_fallthru
    _
  // Predicated region
  $region14: #{discriminator_forward.9} parent=0 // pred_check
    _
  $region15: #{discriminator_forward.9} parent=0 // pred_check_branch
    %16 = sbr.rel (0) target = $region17
  $region16: #{discriminator_forward.9} parent=0 // pred_region
    _
  $region17: #{discriminator_forward.9} parent=0 // pred_fallthru
    _
  %v17 = vld [vmem:[%s2] sm:$0xff]
  %v18 = vld [vmem:[%s2 + $0x8] sm:$0xff]
  %v19 = vld [vmem:[%s2 + $0x10] sm:$0xff]
  %v20 = vld [vmem:[%s2 + $0x18] sm:$0xff]
  %v21 = vld [vmem:[%s2 + $0x20] sm:$0xff]
  %v22 = vld [vmem:[%s2 + $0x28] sm:$0xff]
  %v23 = vld [vmem:[%s2 + $0x30] sm:$0xff]
  %v24 = vld [vmem:[%s2 + $0x38] sm:$0xff]
  %v25 = vld [vmem:[%s2 + $0x40] sm:$0xff]
  %v26 = vld [vmem:[%s2 + $0x48] sm:$0xff]
  %v27 = vld [vmem:[%s2 + $0x50] sm:$0xff]
  %v28 = vld [vmem:[%s2 + $0x58] sm:$0xff]
  %v29 = vld [vmem:[%s2 + $0x60] sm:$0xff]
  %v30 = vld [vmem:[%s2 + $0x68] sm:$0xff]
  %v31 = vld [vmem:[%s2 + $0x70] sm:$0xff]
  %v32 = vld [vmem:[%s2 + $0x78] sm:$0xff]
  %v33 = vunpack.c.l.bf16 %v17
  %v34 = vunpack.c.h.bf16 %v17
  %v35 = vunpack.c.l.bf16 %v18
  %v36 = vunpack.c.h.bf16 %v18
  %v37 = vunpack.c.l.bf16 %v19
  %v38 = vunpack.c.h.bf16 %v19
  %v39 = vunpack.c.l.bf16 %v20
  %v40 = vunpack.c.h.bf16 %v20
  %v41 = vunpack.c.l.bf16 %v21
  %v42 = vunpack.c.h.bf16 %v21
  %v43 = vunpack.c.l.bf16 %v22
  %v44 = vunpack.c.h.bf16 %v22
  %v45 = vunpack.c.l.bf16 %v23
  %v46 = vunpack.c.h.bf16 %v23
  %v47 = vunpack.c.l.bf16 %v24
  %v48 = vunpack.c.h.bf16 %v24
  %v49 = vunpack.c.l.bf16 %v25
  %v50 = vunpack.c.h.bf16 %v25
  %v51 = vunpack.c.l.bf16 %v26
  %v52 = vunpack.c.h.bf16 %v26
  %v53 = vunpack.c.l.bf16 %v27
  %v54 = vunpack.c.h.bf16 %v27
  %v55 = vunpack.c.l.bf16 %v28
  %v56 = vunpack.c.h.bf16 %v28
  %v57 = vunpack.c.l.bf16 %v29
  %v58 = vunpack.c.h.bf16 %v29
  %v59 = vunpack.c.l.bf16 %v30
  %v60 = vunpack.c.h.bf16 %v30
  %v61 = vunpack.c.l.bf16 %v31
  %v62 = vunpack.c.h.bf16 %v31
  %v63 = vunpack.c.l.bf16 %v32
  %v64 = vunpack.c.h.bf16 %v32
  %v65 = vld [vmem:[%s0] sm:$0xff]
  %v66 = vld [vmem:[%s0 + $0x8] sm:$0xff]
  %v67 = vld [vmem:[%s0 + $0x10] sm:$0xff]
  %v68 = vld [vmem:[%s0 + $0x18] sm:$0xff]
  %v73 = vperm.slane %v65, 0
  %v74 = vperm.slane %v65, 1
  %v75 = vperm.slane %v65, 2
  %v76 = vperm.slane %v65, 3
  %v77 = vperm.slane %v65, 4
  %v78 = vperm.slane %v65, 5
  %v79 = vperm.slane %v65, 6
  %v80 = vperm.slane %v65, 7
  %v81 = vperm.slane %v66, 0
  %v82 = vperm.slane %v66, 1
  %v83 = vperm.slane %v66, 2
  %v84 = vperm.slane %v66, 3
  %v85 = vperm.slane %v66, 4
  %v86 = vperm.slane %v66, 5
  %v87 = vperm.slane %v66, 6
  %v88 = vperm.slane %v66, 7
  %v89 = vperm.slane %v67, 0
  %v90 = vperm.slane %v67, 1
  %v91 = vperm.slane %v67, 2
  %v92 = vperm.slane %v67, 3
  %v93 = vperm.slane %v67, 4
  %v94 = vperm.slane %v67, 5
  %v95 = vperm.slane %v67, 6
  %v96 = vperm.slane %v67, 7
  %v97 = vperm.slane %v68, 0
  %v98 = vperm.slane %v68, 1
  %v99 = vperm.slane %v68, 2
  %v100 = vperm.slane %v68, 3
  %v101 = vperm.slane %v68, 4
  %v102 = vperm.slane %v68, 5
  %v103 = vperm.slane %v68, 6
  %v104 = vperm.slane %v68, 7
  %v137 = vmul.f32 %v33, %v73
  %v138 = vmul.f32 %v34, %v74
  %v139 = vmul.f32 %v35, %v75
  %v140 = vmul.f32 %v36, %v76
  %v141 = vmul.f32 %v37, %v77
  %v142 = vmul.f32 %v38, %v78
  %v143 = vmul.f32 %v39, %v79
  %v144 = vmul.f32 %v40, %v80
  %v145 = vmul.f32 %v41, %v81
  %v146 = vmul.f32 %v42, %v82
  %v147 = vmul.f32 %v43, %v83
  %v148 = vmul.f32 %v44, %v84
  %v149 = vmul.f32 %v45, %v85
  %v150 = vmul.f32 %v46, %v86
  %v151 = vmul.f32 %v47, %v87
  %v152 = vmul.f32 %v48, %v88
  %v153 = vmul.f32 %v49, %v89
  %v154 = vmul.f32 %v50, %v90
  %v155 = vmul.f32 %v51, %v91
  %v156 = vmul.f32 %v52, %v92
  %v157 = vmul.f32 %v53, %v93
  %v158 = vmul.f32 %v54, %v94
  %v159 = vmul.f32 %v55, %v95
  %v160 = vmul.f32 %v56, %v96
  %v161 = vmul.f32 %v57, %v97
  %v162 = vmul.f32 %v58, %v98
  %v163 = vmul.f32 %v59, %v99
  %v164 = vmul.f32 %v60, %v100
  %v165 = vmul.f32 %v61, %v101
  %v166 = vmul.f32 %v62, %v102
  %v167 = vmul.f32 %v63, %v103
  %v168 = vmul.f32 %v64, %v104
  %v169 = vld [vmem:[%s1] sm:$0xff]
  %v170 = vld [vmem:[%s1 + $0x8] sm:$0xff]
  %v171 = vld [vmem:[%s1 + $0x10] sm:$0xff]
  %v172 = vld [vmem:[%s1 + $0x18] sm:$0xff]
  %v177 = vperm.slane %v169, 0
  %v178 = vperm.slane %v169, 1
  %v179 = vperm.slane %v169, 2
  %v180 = vperm.slane %v169, 3
  %v181 = vperm.slane %v169, 4
  %v182 = vperm.slane %v169, 5
  %v183 = vperm.slane %v169, 6
  %v184 = vperm.slane %v169, 7
  %v185 = vperm.slane %v170, 0
  %v186 = vperm.slane %v170, 1
  %v187 = vperm.slane %v170, 2
  %v188 = vperm.slane %v170, 3
  %v189 = vperm.slane %v170, 4
  %v190 = vperm.slane %v170, 5
  %v191 = vperm.slane %v170, 6
  %v192 = vperm.slane %v170, 7
  %v193 = vperm.slane %v171, 0
  %v194 = vperm.slane %v171, 1
  %v195 = vperm.slane %v171, 2
  %v196 = vperm.slane %v171, 3
  %v197 = vperm.slane %v171, 4
  %v198 = vperm.slane %v171, 5
  %v199 = vperm.slane %v171, 6
  %v200 = vperm.slane %v171, 7
  %v201 = vperm.slane %v172, 0
  %v202 = vperm.slane %v172, 1
  %v203 = vperm.slane %v172, 2
  %v204 = vperm.slane %v172, 3
  %v205 = vperm.slane %v172, 4
  %v206 = vperm.slane %v172, 5
  %v207 = vperm.slane %v172, 6
  %v208 = vperm.slane %v172, 7
  %v241 = vadd.f32 %v137, %v177
  %v242 = vadd.f32 %v138, %v178
  %v243 = vadd.f32 %v139, %v179
  %v244 = vadd.f32 %v140, %v180
  %v245 = vadd.f32 %v141, %v181
  %v246 = vadd.f32 %v142, %v182
  %v247 = vadd.f32 %v143, %v183
  %v248 = vadd.f32 %v144, %v184
  %v249 = vadd.f32 %v145, %v185
  %v250 = vadd.f32 %v146, %v186
  %v251 = vadd.f32 %v147, %v187
  %v252 = vadd.f32 %v148, %v188
  %v253 = vadd.f32 %v149, %v189
  %v254 = vadd.f32 %v150, %v190
  %v255 = vadd.f32 %v151, %v191
  %v256 = vadd.f32 %v152, %v192
  %v257 = vadd.f32 %v153, %v193
  %v258 = vadd.f32 %v154, %v194
  %v259 = vadd.f32 %v155, %v195
  %v260 = vadd.f32 %v156, %v196
  %v261 = vadd.f32 %v157, %v197
  %v262 = vadd.f32 %v158, %v198
  %v263 = vadd.f32 %v159, %v199
  %v264 = vadd.f32 %v160, %v200
  %v265 = vadd.f32 %v161, %v201
  %v266 = vadd.f32 %v162, %v202
  %v267 = vadd.f32 %v163, %v203
  %v268 = vadd.f32 %v164, %v204
  %v269 = vadd.f32 %v165, %v205
  %v270 = vadd.f32 %v166, %v206
  %v271 = vadd.f32 %v167, %v207
  %v272 = vadd.f32 %v168, %v208
  %vm273 = vcmp.ge.f32.partialorder %v241, 0.0
  %vm274 = vcmp.ge.f32.partialorder %v242, 0.0
  %vm275 = vcmp.ge.f32.partialorder %v243, 0.0
  %vm276 = vcmp.ge.f32.partialorder %v244, 0.0
  %vm277 = vcmp.ge.f32.partialorder %v245, 0.0
  %vm278 = vcmp.ge.f32.partialorder %v246, 0.0
  %vm279 = vcmp.ge.f32.partialorder %v247, 0.0
  %vm280 = vcmp.ge.f32.partialorder %v248, 0.0
  %vm281 = vcmp.ge.f32.partialorder %v249, 0.0
  %vm282 = vcmp.ge.f32.partialorder %v250, 0.0
  %vm283 = vcmp.ge.f32.partialorder %v251, 0.0
  %vm284 = vcmp.ge.f32.partialorder %v252, 0.0
  %vm285 = vcmp.ge.f32.partialorder %v253, 0.0
  %vm286 = vcmp.ge.f32.partialorder %v254, 0.0
  %vm287 = vcmp.ge.f32.partialorder %v255, 0.0
  %vm288 = vcmp.ge.f32.partialorder %v256, 0.0
  %vm289 = vcmp.ge.f32.partialorder %v257, 0.0
  %vm290 = vcmp.ge.f32.partialorder %v258, 0.0
  %vm291 = vcmp.ge.f32.partialorder %v259, 0.0
  %vm292 = vcmp.ge.f32.partialorder %v260, 0.0
  %vm293 = vcmp.ge.f32.partialorder %v261, 0.0
  %vm294 = vcmp.ge.f32.partialorder %v262, 0.0
  %vm295 = vcmp.ge.f32.partialorder %v263, 0.0
  %vm296 = vcmp.ge.f32.partialorder %v264, 0.0
  %vm297 = vcmp.ge.f32.partialorder %v265, 0.0
  %vm298 = vcmp.ge.f32.partialorder %v266, 0.0
  %vm299 = vcmp.ge.f32.partialorder %v267, 0.0
  %vm300 = vcmp.ge.f32.partialorder %v268, 0.0
  %vm301 = vcmp.ge.f32.partialorder %v269, 0.0
  %vm302 = vcmp.ge.f32.partialorder %v270, 0.0
  %vm303 = vcmp.ge.f32.partialorder %v271, 0.0
  %vm304 = vcmp.ge.f32.partialorder %v272, 0.0
  %v305 = vmul.f32 %v241, 0.2
  %v306 = vmul.f32 %v242, 0.2
  %v307 = vmul.f32 %v243, 0.2
  %v308 = vmul.f32 %v244, 0.2
  %v309 = vmul.f32 %v245, 0.2
  %v310 = vmul.f32 %v246, 0.2
  %v311 = vmul.f32 %v247, 0.2
  %v312 = vmul.f32 %v248, 0.2
  %v313 = vmul.f32 %v249, 0.2
  %v314 = vmul.f32 %v250, 0.2
  %v315 = vmul.f32 %v251, 0.2
  %v316 = vmul.f32 %v252, 0.2
  %v317 = vmul.f32 %v253, 0.2
  %v318 = vmul.f32 %v254, 0.2
  %v319 = vmul.f32 %v255, 0.2
  %v320 = vmul.f32 %v256, 0.2
  %v321 = vmul.f32 %v257, 0.2
  %v322 = vmul.f32 %v258, 0.2
  %v323 = vmul.f32 %v259, 0.2
  %v324 = vmul.f32 %v260, 0.2
  %v325 = vmul.f32 %v261, 0.2
  %v326 = vmul.f32 %v262, 0.2
  %v327 = vmul.f32 %v263, 0.2
  %v328 = vmul.f32 %v264, 0.2
  %v329 = vmul.f32 %v265, 0.2
  %v330 = vmul.f32 %v266, 0.2
  %v331 = vmul.f32 %v267, 0.2
  %v332 = vmul.f32 %v268, 0.2
  %v333 = vmul.f32 %v269, 0.2
  %v334 = vmul.f32 %v270, 0.2
  %v335 = vmul.f32 %v271, 0.2
  %v336 = vmul.f32 %v272, 0.2
  %v337 = vsel %vm273, %v241, %v305
  %v338 = vsel %vm274, %v242, %v306
  %v339 = vsel %vm275, %v243, %v307
  %v340 = vsel %vm276, %v244, %v308
  %v341 = vsel %vm277, %v245, %v309
  %v342 = vsel %vm278, %v246, %v310
  %v343 = vsel %vm279, %v247, %v311
  %v344 = vsel %vm280, %v248, %v312
  %v345 = vsel %vm281, %v249, %v313
  %v346 = vsel %vm282, %v250, %v314
  %v347 = vsel %vm283, %v251, %v315
  %v348 = vsel %vm284, %v252, %v316
  %v349 = vsel %vm285, %v253, %v317
  %v350 = vsel %vm286, %v254, %v318
  %v351 = vsel %vm287, %v255, %v319
  %v352 = vsel %vm288, %v256, %v320
  %v353 = vsel %vm289, %v257, %v321
  %v354 = vsel %vm290, %v258, %v322
  %v355 = vsel %vm291, %v259, %v323
  %v356 = vsel %vm292, %v260, %v324
  %v357 = vsel %vm293, %v261, %v325
  %v358 = vsel %vm294, %v262, %v326
  %v359 = vsel %vm295, %v263, %v327
  %v360 = vsel %vm296, %v264, %v328
  %v361 = vsel %vm297, %v265, %v329
  %v362 = vsel %vm298, %v266, %v330
  %v363 = vsel %vm299, %v267, %v331
  %v364 = vsel %vm300, %v268, %v332
  %v365 = vsel %vm301, %v269, %v333
  %v366 = vsel %vm302, %v270, %v334
  %v367 = vsel %vm303, %v271, %v335
  %v368 = vsel %vm304, %v272, %v336
  %v369 = vpack.c.bf16 %v337, %v337
  %v370 = vpack.c.bf16 %v338, %v338
  %v371 = vpack.c.bf16 %v339, %v339
  %v372 = vpack.c.bf16 %v340, %v340
  %v373 = vpack.c.bf16 %v341, %v341
  %v374 = vpack.c.bf16 %v342, %v342
  %v375 = vpack.c.bf16 %v343, %v343
  %v376 = vpack.c.bf16 %v344, %v344
  %v377 = vpack.c.bf16 %v345, %v345
  %v378 = vpack.c.bf16 %v346, %v346
  %v379 = vpack.c.bf16 %v347, %v347
  %v380 = vpack.c.bf16 %v348, %v348
  %v381 = vpack.c.bf16 %v349, %v349
  %v382 = vpack.c.bf16 %v350, %v350
  %v383 = vpack.c.bf16 %v351, %v351
  %v384 = vpack.c.bf16 %v352, %v352
  %v385 = vpack.c.bf16 %v353, %v353
  %v386 = vpack.c.bf16 %v354, %v354
  %v387 = vpack.c.bf16 %v355, %v355
  %v388 = vpack.c.bf16 %v356, %v356
  %v389 = vpack.c.bf16 %v357, %v357
  %v390 = vpack.c.bf16 %v358, %v358
  %v391 = vpack.c.bf16 %v359, %v359
  %v392 = vpack.c.bf16 %v360, %v360
  %v393 = vpack.c.bf16 %v361, %v361
  %v394 = vpack.c.bf16 %v362, %v362
  %v395 = vpack.c.bf16 %v363, %v363
  %v396 = vpack.c.bf16 %v364, %v364
  %v397 = vpack.c.bf16 %v365, %v365
  %v398 = vpack.c.bf16 %v366, %v366
  %v399 = vpack.c.bf16 %v367, %v367
  %v400 = vpack.c.bf16 %v368, %v368
  %v401 = vld [vmem:[%s3] sm:$0xf]
  %v402 = vld [vmem:[%s3 + $0x4] sm:$0xf]
  %v403 = vld [vmem:[%s3 + $0x8] sm:$0xf]
  %v404 = vld [vmem:[%s3 + $0xc] sm:$0xf]
  %v405 = vld [vmem:[%s3 + $0x10] sm:$0xf]
  %v406 = vld [vmem:[%s3 + $0x14] sm:$0xf]
  %v407 = vld [vmem:[%s3 + $0x18] sm:$0xf]
  %v408 = vld [vmem:[%s3 + $0x1c] sm:$0xf]
  %v409 = vld [vmem:[%s3 + $0x20] sm:$0xf]
  %v410 = vld [vmem:[%s3 + $0x24] sm:$0xf]
  %v411 = vld [vmem:[%s3 + $0x28] sm:$0xf]
  %v412 = vld [vmem:[%s3 + $0x2c] sm:$0xf]
  %v413 = vld [vmem:[%s3 + $0x30] sm:$0xf]
  %v414 = vld [vmem:[%s3 + $0x34] sm:$0xf]
  %v415 = vld [vmem:[%s3 + $0x38] sm:$0xf]
  %v416 = vld [vmem:[%s3 + $0x3c] sm:$0xf]
  %v417 = vld [vmem:[%s3 + $0x40] sm:$0xf]
  %v418 = vld [vmem:[%s3 + $0x44] sm:$0xf]
  %v419 = vld [vmem:[%s3 + $0x48] sm:$0xf]
  %v420 = vld [vmem:[%s3 + $0x4c] sm:$0xf]
  %v421 = vld [vmem:[%s3 + $0x50] sm:$0xf]
  %v422 = vld [vmem:[%s3 + $0x54] sm:$0xf]
  %v423 = vld [vmem:[%s3 + $0x58] sm:$0xf]
  %v424 = vld [vmem:[%s3 + $0x5c] sm:$0xf]
  %v425 = vld [vmem:[%s3 + $0x60] sm:$0xf]
  %v426 = vld [vmem:[%s3 + $0x64] sm:$0xf]
  %v427 = vld [vmem:[%s3 + $0x68] sm:$0xf]
  %v428 = vld [vmem:[%s3 + $0x6c] sm:$0xf]
  %v429 = vld [vmem:[%s3 + $0x70] sm:$0xf]
  %v430 = vld [vmem:[%s3 + $0x74] sm:$0xf]
  %v431 = vld [vmem:[%s3 + $0x78] sm:$0xf]
  %v432 = vld [vmem:[%s3 + $0x7c] sm:$0xf]
  %v433 = vld [vmem:[%s3 + $0x80] sm:$0xf]
  %v434 = vld [vmem:[%s3 + $0x84] sm:$0xf]
  %v435 = vld [vmem:[%s3 + $0x88] sm:$0xf]
  %v436 = vld [vmem:[%s3 + $0x8c] sm:$0xf]
  %v437 = vld [vmem:[%s3 + $0x90] sm:$0xf]
  %v438 = vld [vmem:[%s3 + $0x94] sm:$0xf]
  %v439 = vld [vmem:[%s3 + $0x98] sm:$0xf]
  %v440 = vld [vmem:[%s3 + $0x9c] sm:$0xf]
  %v441 = vld [vmem:[%s3 + $0xa0] sm:$0xf]
  %v442 = vld [vmem:[%s3 + $0xa4] sm:$0xf]
  %v443 = vld [vmem:[%s3 + $0xa8] sm:$0xf]
  %v444 = vld [vmem:[%s3 + $0xac] sm:$0xf]
  %v445 = vld [vmem:[%s3 + $0xb0] sm:$0xf]
  %v446 = vld [vmem:[%s3 + $0xb4] sm:$0xf]
  %v447 = vld [vmem:[%s3 + $0xb8] sm:$0xf]
  %v448 = vld [vmem:[%s3 + $0xbc] sm:$0xf]
  %v449 = vld [vmem:[%s3 + $0xc0] sm:$0xf]
  %v450 = vld [vmem:[%s3 + $0xc4] sm:$0xf]
  %v451 = vld [vmem:[%s3 + $0xc8] sm:$0xf]
  %v452 = vld [vmem:[%s3 + $0xcc] sm:$0xf]
  %v453 = vld [vmem:[%s3 + $0xd0] sm:$0xf]
  %v454 = vld [vmem:[%s3 + $0xd4] sm:$0xf]
  %v455 = vld [vmem:[%s3 + $0xd8] sm:$0xf]
  %v456 = vld [vmem:[%s3 + $0xdc] sm:$0xf]
  %v457 = vld [vmem:[%s3 + $0xe0] sm:$0xf]
  %v458 = vld [vmem:[%s3 + $0xe4] sm:$0xf]
  %v459 = vld [vmem:[%s3 + $0xe8] sm:$0xf]
  %v460 = vld [vmem:[%s3 + $0xec] sm:$0xf]
  %v461 = vld [vmem:[%s3 + $0xf0] sm:$0xf]
  %v462 = vld [vmem:[%s3 + $0xf4] sm:$0xf]
  %v463 = vld [vmem:[%s3 + $0xf8] sm:$0xf]
  %v464 = vld [vmem:[%s3 + $0xfc] sm:$0xf]
  %v465 = vld [vmem:[%s3 + $0x100] sm:$0xf]
  %v466 = vld [vmem:[%s3 + $0x104] sm:$0xf]
  %v467 = vld [vmem:[%s3 + $0x108] sm:$0xf]
  %v468 = vld [vmem:[%s3 + $0x10c] sm:$0xf]
  %v469 = vld [vmem:[%s3 + $0x110] sm:$0xf]
  %v470 = vld [vmem:[%s3 + $0x114] sm:$0xf]
  %v471 = vld [vmem:[%s3 + $0x118] sm:$0xf]
  %v472 = vld [vmem:[%s3 + $0x11c] sm:$0xf]
  %v473 = vld [vmem:[%s3 + $0x120] sm:$0xf]
  %v474 = vld [vmem:[%s3 + $0x124] sm:$0xf]
  %v475 = vld [vmem:[%s3 + $0x128] sm:$0xf]
  %v476 = vld [vmem:[%s3 + $0x12c] sm:$0xf]
  %v477 = vld [vmem:[%s3 + $0x130] sm:$0xf]
  %v478 = vld [vmem:[%s3 + $0x134] sm:$0xf]
  %v479 = vld [vmem:[%s3 + $0x138] sm:$0xf]
  %v480 = vld [vmem:[%s3 + $0x13c] sm:$0xf]
  %v481 = vld [vmem:[%s3 + $0x140] sm:$0xf]
  %v482 = vld [vmem:[%s3 + $0x144] sm:$0xf]
  %v483 = vld [vmem:[%s3 + $0x148] sm:$0xf]
  %v484 = vld [vmem:[%s3 + $0x14c] sm:$0xf]
  %v485 = vld [vmem:[%s3 + $0x150] sm:$0xf]
  %v486 = vld [vmem:[%s3 + $0x154] sm:$0xf]
  %v487 = vld [vmem:[%s3 + $0x158] sm:$0xf]
  %v488 = vld [vmem:[%s3 + $0x15c] sm:$0xf]
  %v489 = vld [vmem:[%s3 + $0x160] sm:$0xf]
  %v490 = vld [vmem:[%s3 + $0x164] sm:$0xf]
  %v491 = vld [vmem:[%s3 + $0x168] sm:$0xf]
  %v492 = vld [vmem:[%s3 + $0x16c] sm:$0xf]
  %v493 = vld [vmem:[%s3 + $0x170] sm:$0xf]
  %v494 = vld [vmem:[%s3 + $0x174] sm:$0xf]
  %v495 = vld [vmem:[%s3 + $0x178] sm:$0xf]
  %v496 = vld [vmem:[%s3 + $0x17c] sm:$0xf]
  %v497 = vld [vmem:[%s3 + $0x180] sm:$0xf]
  %v498 = vld [vmem:[%s3 + $0x184] sm:$0xf]
  %v499 = vld [vmem:[%s3 + $0x188] sm:$0xf]
  %v500 = vld [vmem:[%s3 + $0x18c] sm:$0xf]
  %v501 = vld [vmem:[%s3 + $0x190] sm:$0xf]
  %v502 = vld [vmem:[%s3 + $0x194] sm:$0xf]
  %v503 = vld [vmem:[%s3 + $0x198] sm:$0xf]
  %v504 = vld [vmem:[%s3 + $0x19c] sm:$0xf]
  %v505 = vld [vmem:[%s3 + $0x1a0] sm:$0xf]
  %v506 = vld [vmem:[%s3 + $0x1a4] sm:$0xf]
  %v507 = vld [vmem:[%s3 + $0x1a8] sm:$0xf]
  %v508 = vld [vmem:[%s3 + $0x1ac] sm:$0xf]
  %v509 = vld [vmem:[%s3 + $0x1b0] sm:$0xf]
  %v510 = vld [vmem:[%s3 + $0x1b4] sm:$0xf]
  %v511 = vld [vmem:[%s3 + $0x1b8] sm:$0xf]
  %v512 = vld [vmem:[%s3 + $0x1bc] sm:$0xf]
  %v513 = vld [vmem:[%s3 + $0x1c0] sm:$0xf]
  %v514 = vld [vmem:[%s3 + $0x1c4] sm:$0xf]
  %v515 = vld [vmem:[%s3 + $0x1c8] sm:$0xf]
  %v516 = vld [vmem:[%s3 + $0x1cc] sm:$0xf]
  %v517 = vld [vmem:[%s3 + $0x1d0] sm:$0xf]
  %v518 = vld [vmem:[%s3 + $0x1d4] sm:$0xf]
  %v519 = vld [vmem:[%s3 + $0x1d8] sm:$0xf]
  %v520 = vld [vmem:[%s3 + $0x1dc] sm:$0xf]
  %v521 = vld [vmem:[%s3 + $0x1e0] sm:$0xf]
  %v522 = vld [vmem:[%s3 + $0x1e4] sm:$0xf]
  %v523 = vld [vmem:[%s3 + $0x1e8] sm:$0xf]
  %v524 = vld [vmem:[%s3 + $0x1ec] sm:$0xf]
  %v525 = vld [vmem:[%s3 + $0x1f0] sm:$0xf]
  %v526 = vld [vmem:[%s3 + $0x1f4] sm:$0xf]
  %v527 = vld [vmem:[%s3 + $0x1f8] sm:$0xf]
  %v528 = vld [vmem:[%s3 + $0x1fc] sm:$0xf]
  %v529 = vld [vmem:[%s3 + $0x200] sm:$0xf]
  %v530 = vld [vmem:[%s3 + $0x204] sm:$0xf]
  %v531 = vld [vmem:[%s3 + $0x208] sm:$0xf]
  %v532 = vld [vmem:[%s3 + $0x20c] sm:$0xf]
  %v533 = vld [vmem:[%s3 + $0x210] sm:$0xf]
  %v534 = vld [vmem:[%s3 + $0x214] sm:$0xf]
  %v535 = vld [vmem:[%s3 + $0x218] sm:$0xf]
  %v536 = vld [vmem:[%s3 + $0x21c] sm:$0xf]
  %v537 = vld [vmem:[%s3 + $0x220] sm:$0xf]
  %v538 = vld [vmem:[%s3 + $0x224] sm:$0xf]
  %v539 = vld [vmem:[%s3 + $0x228] sm:$0xf]
  %v540 = vld [vmem:[%s3 + $0x22c] sm:$0xf]
  %v541 = vld [vmem:[%s3 + $0x230] sm:$0xf]
  %v542 = vld [vmem:[%s3 + $0x234] sm:$0xf]
  %v543 = vld [vmem:[%s3 + $0x238] sm:$0xf]
  %v544 = vld [vmem:[%s3 + $0x23c] sm:$0xf]
  %v545 = vld [vmem:[%s3 + $0x240] sm:$0xf]
  %v546 = vld [vmem:[%s3 + $0x244] sm:$0xf]
  %v547 = vld [vmem:[%s3 + $0x248] sm:$0xf]
  %v548 = vld [vmem:[%s3 + $0x24c] sm:$0xf]
  %v549 = vld [vmem:[%s3 + $0x250] sm:$0xf]
  %v550 = vld [vmem:[%s3 + $0x254] sm:$0xf]
  %v551 = vld [vmem:[%s3 + $0x258] sm:$0xf]
  %v552 = vld [vmem:[%s3 + $0x25c] sm:$0xf]
  %v553 = vld [vmem:[%s3 + $0x260] sm:$0xf]
  %v554 = vld [vmem:[%s3 + $0x264] sm:$0xf]
  %v555 = vld [vmem:[%s3 + $0x268] sm:$0xf]
  %v556 = vld [vmem:[%s3 + $0x26c] sm:$0xf]
  %v557 = vld [vmem:[%s3 + $0x270] sm:$0xf]
  %v558 = vld [vmem:[%s3 + $0x274] sm:$0xf]
  %v559 = vld [vmem:[%s3 + $0x278] sm:$0xf]
  %v560 = vld [vmem:[%s3 + $0x27c] sm:$0xf]
  %v561 = vld [vmem:[%s3 + $0x280] sm:$0xf]
  %v562 = vld [vmem:[%s3 + $0x284] sm:$0xf]
  %v563 = vld [vmem:[%s3 + $0x288] sm:$0xf]
  %v564 = vld [vmem:[%s3 + $0x28c] sm:$0xf]
  %v565 = vld [vmem:[%s3 + $0x290] sm:$0xf]
  %v566 = vld [vmem:[%s3 + $0x294] sm:$0xf]
  %v567 = vld [vmem:[%s3 + $0x298] sm:$0xf]
  %v568 = vld [vmem:[%s3 + $0x29c] sm:$0xf]
  %v569 = vld [vmem:[%s3 + $0x2a0] sm:$0xf]
  %v570 = vld [vmem:[%s3 + $0x2a4] sm:$0xf]
  %v571 = vld [vmem:[%s3 + $0x2a8] sm:$0xf]
  %v572 = vld [vmem:[%s3 + $0x2ac] sm:$0xf]
  %v573 = vld [vmem:[%s3 + $0x2b0] sm:$0xf]
  %v574 = vld [vmem:[%s3 + $0x2b4] sm:$0xf]
  %v575 = vld [vmem:[%s3 + $0x2b8] sm:$0xf]
  %v576 = vld [vmem:[%s3 + $0x2bc] sm:$0xf]
  %v577 = vld [vmem:[%s3 + $0x2c0] sm:$0xf]
  %v578 = vld [vmem:[%s3 + $0x2c4] sm:$0xf]
  %v579 = vld [vmem:[%s3 + $0x2c8] sm:$0xf]
  %v580 = vld [vmem:[%s3 + $0x2cc] sm:$0xf]
  %v581 = vld [vmem:[%s3 + $0x2d0] sm:$0xf]
  %v582 = vld [vmem:[%s3 + $0x2d4] sm:$0xf]
  %v583 = vld [vmem:[%s3 + $0x2d8] sm:$0xf]
  %v584 = vld [vmem:[%s3 + $0x2dc] sm:$0xf]
  %v585 = vld [vmem:[%s3 + $0x2e0] sm:$0xf]
  %v586 = vld [vmem:[%s3 + $0x2e4] sm:$0xf]
  %v587 = vld [vmem:[%s3 + $0x2e8] sm:$0xf]
  %v588 = vld [vmem:[%s3 + $0x2ec] sm:$0xf]
  %v589 = vld [vmem:[%s3 + $0x2f0] sm:$0xf]
  %v590 = vld [vmem:[%s3 + $0x2f4] sm:$0xf]
  %v591 = vld [vmem:[%s3 + $0x2f8] sm:$0xf]
  %v592 = vld [vmem:[%s3 + $0x2fc] sm:$0xf]
  %v593 = vld [vmem:[%s3 + $0x300] sm:$0xf]
  %v594 = vld [vmem:[%s3 + $0x304] sm:$0xf]
  %v595 = vld [vmem:[%s3 + $0x308] sm:$0xf]
  %v596 = vld [vmem:[%s3 + $0x30c] sm:$0xf]
  %v597 = vld [vmem:[%s3 + $0x310] sm:$0xf]
  %v598 = vld [vmem:[%s3 + $0x314] sm:$0xf]
  %v599 = vld [vmem:[%s3 + $0x318] sm:$0xf]
  %v600 = vld [vmem:[%s3 + $0x31c] sm:$0xf]
  %v601 = vld [vmem:[%s3 + $0x320] sm:$0xf]
  %v602 = vld [vmem:[%s3 + $0x324] sm:$0xf]
  %v603 = vld [vmem:[%s3 + $0x328] sm:$0xf]
  %v604 = vld [vmem:[%s3 + $0x32c] sm:$0xf]
  %v605 = vld [vmem:[%s3 + $0x330] sm:$0xf]
  %v606 = vld [vmem:[%s3 + $0x334] sm:$0xf]
  %v607 = vld [vmem:[%s3 + $0x338] sm:$0xf]
  %v608 = vld [vmem:[%s3 + $0x33c] sm:$0xf]
  %v609 = vld [vmem:[%s3 + $0x340] sm:$0xf]
  %v610 = vld [vmem:[%s3 + $0x344] sm:$0xf]
  %v611 = vld [vmem:[%s3 + $0x348] sm:$0xf]
  %v612 = vld [vmem:[%s3 + $0x34c] sm:$0xf]
  %v613 = vld [vmem:[%s3 + $0x350] sm:$0xf]
  %v614 = vld [vmem:[%s3 + $0x354] sm:$0xf]
  %v615 = vld [vmem:[%s3 + $0x358] sm:$0xf]
  %v616 = vld [vmem:[%s3 + $0x35c] sm:$0xf]
  %v617 = vld [vmem:[%s3 + $0x360] sm:$0xf]
  %v618 = vld [vmem:[%s3 + $0x364] sm:$0xf]
  %v619 = vld [vmem:[%s3 + $0x368] sm:$0xf]
  %v620 = vld [vmem:[%s3 + $0x36c] sm:$0xf]
  %v621 = vld [vmem:[%s3 + $0x370] sm:$0xf]
  %v622 = vld [vmem:[%s3 + $0x374] sm:$0xf]
  %v623 = vld [vmem:[%s3 + $0x378] sm:$0xf]
  %v624 = vld [vmem:[%s3 + $0x37c] sm:$0xf]
  %v625 = vld [vmem:[%s3 + $0x380] sm:$0xf]
  %v626 = vld [vmem:[%s3 + $0x384] sm:$0xf]
  %v627 = vld [vmem:[%s3 + $0x388] sm:$0xf]
  %v628 = vld [vmem:[%s3 + $0x38c] sm:$0xf]
  %v629 = vld [vmem:[%s3 + $0x390] sm:$0xf]
  %v630 = vld [vmem:[%s3 + $0x394] sm:$0xf]
  %v631 = vld [vmem:[%s3 + $0x398] sm:$0xf]
  %v632 = vld [vmem:[%s3 + $0x39c] sm:$0xf]
  %v633 = vld [vmem:[%s3 + $0x3a0] sm:$0xf]
  %v634 = vld [vmem:[%s3 + $0x3a4] sm:$0xf]
  %v635 = vld [vmem:[%s3 + $0x3a8] sm:$0xf]
  %v636 = vld [vmem:[%s3 + $0x3ac] sm:$0xf]
  %v637 = vld [vmem:[%s3 + $0x3b0] sm:$0xf]
  %v638 = vld [vmem:[%s3 + $0x3b4] sm:$0xf]
  %v639 = vld [vmem:[%s3 + $0x3b8] sm:$0xf]
  %v640 = vld [vmem:[%s3 + $0x3bc] sm:$0xf]
  %v641 = vld [vmem:[%s3 + $0x3c0] sm:$0xf]
  %v642 = vld [vmem:[%s3 + $0x3c4] sm:$0xf]
  %v643 = vld [vmem:[%s3 + $0x3c8] sm:$0xf]
  %v644 = vld [vmem:[%s3 + $0x3cc] sm:$0xf]
  %v645 = vld [vmem:[%s3 + $0x3d0] sm:$0xf]
  %v646 = vld [vmem:[%s3 + $0x3d4] sm:$0xf]
  %v647 = vld [vmem:[%s3 + $0x3d8] sm:$0xf]
  %v648 = vld [vmem:[%s3 + $0x3dc] sm:$0xf]
  %v649 = vld [vmem:[%s3 + $0x3e0] sm:$0xf]
  %v650 = vld [vmem:[%s3 + $0x3e4] sm:$0xf]
  %v651 = vld [vmem:[%s3 + $0x3e8] sm:$0xf]
  %v652 = vld [vmem:[%s3 + $0x3ec] sm:$0xf]
  %v653 = vld [vmem:[%s3 + $0x3f0] sm:$0xf]
  %v654 = vld [vmem:[%s3 + $0x3f4] sm:$0xf]
  %v655 = vld [vmem:[%s3 + $0x3f8] sm:$0xf]
  %v656 = vld [vmem:[%s3 + $0x3fc] sm:$0xf]
  %v657 = vld [vmem:[%s3 + $0x400] sm:$0xf]
  %v658 = vld [vmem:[%s3 + $0x404] sm:$0xf]
  %v659 = vld [vmem:[%s3 + $0x408] sm:$0xf]
  %v660 = vld [vmem:[%s3 + $0x40c] sm:$0xf]
  %v661 = vld [vmem:[%s3 + $0x410] sm:$0xf]
  %v662 = vld [vmem:[%s3 + $0x414] sm:$0xf]
  %v663 = vld [vmem:[%s3 + $0x418] sm:$0xf]
  %v664 = vld [vmem:[%s3 + $0x41c] sm:$0xf]
  %v665 = vld [vmem:[%s3 + $0x420] sm:$0xf]
  %v666 = vld [vmem:[%s3 + $0x424] sm:$0xf]
  %v667 = vld [vmem:[%s3 + $0x428] sm:$0xf]
  %v668 = vld [vmem:[%s3 + $0x42c] sm:$0xf]
  %v669 = vld [vmem:[%s3 + $0x430] sm:$0xf]
  %v670 = vld [vmem:[%s3 + $0x434] sm:$0xf]
  %v671 = vld [vmem:[%s3 + $0x438] sm:$0xf]
  %v672 = vld [vmem:[%s3 + $0x43c] sm:$0xf]
  %v673 = vld [vmem:[%s3 + $0x440] sm:$0xf]
  %v674 = vld [vmem:[%s3 + $0x444] sm:$0xf]
  %v675 = vld [vmem:[%s3 + $0x448] sm:$0xf]
  %v676 = vld [vmem:[%s3 + $0x44c] sm:$0xf]
  %v677 = vld [vmem:[%s3 + $0x450] sm:$0xf]
  %v678 = vld [vmem:[%s3 + $0x454] sm:$0xf]
  %v679 = vld [vmem:[%s3 + $0x458] sm:$0xf]
  %v680 = vld [vmem:[%s3 + $0x45c] sm:$0xf]
  %v681 = vld [vmem:[%s3 + $0x460] sm:$0xf]
  %v682 = vld [vmem:[%s3 + $0x464] sm:$0xf]
  %v683 = vld [vmem:[%s3 + $0x468] sm:$0xf]
  %v684 = vld [vmem:[%s3 + $0x46c] sm:$0xf]
  %v685 = vld [vmem:[%s3 + $0x470] sm:$0xf]
  %v686 = vld [vmem:[%s3 + $0x474] sm:$0xf]
  %v687 = vld [vmem:[%s3 + $0x478] sm:$0xf]
  %v688 = vld [vmem:[%s3 + $0x47c] sm:$0xf]
  %v689 = vld [vmem:[%s3 + $0x480] sm:$0xf]
  %v690 = vld [vmem:[%s3 + $0x484] sm:$0xf]
  %v691 = vld [vmem:[%s3 + $0x488] sm:$0xf]
  %v692 = vld [vmem:[%s3 + $0x48c] sm:$0xf]
  %v693 = vld [vmem:[%s3 + $0x490] sm:$0xf]
  %v694 = vld [vmem:[%s3 + $0x494] sm:$0xf]
  %v695 = vld [vmem:[%s3 + $0x498] sm:$0xf]
  %v696 = vld [vmem:[%s3 + $0x49c] sm:$0xf]
  %v697 = vld [vmem:[%s3 + $0x4a0] sm:$0xf]
  %v698 = vld [vmem:[%s3 + $0x4a4] sm:$0xf]
  %v699 = vld [vmem:[%s3 + $0x4a8] sm:$0xf]
  %v700 = vld [vmem:[%s3 + $0x4ac] sm:$0xf]
  %v701 = vld [vmem:[%s3 + $0x4b0] sm:$0xf]
  %v702 = vld [vmem:[%s3 + $0x4b4] sm:$0xf]
  %v703 = vld [vmem:[%s3 + $0x4b8] sm:$0xf]
  %v704 = vld [vmem:[%s3 + $0x4bc] sm:$0xf]
  %v705 = vld [vmem:[%s3 + $0x4c0] sm:$0xf]
  %v706 = vld [vmem:[%s3 + $0x4c4] sm:$0xf]
  %v707 = vld [vmem:[%s3 + $0x4c8] sm:$0xf]
  %v708 = vld [vmem:[%s3 + $0x4cc] sm:$0xf]
  %v709 = vld [vmem:[%s3 + $0x4d0] sm:$0xf]
  %v710 = vld [vmem:[%s3 + $0x4d4] sm:$0xf]
  %v711 = vld [vmem:[%s3 + $0x4d8] sm:$0xf]
  %v712 = vld [vmem:[%s3 + $0x4dc] sm:$0xf]
  %v713 = vld [vmem:[%s3 + $0x4e0] sm:$0xf]
  %v714 = vld [vmem:[%s3 + $0x4e4] sm:$0xf]
  %v715 = vld [vmem:[%s3 + $0x4e8] sm:$0xf]
  %v716 = vld [vmem:[%s3 + $0x4ec] sm:$0xf]
  %v717 = vld [vmem:[%s3 + $0x4f0] sm:$0xf]
  %v718 = vld [vmem:[%s3 + $0x4f4] sm:$0xf]
  %v719 = vld [vmem:[%s3 + $0x4f8] sm:$0xf]
  %v720 = vld [vmem:[%s3 + $0x4fc] sm:$0xf]
  %v721 = vld [vmem:[%s3 + $0x500] sm:$0xf]
  %v722 = vld [vmem:[%s3 + $0x504] sm:$0xf]
  %v723 = vld [vmem:[%s3 + $0x508] sm:$0xf]
  %v724 = vld [vmem:[%s3 + $0x50c] sm:$0xf]
  %v725 = vld [vmem:[%s3 + $0x510] sm:$0xf]
  %v726 = vld [vmem:[%s3 + $0x514] sm:$0xf]
  %v727 = vld [vmem:[%s3 + $0x518] sm:$0xf]
  %v728 = vld [vmem:[%s3 + $0x51c] sm:$0xf]
  %v729 = vld [vmem:[%s3 + $0x520] sm:$0xf]
  %v730 = vld [vmem:[%s3 + $0x524] sm:$0xf]
  %v731 = vld [vmem:[%s3 + $0x528] sm:$0xf]
  %v732 = vld [vmem:[%s3 + $0x52c] sm:$0xf]
  %v733 = vld [vmem:[%s3 + $0x530] sm:$0xf]
  %v734 = vld [vmem:[%s3 + $0x534] sm:$0xf]
  %v735 = vld [vmem:[%s3 + $0x538] sm:$0xf]
  %v736 = vld [vmem:[%s3 + $0x53c] sm:$0xf]
  %v737 = vld [vmem:[%s3 + $0x540] sm:$0xf]
  %v738 = vld [vmem:[%s3 + $0x544] sm:$0xf]
  %v739 = vld [vmem:[%s3 + $0x548] sm:$0xf]
  %v740 = vld [vmem:[%s3 + $0x54c] sm:$0xf]
  %v741 = vld [vmem:[%s3 + $0x550] sm:$0xf]
  %v742 = vld [vmem:[%s3 + $0x554] sm:$0xf]
  %v743 = vld [vmem:[%s3 + $0x558] sm:$0xf]
  %v744 = vld [vmem:[%s3 + $0x55c] sm:$0xf]
  %v745 = vld [vmem:[%s3 + $0x560] sm:$0xf]
  %v746 = vld [vmem:[%s3 + $0x564] sm:$0xf]
  %v747 = vld [vmem:[%s3 + $0x568] sm:$0xf]
  %v748 = vld [vmem:[%s3 + $0x56c] sm:$0xf]
  %v749 = vld [vmem:[%s3 + $0x570] sm:$0xf]
  %v750 = vld [vmem:[%s3 + $0x574] sm:$0xf]
  %v751 = vld [vmem:[%s3 + $0x578] sm:$0xf]
  %v752 = vld [vmem:[%s3 + $0x57c] sm:$0xf]
  %v753 = vld [vmem:[%s3 + $0x580] sm:$0xf]
  %v754 = vld [vmem:[%s3 + $0x584] sm:$0xf]
  %v755 = vld [vmem:[%s3 + $0x588] sm:$0xf]
  %v756 = vld [vmem:[%s3 + $0x58c] sm:$0xf]
  %v757 = vld [vmem:[%s3 + $0x590] sm:$0xf]
  %v758 = vld [vmem:[%s3 + $0x594] sm:$0xf]
  %v759 = vld [vmem:[%s3 + $0x598] sm:$0xf]
  %v760 = vld [vmem:[%s3 + $0x59c] sm:$0xf]
  %v761 = vld [vmem:[%s3 + $0x5a0] sm:$0xf]
  %v762 = vld [vmem:[%s3 + $0x5a4] sm:$0xf]
  %v763 = vld [vmem:[%s3 + $0x5a8] sm:$0xf]
  %v764 = vld [vmem:[%s3 + $0x5ac] sm:$0xf]
  %v765 = vld [vmem:[%s3 + $0x5b0] sm:$0xf]
  %v766 = vld [vmem:[%s3 + $0x5b4] sm:$0xf]
  %v767 = vld [vmem:[%s3 + $0x5b8] sm:$0xf]
  %v768 = vld [vmem:[%s3 + $0x5bc] sm:$0xf]
  %v769 = vld [vmem:[%s3 + $0x5c0] sm:$0xf]
  %v770 = vld [vmem:[%s3 + $0x5c4] sm:$0xf]
  %v771 = vld [vmem:[%s3 + $0x5c8] sm:$0xf]
  %v772 = vld [vmem:[%s3 + $0x5cc] sm:$0xf]
  %v773 = vld [vmem:[%s3 + $0x5d0] sm:$0xf]
  %v774 = vld [vmem:[%s3 + $0x5d4] sm:$0xf]
  %v775 = vld [vmem:[%s3 + $0x5d8] sm:$0xf]
  %v776 = vld [vmem:[%s3 + $0x5dc] sm:$0xf]
  %v777 = vld [vmem:[%s3 + $0x5e0] sm:$0xf]
  %v778 = vld [vmem:[%s3 + $0x5e4] sm:$0xf]
  %v779 = vld [vmem:[%s3 + $0x5e8] sm:$0xf]
  %v780 = vld [vmem:[%s3 + $0x5ec] sm:$0xf]
  %v781 = vld [vmem:[%s3 + $0x5f0] sm:$0xf]
  %v782 = vld [vmem:[%s3 + $0x5f4] sm:$0xf]
  %v783 = vld [vmem:[%s3 + $0x5f8] sm:$0xf]
  %v784 = vld [vmem:[%s3 + $0x5fc] sm:$0xf]
  %v785 = vld [vmem:[%s3 + $0x600] sm:$0xf]
  %v786 = vld [vmem:[%s3 + $0x604] sm:$0xf]
  %v787 = vld [vmem:[%s3 + $0x608] sm:$0xf]
  %v788 = vld [vmem:[%s3 + $0x60c] sm:$0xf]
  %v789 = vld [vmem:[%s3 + $0x610] sm:$0xf]
  %v790 = vld [vmem:[%s3 + $0x614] sm:$0xf]
  %v791 = vld [vmem:[%s3 + $0x618] sm:$0xf]
  %v792 = vld [vmem:[%s3 + $0x61c] sm:$0xf]
  %v793 = vld [vmem:[%s3 + $0x620] sm:$0xf]
  %v794 = vld [vmem:[%s3 + $0x624] sm:$0xf]
  %v795 = vld [vmem:[%s3 + $0x628] sm:$0xf]
  %v796 = vld [vmem:[%s3 + $0x62c] sm:$0xf]
  %v797 = vld [vmem:[%s3 + $0x630] sm:$0xf]
  %v798 = vld [vmem:[%s3 + $0x634] sm:$0xf]
  %v799 = vld [vmem:[%s3 + $0x638] sm:$0xf]
  %v800 = vld [vmem:[%s3 + $0x63c] sm:$0xf]
  %v801 = vld [vmem:[%s3 + $0x640] sm:$0xf]
  %v802 = vld [vmem:[%s3 + $0x644] sm:$0xf]
  %v803 = vld [vmem:[%s3 + $0x648] sm:$0xf]
  %v804 = vld [vmem:[%s3 + $0x64c] sm:$0xf]
  %v805 = vld [vmem:[%s3 + $0x650] sm:$0xf]
  %v806 = vld [vmem:[%s3 + $0x654] sm:$0xf]
  %v807 = vld [vmem:[%s3 + $0x658] sm:$0xf]
  %v808 = vld [vmem:[%s3 + $0x65c] sm:$0xf]
  %v809 = vld [vmem:[%s3 + $0x660] sm:$0xf]
  %v810 = vld [vmem:[%s3 + $0x664] sm:$0xf]
  %v811 = vld [vmem:[%s3 + $0x668] sm:$0xf]
  %v812 = vld [vmem:[%s3 + $0x66c] sm:$0xf]
  %v813 = vld [vmem:[%s3 + $0x670] sm:$0xf]
  %v814 = vld [vmem:[%s3 + $0x674] sm:$0xf]
  %v815 = vld [vmem:[%s3 + $0x678] sm:$0xf]
  %v816 = vld [vmem:[%s3 + $0x67c] sm:$0xf]
  %v817 = vld [vmem:[%s3 + $0x680] sm:$0xf]
  %v818 = vld [vmem:[%s3 + $0x684] sm:$0xf]
  %v819 = vld [vmem:[%s3 + $0x688] sm:$0xf]
  %v820 = vld [vmem:[%s3 + $0x68c] sm:$0xf]
  %v821 = vld [vmem:[%s3 + $0x690] sm:$0xf]
  %v822 = vld [vmem:[%s3 + $0x694] sm:$0xf]
  %v823 = vld [vmem:[%s3 + $0x698] sm:$0xf]
  %v824 = vld [vmem:[%s3 + $0x69c] sm:$0xf]
  %v825 = vld [vmem:[%s3 + $0x6a0] sm:$0xf]
  %v826 = vld [vmem:[%s3 + $0x6a4] sm:$0xf]
  %v827 = vld [vmem:[%s3 + $0x6a8] sm:$0xf]
  %v828 = vld [vmem:[%s3 + $0x6ac] sm:$0xf]
  %v829 = vld [vmem:[%s3 + $0x6b0] sm:$0xf]
  %v830 = vld [vmem:[%s3 + $0x6b4] sm:$0xf]
  %v831 = vld [vmem:[%s3 + $0x6b8] sm:$0xf]
  %v832 = vld [vmem:[%s3 + $0x6bc] sm:$0xf]
  %v833 = vld [vmem:[%s3 + $0x6c0] sm:$0xf]
  %v834 = vld [vmem:[%s3 + $0x6c4] sm:$0xf]
  %v835 = vld [vmem:[%s3 + $0x6c8] sm:$0xf]
  %v836 = vld [vmem:[%s3 + $0x6cc] sm:$0xf]
  %v837 = vld [vmem:[%s3 + $0x6d0] sm:$0xf]
  %v838 = vld [vmem:[%s3 + $0x6d4] sm:$0xf]
  %v839 = vld [vmem:[%s3 + $0x6d8] sm:$0xf]
  %v840 = vld [vmem:[%s3 + $0x6dc] sm:$0xf]
  %v841 = vld [vmem:[%s3 + $0x6e0] sm:$0xf]
  %v842 = vld [vmem:[%s3 + $0x6e4] sm:$0xf]
  %v843 = vld [vmem:[%s3 + $0x6e8] sm:$0xf]
  %v844 = vld [vmem:[%s3 + $0x6ec] sm:$0xf]
  %v845 = vld [vmem:[%s3 + $0x6f0] sm:$0xf]
  %v846 = vld [vmem:[%s3 + $0x6f4] sm:$0xf]
  %v847 = vld [vmem:[%s3 + $0x6f8] sm:$0xf]
  %v848 = vld [vmem:[%s3 + $0x6fc] sm:$0xf]
  %v849 = vld [vmem:[%s3 + $0x700] sm:$0xf]
  %v850 = vld [vmem:[%s3 + $0x704] sm:$0xf]
  %v851 = vld [vmem:[%s3 + $0x708] sm:$0xf]
  %v852 = vld [vmem:[%s3 + $0x70c] sm:$0xf]
  %v853 = vld [vmem:[%s3 + $0x710] sm:$0xf]
  %v854 = vld [vmem:[%s3 + $0x714] sm:$0xf]
  %v855 = vld [vmem:[%s3 + $0x718] sm:$0xf]
  %v856 = vld [vmem:[%s3 + $0x71c] sm:$0xf]
  %v857 = vld [vmem:[%s3 + $0x720] sm:$0xf]
  %v858 = vld [vmem:[%s3 + $0x724] sm:$0xf]
  %v859 = vld [vmem:[%s3 + $0x728] sm:$0xf]
  %v860 = vld [vmem:[%s3 + $0x72c] sm:$0xf]
  %v861 = vld [vmem:[%s3 + $0x730] sm:$0xf]
  %v862 = vld [vmem:[%s3 + $0x734] sm:$0xf]
  %v863 = vld [vmem:[%s3 + $0x738] sm:$0xf]
  %v864 = vld [vmem:[%s3 + $0x73c] sm:$0xf]
  %v865 = vld [vmem:[%s3 + $0x740] sm:$0xf]
  %v866 = vld [vmem:[%s3 + $0x744] sm:$0xf]
  %v867 = vld [vmem:[%s3 + $0x748] sm:$0xf]
  %v868 = vld [vmem:[%s3 + $0x74c] sm:$0xf]
  %v869 = vld [vmem:[%s3 + $0x750] sm:$0xf]
  %v870 = vld [vmem:[%s3 + $0x754] sm:$0xf]
  %v871 = vld [vmem:[%s3 + $0x758] sm:$0xf]
  %v872 = vld [vmem:[%s3 + $0x75c] sm:$0xf]
  %v873 = vld [vmem:[%s3 + $0x760] sm:$0xf]
  %v874 = vld [vmem:[%s3 + $0x764] sm:$0xf]
  %v875 = vld [vmem:[%s3 + $0x768] sm:$0xf]
  %v876 = vld [vmem:[%s3 + $0x76c] sm:$0xf]
  %v877 = vld [vmem:[%s3 + $0x770] sm:$0xf]
  %v878 = vld [vmem:[%s3 + $0x774] sm:$0xf]
  %v879 = vld [vmem:[%s3 + $0x778] sm:$0xf]
  %v880 = vld [vmem:[%s3 + $0x77c] sm:$0xf]
  %v881 = vld [vmem:[%s3 + $0x780] sm:$0xf]
  %v882 = vld [vmem:[%s3 + $0x784] sm:$0xf]
  %v883 = vld [vmem:[%s3 + $0x788] sm:$0xf]
  %v884 = vld [vmem:[%s3 + $0x78c] sm:$0xf]
  %v885 = vld [vmem:[%s3 + $0x790] sm:$0xf]
  %v886 = vld [vmem:[%s3 + $0x794] sm:$0xf]
  %v887 = vld [vmem:[%s3 + $0x798] sm:$0xf]
  %v888 = vld [vmem:[%s3 + $0x79c] sm:$0xf]
  %v889 = vld [vmem:[%s3 + $0x7a0] sm:$0xf]
  %v890 = vld [vmem:[%s3 + $0x7a4] sm:$0xf]
  %v891 = vld [vmem:[%s3 + $0x7a8] sm:$0xf]
  %v892 = vld [vmem:[%s3 + $0x7ac] sm:$0xf]
  %v893 = vld [vmem:[%s3 + $0x7b0] sm:$0xf]
  %v894 = vld [vmem:[%s3 + $0x7b4] sm:$0xf]
  %v895 = vld [vmem:[%s3 + $0x7b8] sm:$0xf]
  %v896 = vld [vmem:[%s3 + $0x7bc] sm:$0xf]
  %v897 = vld [vmem:[%s3 + $0x7c0] sm:$0xf]
  %v898 = vld [vmem:[%s3 + $0x7c4] sm:$0xf]
  %v899 = vld [vmem:[%s3 + $0x7c8] sm:$0xf]
  %v900 = vld [vmem:[%s3 + $0x7cc] sm:$0xf]
  %v901 = vld [vmem:[%s3 + $0x7d0] sm:$0xf]
  %v902 = vld [vmem:[%s3 + $0x7d4] sm:$0xf]
  %v903 = vld [vmem:[%s3 + $0x7d8] sm:$0xf]
  %v904 = vld [vmem:[%s3 + $0x7dc] sm:$0xf]
  %v905 = vld [vmem:[%s3 + $0x7e0] sm:$0xf]
  %v906 = vld [vmem:[%s3 + $0x7e4] sm:$0xf]
  %v907 = vld [vmem:[%s3 + $0x7e8] sm:$0xf]
  %v908 = vld [vmem:[%s3 + $0x7ec] sm:$0xf]
  %v909 = vld [vmem:[%s3 + $0x7f0] sm:$0xf]
  %v910 = vld [vmem:[%s3 + $0x7f4] sm:$0xf]
  %v911 = vld [vmem:[%s3 + $0x7f8] sm:$0xf]
  %v912 = vld [vmem:[%s3 + $0x7fc] sm:$0xf]
  %v1425 = vunpack.c.l.b16 %v401
  %v1426 = vunpack.c.l.b16 %v402
  %v1427 = vunpack.c.l.b16 %v403
  %v1428 = vunpack.c.l.b16 %v404
  %v1429 = vunpack.c.l.b16 %v405
  %v1430 = vunpack.c.l.b16 %v406
  %v1431 = vunpack.c.l.b16 %v407
  %v1432 = vunpack.c.l.b16 %v408
  %v1433 = vunpack.c.l.b16 %v409
  %v1434 = vunpack.c.l.b16 %v410
  %v1435 = vunpack.c.l.b16 %v411
  %v1436 = vunpack.c.l.b16 %v412
  %v1437 = vunpack.c.l.b16 %v413
  %v1438 = vunpack.c.l.b16 %v414
  %v1439 = vunpack.c.l.b16 %v415
  %v1440 = vunpack.c.l.b16 %v416
  %v1441 = vunpack.c.l.b16 %v417
  %v1442 = vunpack.c.l.b16 %v418
  %v1443 = vunpack.c.l.b16 %v419
  %v1444 = vunpack.c.l.b16 %v420
  %v1445 = vunpack.c.l.b16 %v421
  %v1446 = vunpack.c.l.b16 %v422
  %v1447 = vunpack.c.l.b16 %v423
  %v1448 = vunpack.c.l.b16 %v424
  %v1449 = vunpack.c.l.b16 %v425
  %v1450 = vunpack.c.l.b16 %v426
  %v1451 = vunpack.c.l.b16 %v427
  %v1452 = vunpack.c.l.b16 %v428
  %v1453 = vunpack.c.l.b16 %v429
  %v1454 = vunpack.c.l.b16 %v430
  %v1455 = vunpack.c.l.b16 %v431
  %v1456 = vunpack.c.l.b16 %v432
  %v1457 = vunpack.c.l.b16 %v433
  %v1458 = vunpack.c.l.b16 %v434
  %v1459 = vunpack.c.l.b16 %v435
  %v1460 = vunpack.c.l.b16 %v436
  %v1461 = vunpack.c.l.b16 %v437
  %v1462 = vunpack.c.l.b16 %v438
  %v1463 = vunpack.c.l.b16 %v439
  %v1464 = vunpack.c.l.b16 %v440
  %v1465 = vunpack.c.l.b16 %v441
  %v1466 = vunpack.c.l.b16 %v442
  %v1467 = vunpack.c.l.b16 %v443
  %v1468 = vunpack.c.l.b16 %v444
  %v1469 = vunpack.c.l.b16 %v445
  %v1470 = vunpack.c.l.b16 %v446
  %v1471 = vunpack.c.l.b16 %v447
  %v1472 = vunpack.c.l.b16 %v448
  %v1473 = vunpack.c.l.b16 %v449
  %v1474 = vunpack.c.l.b16 %v450
  %v1475 = vunpack.c.l.b16 %v451
  %v1476 = vunpack.c.l.b16 %v452
  %v1477 = vunpack.c.l.b16 %v453
  %v1478 = vunpack.c.l.b16 %v454
  %v1479 = vunpack.c.l.b16 %v455
  %v1480 = vunpack.c.l.b16 %v456
  %v1481 = vunpack.c.l.b16 %v457
  %v1482 = vunpack.c.l.b16 %v458
  %v1483 = vunpack.c.l.b16 %v459
  %v1484 = vunpack.c.l.b16 %v460
  %v1485 = vunpack.c.l.b16 %v461
  %v1486 = vunpack.c.l.b16 %v462
  %v1487 = vunpack.c.l.b16 %v463
  %v1488 = vunpack.c.l.b16 %v464
  %v1489 = vunpack.c.l.b16 %v465
  %v1490 = vunpack.c.l.b16 %v466
  %v1491 = vunpack.c.l.b16 %v467
  %v1492 = vunpack.c.l.b16 %v468
  %v1493 = vunpack.c.l.b16 %v469
  %v1494 = vunpack.c.l.b16 %v470
  %v1495 = vunpack.c.l.b16 %v471
  %v1496 = vunpack.c.l.b16 %v472
  %v1497 = vunpack.c.l.b16 %v473
  %v1498 = vunpack.c.l.b16 %v474
  %v1499 = vunpack.c.l.b16 %v475
  %v1500 = vunpack.c.l.b16 %v476
  %v1501 = vunpack.c.l.b16 %v477
  %v1502 = vunpack.c.l.b16 %v478
  %v1503 = vunpack.c.l.b16 %v479
  %v1504 = vunpack.c.l.b16 %v480
  %v1505 = vunpack.c.l.b16 %v481
  %v1506 = vunpack.c.l.b16 %v482
  %v1507 = vunpack.c.l.b16 %v483
  %v1508 = vunpack.c.l.b16 %v484
  %v1509 = vunpack.c.l.b16 %v485
  %v1510 = vunpack.c.l.b16 %v486
  %v1511 = vunpack.c.l.b16 %v487
  %v1512 = vunpack.c.l.b16 %v488
  %v1513 = vunpack.c.l.b16 %v489
  %v1514 = vunpack.c.l.b16 %v490
  %v1515 = vunpack.c.l.b16 %v491
  %v1516 = vunpack.c.l.b16 %v492
  %v1517 = vunpack.c.l.b16 %v493
  %v1518 = vunpack.c.l.b16 %v494
  %v1519 = vunpack.c.l.b16 %v495
  %v1520 = vunpack.c.l.b16 %v496
  %v1521 = vunpack.c.l.b16 %v497
  %v1522 = vunpack.c.l.b16 %v498
  %v1523 = vunpack.c.l.b16 %v499
  %v1524 = vunpack.c.l.b16 %v500
  %v1525 = vunpack.c.l.b16 %v501
  %v1526 = vunpack.c.l.b16 %v502
  %v1527 = vunpack.c.l.b16 %v503
  %v1528 = vunpack.c.l.b16 %v504
  %v1529 = vunpack.c.l.b16 %v505
  %v1530 = vunpack.c.l.b16 %v506
  %v1531 = vunpack.c.l.b16 %v507
  %v1532 = vunpack.c.l.b16 %v508
  %v1533 = vunpack.c.l.b16 %v509
  %v1534 = vunpack.c.l.b16 %v510
  %v1535 = vunpack.c.l.b16 %v511
  %v1536 = vunpack.c.l.b16 %v512
  %v1537 = vunpack.c.l.b16 %v513
  %v1538 = vunpack.c.l.b16 %v514
  %v1539 = vunpack.c.l.b16 %v515
  %v1540 = vunpack.c.l.b16 %v516
  %v1541 = vunpack.c.l.b16 %v517
  %v1542 = vunpack.c.l.b16 %v518
  %v1543 = vunpack.c.l.b16 %v519
  %v1544 = vunpack.c.l.b16 %v520
  %v1545 = vunpack.c.l.b16 %v521
  %v1546 = vunpack.c.l.b16 %v522
  %v1547 = vunpack.c.l.b16 %v523
  %v1548 = vunpack.c.l.b16 %v524
  %v1549 = vunpack.c.l.b16 %v525
  %v1550 = vunpack.c.l.b16 %v526
  %v1551 = vunpack.c.l.b16 %v527
  %v1552 = vunpack.c.l.b16 %v528
  %v1553 = vunpack.c.l.b16 %v529
  %v1554 = vunpack.c.l.b16 %v530
  %v1555 = vunpack.c.l.b16 %v531
  %v1556 = vunpack.c.l.b16 %v532
  %v1557 = vunpack.c.l.b16 %v533
  %v1558 = vunpack.c.l.b16 %v534
  %v1559 = vunpack.c.l.b16 %v535
  %v1560 = vunpack.c.l.b16 %v536
  %v1561 = vunpack.c.l.b16 %v537
  %v1562 = vunpack.c.l.b16 %v538
  %v1563 = vunpack.c.l.b16 %v539
  %v1564 = vunpack.c.l.b16 %v540
  %v1565 = vunpack.c.l.b16 %v541
  %v1566 = vunpack.c.l.b16 %v542
  %v1567 = vunpack.c.l.b16 %v543
  %v1568 = vunpack.c.l.b16 %v544
  %v1569 = vunpack.c.l.b16 %v545
  %v1570 = vunpack.c.l.b16 %v546
  %v1571 = vunpack.c.l.b16 %v547
  %v1572 = vunpack.c.l.b16 %v548
  %v1573 = vunpack.c.l.b16 %v549
  %v1574 = vunpack.c.l.b16 %v550
  %v1575 = vunpack.c.l.b16 %v551
  %v1576 = vunpack.c.l.b16 %v552
  %v1577 = vunpack.c.l.b16 %v553
  %v1578 = vunpack.c.l.b16 %v554
  %v1579 = vunpack.c.l.b16 %v555
  %v1580 = vunpack.c.l.b16 %v556
  %v1581 = vunpack.c.l.b16 %v557
  %v1582 = vunpack.c.l.b16 %v558
  %v1583 = vunpack.c.l.b16 %v559
  %v1584 = vunpack.c.l.b16 %v560
  %v1585 = vunpack.c.l.b16 %v561
  %v1586 = vunpack.c.l.b16 %v562
  %v1587 = vunpack.c.l.b16 %v563
  %v1588 = vunpack.c.l.b16 %v564
  %v1589 = vunpack.c.l.b16 %v565
  %v1590 = vunpack.c.l.b16 %v566
  %v1591 = vunpack.c.l.b16 %v567
  %v1592 = vunpack.c.l.b16 %v568
  %v1593 = vunpack.c.l.b16 %v569
  %v1594 = vunpack.c.l.b16 %v570
  %v1595 = vunpack.c.l.b16 %v571
  %v1596 = vunpack.c.l.b16 %v572
  %v1597 = vunpack.c.l.b16 %v573
  %v1598 = vunpack.c.l.b16 %v574
  %v1599 = vunpack.c.l.b16 %v575
  %v1600 = vunpack.c.l.b16 %v576
  %v1601 = vunpack.c.l.b16 %v577
  %v1602 = vunpack.c.l.b16 %v578
  %v1603 = vunpack.c.l.b16 %v579
  %v1604 = vunpack.c.l.b16 %v580
  %v1605 = vunpack.c.l.b16 %v581
  %v1606 = vunpack.c.l.b16 %v582
  %v1607 = vunpack.c.l.b16 %v583
  %v1608 = vunpack.c.l.b16 %v584
  %v1609 = vunpack.c.l.b16 %v585
  %v1610 = vunpack.c.l.b16 %v586
  %v1611 = vunpack.c.l.b16 %v587
  %v1612 = vunpack.c.l.b16 %v588
  %v1613 = vunpack.c.l.b16 %v589
  %v1614 = vunpack.c.l.b16 %v590
  %v1615 = vunpack.c.l.b16 %v591
  %v1616 = vunpack.c.l.b16 %v592
  %v1617 = vunpack.c.l.b16 %v593
  %v1618 = vunpack.c.l.b16 %v594
  %v1619 = vunpack.c.l.b16 %v595
  %v1620 = vunpack.c.l.b16 %v596
  %v1621 = vunpack.c.l.b16 %v597
  %v1622 = vunpack.c.l.b16 %v598
  %v1623 = vunpack.c.l.b16 %v599
  %v1624 = vunpack.c.l.b16 %v600
  %v1625 = vunpack.c.l.b16 %v601
  %v1626 = vunpack.c.l.b16 %v602
  %v1627 = vunpack.c.l.b16 %v603
  %v1628 = vunpack.c.l.b16 %v604
  %v1629 = vunpack.c.l.b16 %v605
  %v1630 = vunpack.c.l.b16 %v606
  %v1631 = vunpack.c.l.b16 %v607
  %v1632 = vunpack.c.l.b16 %v608
  %v1633 = vunpack.c.l.b16 %v609
  %v1634 = vunpack.c.l.b16 %v610
  %v1635 = vunpack.c.l.b16 %v611
  %v1636 = vunpack.c.l.b16 %v612
  %v1637 = vunpack.c.l.b16 %v613
  %v1638 = vunpack.c.l.b16 %v614
  %v1639 = vunpack.c.l.b16 %v615
  %v1640 = vunpack.c.l.b16 %v616
  %v1641 = vunpack.c.l.b16 %v617
  %v1642 = vunpack.c.l.b16 %v618
  %v1643 = vunpack.c.l.b16 %v619
  %v1644 = vunpack.c.l.b16 %v620
  %v1645 = vunpack.c.l.b16 %v621
  %v1646 = vunpack.c.l.b16 %v622
  %v1647 = vunpack.c.l.b16 %v623
  %v1648 = vunpack.c.l.b16 %v624
  %v1649 = vunpack.c.l.b16 %v625
  %v1650 = vunpack.c.l.b16 %v626
  %v1651 = vunpack.c.l.b16 %v627
  %v1652 = vunpack.c.l.b16 %v628
  %v1653 = vunpack.c.l.b16 %v629
  %v1654 = vunpack.c.l.b16 %v630
  %v1655 = vunpack.c.l.b16 %v631
  %v1656 = vunpack.c.l.b16 %v632
  %v1657 = vunpack.c.l.b16 %v633
  %v1658 = vunpack.c.l.b16 %v634
  %v1659 = vunpack.c.l.b16 %v635
  %v1660 = vunpack.c.l.b16 %v636
  %v1661 = vunpack.c.l.b16 %v637
  %v1662 = vunpack.c.l.b16 %v638
  %v1663 = vunpack.c.l.b16 %v639
  %v1664 = vunpack.c.l.b16 %v640
  %v1665 = vunpack.c.l.b16 %v641
  %v1666 = vunpack.c.l.b16 %v642
  %v1667 = vunpack.c.l.b16 %v643
  %v1668 = vunpack.c.l.b16 %v644
  %v1669 = vunpack.c.l.b16 %v645
  %v1670 = vunpack.c.l.b16 %v646
  %v1671 = vunpack.c.l.b16 %v647
  %v1672 = vunpack.c.l.b16 %v648
  %v1673 = vunpack.c.l.b16 %v649
  %v1674 = vunpack.c.l.b16 %v650
  %v1675 = vunpack.c.l.b16 %v651
  %v1676 = vunpack.c.l.b16 %v652
  %v1677 = vunpack.c.l.b16 %v653
  %v1678 = vunpack.c.l.b16 %v654
  %v1679 = vunpack.c.l.b16 %v655
  %v1680 = vunpack.c.l.b16 %v656
  %v1681 = vunpack.c.l.b16 %v657
  %v1682 = vunpack.c.l.b16 %v658
  %v1683 = vunpack.c.l.b16 %v659
  %v1684 = vunpack.c.l.b16 %v660
  %v1685 = vunpack.c.l.b16 %v661
  %v1686 = vunpack.c.l.b16 %v662
  %v1687 = vunpack.c.l.b16 %v663
  %v1688 = vunpack.c.l.b16 %v664
  %v1689 = vunpack.c.l.b16 %v665
  %v1690 = vunpack.c.l.b16 %v666
  %v1691 = vunpack.c.l.b16 %v667
  %v1692 = vunpack.c.l.b16 %v668
  %v1693 = vunpack.c.l.b16 %v669
  %v1694 = vunpack.c.l.b16 %v670
  %v1695 = vunpack.c.l.b16 %v671
  %v1696 = vunpack.c.l.b16 %v672
  %v1697 = vunpack.c.l.b16 %v673
  %v1698 = vunpack.c.l.b16 %v674
  %v1699 = vunpack.c.l.b16 %v675
  %v1700 = vunpack.c.l.b16 %v676
  %v1701 = vunpack.c.l.b16 %v677
  %v1702 = vunpack.c.l.b16 %v678
  %v1703 = vunpack.c.l.b16 %v679
  %v1704 = vunpack.c.l.b16 %v680
  %v1705 = vunpack.c.l.b16 %v681
  %v1706 = vunpack.c.l.b16 %v682
  %v1707 = vunpack.c.l.b16 %v683
  %v1708 = vunpack.c.l.b16 %v684
  %v1709 = vunpack.c.l.b16 %v685
  %v1710 = vunpack.c.l.b16 %v686
  %v1711 = vunpack.c.l.b16 %v687
  %v1712 = vunpack.c.l.b16 %v688
  %v1713 = vunpack.c.l.b16 %v689
  %v1714 = vunpack.c.l.b16 %v690
  %v1715 = vunpack.c.l.b16 %v691
  %v1716 = vunpack.c.l.b16 %v692
  %v1717 = vunpack.c.l.b16 %v693
  %v1718 = vunpack.c.l.b16 %v694
  %v1719 = vunpack.c.l.b16 %v695
  %v1720 = vunpack.c.l.b16 %v696
  %v1721 = vunpack.c.l.b16 %v697
  %v1722 = vunpack.c.l.b16 %v698
  %v1723 = vunpack.c.l.b16 %v699
  %v1724 = vunpack.c.l.b16 %v700
  %v1725 = vunpack.c.l.b16 %v701
  %v1726 = vunpack.c.l.b16 %v702
  %v1727 = vunpack.c.l.b16 %v703
  %v1728 = vunpack.c.l.b16 %v704
  %v1729 = vunpack.c.l.b16 %v705
  %v1730 = vunpack.c.l.b16 %v706
  %v1731 = vunpack.c.l.b16 %v707
  %v1732 = vunpack.c.l.b16 %v708
  %v1733 = vunpack.c.l.b16 %v709
  %v1734 = vunpack.c.l.b16 %v710
  %v1735 = vunpack.c.l.b16 %v711
  %v1736 = vunpack.c.l.b16 %v712
  %v1737 = vunpack.c.l.b16 %v713
  %v1738 = vunpack.c.l.b16 %v714
  %v1739 = vunpack.c.l.b16 %v715
  %v1740 = vunpack.c.l.b16 %v716
  %v1741 = vunpack.c.l.b16 %v717
  %v1742 = vunpack.c.l.b16 %v718
  %v1743 = vunpack.c.l.b16 %v719
  %v1744 = vunpack.c.l.b16 %v720
  %v1745 = vunpack.c.l.b16 %v721
  %v1746 = vunpack.c.l.b16 %v722
  %v1747 = vunpack.c.l.b16 %v723
  %v1748 = vunpack.c.l.b16 %v724
  %v1749 = vunpack.c.l.b16 %v725
  %v1750 = vunpack.c.l.b16 %v726
  %v1751 = vunpack.c.l.b16 %v727
  %v1752 = vunpack.c.l.b16 %v728
  %v1753 = vunpack.c.l.b16 %v729
  %v1754 = vunpack.c.l.b16 %v730
  %v1755 = vunpack.c.l.b16 %v731
  %v1756 = vunpack.c.l.b16 %v732
  %v1757 = vunpack.c.l.b16 %v733
  %v1758 = vunpack.c.l.b16 %v734
  %v1759 = vunpack.c.l.b16 %v735
  %v1760 = vunpack.c.l.b16 %v736
  %v1761 = vunpack.c.l.b16 %v737
  %v1762 = vunpack.c.l.b16 %v738
  %v1763 = vunpack.c.l.b16 %v739
  %v1764 = vunpack.c.l.b16 %v740
  %v1765 = vunpack.c.l.b16 %v741
  %v1766 = vunpack.c.l.b16 %v742
  %v1767 = vunpack.c.l.b16 %v743
  %v1768 = vunpack.c.l.b16 %v744
  %v1769 = vunpack.c.l.b16 %v745
  %v1770 = vunpack.c.l.b16 %v746
  %v1771 = vunpack.c.l.b16 %v747
  %v1772 = vunpack.c.l.b16 %v748
  %v1773 = vunpack.c.l.b16 %v749
  %v1774 = vunpack.c.l.b16 %v750
  %v1775 = vunpack.c.l.b16 %v751
  %v1776 = vunpack.c.l.b16 %v752
  %v1777 = vunpack.c.l.b16 %v753
  %v1778 = vunpack.c.l.b16 %v754
  %v1779 = vunpack.c.l.b16 %v755
  %v1780 = vunpack.c.l.b16 %v756
  %v1781 = vunpack.c.l.b16 %v757
  %v1782 = vunpack.c.l.b16 %v758
  %v1783 = vunpack.c.l.b16 %v759
  %v1784 = vunpack.c.l.b16 %v760
  %v1785 = vunpack.c.l.b16 %v761
  %v1786 = vunpack.c.l.b16 %v762
  %v1787 = vunpack.c.l.b16 %v763
  %v1788 = vunpack.c.l.b16 %v764
  %v1789 = vunpack.c.l.b16 %v765
  %v1790 = vunpack.c.l.b16 %v766
  %v1791 = vunpack.c.l.b16 %v767
  %v1792 = vunpack.c.l.b16 %v768
  %v1793 = vunpack.c.l.b16 %v769
  %v1794 = vunpack.c.l.b16 %v770
  %v1795 = vunpack.c.l.b16 %v771
  %v1796 = vunpack.c.l.b16 %v772
  %v1797 = vunpack.c.l.b16 %v773
  %v1798 = vunpack.c.l.b16 %v774
  %v1799 = vunpack.c.l.b16 %v775
  %v1800 = vunpack.c.l.b16 %v776
  %v1801 = vunpack.c.l.b16 %v777
  %v1802 = vunpack.c.l.b16 %v778
  %v1803 = vunpack.c.l.b16 %v779
  %v1804 = vunpack.c.l.b16 %v780
  %v1805 = vunpack.c.l.b16 %v781
  %v1806 = vunpack.c.l.b16 %v782
  %v1807 = vunpack.c.l.b16 %v783
  %v1808 = vunpack.c.l.b16 %v784
  %v1809 = vunpack.c.l.b16 %v785
  %v1810 = vunpack.c.l.b16 %v786
  %v1811 = vunpack.c.l.b16 %v787
  %v1812 = vunpack.c.l.b16 %v788
  %v1813 = vunpack.c.l.b16 %v789
  %v1814 = vunpack.c.l.b16 %v790
  %v1815 = vunpack.c.l.b16 %v791
  %v1816 = vunpack.c.l.b16 %v792
  %v1817 = vunpack.c.l.b16 %v793
  %v1818 = vunpack.c.l.b16 %v794
  %v1819 = vunpack.c.l.b16 %v795
  %v1820 = vunpack.c.l.b16 %v796
  %v1821 = vunpack.c.l.b16 %v797
  %v1822 = vunpack.c.l.b16 %v798
  %v1823 = vunpack.c.l.b16 %v799
  %v1824 = vunpack.c.l.b16 %v800
  %v1825 = vunpack.c.l.b16 %v801
  %v1826 = vunpack.c.l.b16 %v802
  %v1827 = vunpack.c.l.b16 %v803
  %v1828 = vunpack.c.l.b16 %v804
  %v1829 = vunpack.c.l.b16 %v805
  %v1830 = vunpack.c.l.b16 %v806
  %v1831 = vunpack.c.l.b16 %v807
  %v1832 = vunpack.c.l.b16 %v808
  %v1833 = vunpack.c.l.b16 %v809
  %v1834 = vunpack.c.l.b16 %v810
  %v1835 = vunpack.c.l.b16 %v811
  %v1836 = vunpack.c.l.b16 %v812
  %v1837 = vunpack.c.l.b16 %v813
  %v1838 = vunpack.c.l.b16 %v814
  %v1839 = vunpack.c.l.b16 %v815
  %v1840 = vunpack.c.l.b16 %v816
  %v1841 = vunpack.c.l.b16 %v817
  %v1842 = vunpack.c.l.b16 %v818
  %v1843 = vunpack.c.l.b16 %v819
  %v1844 = vunpack.c.l.b16 %v820
  %v1845 = vunpack.c.l.b16 %v821
  %v1846 = vunpack.c.l.b16 %v822
  %v1847 = vunpack.c.l.b16 %v823
  %v1848 = vunpack.c.l.b16 %v824
  %v1849 = vunpack.c.l.b16 %v825
  %v1850 = vunpack.c.l.b16 %v826
  %v1851 = vunpack.c.l.b16 %v827
  %v1852 = vunpack.c.l.b16 %v828
  %v1853 = vunpack.c.l.b16 %v829
  %v1854 = vunpack.c.l.b16 %v830
  %v1855 = vunpack.c.l.b16 %v831
  %v1856 = vunpack.c.l.b16 %v832
  %v1857 = vunpack.c.l.b16 %v833
  %v1858 = vunpack.c.l.b16 %v834
  %v1859 = vunpack.c.l.b16 %v835
  %v1860 = vunpack.c.l.b16 %v836
  %v1861 = vunpack.c.l.b16 %v837
  %v1862 = vunpack.c.l.b16 %v838
  %v1863 = vunpack.c.l.b16 %v839
  %v1864 = vunpack.c.l.b16 %v840
  %v1865 = vunpack.c.l.b16 %v841
  %v1866 = vunpack.c.l.b16 %v842
  %v1867 = vunpack.c.l.b16 %v843
  %v1868 = vunpack.c.l.b16 %v844
  %v1869 = vunpack.c.l.b16 %v845
  %v1870 = vunpack.c.l.b16 %v846
  %v1871 = vunpack.c.l.b16 %v847
  %v1872 = vunpack.c.l.b16 %v848
  %v1873 = vunpack.c.l.b16 %v849
  %v1874 = vunpack.c.l.b16 %v850
  %v1875 = vunpack.c.l.b16 %v851
  %v1876 = vunpack.c.l.b16 %v852
  %v1877 = vunpack.c.l.b16 %v853
  %v1878 = vunpack.c.l.b16 %v854
  %v1879 = vunpack.c.l.b16 %v855
  %v1880 = vunpack.c.l.b16 %v856
  %v1881 = vunpack.c.l.b16 %v857
  %v1882 = vunpack.c.l.b16 %v858
  %v1883 = vunpack.c.l.b16 %v859
  %v1884 = vunpack.c.l.b16 %v860
  %v1885 = vunpack.c.l.b16 %v861
  %v1886 = vunpack.c.l.b16 %v862
  %v1887 = vunpack.c.l.b16 %v863
  %v1888 = vunpack.c.l.b16 %v864
  %v1889 = vunpack.c.l.b16 %v865
  %v1890 = vunpack.c.l.b16 %v866
  %v1891 = vunpack.c.l.b16 %v867
  %v1892 = vunpack.c.l.b16 %v868
  %v1893 = vunpack.c.l.b16 %v869
  %v1894 = vunpack.c.l.b16 %v870
  %v1895 = vunpack.c.l.b16 %v871
  %v1896 = vunpack.c.l.b16 %v872
  %v1897 = vunpack.c.l.b16 %v873
  %v1898 = vunpack.c.l.b16 %v874
  %v1899 = vunpack.c.l.b16 %v875
  %v1900 = vunpack.c.l.b16 %v876
  %v1901 = vunpack.c.l.b16 %v877
  %v1902 = vunpack.c.l.b16 %v878
  %v1903 = vunpack.c.l.b16 %v879
  %v1904 = vunpack.c.l.b16 %v880
  %v1905 = vunpack.c.l.b16 %v881
  %v1906 = vunpack.c.l.b16 %v882
  %v1907 = vunpack.c.l.b16 %v883
  %v1908 = vunpack.c.l.b16 %v884
  %v1909 = vunpack.c.l.b16 %v885
  %v1910 = vunpack.c.l.b16 %v886
  %v1911 = vunpack.c.l.b16 %v887
  %v1912 = vunpack.c.l.b16 %v888
  %v1913 = vunpack.c.l.b16 %v889
  %v1914 = vunpack.c.l.b16 %v890
  %v1915 = vunpack.c.l.b16 %v891
  %v1916 = vunpack.c.l.b16 %v892
  %v1917 = vunpack.c.l.b16 %v893
  %v1918 = vunpack.c.l.b16 %v894
  %v1919 = vunpack.c.l.b16 %v895
  %v1920 = vunpack.c.l.b16 %v896
  %v1921 = vunpack.c.l.b16 %v897
  %v1922 = vunpack.c.l.b16 %v898
  %v1923 = vunpack.c.l.b16 %v899
  %v1924 = vunpack.c.l.b16 %v900
  %v1925 = vunpack.c.l.b16 %v901
  %v1926 = vunpack.c.l.b16 %v902
  %v1927 = vunpack.c.l.b16 %v903
  %v1928 = vunpack.c.l.b16 %v904
  %v1929 = vunpack.c.l.b16 %v905
  %v1930 = vunpack.c.l.b16 %v906
  %v1931 = vunpack.c.l.b16 %v907
  %v1932 = vunpack.c.l.b16 %v908
  %v1933 = vunpack.c.l.b16 %v909
  %v1934 = vunpack.c.l.b16 %v910
  %v1935 = vunpack.c.l.b16 %v911
  %v1936 = vunpack.c.l.b16 %v912
  %v1937 = vpack.c.b16 %v1426, %v1425
  %v1938 = vpack.c.b16 %v1428, %v1427
  %v1939 = vpack.c.b16 %v1430, %v1429
  %v1940 = vpack.c.b16 %v1432, %v1431
  %v1941 = vpack.c.b16 %v1434, %v1433
  %v1942 = vpack.c.b16 %v1436, %v1435
  %v1943 = vpack.c.b16 %v1438, %v1437
  %v1944 = vpack.c.b16 %v1440, %v1439
  %v1945 = vpack.c.b16 %v1442, %v1441
  %v1946 = vpack.c.b16 %v1444, %v1443
  %v1947 = vpack.c.b16 %v1446, %v1445
  %v1948 = vpack.c.b16 %v1448, %v1447
  %v1949 = vpack.c.b16 %v1450, %v1449
  %v1950 = vpack.c.b16 %v1452, %v1451
  %v1951 = vpack.c.b16 %v1454, %v1453
  %v1952 = vpack.c.b16 %v1456, %v1455
  %v1953 = vpack.c.b16 %v1458, %v1457
  %v1954 = vpack.c.b16 %v1460, %v1459
  %v1955 = vpack.c.b16 %v1462, %v1461
  %v1956 = vpack.c.b16 %v1464, %v1463
  %v1957 = vpack.c.b16 %v1466, %v1465
  %v1958 = vpack.c.b16 %v1468, %v1467
  %v1959 = vpack.c.b16 %v1470, %v1469
  %v1960 = vpack.c.b16 %v1472, %v1471
  %v1961 = vpack.c.b16 %v1474, %v1473
  %v1962 = vpack.c.b16 %v1476, %v1475
  %v1963 = vpack.c.b16 %v1478, %v1477
  %v1964 = vpack.c.b16 %v1480, %v1479
  %v1965 = vpack.c.b16 %v1482, %v1481
  %v1966 = vpack.c.b16 %v1484, %v1483
  %v1967 = vpack.c.b16 %v1486, %v1485
  %v1968 = vpack.c.b16 %v1488, %v1487
  %v1969 = vpack.c.b16 %v1490, %v1489
  %v1970 = vpack.c.b16 %v1492, %v1491
  %v1971 = vpack.c.b16 %v1494, %v1493
  %v1972 = vpack.c.b16 %v1496, %v1495
  %v1973 = vpack.c.b16 %v1498, %v1497
  %v1974 = vpack.c.b16 %v1500, %v1499
  %v1975 = vpack.c.b16 %v1502, %v1501
  %v1976 = vpack.c.b16 %v1504, %v1503
  %v1977 = vpack.c.b16 %v1506, %v1505
  %v1978 = vpack.c.b16 %v1508, %v1507
  %v1979 = vpack.c.b16 %v1510, %v1509
  %v1980 = vpack.c.b16 %v1512, %v1511
  %v1981 = vpack.c.b16 %v1514, %v1513
  %v1982 = vpack.c.b16 %v1516, %v1515
  %v1983 = vpack.c.b16 %v1518, %v1517
  %v1984 = vpack.c.b16 %v1520, %v1519
  %v1985 = vpack.c.b16 %v1522, %v1521
  %v1986 = vpack.c.b16 %v1524, %v1523
  %v1987 = vpack.c.b16 %v1526, %v1525
  %v1988 = vpack.c.b16 %v1528, %v1527
  %v1989 = vpack.c.b16 %v1530, %v1529
  %v1990 = vpack.c.b16 %v1532, %v1531
  %v1991 = vpack.c.b16 %v1534, %v1533
  %v1992 = vpack.c.b16 %v1536, %v1535
  %v1993 = vpack.c.b16 %v1538, %v1537
  %v1994 = vpack.c.b16 %v1540, %v1539
  %v1995 = vpack.c.b16 %v1542, %v1541
  %v1996 = vpack.c.b16 %v1544, %v1543
  %v1997 = vpack.c.b16 %v1546, %v1545
  %v1998 = vpack.c.b16 %v1548, %v1547
  %v1999 = vpack.c.b16 %v1550, %v1549
  %v2000 = vpack.c.b16 %v1552, %v1551
  %v2001 = vpack.c.b16 %v1554, %v1553
  %v2002 = vpack.c.b16 %v1556, %v1555
  %v2003 = vpack.c.b16 %v1558, %v1557
  %v2004 = vpack.c.b16 %v1560, %v1559
  %v2005 = vpack.c.b16 %v1562, %v1561
  %v2006 = vpack.c.b16 %v1564, %v1563
  %v2007 = vpack.c.b16 %v1566, %v1565
  %v2008 = vpack.c.b16 %v1568, %v1567
  %v2009 = vpack.c.b16 %v1570, %v1569
  %v2010 = vpack.c.b16 %v1572, %v1571
  %v2011 = vpack.c.b16 %v1574, %v1573
  %v2012 = vpack.c.b16 %v1576, %v1575
  %v2013 = vpack.c.b16 %v1578, %v1577
  %v2014 = vpack.c.b16 %v1580, %v1579
  %v2015 = vpack.c.b16 %v1582, %v1581
  %v2016 = vpack.c.b16 %v1584, %v1583
  %v2017 = vpack.c.b16 %v1586, %v1585
  %v2018 = vpack.c.b16 %v1588, %v1587
  %v2019 = vpack.c.b16 %v1590, %v1589
  %v2020 = vpack.c.b16 %v1592, %v1591
  %v2021 = vpack.c.b16 %v1594, %v1593
  %v2022 = vpack.c.b16 %v1596, %v1595
  %v2023 = vpack.c.b16 %v1598, %v1597
  %v2024 = vpack.c.b16 %v1600, %v1599
  %v2025 = vpack.c.b16 %v1602, %v1601
  %v2026 = vpack.c.b16 %v1604, %v1603
  %v2027 = vpack.c.b16 %v1606, %v1605
  %v2028 = vpack.c.b16 %v1608, %v1607
  %v2029 = vpack.c.b16 %v1610, %v1609
  %v2030 = vpack.c.b16 %v1612, %v1611
  %v2031 = vpack.c.b16 %v1614, %v1613
  %v2032 = vpack.c.b16 %v1616, %v1615
  %v2033 = vpack.c.b16 %v1618, %v1617
  %v2034 = vpack.c.b16 %v1620, %v1619
  %v2035 = vpack.c.b16 %v1622, %v1621
  %v2036 = vpack.c.b16 %v1624, %v1623
  %v2037 = vpack.c.b16 %v1626, %v1625
  %v2038 = vpack.c.b16 %v1628, %v1627
  %v2039 = vpack.c.b16 %v1630, %v1629
  %v2040 = vpack.c.b16 %v1632, %v1631
  %v2041 = vpack.c.b16 %v1634, %v1633
  %v2042 = vpack.c.b16 %v1636, %v1635
  %v2043 = vpack.c.b16 %v1638, %v1637
  %v2044 = vpack.c.b16 %v1640, %v1639
  %v2045 = vpack.c.b16 %v1642, %v1641
  %v2046 = vpack.c.b16 %v1644, %v1643
  %v2047 = vpack.c.b16 %v1646, %v1645
  %v2048 = vpack.c.b16 %v1648, %v1647
  %v2049 = vpack.c.b16 %v1650, %v1649
  %v2050 = vpack.c.b16 %v1652, %v1651
  %v2051 = vpack.c.b16 %v1654, %v1653
  %v2052 = vpack.c.b16 %v1656, %v1655
  %v2053 = vpack.c.b16 %v1658, %v1657
  %v2054 = vpack.c.b16 %v1660, %v1659
  %v2055 = vpack.c.b16 %v1662, %v1661
  %v2056 = vpack.c.b16 %v1664, %v1663
  %v2057 = vpack.c.b16 %v1666, %v1665
  %v2058 = vpack.c.b16 %v1668, %v1667
  %v2059 = vpack.c.b16 %v1670, %v1669
  %v2060 = vpack.c.b16 %v1672, %v1671
  %v2061 = vpack.c.b16 %v1674, %v1673
  %v2062 = vpack.c.b16 %v1676, %v1675
  %v2063 = vpack.c.b16 %v1678, %v1677
  %v2064 = vpack.c.b16 %v1680, %v1679
  %v2065 = vpack.c.b16 %v1682, %v1681
  %v2066 = vpack.c.b16 %v1684, %v1683
  %v2067 = vpack.c.b16 %v1686, %v1685
  %v2068 = vpack.c.b16 %v1688, %v1687
  %v2069 = vpack.c.b16 %v1690, %v1689
  %v2070 = vpack.c.b16 %v1692, %v1691
  %v2071 = vpack.c.b16 %v1694, %v1693
  %v2072 = vpack.c.b16 %v1696, %v1695
  %v2073 = vpack.c.b16 %v1698, %v1697
  %v2074 = vpack.c.b16 %v1700, %v1699
  %v2075 = vpack.c.b16 %v1702, %v1701
  %v2076 = vpack.c.b16 %v1704, %v1703
  %v2077 = vpack.c.b16 %v1706, %v1705
  %v2078 = vpack.c.b16 %v1708, %v1707
  %v2079 = vpack.c.b16 %v1710, %v1709
  %v2080 = vpack.c.b16 %v1712, %v1711
  %v2081 = vpack.c.b16 %v1714, %v1713
  %v2082 = vpack.c.b16 %v1716, %v1715
  %v2083 = vpack.c.b16 %v1718, %v1717
  %v2084 = vpack.c.b16 %v1720, %v1719
  %v2085 = vpack.c.b16 %v1722, %v1721
  %v2086 = vpack.c.b16 %v1724, %v1723
  %v2087 = vpack.c.b16 %v1726, %v1725
  %v2088 = vpack.c.b16 %v1728, %v1727
  %v2089 = vpack.c.b16 %v1730, %v1729
  %v2090 = vpack.c.b16 %v1732, %v1731
  %v2091 = vpack.c.b16 %v1734, %v1733
  %v2092 = vpack.c.b16 %v1736, %v1735
  %v2093 = vpack.c.b16 %v1738, %v1737
  %v2094 = vpack.c.b16 %v1740, %v1739
  %v2095 = vpack.c.b16 %v1742, %v1741
  %v2096 = vpack.c.b16 %v1744, %v1743
  %v2097 = vpack.c.b16 %v1746, %v1745
  %v2098 = vpack.c.b16 %v1748, %v1747
  %v2099 = vpack.c.b16 %v1750, %v1749
  %v2100 = vpack.c.b16 %v1752, %v1751
  %v2101 = vpack.c.b16 %v1754, %v1753
  %v2102 = vpack.c.b16 %v1756, %v1755
  %v2103 = vpack.c.b16 %v1758, %v1757
  %v2104 = vpack.c.b16 %v1760, %v1759
  %v2105 = vpack.c.b16 %v1762, %v1761
  %v2106 = vpack.c.b16 %v1764, %v1763
  %v2107 = vpack.c.b16 %v1766, %v1765
  %v2108 = vpack.c.b16 %v1768, %v1767
  %v2109 = vpack.c.b16 %v1770, %v1769
  %v2110 = vpack.c.b16 %v1772, %v1771
  %v2111 = vpack.c.b16 %v1774, %v1773
  %v2112 = vpack.c.b16 %v1776, %v1775
  %v2113 = vpack.c.b16 %v1778, %v1777
  %v2114 = vpack.c.b16 %v1780, %v1779
  %v2115 = vpack.c.b16 %v1782, %v1781
  %v2116 = vpack.c.b16 %v1784, %v1783
  %v2117 = vpack.c.b16 %v1786, %v1785
  %v2118 = vpack.c.b16 %v1788, %v1787
  %v2119 = vpack.c.b16 %v1790, %v1789
  %v2120 = vpack.c.b16 %v1792, %v1791
  %v2121 = vpack.c.b16 %v1794, %v1793
  %v2122 = vpack.c.b16 %v1796, %v1795
  %v2123 = vpack.c.b16 %v1798, %v1797
  %v2124 = vpack.c.b16 %v1800, %v1799
  %v2125 = vpack.c.b16 %v1802, %v1801
  %v2126 = vpack.c.b16 %v1804, %v1803
  %v2127 = vpack.c.b16 %v1806, %v1805
  %v2128 = vpack.c.b16 %v1808, %v1807
  %v2129 = vpack.c.b16 %v1810, %v1809
  %v2130 = vpack.c.b16 %v1812, %v1811
  %v2131 = vpack.c.b16 %v1814, %v1813
  %v2132 = vpack.c.b16 %v1816, %v1815
  %v2133 = vpack.c.b16 %v1818, %v1817
  %v2134 = vpack.c.b16 %v1820, %v1819
  %v2135 = vpack.c.b16 %v1822, %v1821
  %v2136 = vpack.c.b16 %v1824, %v1823
  %v2137 = vpack.c.b16 %v1826, %v1825
  %v2138 = vpack.c.b16 %v1828, %v1827
  %v2139 = vpack.c.b16 %v1830, %v1829
  %v2140 = vpack.c.b16 %v1832, %v1831
  %v2141 = vpack.c.b16 %v1834, %v1833
  %v2142 = vpack.c.b16 %v1836, %v1835
  %v2143 = vpack.c.b16 %v1838, %v1837
  %v2144 = vpack.c.b16 %v1840, %v1839
  %v2145 = vpack.c.b16 %v1842, %v1841
  %v2146 = vpack.c.b16 %v1844, %v1843
  %v2147 = vpack.c.b16 %v1846, %v1845
  %v2148 = vpack.c.b16 %v1848, %v1847
  %v2149 = vpack.c.b16 %v1850, %v1849
  %v2150 = vpack.c.b16 %v1852, %v1851
  %v2151 = vpack.c.b16 %v1854, %v1853
  %v2152 = vpack.c.b16 %v1856, %v1855
  %v2153 = vpack.c.b16 %v1858, %v1857
  %v2154 = vpack.c.b16 %v1860, %v1859
  %v2155 = vpack.c.b16 %v1862, %v1861
  %v2156 = vpack.c.b16 %v1864, %v1863
  %v2157 = vpack.c.b16 %v1866, %v1865
  %v2158 = vpack.c.b16 %v1868, %v1867
  %v2159 = vpack.c.b16 %v1870, %v1869
  %v2160 = vpack.c.b16 %v1872, %v1871
  %v2161 = vpack.c.b16 %v1874, %v1873
  %v2162 = vpack.c.b16 %v1876, %v1875
  %v2163 = vpack.c.b16 %v1878, %v1877
  %v2164 = vpack.c.b16 %v1880, %v1879
  %v2165 = vpack.c.b16 %v1882, %v1881
  %v2166 = vpack.c.b16 %v1884, %v1883
  %v2167 = vpack.c.b16 %v1886, %v1885
  %v2168 = vpack.c.b16 %v1888, %v1887
  %v2169 = vpack.c.b16 %v1890, %v1889
  %v2170 = vpack.c.b16 %v1892, %v1891
  %v2171 = vpack.c.b16 %v1894, %v1893
  %v2172 = vpack.c.b16 %v1896, %v1895
  %v2173 = vpack.c.b16 %v1898, %v1897
  %v2174 = vpack.c.b16 %v1900, %v1899
  %v2175 = vpack.c.b16 %v1902, %v1901
  %v2176 = vpack.c.b16 %v1904, %v1903
  %v2177 = vpack.c.b16 %v1906, %v1905
  %v2178 = vpack.c.b16 %v1908, %v1907
  %v2179 = vpack.c.b16 %v1910, %v1909
  %v2180 = vpack.c.b16 %v1912, %v1911
  %v2181 = vpack.c.b16 %v1914, %v1913
  %v2182 = vpack.c.b16 %v1916, %v1915
  %v2183 = vpack.c.b16 %v1918, %v1917
  %v2184 = vpack.c.b16 %v1920, %v1919
  %v2185 = vpack.c.b16 %v1922, %v1921
  %v2186 = vpack.c.b16 %v1924, %v1923
  %v2187 = vpack.c.b16 %v1926, %v1925
  %v2188 = vpack.c.b16 %v1928, %v1927
  %v2189 = vpack.c.b16 %v1930, %v1929
  %v2190 = vpack.c.b16 %v1932, %v1931
  %v2191 = vpack.c.b16 %v1934, %v1933
  %v2192 = vpack.c.b16 %v1936, %v1935
  %2449 = vmatpush.bf16.msra.mxu0 %v1944
  %2450 = vmatpush.bf16.msra.mxu0 %v1943
  %2451 = vmatpush.bf16.msra.mxu0 %v1942
  %2452 = vmatpush.bf16.msra.mxu0 %v1941
  %2453 = vmatpush.bf16.msra.mxu0 %v1940
  %2454 = vmatpush.bf16.msra.mxu0 %v1939
  %2455 = vmatpush.bf16.msra.mxu0 %v1938
  %2456 = vmatpush.bf16.msra.mxu0 %v1937
  %2457 = vmatmul.bf16.gmra.mxu0 %v369
  %v2458 = vpop.f32.mrf.mxu0
  %v2459 = vadd.f32 0.0, %v2458
  %v2460 = vpop.f32.mrf.mxu0
  %2461 = vdwg.mxu0
  %2462 = vmatpush.bf16.msra.mxu0 %v1952
  %2463 = vmatpush.bf16.msra.mxu0 %v1951
  %2464 = vmatpush.bf16.msra.mxu0 %v1950
  %2465 = vmatpush.bf16.msra.mxu0 %v1949
  %2466 = vmatpush.bf16.msra.mxu0 %v1948
  %2467 = vmatpush.bf16.msra.mxu0 %v1947
  %2468 = vmatpush.bf16.msra.mxu0 %v1946
  %2469 = vmatpush.bf16.msra.mxu0 %v1945
  %2470 = vmatmul.bf16.gmra.mxu0 %v370
  %v2471 = vpop.f32.mrf.mxu0
  %v2472 = vadd.f32 %v2459, %v2471
  %v2473 = vpop.f32.mrf.mxu0
  %2474 = vdwg.mxu0
  %2475 = vmatpush.bf16.msra.mxu0 %v1960
  %2476 = vmatpush.bf16.msra.mxu0 %v1959
  %2477 = vmatpush.bf16.msra.mxu0 %v1958
  %2478 = vmatpush.bf16.msra.mxu0 %v1957
  %2479 = vmatpush.bf16.msra.mxu0 %v1956
  %2480 = vmatpush.bf16.msra.mxu0 %v1955
  %2481 = vmatpush.bf16.msra.mxu0 %v1954
  %2482 = vmatpush.bf16.msra.mxu0 %v1953
  %2483 = vmatmul.bf16.gmra.mxu0 %v371
  %v2484 = vpop.f32.mrf.mxu0
  %v2485 = vadd.f32 %v2472, %v2484
  %v2486 = vpop.f32.mrf.mxu0
  %2487 = vdwg.mxu0
  %2488 = vmatpush.bf16.msra.mxu0 %v1968
  %2489 = vmatpush.bf16.msra.mxu0 %v1967
  %2490 = vmatpush.bf16.msra.mxu0 %v1966
  %2491 = vmatpush.bf16.msra.mxu0 %v1965
  %2492 = vmatpush.bf16.msra.mxu0 %v1964
  %2493 = vmatpush.bf16.msra.mxu0 %v1963
  %2494 = vmatpush.bf16.msra.mxu0 %v1962
  %2495 = vmatpush.bf16.msra.mxu0 %v1961
  %2496 = vmatmul.bf16.gmra.mxu0 %v372
  %v2497 = vpop.f32.mrf.mxu0
  %v2498 = vadd.f32 %v2485, %v2497
  %v2499 = vpop.f32.mrf.mxu0
  %2500 = vdwg.mxu0
  %2501 = vmatpush.bf16.msra.mxu0 %v1976
  %2502 = vmatpush.bf16.msra.mxu0 %v1975
  %2503 = vmatpush.bf16.msra.mxu0 %v1974
  %2504 = vmatpush.bf16.msra.mxu0 %v1973
  %2505 = vmatpush.bf16.msra.mxu0 %v1972
  %2506 = vmatpush.bf16.msra.mxu0 %v1971
  %2507 = vmatpush.bf16.msra.mxu0 %v1970
  %2508 = vmatpush.bf16.msra.mxu0 %v1969
  %2509 = vmatmul.bf16.gmra.mxu0 %v373
  %v2510 = vpop.f32.mrf.mxu0
  %v2511 = vadd.f32 %v2498, %v2510
  %v2512 = vpop.f32.mrf.mxu0
  %2513 = vdwg.mxu0
  %2514 = vmatpush.bf16.msra.mxu0 %v1984
  %2515 = vmatpush.bf16.msra.mxu0 %v1983
  %2516 = vmatpush.bf16.msra.mxu0 %v1982
  %2517 = vmatpush.bf16.msra.mxu0 %v1981
  %2518 = vmatpush.bf16.msra.mxu0 %v1980
  %2519 = vmatpush.bf16.msra.mxu0 %v1979
  %2520 = vmatpush.bf16.msra.mxu0 %v1978
  %2521 = vmatpush.bf16.msra.mxu0 %v1977
  %2522 = vmatmul.bf16.gmra.mxu0 %v374
  %v2523 = vpop.f32.mrf.mxu0
  %v2524 = vadd.f32 %v2511, %v2523
  %v2525 = vpop.f32.mrf.mxu0
  %2526 = vdwg.mxu0
  %2527 = vmatpush.bf16.msra.mxu0 %v1992
  %2528 = vmatpush.bf16.msra.mxu0 %v1991
  %2529 = vmatpush.bf16.msra.mxu0 %v1990
  %2530 = vmatpush.bf16.msra.mxu0 %v1989
  %2531 = vmatpush.bf16.msra.mxu0 %v1988
  %2532 = vmatpush.bf16.msra.mxu0 %v1987
  %2533 = vmatpush.bf16.msra.mxu0 %v1986
  %2534 = vmatpush.bf16.msra.mxu0 %v1985
  %2535 = vmatmul.bf16.gmra.mxu0 %v375
  %v2536 = vpop.f32.mrf.mxu0
  %v2537 = vadd.f32 %v2524, %v2536
  %v2538 = vpop.f32.mrf.mxu0
  %2539 = vdwg.mxu0
  %2540 = vmatpush.bf16.msra.mxu0 %v2000
  %2541 = vmatpush.bf16.msra.mxu0 %v1999
  %2542 = vmatpush.bf16.msra.mxu0 %v1998
  %2543 = vmatpush.bf16.msra.mxu0 %v1997
  %2544 = vmatpush.bf16.msra.mxu0 %v1996
  %2545 = vmatpush.bf16.msra.mxu0 %v1995
  %2546 = vmatpush.bf16.msra.mxu0 %v1994
  %2547 = vmatpush.bf16.msra.mxu0 %v1993
  %2548 = vmatmul.bf16.gmra.mxu0 %v376
  %v2549 = vpop.f32.mrf.mxu0
  %v2550 = vadd.f32 %v2537, %v2549
  %v2551 = vpop.f32.mrf.mxu0
  %2552 = vdwg.mxu0
  %2553 = vmatpush.bf16.msra.mxu0 %v2008
  %2554 = vmatpush.bf16.msra.mxu0 %v2007
  %2555 = vmatpush.bf16.msra.mxu0 %v2006
  %2556 = vmatpush.bf16.msra.mxu0 %v2005
  %2557 = vmatpush.bf16.msra.mxu0 %v2004
  %2558 = vmatpush.bf16.msra.mxu0 %v2003
  %2559 = vmatpush.bf16.msra.mxu0 %v2002
  %2560 = vmatpush.bf16.msra.mxu0 %v2001
  %2561 = vmatmul.bf16.gmra.mxu0 %v377
  %v2562 = vpop.f32.mrf.mxu0
  %v2563 = vadd.f32 %v2550, %v2562
  %v2564 = vpop.f32.mrf.mxu0
  %2565 = vdwg.mxu0
  %2566 = vmatpush.bf16.msra.mxu0 %v2016
  %2567 = vmatpush.bf16.msra.mxu0 %v2015
  %2568 = vmatpush.bf16.msra.mxu0 %v2014
  %2569 = vmatpush.bf16.msra.mxu0 %v2013
  %2570 = vmatpush.bf16.msra.mxu0 %v2012
  %2571 = vmatpush.bf16.msra.mxu0 %v2011
  %2572 = vmatpush.bf16.msra.mxu0 %v2010
  %2573 = vmatpush.bf16.msra.mxu0 %v2009
  %2574 = vmatmul.bf16.gmra.mxu0 %v378
  %v2575 = vpop.f32.mrf.mxu0
  %v2576 = vadd.f32 %v2563, %v2575
  %v2577 = vpop.f32.mrf.mxu0
  %2578 = vdwg.mxu0
  %2579 = vmatpush.bf16.msra.mxu0 %v2024
  %2580 = vmatpush.bf16.msra.mxu0 %v2023
  %2581 = vmatpush.bf16.msra.mxu0 %v2022
  %2582 = vmatpush.bf16.msra.mxu0 %v2021
  %2583 = vmatpush.bf16.msra.mxu0 %v2020
  %2584 = vmatpush.bf16.msra.mxu0 %v2019
  %2585 = vmatpush.bf16.msra.mxu0 %v2018
  %2586 = vmatpush.bf16.msra.mxu0 %v2017
  %2587 = vmatmul.bf16.gmra.mxu0 %v379
  %v2588 = vpop.f32.mrf.mxu0
  %v2589 = vadd.f32 %v2576, %v2588
  %v2590 = vpop.f32.mrf.mxu0
  %2591 = vdwg.mxu0
  %2592 = vmatpush.bf16.msra.mxu0 %v2032
  %2593 = vmatpush.bf16.msra.mxu0 %v2031
  %2594 = vmatpush.bf16.msra.mxu0 %v2030
  %2595 = vmatpush.bf16.msra.mxu0 %v2029
  %2596 = vmatpush.bf16.msra.mxu0 %v2028
  %2597 = vmatpush.bf16.msra.mxu0 %v2027
  %2598 = vmatpush.bf16.msra.mxu0 %v2026
  %2599 = vmatpush.bf16.msra.mxu0 %v2025
  %2600 = vmatmul.bf16.gmra.mxu0 %v380
  %v2601 = vpop.f32.mrf.mxu0
  %v2602 = vadd.f32 %v2589, %v2601
  %v2603 = vpop.f32.mrf.mxu0
  %2604 = vdwg.mxu0
  %2605 = vmatpush.bf16.msra.mxu0 %v2040
  %2606 = vmatpush.bf16.msra.mxu0 %v2039
  %2607 = vmatpush.bf16.msra.mxu0 %v2038
  %2608 = vmatpush.bf16.msra.mxu0 %v2037
  %2609 = vmatpush.bf16.msra.mxu0 %v2036
  %2610 = vmatpush.bf16.msra.mxu0 %v2035
  %2611 = vmatpush.bf16.msra.mxu0 %v2034
  %2612 = vmatpush.bf16.msra.mxu0 %v2033
  %2613 = vmatmul.bf16.gmra.mxu0 %v381
  %v2614 = vpop.f32.mrf.mxu0
  %v2615 = vadd.f32 %v2602, %v2614
  %v2616 = vpop.f32.mrf.mxu0
  %2617 = vdwg.mxu0
  %2618 = vmatpush.bf16.msra.mxu0 %v2048
  %2619 = vmatpush.bf16.msra.mxu0 %v2047
  %2620 = vmatpush.bf16.msra.mxu0 %v2046
  %2621 = vmatpush.bf16.msra.mxu0 %v2045
  %2622 = vmatpush.bf16.msra.mxu0 %v2044
  %2623 = vmatpush.bf16.msra.mxu0 %v2043
  %2624 = vmatpush.bf16.msra.mxu0 %v2042
  %2625 = vmatpush.bf16.msra.mxu0 %v2041
  %2626 = vmatmul.bf16.gmra.mxu0 %v382
  %v2627 = vpop.f32.mrf.mxu0
  %v2628 = vadd.f32 %v2615, %v2627
  %v2629 = vpop.f32.mrf.mxu0
  %2630 = vdwg.mxu0
  %2631 = vmatpush.bf16.msra.mxu0 %v2056
  %2632 = vmatpush.bf16.msra.mxu0 %v2055
  %2633 = vmatpush.bf16.msra.mxu0 %v2054
  %2634 = vmatpush.bf16.msra.mxu0 %v2053
  %2635 = vmatpush.bf16.msra.mxu0 %v2052
  %2636 = vmatpush.bf16.msra.mxu0 %v2051
  %2637 = vmatpush.bf16.msra.mxu0 %v2050
  %2638 = vmatpush.bf16.msra.mxu0 %v2049
  %2639 = vmatmul.bf16.gmra.mxu0 %v383
  %v2640 = vpop.f32.mrf.mxu0
  %v2641 = vadd.f32 %v2628, %v2640
  %v2642 = vpop.f32.mrf.mxu0
  %2643 = vdwg.mxu0
  %2644 = vmatpush.bf16.msra.mxu0 %v2064
  %2645 = vmatpush.bf16.msra.mxu0 %v2063
  %2646 = vmatpush.bf16.msra.mxu0 %v2062
  %2647 = vmatpush.bf16.msra.mxu0 %v2061
  %2648 = vmatpush.bf16.msra.mxu0 %v2060
  %2649 = vmatpush.bf16.msra.mxu0 %v2059
  %2650 = vmatpush.bf16.msra.mxu0 %v2058
  %2651 = vmatpush.bf16.msra.mxu0 %v2057
  %2652 = vmatmul.bf16.gmra.mxu0 %v384
  %v2653 = vpop.f32.mrf.mxu0
  %v2654 = vadd.f32 %v2641, %v2653
  %v2655 = vpop.f32.mrf.mxu0
  %2656 = vdwg.mxu0
  %2657 = vmatpush.bf16.msra.mxu0 %v2072
  %2658 = vmatpush.bf16.msra.mxu0 %v2071
  %2659 = vmatpush.bf16.msra.mxu0 %v2070
  %2660 = vmatpush.bf16.msra.mxu0 %v2069
  %2661 = vmatpush.bf16.msra.mxu0 %v2068
  %2662 = vmatpush.bf16.msra.mxu0 %v2067
  %2663 = vmatpush.bf16.msra.mxu0 %v2066
  %2664 = vmatpush.bf16.msra.mxu0 %v2065
  %2665 = vmatmul.bf16.gmra.mxu0 %v385
  %v2666 = vpop.f32.mrf.mxu0
  %v2667 = vadd.f32 %v2654, %v2666
  %v2668 = vpop.f32.mrf.mxu0
  %2669 = vdwg.mxu0
  %2670 = vmatpush.bf16.msra.mxu0 %v2080
  %2671 = vmatpush.bf16.msra.mxu0 %v2079
  %2672 = vmatpush.bf16.msra.mxu0 %v2078
  %2673 = vmatpush.bf16.msra.mxu0 %v2077
  %2674 = vmatpush.bf16.msra.mxu0 %v2076
  %2675 = vmatpush.bf16.msra.mxu0 %v2075
  %2676 = vmatpush.bf16.msra.mxu0 %v2074
  %2677 = vmatpush.bf16.msra.mxu0 %v2073
  %2678 = vmatmul.bf16.gmra.mxu0 %v386
  %v2679 = vpop.f32.mrf.mxu0
  %v2680 = vadd.f32 %v2667, %v2679
  %v2681 = vpop.f32.mrf.mxu0
  %2682 = vdwg.mxu0
  %2683 = vmatpush.bf16.msra.mxu0 %v2088
  %2684 = vmatpush.bf16.msra.mxu0 %v2087
  %2685 = vmatpush.bf16.msra.mxu0 %v2086
  %2686 = vmatpush.bf16.msra.mxu0 %v2085
  %2687 = vmatpush.bf16.msra.mxu0 %v2084
  %2688 = vmatpush.bf16.msra.mxu0 %v2083
  %2689 = vmatpush.bf16.msra.mxu0 %v2082
  %2690 = vmatpush.bf16.msra.mxu0 %v2081
  %2691 = vmatmul.bf16.gmra.mxu0 %v387
  %v2692 = vpop.f32.mrf.mxu0
  %v2693 = vadd.f32 %v2680, %v2692
  %v2694 = vpop.f32.mrf.mxu0
  %2695 = vdwg.mxu0
  %2696 = vmatpush.bf16.msra.mxu0 %v2096
  %2697 = vmatpush.bf16.msra.mxu0 %v2095
  %2698 = vmatpush.bf16.msra.mxu0 %v2094
  %2699 = vmatpush.bf16.msra.mxu0 %v2093
  %2700 = vmatpush.bf16.msra.mxu0 %v2092
  %2701 = vmatpush.bf16.msra.mxu0 %v2091
  %2702 = vmatpush.bf16.msra.mxu0 %v2090
  %2703 = vmatpush.bf16.msra.mxu0 %v2089
  %2704 = vmatmul.bf16.gmra.mxu0 %v388
  %v2705 = vpop.f32.mrf.mxu0
  %v2706 = vadd.f32 %v2693, %v2705
  %v2707 = vpop.f32.mrf.mxu0
  %2708 = vdwg.mxu0
  %2709 = vmatpush.bf16.msra.mxu0 %v2104
  %2710 = vmatpush.bf16.msra.mxu0 %v2103
  %2711 = vmatpush.bf16.msra.mxu0 %v2102
  %2712 = vmatpush.bf16.msra.mxu0 %v2101
  %2713 = vmatpush.bf16.msra.mxu0 %v2100
  %2714 = vmatpush.bf16.msra.mxu0 %v2099
  %2715 = vmatpush.bf16.msra.mxu0 %v2098
  %2716 = vmatpush.bf16.msra.mxu0 %v2097
  %2717 = vmatmul.bf16.gmra.mxu0 %v389
  %v2718 = vpop.f32.mrf.mxu0
  %v2719 = vadd.f32 %v2706, %v2718
  %v2720 = vpop.f32.mrf.mxu0
  %2721 = vdwg.mxu0
  %2722 = vmatpush.bf16.msra.mxu0 %v2112
  %2723 = vmatpush.bf16.msra.mxu0 %v2111
  %2724 = vmatpush.bf16.msra.mxu0 %v2110
  %2725 = vmatpush.bf16.msra.mxu0 %v2109
  %2726 = vmatpush.bf16.msra.mxu0 %v2108
  %2727 = vmatpush.bf16.msra.mxu0 %v2107
  %2728 = vmatpush.bf16.msra.mxu0 %v2106
  %2729 = vmatpush.bf16.msra.mxu0 %v2105
  %2730 = vmatmul.bf16.gmra.mxu0 %v390
  %v2731 = vpop.f32.mrf.mxu0
  %v2732 = vadd.f32 %v2719, %v2731
  %v2733 = vpop.f32.mrf.mxu0
  %2734 = vdwg.mxu0
  %2735 = vmatpush.bf16.msra.mxu0 %v2120
  %2736 = vmatpush.bf16.msra.mxu0 %v2119
  %2737 = vmatpush.bf16.msra.mxu0 %v2118
  %2738 = vmatpush.bf16.msra.mxu0 %v2117
  %2739 = vmatpush.bf16.msra.mxu0 %v2116
  %2740 = vmatpush.bf16.msra.mxu0 %v2115
  %2741 = vmatpush.bf16.msra.mxu0 %v2114
  %2742 = vmatpush.bf16.msra.mxu0 %v2113
  %2743 = vmatmul.bf16.gmra.mxu0 %v391
  %v2744 = vpop.f32.mrf.mxu0
  %v2745 = vadd.f32 %v2732, %v2744
  %v2746 = vpop.f32.mrf.mxu0
  %2747 = vdwg.mxu0
  %2748 = vmatpush.bf16.msra.mxu0 %v2128
  %2749 = vmatpush.bf16.msra.mxu0 %v2127
  %2750 = vmatpush.bf16.msra.mxu0 %v2126
  %2751 = vmatpush.bf16.msra.mxu0 %v2125
  %2752 = vmatpush.bf16.msra.mxu0 %v2124
  %2753 = vmatpush.bf16.msra.mxu0 %v2123
  %2754 = vmatpush.bf16.msra.mxu0 %v2122
  %2755 = vmatpush.bf16.msra.mxu0 %v2121
  %2756 = vmatmul.bf16.gmra.mxu0 %v392
  %v2757 = vpop.f32.mrf.mxu0
  %v2758 = vadd.f32 %v2745, %v2757
  %v2759 = vpop.f32.mrf.mxu0
  %2760 = vdwg.mxu0
  %2761 = vmatpush.bf16.msra.mxu0 %v2136
  %2762 = vmatpush.bf16.msra.mxu0 %v2135
  %2763 = vmatpush.bf16.msra.mxu0 %v2134
  %2764 = vmatpush.bf16.msra.mxu0 %v2133
  %2765 = vmatpush.bf16.msra.mxu0 %v2132
  %2766 = vmatpush.bf16.msra.mxu0 %v2131
  %2767 = vmatpush.bf16.msra.mxu0 %v2130
  %2768 = vmatpush.bf16.msra.mxu0 %v2129
  %2769 = vmatmul.bf16.gmra.mxu0 %v393
  %v2770 = vpop.f32.mrf.mxu0
  %v2771 = vadd.f32 %v2758, %v2770
  %v2772 = vpop.f32.mrf.mxu0
  %2773 = vdwg.mxu0
  %2774 = vmatpush.bf16.msra.mxu0 %v2144
  %2775 = vmatpush.bf16.msra.mxu0 %v2143
  %2776 = vmatpush.bf16.msra.mxu0 %v2142
  %2777 = vmatpush.bf16.msra.mxu0 %v2141
  %2778 = vmatpush.bf16.msra.mxu0 %v2140
  %2779 = vmatpush.bf16.msra.mxu0 %v2139
  %2780 = vmatpush.bf16.msra.mxu0 %v2138
  %2781 = vmatpush.bf16.msra.mxu0 %v2137
  %2782 = vmatmul.bf16.gmra.mxu0 %v394
  %v2783 = vpop.f32.mrf.mxu0
  %v2784 = vadd.f32 %v2771, %v2783
  %v2785 = vpop.f32.mrf.mxu0
  %2786 = vdwg.mxu0
  %2787 = vmatpush.bf16.msra.mxu0 %v2152
  %2788 = vmatpush.bf16.msra.mxu0 %v2151
  %2789 = vmatpush.bf16.msra.mxu0 %v2150
  %2790 = vmatpush.bf16.msra.mxu0 %v2149
  %2791 = vmatpush.bf16.msra.mxu0 %v2148
  %2792 = vmatpush.bf16.msra.mxu0 %v2147
  %2793 = vmatpush.bf16.msra.mxu0 %v2146
  %2794 = vmatpush.bf16.msra.mxu0 %v2145
  %2795 = vmatmul.bf16.gmra.mxu0 %v395
  %v2796 = vpop.f32.mrf.mxu0
  %v2797 = vadd.f32 %v2784, %v2796
  %v2798 = vpop.f32.mrf.mxu0
  %2799 = vdwg.mxu0
  %2800 = vmatpush.bf16.msra.mxu0 %v2160
  %2801 = vmatpush.bf16.msra.mxu0 %v2159
  %2802 = vmatpush.bf16.msra.mxu0 %v2158
  %2803 = vmatpush.bf16.msra.mxu0 %v2157
  %2804 = vmatpush.bf16.msra.mxu0 %v2156
  %2805 = vmatpush.bf16.msra.mxu0 %v2155
  %2806 = vmatpush.bf16.msra.mxu0 %v2154
  %2807 = vmatpush.bf16.msra.mxu0 %v2153
  %2808 = vmatmul.bf16.gmra.mxu0 %v396
  %v2809 = vpop.f32.mrf.mxu0
  %v2810 = vadd.f32 %v2797, %v2809
  %v2811 = vpop.f32.mrf.mxu0
  %2812 = vdwg.mxu0
  %2813 = vmatpush.bf16.msra.mxu0 %v2168
  %2814 = vmatpush.bf16.msra.mxu0 %v2167
  %2815 = vmatpush.bf16.msra.mxu0 %v2166
  %2816 = vmatpush.bf16.msra.mxu0 %v2165
  %2817 = vmatpush.bf16.msra.mxu0 %v2164
  %2818 = vmatpush.bf16.msra.mxu0 %v2163
  %2819 = vmatpush.bf16.msra.mxu0 %v2162
  %2820 = vmatpush.bf16.msra.mxu0 %v2161
  %2821 = vmatmul.bf16.gmra.mxu0 %v397
  %v2822 = vpop.f32.mrf.mxu0
  %v2823 = vadd.f32 %v2810, %v2822
  %v2824 = vpop.f32.mrf.mxu0
  %2825 = vdwg.mxu0
  %2826 = vmatpush.bf16.msra.mxu0 %v2176
  %2827 = vmatpush.bf16.msra.mxu0 %v2175
  %2828 = vmatpush.bf16.msra.mxu0 %v2174
  %2829 = vmatpush.bf16.msra.mxu0 %v2173
  %2830 = vmatpush.bf16.msra.mxu0 %v2172
  %2831 = vmatpush.bf16.msra.mxu0 %v2171
  %2832 = vmatpush.bf16.msra.mxu0 %v2170
  %2833 = vmatpush.bf16.msra.mxu0 %v2169
  %2834 = vmatmul.bf16.gmra.mxu0 %v398
  %v2835 = vpop.f32.mrf.mxu0
  %v2836 = vadd.f32 %v2823, %v2835
  %v2837 = vpop.f32.mrf.mxu0
  %2838 = vdwg.mxu0
  %2839 = vmatpush.bf16.msra.mxu0 %v2184
  %2840 = vmatpush.bf16.msra.mxu0 %v2183
  %2841 = vmatpush.bf16.msra.mxu0 %v2182
  %2842 = vmatpush.bf16.msra.mxu0 %v2181
  %2843 = vmatpush.bf16.msra.mxu0 %v2180
  %2844 = vmatpush.bf16.msra.mxu0 %v2179
  %2845 = vmatpush.bf16.msra.mxu0 %v2178
  %2846 = vmatpush.bf16.msra.mxu0 %v2177
  %2847 = vmatmul.bf16.gmra.mxu0 %v399
  %v2848 = vpop.f32.mrf.mxu0
  %v2849 = vadd.f32 %v2836, %v2848
  %v2850 = vpop.f32.mrf.mxu0
  %2851 = vdwg.mxu0
  %2852 = vmatpush.bf16.msra.mxu0 %v2192
  %2853 = vmatpush.bf16.msra.mxu0 %v2191
  %2854 = vmatpush.bf16.msra.mxu0 %v2190
  %2855 = vmatpush.bf16.msra.mxu0 %v2189
  %2856 = vmatpush.bf16.msra.mxu0 %v2188
  %2857 = vmatpush.bf16.msra.mxu0 %v2187
  %2858 = vmatpush.bf16.msra.mxu0 %v2186
  %2859 = vmatpush.bf16.msra.mxu0 %v2185
  %2860 = vmatmul.bf16.gmra.mxu0 %v400
  %v2861 = vpop.f32.mrf.mxu0
  %v2862 = vadd.f32 %v2849, %v2861
  %v2863 = vpop.f32.mrf.mxu0
  %2864 = vdwg.mxu0
  %v2865 = vsub.f32 0.0, %v2862
  %v2866 = vmul.f32 %v2865, 1.442695
  %v2867 = vpow.pop %v2866
  %v2868 = vadd.f32 %v2867, 1.0
  %v2869 = vrcp.pop %v2868
  %v2870 = vmul.f32 %v2868, %v2869
  %v2871 = vsub.f32 1.0, %v2870
  %v2872 = vmul.f32 %v2869, %v2871
  %v2873 = vadd.f32 %v2869, %v2872
  %vm2874 = vweird.f32 %v2868
  %vm2875 = vweird.f32 %v2869
  %vm2876 = vmor %vm2874, %vm2875
  %v2877 = vsel %vm2876, %v2869, %v2873
  %v2878 = vand.u32 2147483647, %v2868
  %vm2879 = vcmp.eq.f32.partialorder %v2878, 8.507059e+37
  %v2880 = vand.u32 %v2868, 2147483648
  %v2881 = vor.u32 1.1754944e-38, %v2880
  %v2882 = vsel %vm2879, %v2881, %v2877
  %v2883 = vmul.f32 1.0, %v2882
  %2884 = vst [vmem:[%s4] sm:$0xff] %v2883
  // Predicated region
  $region18: #{discriminator_forward.9} parent=0 // pred_check
    _
  $region19: #{discriminator_forward.9} parent=0 // pred_check_branch
    %2886 = sbr.rel (0) target = $region21
  $region20: #{discriminator_forward.9} parent=0 // pred_region
    _
  $region21: #{discriminator_forward.9} parent=0 // pred_fallthru
    _
  // Predicated region
  $region22: #{discriminator_forward.9} parent=0 // pred_check
    _
  $region23: #{discriminator_forward.9} parent=0 // pred_check_branch
    %2888 = sbr.rel (0) target = $region25
  $region24: #{discriminator_forward.9} parent=0 // pred_region
    _
  $region25: #{discriminator_forward.9} parent=0 // pred_fallthru
    _

</llo_original>
